<compile_context>
chip_gen: v7x
topology: tpu7x:2x2x1
jax: 0.10.0
libtpu: 0.0.40
codegen_flags: <defaults>
</compile_context>

<pallas_src>
import functools

import jax
import jax.numpy as jnp
import numpy as np
from jax import lax
from jax.experimental import pallas as pl
from jax.experimental.pallas import tpu as pltpu

LN_EPS = 1e-5  # torch.nn.LayerNorm default eps


def _knn_block_kernel(
    # ---- inputs ----------------------------------------------------------
    xcat_q_ref,   # (tq, d+C_in)  query tile   [positions | weights]
    xcat_s_ref,   # (tk, d+C_in)  source tile  [positions | weights]
    xsrcT_ref,    # (d, tk)       source positions, transposed, * 1/(sqrt(2)*sigma)
    kflat_ref,    # (1, F*d)      filter-kernel positions, flattened, pre-scaled
    kw2d_ref,     # (d+C_in, F*C_out)  conv weights: [zeros(d); kw] fused over F
    gamma_ref,    # (1, C_out)    LayerNorm gamma
    beta_ref,     # (1, C_out)    LayerNorm beta
    w1_ref,       # (d+C_in, H)   delta MLP layer 1: [zeros(d); w1]
    b1_ref,       # (1, H)
    w2_ref,       # (H, d+C_in)
    b2_ref,       # (1, d+C_in)
    # ---- outputs ---------------------------------------------------------
    out_cat_ref,  # (tq, d+C_in)  x_cat + delta  (split into pos/w in wrapper)
    sampled_ref,  # (tq, C_out)   Gaussian-sampled LayerNormed conv mixture
    # ---- scratch ---------------------------------------------------------
    k_scr,        # (tq, F*tk)    Gaussian kernel matrix tile
    nw_scr,       # (F*tk, C_out) normalized conv weights tile
    *, n_filters, n_valid, mask_tail, inv_scale,
):
    f32 = jnp.float32
    d, tk = xsrcT_ref.shape
    C_out = gamma_ref.shape[1]
    F = n_filters
    k_step = pl.program_id(1)

    # ---- once per query tile: delta MLP + residual, zero the accumulator --
    @pl.when(k_step == 0)
    def _():
        xcat = xcat_q_ref[...]
        h = jnp.maximum(
            jnp.dot(xcat, w1_ref[...], preferred_element_type=f32) + b1_ref[...],
            0.0)
        delta = jnp.dot(h, w2_ref[...], preferred_element_type=f32) + b2_ref[...]
        out_cat_ref[...] = xcat + delta            # one lane-contiguous store
        sampled_ref[...] = jnp.zeros_like(sampled_ref)

    # ---- fused KernelConv for this source tile: ONE matmul over all F -----
    w_all = jnp.dot(xcat_s_ref[...], kw2d_ref[...],
                    preferred_element_type=f32)    # (tk, F*C_out)
    gamma = gamma_ref[...]
    beta = beta_ref[...]

    # Pre-scaled query positions (1/(2 sigma^2) folded into the coordinates).
    xq_sc = xcat_q_ref[:, :d] * inv_scale          # (tq, d)
    xsT = xsrcT_ref[...]                           # (d, tk) already scaled
    kflat = kflat_ref[...]                         # (1, F*d) already scaled

    if mask_tail:
        rows = lax.broadcasted_iota(jnp.int32, (tk, 1), 0)
        valid_rows = (k_step * tk + rows) < n_valid          # (tk, 1)

    # F is small; this static loop just fills the two VMEM staging buffers —
    # every per-j temporary is consumed by a ref store, so register pressure
    # stays bounded (no serial MXU-accumulate chain anymore).
    for j in range(F):
        # LayerNorm over channels for filter j (y.map_weights(norm)).
        wj = w_all[:, j * C_out:(j + 1) * C_out]             # (tk, C_out)
        mu = jnp.mean(wj, axis=-1, keepdims=True)
        var = jnp.mean((wj - mu) ** 2, axis=-1, keepdims=True)
        nwj = (wj - mu) * lax.rsqrt(var + LN_EPS) * gamma + beta
        if mask_tail:
            nwj = jnp.where(valid_rows, nwj, 0.0)            # zero padded rows
        nw_scr[j * tk:(j + 1) * tk, :] = nwj.astype(nw_scr.dtype)

        # Gaussian kernel block exp(-||x_q - (x_s + k_j)||^2 / (2 sigma^2)),
        # direct squared differences on the VPU (no MXU, no (N,N) temps).
        d2 = None
        for dim in range(d):
            c = j * d + dim
            a = xq_sc[:, dim:dim + 1] - kflat[:, c:c + 1]    # (tq, 1)
            dx = a - xsT[dim:dim + 1, :]                     # (tq, tk)
            d2 = dx * dx if d2 is None else d2 + dx * dx
        kj = jnp.exp(-d2)
        k_scr[:, j * tk:(j + 1) * tk] = kj.astype(k_scr.dtype)

    # ---- ONE MXU matmul per grid step: contraction axis = F * tk ----------
    sampled_ref[...] += jnp.dot(k_scr[...], nw_scr[...],
                                preferred_element_type=f32)


@functools.partial(jax.jit, static_argnames=("sigma", "tile", "sample_dtype"))
def knn_block_forward(xpos, xw, kpos, kw, gamma, beta, w1, b1, w2, b2,
                      *, sigma=1.0, tile=128, sample_dtype=jnp.float32):
    """Fused KNNBlock forward.  Returns (out_positions, out_weights, sampled)."""
    f32 = jnp.float32
    N, d = xpos.shape
    C_in = xw.shape[1]
    F, _, C_out = kw.shape
    H = w1.shape[1]
    dc = d + C_in

    inv_scale = float(1.0 / (np.sqrt(2.0) * sigma))

    n_tiles = (N + tile - 1) // tile
    Np = n_tiles * tile
    pad = Np - N

    # Concatenate positions+weights so the query side is a single slab and the
    # residual/delta output is one lane-contiguous store.
    xcat = jnp.concatenate([xpos, xw], axis=1).astype(f32)           # (N, dc)
    xsrcT = (xpos.T * inv_scale).astype(f32)                         # (d, N) lane-dense
    if pad:
        xcat = jnp.pad(xcat, ((0, pad), (0, 0)))
        xsrcT = jnp.pad(xsrcT, ((0, 0), (0, pad)))
    kflat = (kpos * inv_scale).reshape(1, F * d).astype(f32)         # (1, F*d)

    # kw (F, C_in, C_out) -> (C_in, F*C_out); prepend d zero rows so the conv
    # matmul can consume xcat directly (position columns contribute nothing).
    kw2d = jnp.transpose(kw, (1, 0, 2)).reshape(C_in, F * C_out).astype(f32)
    kw2d = jnp.concatenate([jnp.zeros((d, F * C_out), f32), kw2d], axis=0)
    w1p = jnp.concatenate([jnp.zeros((d, H), f32), w1.astype(f32)], axis=0)

    grid = (Np // tile, Np // tile)   # (query tiles "parallel", source "arbitrary")

    kernel = functools.partial(
        _knn_block_kernel,
        n_filters=F, n_valid=N, mask_tail=(pad > 0), inv_scale=inv_scale)

    grid_spec = pltpu.PrefetchScalarGridSpec(
        num_scalar_prefetch=0,
        grid=grid,
        in_specs=[
            pl.BlockSpec((tile, dc), lambda i, k: (i, 0)),        # xcat (query)
            pl.BlockSpec((tile, dc), lambda i, k: (k, 0)),        # xcat (source)
            pl.BlockSpec((d, tile), lambda i, k: (0, k)),         # xsrcT (source)
            pl.BlockSpec((1, F * d), lambda i, k: (0, 0)),        # kflat
            pl.BlockSpec((dc, F * C_out), lambda i, k: (0, 0)),   # kw2d
            pl.BlockSpec((1, C_out), lambda i, k: (0, 0)),        # gamma
            pl.BlockSpec((1, C_out), lambda i, k: (0, 0)),        # beta
            pl.BlockSpec((dc, H), lambda i, k: (0, 0)),           # w1 (padded)
            pl.BlockSpec((1, H), lambda i, k: (0, 0)),            # b1
            pl.BlockSpec((H, dc), lambda i, k: (0, 0)),           # w2
            pl.BlockSpec((1, dc), lambda i, k: (0, 0)),           # b2
        ],
        out_specs=[
            pl.BlockSpec((tile, dc), lambda i, k: (i, 0)),        # out_cat
            pl.BlockSpec((tile, C_out), lambda i, k: (i, 0)),     # sampled (acc)
        ],
        scratch_shapes=[
            pltpu.VMEM((tile, F * tile), sample_dtype),           # K tile
            pltpu.VMEM((F * tile, C_out), sample_dtype),          # normed conv tile
        ],
    )

    out_cat, sampled = pl.pallas_call(
        kernel,
        out_shape=(
            jax.ShapeDtypeStruct((Np, dc), f32),
            jax.ShapeDtypeStruct((Np, C_out), f32),
        ),
        grid_spec=grid_spec,
        compiler_params=pltpu.CompilerParams(
            dimension_semantics=("parallel", "arbitrary"),
            vmem_limit_bytes=32 * 1024 * 1024,
        ),
    )(xcat, xcat, xsrcT, kflat, kw2d,
      gamma.astype(f32), beta.astype(f32),
      w1p, b1.astype(f32), w2.astype(f32), b2.astype(f32))

    out_cat = out_cat[:N]
    return out_cat[:, :d], out_cat[:, d:], sampled[:N]


def knn_block_reference(xpos, xw, kpos, kw, gamma, beta, w1, b1, w2, b2,
                        sigma=1.0):
    """Pure-JAX reference mirroring the PyTorch module."""
    N, d = xpos.shape
    F, C_in, C_out = kw.shape
    # KernelConv
    ypos = (xpos[:, None, :] + kpos[None, :, :]).reshape(N * F, d)
    yw = jnp.einsum('if,jfg->ijg', xw, kw).reshape(N * F, C_out)
    # LayerNorm (y.map_weights(norm))
    mu = jnp.mean(yw, axis=-1, keepdims=True)
    var = jnp.mean((yw - mu) ** 2, axis=-1, keepdims=True)
    yw = (yw - mu) / jnp.sqrt(var + LN_EPS) * gamma + beta
    # KernelSample with GaussianKernel(sigma) at x.positions
    d2 = jnp.sum((xpos[:, None, :] - ypos[None, :, :]) ** 2, axis=-1)
    K = jnp.exp(-d2 / (2.0 * sigma ** 2))
    sampled = K @ yw
    # delta_module
    h = jax.nn.relu(xw @ w1 + b1)
    delta = h @ w2 + b2
    return xpos + delta[:, :d], xw + delta[:, d:], sampled


if __name__ == "__main__":
    key = jax.random.PRNGKey(0)
    N, d = 300, 2           # in_kernels (not a tile multiple -> exercises masking)
    C_in, C_out = 8, 16     # in_channels, out_channels
    F = 9                   # max_filter_kernels (kernel_init='uniform' keeps all F)
    H = 32                  # delta_module hidden width
    kernel_spread = 1.0

    ks = jax.random.split(key, 6)
    # Mixture input
    xpos = jax.random.normal(ks[0], (N, d), jnp.float32)
    xw = jax.random.normal(ks[1], (N, C_in), jnp.float32)
    # KernelConv parameters (synthetic init matching the module's recipes)
    #   _uniform_positions: F**(1/d) * spread * (U[0,1) - 0.5)
    kpos = (F ** (1.0 / d)) * kernel_spread * (
        jax.random.uniform(ks[2], (F, d), jnp.float32) - 0.5)
    #   kaiming_normal_ on (F, C_in, C_out)
    kw = jax.random.normal(ks[3], (F, C_in, C_out), jnp.float32) * jnp.sqrt(
        2.0 / (C_in * C_out))
    # norm = LayerNorm(C_out), default affine params
    gamma = jnp.ones((1, C_out), jnp.float32)
    beta = jnp.zeros((1, C_out), jnp.float32)
    # delta_module = Linear(C_in, H) -> ReLU -> Linear(H, d + C_in)
    w1 = jax.random.normal(ks[4], (C_in, H), jnp.float32) * jnp.sqrt(2.0 / C_in)
    b1 = jnp.zeros((1, H), jnp.float32)
    w2 = jax.random.normal(ks[5], (H, d + C_in), jnp.float32) * jnp.sqrt(1.0 / H)
    b2 = jnp.zeros((1, d + C_in), jnp.float32)

    outs = knn_block_forward(xpos, xw, kpos, kw, gamma, beta, w1, b1, w2, b2)
    outs = jax.block_until_ready(outs)

    refs = knn_block_reference(xpos, xw, kpos, kw, gamma, beta, w1, b1, w2, b2)
    for o, r in zip(outs, refs):
        np.testing.assert_allclose(np.asarray(o), np.asarray(r),
                                   rtol=1e-2, atol=1e-2)

    print("KERNEL_OK")
</pallas_src>

<mosaic_0001>
module attributes {stable_mosaic.version = 11 : i64} {
  func.func @_knn_block_kernel(%arg0: i32, %arg1: i32, %arg2: memref<128x10xf32, #tpu.memory_space<vmem>>, %arg3: memref<128x10xf32, #tpu.memory_space<vmem>>, %arg4: memref<2x128xf32, #tpu.memory_space<vmem>>, %arg5: memref<1x18xf32, #tpu.memory_space<vmem>>, %arg6: memref<10x144xf32, #tpu.memory_space<vmem>>, %arg7: memref<1x16xf32, #tpu.memory_space<vmem>>, %arg8: memref<1x16xf32, #tpu.memory_space<vmem>>, %arg9: memref<10x32xf32, #tpu.memory_space<vmem>>, %arg10: memref<1x32xf32, #tpu.memory_space<vmem>>, %arg11: memref<32x10xf32, #tpu.memory_space<vmem>>, %arg12: memref<1x10xf32, #tpu.memory_space<vmem>>, %arg13: memref<128x10xf32, #tpu.memory_space<vmem>>, %arg14: memref<128x16xf32, #tpu.memory_space<vmem>>, %arg15: memref<128x1152xf32, #tpu.memory_space<vmem>>, %arg16: memref<1152x16xf32, #tpu.memory_space<vmem>>) attributes {dimension_semantics = [#tpu.dimension_semantics<parallel>, #tpu.dimension_semantics<arbitrary>], iteration_bounds = array<i64: 3, 3>, scalar_prefetch = 0 : i64, scratch_operands = 2 : i64, tpu.core_type = #tpu.core_type<tc>, window_params = [{transform_indices = @transform_0, window_bounds = array<i64: 128, 10>}, {transform_indices = @transform_1, window_bounds = array<i64: 128, 10>}, {transform_indices = @transform_2, window_bounds = array<i64: 2, 128>}, {pipeline_mode = #tpu.pipeline_mode<synchronous>, transform_indices = @transform_3, window_bounds = array<i64: 1, 18>}, {pipeline_mode = #tpu.pipeline_mode<synchronous>, transform_indices = @transform_4, window_bounds = array<i64: 10, 144>}, {pipeline_mode = #tpu.pipeline_mode<synchronous>, transform_indices = @transform_5, window_bounds = array<i64: 1, 16>}, {pipeline_mode = #tpu.pipeline_mode<synchronous>, transform_indices = @transform_6, window_bounds = array<i64: 1, 16>}, {pipeline_mode = #tpu.pipeline_mode<synchronous>, transform_indices = @transform_7, window_bounds = array<i64: 10, 32>}, {pipeline_mode = #tpu.pipeline_mode<synchronous>, transform_indices = @transform_8, window_bounds = array<i64: 1, 32>}, {pipeline_mode = #tpu.pipeline_mode<synchronous>, transform_indices = @transform_9, window_bounds = array<i64: 32, 10>}, {pipeline_mode = #tpu.pipeline_mode<synchronous>, transform_indices = @transform_10, window_bounds = array<i64: 1, 10>}, {transform_indices = @transform_11, window_bounds = array<i64: 128, 10>}, {transform_indices = @transform_12, window_bounds = array<i64: 128, 16>}]} {
    %c0_i32 = arith.constant 0 : i32
    %0 = arith.cmpi eq, %arg1, %c0_i32 : i32
    %1 = arith.extui %0 : i1 to i32
    %c0_i32_0 = arith.constant 0 : i32
    %2 = arith.cmpi ne, %1, %c0_i32_0 : i32
    scf.if %2 {
      %c0_115 = arith.constant 0 : index
      %c0_116 = arith.constant 0 : index
      %484 = vector.load %arg2[%c0_115, %c0_116] : memref<128x10xf32, #tpu.memory_space<vmem>>, vector<128x10xf32>
      %c0_117 = arith.constant 0 : index
      %c0_118 = arith.constant 0 : index
      %485 = vector.load %arg9[%c0_117, %c0_118] : memref<10x32xf32, #tpu.memory_space<vmem>>, vector<10x32xf32>
      %cst_119 = arith.constant dense<0.000000e+00> : vector<128x32xf32>
      %486 = tpu.matmul %484, %485, %cst_119 {dimension_numbers = #tpu.dot_dimension_numbers<[1], [0], [0], [1], [0, 0, 1, 1], [], []>} : vector<128x10xf32>, vector<10x32xf32>, vector<128x32xf32> -> vector<128x32xf32>
      %c0_120 = arith.constant 0 : index
      %c0_121 = arith.constant 0 : index
      %487 = vector.load %arg10[%c0_120, %c0_121] : memref<1x32xf32, #tpu.memory_space<vmem>>, vector<1x32xf32>
      %488 = vector.broadcast %487 : vector<1x32xf32> to vector<128x32xf32>
      %489 = arith.addf %486, %488 : vector<128x32xf32>
      %cst_122 = arith.constant 0.000000e+00 : f32
      %490 = vector.broadcast %cst_122 : f32 to vector<128x32xf32>
      %491 = arith.maximumf %489, %490 : vector<128x32xf32>
      %c0_123 = arith.constant 0 : index
      %c0_124 = arith.constant 0 : index
      %492 = vector.load %arg11[%c0_123, %c0_124] : memref<32x10xf32, #tpu.memory_space<vmem>>, vector<32x10xf32>
      %cst_125 = arith.constant dense<0.000000e+00> : vector<128x10xf32>
      %493 = tpu.matmul %491, %492, %cst_125 {dimension_numbers = #tpu.dot_dimension_numbers<[1], [0], [0], [1], [0, 0, 1, 1], [], []>} : vector<128x32xf32>, vector<32x10xf32>, vector<128x10xf32> -> vector<128x10xf32>
      %c0_126 = arith.constant 0 : index
      %c0_127 = arith.constant 0 : index
      %494 = vector.load %arg12[%c0_126, %c0_127] : memref<1x10xf32, #tpu.memory_space<vmem>>, vector<1x10xf32>
      %495 = vector.broadcast %494 : vector<1x10xf32> to vector<128x10xf32>
      %496 = arith.addf %493, %495 : vector<128x10xf32>
      %497 = arith.addf %484, %496 : vector<128x10xf32>
      %c0_128 = arith.constant 0 : index
      %c0_129 = arith.constant 0 : index
      %498 = vector.load %arg13[%c0_128, %c0_129] : memref<128x10xf32, #tpu.memory_space<vmem>>, vector<128x10xf32>
      tpu.vector_store %arg13[%c0_128, %c0_129], %497 {strides = array<i32>} : memref<128x10xf32, #tpu.memory_space<vmem>>, vector<128x10xf32>,
      %cst_130 = arith.constant 0.000000e+00 : f32
      %499 = vector.broadcast %cst_130 : f32 to vector<128x16xf32>
      %c0_131 = arith.constant 0 : index
      %c0_132 = arith.constant 0 : index
      %500 = vector.load %arg14[%c0_131, %c0_132] : memref<128x16xf32, #tpu.memory_space<vmem>>, vector<128x16xf32>
      tpu.vector_store %arg14[%c0_131, %c0_132], %499 {strides = array<i32>} : memref<128x16xf32, #tpu.memory_space<vmem>>, vector<128x16xf32>,
    } else {
    }
    %c0 = arith.constant 0 : index
    %c0_1 = arith.constant 0 : index
    %3 = vector.load %arg3[%c0, %c0_1] : memref<128x10xf32, #tpu.memory_space<vmem>>, vector<128x10xf32>
    %c0_2 = arith.constant 0 : index
    %c0_3 = arith.constant 0 : index
    %4 = vector.load %arg6[%c0_2, %c0_3] : memref<10x144xf32, #tpu.memory_space<vmem>>, vector<10x144xf32>
    %cst = arith.constant dense<0.000000e+00> : vector<128x144xf32>
    %5 = tpu.matmul %3, %4, %cst {dimension_numbers = #tpu.dot_dimension_numbers<[1], [0], [0], [1], [0, 0, 1, 1], [], []>} : vector<128x10xf32>, vector<10x144xf32>, vector<128x144xf32> -> vector<128x144xf32>
    %c0_4 = arith.constant 0 : index
    %c0_5 = arith.constant 0 : index
    %6 = vector.load %arg7[%c0_4, %c0_5] : memref<1x16xf32, #tpu.memory_space<vmem>>, vector<1x16xf32>
    %c0_6 = arith.constant 0 : index
    %c0_7 = arith.constant 0 : index
    %7 = vector.load %arg8[%c0_6, %c0_7] : memref<1x16xf32, #tpu.memory_space<vmem>>, vector<1x16xf32>
    %c0_8 = arith.constant 0 : index
    %c0_9 = arith.constant 0 : index
    %8 = vector.load %arg2[%c0_8, %c0_9] : memref<128x10xf32, #tpu.memory_space<vmem>>, vector<128x2xf32>
    %cst_10 = arith.constant 0.707106769 : f32
    %9 = vector.broadcast %cst_10 : f32 to vector<128x2xf32>
    %10 = arith.mulf %8, %9 : vector<128x2xf32>
    %c0_11 = arith.constant 0 : index
    %c0_12 = arith.constant 0 : index
    %11 = vector.load %arg4[%c0_11, %c0_12] : memref<2x128xf32, #tpu.memory_space<vmem>>, vector<2x128xf32>
    %c0_13 = arith.constant 0 : index
    %c0_14 = arith.constant 0 : index
    %12 = vector.load %arg5[%c0_13, %c0_14] : memref<1x18xf32, #tpu.memory_space<vmem>>, vector<1x18xf32>
    %13 = tpu.iota {dimensions = array<i32: 0>} : vector<128x1xi32>
    %c128_i32 = arith.constant 128 : i32
    %14 = arith.muli %arg1, %c128_i32 : i32
    %15 = vector.broadcast %14 : i32 to vector<128x1xi32>
    %16 = arith.addi %15, %13 : vector<128x1xi32>
    %c300_i32 = arith.constant 300 : i32
    %17 = vector.broadcast %c300_i32 : i32 to vector<128x1xi32>
    %18 = arith.cmpi slt, %16, %17 : vector<128x1xi32>
    %19 = vector.extract_strided_slice %5 {offsets = [0, 0], sizes = [128, 16], strides = [1, 1]} : vector<128x144xf32> to vector<128x16xf32>
    %cst_15 = arith.constant dense<0.000000e+00> : vector<128xf32>
    %20 = vector.multi_reduction <add>, %19, %cst_15 [1] : vector<128x16xf32> to vector<128xf32>
    %21 = vector.shape_cast %20 : vector<128xf32> to vector<128x1xf32>
    %cst_16 = arith.constant 1.600000e+01 : f32
    %22 = vector.broadcast %cst_16 : f32 to vector<128x1xf32>
    %23 = arith.divf %21, %22 : vector<128x1xf32>
    %24 = vector.broadcast %23 : vector<128x1xf32> to vector<128x16xf32>
    %25 = arith.subf %19, %24 : vector<128x16xf32>
    %26 = arith.mulf %25, %25 : vector<128x16xf32>
    %cst_17 = arith.constant dense<0.000000e+00> : vector<128xf32>
    %27 = vector.multi_reduction <add>, %26, %cst_17 [1] : vector<128x16xf32> to vector<128xf32>
    %28 = vector.shape_cast %27 : vector<128xf32> to vector<128x1xf32>
    %cst_18 = arith.constant 1.600000e+01 : f32
    %29 = vector.broadcast %cst_18 : f32 to vector<128x1xf32>
    %30 = arith.divf %28, %29 : vector<128x1xf32>
    %31 = vector.broadcast %23 : vector<128x1xf32> to vector<128x16xf32>
    %32 = arith.subf %19, %31 : vector<128x16xf32>
    %cst_19 = arith.constant 9.99999974E-6 : f32
    %33 = vector.broadcast %cst_19 : f32 to vector<128x1xf32>
    %34 = arith.addf %30, %33 : vector<128x1xf32>
    %35 = math.rsqrt %34 : vector<128x1xf32>
    %36 = vector.broadcast %35 : vector<128x1xf32> to vector<128x16xf32>
    %37 = arith.mulf %32, %36 : vector<128x16xf32>
    %38 = vector.broadcast %6 : vector<1x16xf32> to vector<128x16xf32>
    %39 = arith.mulf %37, %38 : vector<128x16xf32>
    %40 = vector.broadcast %7 : vector<1x16xf32> to vector<128x16xf32>
    %41 = arith.addf %39, %40 : vector<128x16xf32>
    %cst_20 = arith.constant 0.000000e+00 : f32
    %42 = vector.shape_cast %18 : vector<128x1xi1> to vector<128x1xi1>
    %43 = vector.broadcast %42 : vector<128x1xi1> to vector<128x16xi1>
    %44 = vector.broadcast %cst_20 : f32 to vector<128x16xf32>
    %45 = arith.select %43, %41, %44 : vector<128x16xi1>, vector<128x16xf32>
    %c0_21 = arith.constant 0 : index
    %c0_22 = arith.constant 0 : index
    %46 = vector.load %arg16[%c0_21, %c0_22] : memref<1152x16xf32, #tpu.memory_space<vmem>>, vector<128x16xf32>
    tpu.vector_store %arg16[%c0_21, %c0_22], %45 {strides = array<i32>} : memref<1152x16xf32, #tpu.memory_space<vmem>>, vector<128x16xf32>,
    %47 = vector.extract_strided_slice %10 {offsets = [0, 0], sizes = [128, 1], strides = [1, 1]} : vector<128x2xf32> to vector<128x1xf32>
    %48 = vector.extract_strided_slice %12 {offsets = [0, 0], sizes = [1, 1], strides = [1, 1]} : vector<1x18xf32> to vector<1x1xf32>
    %49 = vector.broadcast %48 : vector<1x1xf32> to vector<128x1xf32>
    %50 = arith.subf %47, %49 : vector<128x1xf32>
    %51 = vector.extract_strided_slice %11 {offsets = [0, 0], sizes = [1, 128], strides = [1, 1]} : vector<2x128xf32> to vector<1x128xf32>
    %52 = vector.broadcast %50 : vector<128x1xf32> to vector<128x128xf32>
    %53 = vector.broadcast %51 : vector<1x128xf32> to vector<128x128xf32>
    %54 = arith.subf %52, %53 : vector<128x128xf32>
    %55 = arith.mulf %54, %54 : vector<128x128xf32>
    %56 = vector.extract_strided_slice %10 {offsets = [0, 1], sizes = [128, 1], strides = [1, 1]} : vector<128x2xf32> to vector<128x1xf32>
    %57 = vector.extract_strided_slice %12 {offsets = [0, 1], sizes = [1, 1], strides = [1, 1]} : vector<1x18xf32> to vector<1x1xf32>
    %58 = vector.broadcast %57 : vector<1x1xf32> to vector<128x1xf32>
    %59 = arith.subf %56, %58 : vector<128x1xf32>
    %60 = vector.extract_strided_slice %11 {offsets = [1, 0], sizes = [1, 128], strides = [1, 1]} : vector<2x128xf32> to vector<1x128xf32>
    %61 = vector.broadcast %59 : vector<128x1xf32> to vector<128x128xf32>
    %62 = vector.broadcast %60 : vector<1x128xf32> to vector<128x128xf32>
    %63 = arith.subf %61, %62 : vector<128x128xf32>
    %64 = arith.mulf %63, %63 : vector<128x128xf32>
    %65 = arith.addf %55, %64 : vector<128x128xf32>
    %cst_23 = arith.constant 0.000000e+00 : f32
    %66 = vector.broadcast %cst_23 : f32 to vector<128x128xf32>
    %67 = arith.subf %66, %65 : vector<128x128xf32>
    %68 = math.exp %67 : vector<128x128xf32>
    %c0_24 = arith.constant 0 : index
    %c0_25 = arith.constant 0 : index
    %69 = vector.load %arg15[%c0_24, %c0_25] : memref<128x1152xf32, #tpu.memory_space<vmem>>, vector<128x128xf32>
    tpu.vector_store %arg15[%c0_24, %c0_25], %68 {strides = array<i32>} : memref<128x1152xf32, #tpu.memory_space<vmem>>, vector<128x128xf32>,
    %70 = vector.extract_strided_slice %5 {offsets = [0, 16], sizes = [128, 16], strides = [1, 1]} : vector<128x144xf32> to vector<128x16xf32>
    %cst_26 = arith.constant dense<0.000000e+00> : vector<128xf32>
    %71 = vector.multi_reduction <add>, %70, %cst_26 [1] : vector<128x16xf32> to vector<128xf32>
    %72 = vector.shape_cast %71 : vector<128xf32> to vector<128x1xf32>
    %cst_27 = arith.constant 1.600000e+01 : f32
    %73 = vector.broadcast %cst_27 : f32 to vector<128x1xf32>
    %74 = arith.divf %72, %73 : vector<128x1xf32>
    %75 = vector.broadcast %74 : vector<128x1xf32> to vector<128x16xf32>
    %76 = arith.subf %70, %75 : vector<128x16xf32>
    %77 = arith.mulf %76, %76 : vector<128x16xf32>
    %cst_28 = arith.constant dense<0.000000e+00> : vector<128xf32>
    %78 = vector.multi_reduction <add>, %77, %cst_28 [1] : vector<128x16xf32> to vector<128xf32>
    %79 = vector.shape_cast %78 : vector<128xf32> to vector<128x1xf32>
    %cst_29 = arith.constant 1.600000e+01 : f32
    %80 = vector.broadcast %cst_29 : f32 to vector<128x1xf32>
    %81 = arith.divf %79, %80 : vector<128x1xf32>
    %82 = vector.broadcast %74 : vector<128x1xf32> to vector<128x16xf32>
    %83 = arith.subf %70, %82 : vector<128x16xf32>
    %cst_30 = arith.constant 9.99999974E-6 : f32
    %84 = vector.broadcast %cst_30 : f32 to vector<128x1xf32>
    %85 = arith.addf %81, %84 : vector<128x1xf32>
    %86 = math.rsqrt %85 : vector<128x1xf32>
    %87 = vector.broadcast %86 : vector<128x1xf32> to vector<128x16xf32>
    %88 = arith.mulf %83, %87 : vector<128x16xf32>
    %89 = vector.broadcast %6 : vector<1x16xf32> to vector<128x16xf32>
    %90 = arith.mulf %88, %89 : vector<128x16xf32>
    %91 = vector.broadcast %7 : vector<1x16xf32> to vector<128x16xf32>
    %92 = arith.addf %90, %91 : vector<128x16xf32>
    %cst_31 = arith.constant 0.000000e+00 : f32
    %93 = vector.shape_cast %18 : vector<128x1xi1> to vector<128x1xi1>
    %94 = vector.broadcast %93 : vector<128x1xi1> to vector<128x16xi1>
    %95 = vector.broadcast %cst_31 : f32 to vector<128x16xf32>
    %96 = arith.select %94, %92, %95 : vector<128x16xi1>, vector<128x16xf32>
    %c128 = arith.constant 128 : index
    %c0_32 = arith.constant 0 : index
    %97 = vector.load %arg16[%c128, %c0_32] : memref<1152x16xf32, #tpu.memory_space<vmem>>, vector<128x16xf32>
    tpu.vector_store %arg16[%c128, %c0_32], %96 {strides = array<i32>} : memref<1152x16xf32, #tpu.memory_space<vmem>>, vector<128x16xf32>,
    %98 = vector.extract_strided_slice %10 {offsets = [0, 0], sizes = [128, 1], strides = [1, 1]} : vector<128x2xf32> to vector<128x1xf32>
    %99 = vector.extract_strided_slice %12 {offsets = [0, 2], sizes = [1, 1], strides = [1, 1]} : vector<1x18xf32> to vector<1x1xf32>
    %100 = vector.broadcast %99 : vector<1x1xf32> to vector<128x1xf32>
    %101 = arith.subf %98, %100 : vector<128x1xf32>
    %102 = vector.extract_strided_slice %11 {offsets = [0, 0], sizes = [1, 128], strides = [1, 1]} : vector<2x128xf32> to vector<1x128xf32>
    %103 = vector.broadcast %101 : vector<128x1xf32> to vector<128x128xf32>
    %104 = vector.broadcast %102 : vector<1x128xf32> to vector<128x128xf32>
    %105 = arith.subf %103, %104 : vector<128x128xf32>
    %106 = arith.mulf %105, %105 : vector<128x128xf32>
    %107 = vector.extract_strided_slice %10 {offsets = [0, 1], sizes = [128, 1], strides = [1, 1]} : vector<128x2xf32> to vector<128x1xf32>
    %108 = vector.extract_strided_slice %12 {offsets = [0, 3], sizes = [1, 1], strides = [1, 1]} : vector<1x18xf32> to vector<1x1xf32>
    %109 = vector.broadcast %108 : vector<1x1xf32> to vector<128x1xf32>
    %110 = arith.subf %107, %109 : vector<128x1xf32>
    %111 = vector.extract_strided_slice %11 {offsets = [1, 0], sizes = [1, 128], strides = [1, 1]} : vector<2x128xf32> to vector<1x128xf32>
    %112 = vector.broadcast %110 : vector<128x1xf32> to vector<128x128xf32>
    %113 = vector.broadcast %111 : vector<1x128xf32> to vector<128x128xf32>
    %114 = arith.subf %112, %113 : vector<128x128xf32>
    %115 = arith.mulf %114, %114 : vector<128x128xf32>
    %116 = arith.addf %106, %115 : vector<128x128xf32>
    %cst_33 = arith.constant 0.000000e+00 : f32
    %117 = vector.broadcast %cst_33 : f32 to vector<128x128xf32>
    %118 = arith.subf %117, %116 : vector<128x128xf32>
    %119 = math.exp %118 : vector<128x128xf32>
    %c0_34 = arith.constant 0 : index
    %c128_35 = arith.constant 128 : index
    %120 = vector.load %arg15[%c0_34, %c128_35] : memref<128x1152xf32, #tpu.memory_space<vmem>>, vector<128x128xf32>
    tpu.vector_store %arg15[%c0_34, %c128_35], %119 {strides = array<i32>} : memref<128x1152xf32, #tpu.memory_space<vmem>>, vector<128x128xf32>,
    %121 = vector.extract_strided_slice %5 {offsets = [0, 32], sizes = [128, 16], strides = [1, 1]} : vector<128x144xf32> to vector<128x16xf32>
    %cst_36 = arith.constant dense<0.000000e+00> : vector<128xf32>
    %122 = vector.multi_reduction <add>, %121, %cst_36 [1] : vector<128x16xf32> to vector<128xf32>
    %123 = vector.shape_cast %122 : vector<128xf32> to vector<128x1xf32>
    %cst_37 = arith.constant 1.600000e+01 : f32
    %124 = vector.broadcast %cst_37 : f32 to vector<128x1xf32>
    %125 = arith.divf %123, %124 : vector<128x1xf32>
    %126 = vector.broadcast %125 : vector<128x1xf32> to vector<128x16xf32>
    %127 = arith.subf %121, %126 : vector<128x16xf32>
    %128 = arith.mulf %127, %127 : vector<128x16xf32>
    %cst_38 = arith.constant dense<0.000000e+00> : vector<128xf32>
    %129 = vector.multi_reduction <add>, %128, %cst_38 [1] : vector<128x16xf32> to vector<128xf32>
    %130 = vector.shape_cast %129 : vector<128xf32> to vector<128x1xf32>
    %cst_39 = arith.constant 1.600000e+01 : f32
    %131 = vector.broadcast %cst_39 : f32 to vector<128x1xf32>
    %132 = arith.divf %130, %131 : vector<128x1xf32>
    %133 = vector.broadcast %125 : vector<128x1xf32> to vector<128x16xf32>
    %134 = arith.subf %121, %133 : vector<128x16xf32>
    %cst_40 = arith.constant 9.99999974E-6 : f32
    %135 = vector.broadcast %cst_40 : f32 to vector<128x1xf32>
    %136 = arith.addf %132, %135 : vector<128x1xf32>
    %137 = math.rsqrt %136 : vector<128x1xf32>
    %138 = vector.broadcast %137 : vector<128x1xf32> to vector<128x16xf32>
    %139 = arith.mulf %134, %138 : vector<128x16xf32>
    %140 = vector.broadcast %6 : vector<1x16xf32> to vector<128x16xf32>
    %141 = arith.mulf %139, %140 : vector<128x16xf32>
    %142 = vector.broadcast %7 : vector<1x16xf32> to vector<128x16xf32>
    %143 = arith.addf %141, %142 : vector<128x16xf32>
    %cst_41 = arith.constant 0.000000e+00 : f32
    %144 = vector.shape_cast %18 : vector<128x1xi1> to vector<128x1xi1>
    %145 = vector.broadcast %144 : vector<128x1xi1> to vector<128x16xi1>
    %146 = vector.broadcast %cst_41 : f32 to vector<128x16xf32>
    %147 = arith.select %145, %143, %146 : vector<128x16xi1>, vector<128x16xf32>
    %c256 = arith.constant 256 : index
    %c0_42 = arith.constant 0 : index
    %148 = vector.load %arg16[%c256, %c0_42] : memref<1152x16xf32, #tpu.memory_space<vmem>>, vector<128x16xf32>
    tpu.vector_store %arg16[%c256, %c0_42], %147 {strides = array<i32>} : memref<1152x16xf32, #tpu.memory_space<vmem>>, vector<128x16xf32>,
    %149 = vector.extract_strided_slice %10 {offsets = [0, 0], sizes = [128, 1], strides = [1, 1]} : vector<128x2xf32> to vector<128x1xf32>
    %150 = vector.extract_strided_slice %12 {offsets = [0, 4], sizes = [1, 1], strides = [1, 1]} : vector<1x18xf32> to vector<1x1xf32>
    %151 = vector.broadcast %150 : vector<1x1xf32> to vector<128x1xf32>
    %152 = arith.subf %149, %151 : vector<128x1xf32>
    %153 = vector.extract_strided_slice %11 {offsets = [0, 0], sizes = [1, 128], strides = [1, 1]} : vector<2x128xf32> to vector<1x128xf32>
    %154 = vector.broadcast %152 : vector<128x1xf32> to vector<128x128xf32>
    %155 = vector.broadcast %153 : vector<1x128xf32> to vector<128x128xf32>
    %156 = arith.subf %154, %155 : vector<128x128xf32>
    %157 = arith.mulf %156, %156 : vector<128x128xf32>
    %158 = vector.extract_strided_slice %10 {offsets = [0, 1], sizes = [128, 1], strides = [1, 1]} : vector<128x2xf32> to vector<128x1xf32>
    %159 = vector.extract_strided_slice %12 {offsets = [0, 5], sizes = [1, 1], strides = [1, 1]} : vector<1x18xf32> to vector<1x1xf32>
    %160 = vector.broadcast %159 : vector<1x1xf32> to vector<128x1xf32>
    %161 = arith.subf %158, %160 : vector<128x1xf32>
    %162 = vector.extract_strided_slice %11 {offsets = [1, 0], sizes = [1, 128], strides = [1, 1]} : vector<2x128xf32> to vector<1x128xf32>
    %163 = vector.broadcast %161 : vector<128x1xf32> to vector<128x128xf32>
    %164 = vector.broadcast %162 : vector<1x128xf32> to vector<128x128xf32>
    %165 = arith.subf %163, %164 : vector<128x128xf32>
    %166 = arith.mulf %165, %165 : vector<128x128xf32>
    %167 = arith.addf %157, %166 : vector<128x128xf32>
    %cst_43 = arith.constant 0.000000e+00 : f32
    %168 = vector.broadcast %cst_43 : f32 to vector<128x128xf32>
    %169 = arith.subf %168, %167 : vector<128x128xf32>
    %170 = math.exp %169 : vector<128x128xf32>
    %c0_44 = arith.constant 0 : index
    %c256_45 = arith.constant 256 : index
    %171 = vector.load %arg15[%c0_44, %c256_45] : memref<128x1152xf32, #tpu.memory_space<vmem>>, vector<128x128xf32>
    tpu.vector_store %arg15[%c0_44, %c256_45], %170 {strides = array<i32>} : memref<128x1152xf32, #tpu.memory_space<vmem>>, vector<128x128xf32>,
    %172 = vector.extract_strided_slice %5 {offsets = [0, 48], sizes = [128, 16], strides = [1, 1]} : vector<128x144xf32> to vector<128x16xf32>
    %cst_46 = arith.constant dense<0.000000e+00> : vector<128xf32>
    %173 = vector.multi_reduction <add>, %172, %cst_46 [1] : vector<128x16xf32> to vector<128xf32>
    %174 = vector.shape_cast %173 : vector<128xf32> to vector<128x1xf32>
    %cst_47 = arith.constant 1.600000e+01 : f32
    %175 = vector.broadcast %cst_47 : f32 to vector<128x1xf32>
    %176 = arith.divf %174, %175 : vector<128x1xf32>
    %177 = vector.broadcast %176 : vector<128x1xf32> to vector<128x16xf32>
    %178 = arith.subf %172, %177 : vector<128x16xf32>
    %179 = arith.mulf %178, %178 : vector<128x16xf32>
    %cst_48 = arith.constant dense<0.000000e+00> : vector<128xf32>
    %180 = vector.multi_reduction <add>, %179, %cst_48 [1] : vector<128x16xf32> to vector<128xf32>
    %181 = vector.shape_cast %180 : vector<128xf32> to vector<128x1xf32>
    %cst_49 = arith.constant 1.600000e+01 : f32
    %182 = vector.broadcast %cst_49 : f32 to vector<128x1xf32>
    %183 = arith.divf %181, %182 : vector<128x1xf32>
    %184 = vector.broadcast %176 : vector<128x1xf32> to vector<128x16xf32>
    %185 = arith.subf %172, %184 : vector<128x16xf32>
    %cst_50 = arith.constant 9.99999974E-6 : f32
    %186 = vector.broadcast %cst_50 : f32 to vector<128x1xf32>
    %187 = arith.addf %183, %186 : vector<128x1xf32>
    %188 = math.rsqrt %187 : vector<128x1xf32>
    %189 = vector.broadcast %188 : vector<128x1xf32> to vector<128x16xf32>
    %190 = arith.mulf %185, %189 : vector<128x16xf32>
    %191 = vector.broadcast %6 : vector<1x16xf32> to vector<128x16xf32>
    %192 = arith.mulf %190, %191 : vector<128x16xf32>
    %193 = vector.broadcast %7 : vector<1x16xf32> to vector<128x16xf32>
    %194 = arith.addf %192, %193 : vector<128x16xf32>
    %cst_51 = arith.constant 0.000000e+00 : f32
    %195 = vector.shape_cast %18 : vector<128x1xi1> to vector<128x1xi1>
    %196 = vector.broadcast %195 : vector<128x1xi1> to vector<128x16xi1>
    %197 = vector.broadcast %cst_51 : f32 to vector<128x16xf32>
    %198 = arith.select %196, %194, %197 : vector<128x16xi1>, vector<128x16xf32>
    %c384 = arith.constant 384 : index
    %c0_52 = arith.constant 0 : index
    %199 = vector.load %arg16[%c384, %c0_52] : memref<1152x16xf32, #tpu.memory_space<vmem>>, vector<128x16xf32>
    tpu.vector_store %arg16[%c384, %c0_52], %198 {strides = array<i32>} : memref<1152x16xf32, #tpu.memory_space<vmem>>, vector<128x16xf32>,
    %200 = vector.extract_strided_slice %10 {offsets = [0, 0], sizes = [128, 1], strides = [1, 1]} : vector<128x2xf32> to vector<128x1xf32>
    %201 = vector.extract_strided_slice %12 {offsets = [0, 6], sizes = [1, 1], strides = [1, 1]} : vector<1x18xf32> to vector<1x1xf32>
    %202 = vector.broadcast %201 : vector<1x1xf32> to vector<128x1xf32>
    %203 = arith.subf %200, %202 : vector<128x1xf32>
    %204 = vector.extract_strided_slice %11 {offsets = [0, 0], sizes = [1, 128], strides = [1, 1]} : vector<2x128xf32> to vector<1x128xf32>
    %205 = vector.broadcast %203 : vector<128x1xf32> to vector<128x128xf32>
    %206 = vector.broadcast %204 : vector<1x128xf32> to vector<128x128xf32>
    %207 = arith.subf %205, %206 : vector<128x128xf32>
    %208 = arith.mulf %207, %207 : vector<128x128xf32>
    %209 = vector.extract_strided_slice %10 {offsets = [0, 1], sizes = [128, 1], strides = [1, 1]} : vector<128x2xf32> to vector<128x1xf32>
    %210 = vector.extract_strided_slice %12 {offsets = [0, 7], sizes = [1, 1], strides = [1, 1]} : vector<1x18xf32> to vector<1x1xf32>
    %211 = vector.broadcast %210 : vector<1x1xf32> to vector<128x1xf32>
    %212 = arith.subf %209, %211 : vector<128x1xf32>
    %213 = vector.extract_strided_slice %11 {offsets = [1, 0], sizes = [1, 128], strides = [1, 1]} : vector<2x128xf32> to vector<1x128xf32>
    %214 = vector.broadcast %212 : vector<128x1xf32> to vector<128x128xf32>
    %215 = vector.broadcast %213 : vector<1x128xf32> to vector<128x128xf32>
    %216 = arith.subf %214, %215 : vector<128x128xf32>
    %217 = arith.mulf %216, %216 : vector<128x128xf32>
    %218 = arith.addf %208, %217 : vector<128x128xf32>
    %cst_53 = arith.constant 0.000000e+00 : f32
    %219 = vector.broadcast %cst_53 : f32 to vector<128x128xf32>
    %220 = arith.subf %219, %218 : vector<128x128xf32>
    %221 = math.exp %220 : vector<128x128xf32>
    %c0_54 = arith.constant 0 : index
    %c384_55 = arith.constant 384 : index
    %222 = vector.load %arg15[%c0_54, %c384_55] : memref<128x1152xf32, #tpu.memory_space<vmem>>, vector<128x128xf32>
    tpu.vector_store %arg15[%c0_54, %c384_55], %221 {strides = array<i32>} : memref<128x1152xf32, #tpu.memory_space<vmem>>, vector<128x128xf32>,
    %223 = vector.extract_strided_slice %5 {offsets = [0, 64], sizes = [128, 16], strides = [1, 1]} : vector<128x144xf32> to vector<128x16xf32>
    %cst_56 = arith.constant dense<0.000000e+00> : vector<128xf32>
    %224 = vector.multi_reduction <add>, %223, %cst_56 [1] : vector<128x16xf32> to vector<128xf32>
    %225 = vector.shape_cast %224 : vector<128xf32> to vector<128x1xf32>
    %cst_57 = arith.constant 1.600000e+01 : f32
    %226 = vector.broadcast %cst_57 : f32 to vector<128x1xf32>
    %227 = arith.divf %225, %226 : vector<128x1xf32>
    %228 = vector.broadcast %227 : vector<128x1xf32> to vector<128x16xf32>
    %229 = arith.subf %223, %228 : vector<128x16xf32>
    %230 = arith.mulf %229, %229 : vector<128x16xf32>
    %cst_58 = arith.constant dense<0.000000e+00> : vector<128xf32>
    %231 = vector.multi_reduction <add>, %230, %cst_58 [1] : vector<128x16xf32> to vector<128xf32>
    %232 = vector.shape_cast %231 : vector<128xf32> to vector<128x1xf32>
    %cst_59 = arith.constant 1.600000e+01 : f32
    %233 = vector.broadcast %cst_59 : f32 to vector<128x1xf32>
    %234 = arith.divf %232, %233 : vector<128x1xf32>
    %235 = vector.broadcast %227 : vector<128x1xf32> to vector<128x16xf32>
    %236 = arith.subf %223, %235 : vector<128x16xf32>
    %cst_60 = arith.constant 9.99999974E-6 : f32
    %237 = vector.broadcast %cst_60 : f32 to vector<128x1xf32>
    %238 = arith.addf %234, %237 : vector<128x1xf32>
    %239 = math.rsqrt %238 : vector<128x1xf32>
    %240 = vector.broadcast %239 : vector<128x1xf32> to vector<128x16xf32>
    %241 = arith.mulf %236, %240 : vector<128x16xf32>
    %242 = vector.broadcast %6 : vector<1x16xf32> to vector<128x16xf32>
    %243 = arith.mulf %241, %242 : vector<128x16xf32>
    %244 = vector.broadcast %7 : vector<1x16xf32> to vector<128x16xf32>
    %245 = arith.addf %243, %244 : vector<128x16xf32>
    %cst_61 = arith.constant 0.000000e+00 : f32
    %246 = vector.shape_cast %18 : vector<128x1xi1> to vector<128x1xi1>
    %247 = vector.broadcast %246 : vector<128x1xi1> to vector<128x16xi1>
    %248 = vector.broadcast %cst_61 : f32 to vector<128x16xf32>
    %249 = arith.select %247, %245, %248 : vector<128x16xi1>, vector<128x16xf32>
    %c512 = arith.constant 512 : index
    %c0_62 = arith.constant 0 : index
    %250 = vector.load %arg16[%c512, %c0_62] : memref<1152x16xf32, #tpu.memory_space<vmem>>, vector<128x16xf32>
    tpu.vector_store %arg16[%c512, %c0_62], %249 {strides = array<i32>} : memref<1152x16xf32, #tpu.memory_space<vmem>>, vector<128x16xf32>,
    %251 = vector.extract_strided_slice %10 {offsets = [0, 0], sizes = [128, 1], strides = [1, 1]} : vector<128x2xf32> to vector<128x1xf32>
    %252 = vector.extract_strided_slice %12 {offsets = [0, 8], sizes = [1, 1], strides = [1, 1]} : vector<1x18xf32> to vector<1x1xf32>
    %253 = vector.broadcast %252 : vector<1x1xf32> to vector<128x1xf32>
    %254 = arith.subf %251, %253 : vector<128x1xf32>
    %255 = vector.extract_strided_slice %11 {offsets = [0, 0], sizes = [1, 128], strides = [1, 1]} : vector<2x128xf32> to vector<1x128xf32>
    %256 = vector.broadcast %254 : vector<128x1xf32> to vector<128x128xf32>
    %257 = vector.broadcast %255 : vector<1x128xf32> to vector<128x128xf32>
    %258 = arith.subf %256, %257 : vector<128x128xf32>
    %259 = arith.mulf %258, %258 : vector<128x128xf32>
    %260 = vector.extract_strided_slice %10 {offsets = [0, 1], sizes = [128, 1], strides = [1, 1]} : vector<128x2xf32> to vector<128x1xf32>
    %261 = vector.extract_strided_slice %12 {offsets = [0, 9], sizes = [1, 1], strides = [1, 1]} : vector<1x18xf32> to vector<1x1xf32>
    %262 = vector.broadcast %261 : vector<1x1xf32> to vector<128x1xf32>
    %263 = arith.subf %260, %262 : vector<128x1xf32>
    %264 = vector.extract_strided_slice %11 {offsets = [1, 0], sizes = [1, 128], strides = [1, 1]} : vector<2x128xf32> to vector<1x128xf32>
    %265 = vector.broadcast %263 : vector<128x1xf32> to vector<128x128xf32>
    %266 = vector.broadcast %264 : vector<1x128xf32> to vector<128x128xf32>
    %267 = arith.subf %265, %266 : vector<128x128xf32>
    %268 = arith.mulf %267, %267 : vector<128x128xf32>
    %269 = arith.addf %259, %268 : vector<128x128xf32>
    %cst_63 = arith.constant 0.000000e+00 : f32
    %270 = vector.broadcast %cst_63 : f32 to vector<128x128xf32>
    %271 = arith.subf %270, %269 : vector<128x128xf32>
    %272 = math.exp %271 : vector<128x128xf32>
    %c0_64 = arith.constant 0 : index
    %c512_65 = arith.constant 512 : index
    %273 = vector.load %arg15[%c0_64, %c512_65] : memref<128x1152xf32, #tpu.memory_space<vmem>>, vector<128x128xf32>
    tpu.vector_store %arg15[%c0_64, %c512_65], %272 {strides = array<i32>} : memref<128x1152xf32, #tpu.memory_space<vmem>>, vector<128x128xf32>,
    %274 = vector.extract_strided_slice %5 {offsets = [0, 80], sizes = [128, 16], strides = [1, 1]} : vector<128x144xf32> to vector<128x16xf32>
    %cst_66 = arith.constant dense<0.000000e+00> : vector<128xf32>
    %275 = vector.multi_reduction <add>, %274, %cst_66 [1] : vector<128x16xf32> to vector<128xf32>
    %276 = vector.shape_cast %275 : vector<128xf32> to vector<128x1xf32>
    %cst_67 = arith.constant 1.600000e+01 : f32
    %277 = vector.broadcast %cst_67 : f32 to vector<128x1xf32>
    %278 = arith.divf %276, %277 : vector<128x1xf32>
    %279 = vector.broadcast %278 : vector<128x1xf32> to vector<128x16xf32>
    %280 = arith.subf %274, %279 : vector<128x16xf32>
    %281 = arith.mulf %280, %280 : vector<128x16xf32>
    %cst_68 = arith.constant dense<0.000000e+00> : vector<128xf32>
    %282 = vector.multi_reduction <add>, %281, %cst_68 [1] : vector<128x16xf32> to vector<128xf32>
    %283 = vector.shape_cast %282 : vector<128xf32> to vector<128x1xf32>
    %cst_69 = arith.constant 1.600000e+01 : f32
    %284 = vector.broadcast %cst_69 : f32 to vector<128x1xf32>
    %285 = arith.divf %283, %284 : vector<128x1xf32>
    %286 = vector.broadcast %278 : vector<128x1xf32> to vector<128x16xf32>
    %287 = arith.subf %274, %286 : vector<128x16xf32>
    %cst_70 = arith.constant 9.99999974E-6 : f32
    %288 = vector.broadcast %cst_70 : f32 to vector<128x1xf32>
    %289 = arith.addf %285, %288 : vector<128x1xf32>
    %290 = math.rsqrt %289 : vector<128x1xf32>
    %291 = vector.broadcast %290 : vector<128x1xf32> to vector<128x16xf32>
    %292 = arith.mulf %287, %291 : vector<128x16xf32>
    %293 = vector.broadcast %6 : vector<1x16xf32> to vector<128x16xf32>
    %294 = arith.mulf %292, %293 : vector<128x16xf32>
    %295 = vector.broadcast %7 : vector<1x16xf32> to vector<128x16xf32>
    %296 = arith.addf %294, %295 : vector<128x16xf32>
    %cst_71 = arith.constant 0.000000e+00 : f32
    %297 = vector.shape_cast %18 : vector<128x1xi1> to vector<128x1xi1>
    %298 = vector.broadcast %297 : vector<128x1xi1> to vector<128x16xi1>
    %299 = vector.broadcast %cst_71 : f32 to vector<128x16xf32>
    %300 = arith.select %298, %296, %299 : vector<128x16xi1>, vector<128x16xf32>
    %c640 = arith.constant 640 : index
    %c0_72 = arith.constant 0 : index
    %301 = vector.load %arg16[%c640, %c0_72] : memref<1152x16xf32, #tpu.memory_space<vmem>>, vector<128x16xf32>
    tpu.vector_store %arg16[%c640, %c0_72], %300 {strides = array<i32>} : memref<1152x16xf32, #tpu.memory_space<vmem>>, vector<128x16xf32>,
    %302 = vector.extract_strided_slice %10 {offsets = [0, 0], sizes = [128, 1], strides = [1, 1]} : vector<128x2xf32> to vector<128x1xf32>
    %303 = vector.extract_strided_slice %12 {offsets = [0, 10], sizes = [1, 1], strides = [1, 1]} : vector<1x18xf32> to vector<1x1xf32>
    %304 = vector.broadcast %303 : vector<1x1xf32> to vector<128x1xf32>
    %305 = arith.subf %302, %304 : vector<128x1xf32>
    %306 = vector.extract_strided_slice %11 {offsets = [0, 0], sizes = [1, 128], strides = [1, 1]} : vector<2x128xf32> to vector<1x128xf32>
    %307 = vector.broadcast %305 : vector<128x1xf32> to vector<128x128xf32>
    %308 = vector.broadcast %306 : vector<1x128xf32> to vector<128x128xf32>
    %309 = arith.subf %307, %308 : vector<128x128xf32>
    %310 = arith.mulf %309, %309 : vector<128x128xf32>
    %311 = vector.extract_strided_slice %10 {offsets = [0, 1], sizes = [128, 1], strides = [1, 1]} : vector<128x2xf32> to vector<128x1xf32>
    %312 = vector.extract_strided_slice %12 {offsets = [0, 11], sizes = [1, 1], strides = [1, 1]} : vector<1x18xf32> to vector<1x1xf32>
    %313 = vector.broadcast %312 : vector<1x1xf32> to vector<128x1xf32>
    %314 = arith.subf %311, %313 : vector<128x1xf32>
    %315 = vector.extract_strided_slice %11 {offsets = [1, 0], sizes = [1, 128], strides = [1, 1]} : vector<2x128xf32> to vector<1x128xf32>
    %316 = vector.broadcast %314 : vector<128x1xf32> to vector<128x128xf32>
    %317 = vector.broadcast %315 : vector<1x128xf32> to vector<128x128xf32>
    %318 = arith.subf %316, %317 : vector<128x128xf32>
    %319 = arith.mulf %318, %318 : vector<128x128xf32>
    %320 = arith.addf %310, %319 : vector<128x128xf32>
    %cst_73 = arith.constant 0.000000e+00 : f32
    %321 = vector.broadcast %cst_73 : f32 to vector<128x128xf32>
    %322 = arith.subf %321, %320 : vector<128x128xf32>
    %323 = math.exp %322 : vector<128x128xf32>
    %c0_74 = arith.constant 0 : index
    %c640_75 = arith.constant 640 : index
    %324 = vector.load %arg15[%c0_74, %c640_75] : memref<128x1152xf32, #tpu.memory_space<vmem>>, vector<128x128xf32>
    tpu.vector_store %arg15[%c0_74, %c640_75], %323 {strides = array<i32>} : memref<128x1152xf32, #tpu.memory_space<vmem>>, vector<128x128xf32>,
    %325 = vector.extract_strided_slice %5 {offsets = [0, 96], sizes = [128, 16], strides = [1, 1]} : vector<128x144xf32> to vector<128x16xf32>
    %cst_76 = arith.constant dense<0.000000e+00> : vector<128xf32>
    %326 = vector.multi_reduction <add>, %325, %cst_76 [1] : vector<128x16xf32> to vector<128xf32>
    %327 = vector.shape_cast %326 : vector<128xf32> to vector<128x1xf32>
    %cst_77 = arith.constant 1.600000e+01 : f32
    %328 = vector.broadcast %cst_77 : f32 to vector<128x1xf32>
    %329 = arith.divf %327, %328 : vector<128x1xf32>
    %330 = vector.broadcast %329 : vector<128x1xf32> to vector<128x16xf32>
    %331 = arith.subf %325, %330 : vector<128x16xf32>
    %332 = arith.mulf %331, %331 : vector<128x16xf32>
    %cst_78 = arith.constant dense<0.000000e+00> : vector<128xf32>
    %333 = vector.multi_reduction <add>, %332, %cst_78 [1] : vector<128x16xf32> to vector<128xf32>
    %334 = vector.shape_cast %333 : vector<128xf32> to vector<128x1xf32>
    %cst_79 = arith.constant 1.600000e+01 : f32
    %335 = vector.broadcast %cst_79 : f32 to vector<128x1xf32>
    %336 = arith.divf %334, %335 : vector<128x1xf32>
    %337 = vector.broadcast %329 : vector<128x1xf32> to vector<128x16xf32>
    %338 = arith.subf %325, %337 : vector<128x16xf32>
    %cst_80 = arith.constant 9.99999974E-6 : f32
    %339 = vector.broadcast %cst_80 : f32 to vector<128x1xf32>
    %340 = arith.addf %336, %339 : vector<128x1xf32>
    %341 = math.rsqrt %340 : vector<128x1xf32>
    %342 = vector.broadcast %341 : vector<128x1xf32> to vector<128x16xf32>
    %343 = arith.mulf %338, %342 : vector<128x16xf32>
    %344 = vector.broadcast %6 : vector<1x16xf32> to vector<128x16xf32>
    %345 = arith.mulf %343, %344 : vector<128x16xf32>
    %346 = vector.broadcast %7 : vector<1x16xf32> to vector<128x16xf32>
    %347 = arith.addf %345, %346 : vector<128x16xf32>
    %cst_81 = arith.constant 0.000000e+00 : f32
    %348 = vector.shape_cast %18 : vector<128x1xi1> to vector<128x1xi1>
    %349 = vector.broadcast %348 : vector<128x1xi1> to vector<128x16xi1>
    %350 = vector.broadcast %cst_81 : f32 to vector<128x16xf32>
    %351 = arith.select %349, %347, %350 : vector<128x16xi1>, vector<128x16xf32>
    %c768 = arith.constant 768 : index
    %c0_82 = arith.constant 0 : index
    %352 = vector.load %arg16[%c768, %c0_82] : memref<1152x16xf32, #tpu.memory_space<vmem>>, vector<128x16xf32>
    tpu.vector_store %arg16[%c768, %c0_82], %351 {strides = array<i32>} : memref<1152x16xf32, #tpu.memory_space<vmem>>, vector<128x16xf32>,
    %353 = vector.extract_strided_slice %10 {offsets = [0, 0], sizes = [128, 1], strides = [1, 1]} : vector<128x2xf32> to vector<128x1xf32>
    %354 = vector.extract_strided_slice %12 {offsets = [0, 12], sizes = [1, 1], strides = [1, 1]} : vector<1x18xf32> to vector<1x1xf32>
    %355 = vector.broadcast %354 : vector<1x1xf32> to vector<128x1xf32>
    %356 = arith.subf %353, %355 : vector<128x1xf32>
    %357 = vector.extract_strided_slice %11 {offsets = [0, 0], sizes = [1, 128], strides = [1, 1]} : vector<2x128xf32> to vector<1x128xf32>
    %358 = vector.broadcast %356 : vector<128x1xf32> to vector<128x128xf32>
    %359 = vector.broadcast %357 : vector<1x128xf32> to vector<128x128xf32>
    %360 = arith.subf %358, %359 : vector<128x128xf32>
    %361 = arith.mulf %360, %360 : vector<128x128xf32>
    %362 = vector.extract_strided_slice %10 {offsets = [0, 1], sizes = [128, 1], strides = [1, 1]} : vector<128x2xf32> to vector<128x1xf32>
    %363 = vector.extract_strided_slice %12 {offsets = [0, 13], sizes = [1, 1], strides = [1, 1]} : vector<1x18xf32> to vector<1x1xf32>
    %364 = vector.broadcast %363 : vector<1x1xf32> to vector<128x1xf32>
    %365 = arith.subf %362, %364 : vector<128x1xf32>
    %366 = vector.extract_strided_slice %11 {offsets = [1, 0], sizes = [1, 128], strides = [1, 1]} : vector<2x128xf32> to vector<1x128xf32>
    %367 = vector.broadcast %365 : vector<128x1xf32> to vector<128x128xf32>
    %368 = vector.broadcast %366 : vector<1x128xf32> to vector<128x128xf32>
    %369 = arith.subf %367, %368 : vector<128x128xf32>
    %370 = arith.mulf %369, %369 : vector<128x128xf32>
    %371 = arith.addf %361, %370 : vector<128x128xf32>
    %cst_83 = arith.constant 0.000000e+00 : f32
    %372 = vector.broadcast %cst_83 : f32 to vector<128x128xf32>
    %373 = arith.subf %372, %371 : vector<128x128xf32>
    %374 = math.exp %373 : vector<128x128xf32>
    %c0_84 = arith.constant 0 : index
    %c768_85 = arith.constant 768 : index
    %375 = vector.load %arg15[%c0_84, %c768_85] : memref<128x1152xf32, #tpu.memory_space<vmem>>, vector<128x128xf32>
    tpu.vector_store %arg15[%c0_84, %c768_85], %374 {strides = array<i32>} : memref<128x1152xf32, #tpu.memory_space<vmem>>, vector<128x128xf32>,
    %376 = vector.extract_strided_slice %5 {offsets = [0, 112], sizes = [128, 16], strides = [1, 1]} : vector<128x144xf32> to vector<128x16xf32>
    %cst_86 = arith.constant dense<0.000000e+00> : vector<128xf32>
    %377 = vector.multi_reduction <add>, %376, %cst_86 [1] : vector<128x16xf32> to vector<128xf32>
    %378 = vector.shape_cast %377 : vector<128xf32> to vector<128x1xf32>
    %cst_87 = arith.constant 1.600000e+01 : f32
    %379 = vector.broadcast %cst_87 : f32 to vector<128x1xf32>
    %380 = arith.divf %378, %379 : vector<128x1xf32>
    %381 = vector.broadcast %380 : vector<128x1xf32> to vector<128x16xf32>
    %382 = arith.subf %376, %381 : vector<128x16xf32>
    %383 = arith.mulf %382, %382 : vector<128x16xf32>
    %cst_88 = arith.constant dense<0.000000e+00> : vector<128xf32>
    %384 = vector.multi_reduction <add>, %383, %cst_88 [1] : vector<128x16xf32> to vector<128xf32>
    %385 = vector.shape_cast %384 : vector<128xf32> to vector<128x1xf32>
    %cst_89 = arith.constant 1.600000e+01 : f32
    %386 = vector.broadcast %cst_89 : f32 to vector<128x1xf32>
    %387 = arith.divf %385, %386 : vector<128x1xf32>
    %388 = vector.broadcast %380 : vector<128x1xf32> to vector<128x16xf32>
    %389 = arith.subf %376, %388 : vector<128x16xf32>
    %cst_90 = arith.constant 9.99999974E-6 : f32
    %390 = vector.broadcast %cst_90 : f32 to vector<128x1xf32>
    %391 = arith.addf %387, %390 : vector<128x1xf32>
    %392 = math.rsqrt %391 : vector<128x1xf32>
    %393 = vector.broadcast %392 : vector<128x1xf32> to vector<128x16xf32>
    %394 = arith.mulf %389, %393 : vector<128x16xf32>
    %395 = vector.broadcast %6 : vector<1x16xf32> to vector<128x16xf32>
    %396 = arith.mulf %394, %395 : vector<128x16xf32>
    %397 = vector.broadcast %7 : vector<1x16xf32> to vector<128x16xf32>
    %398 = arith.addf %396, %397 : vector<128x16xf32>
    %cst_91 = arith.constant 0.000000e+00 : f32
    %399 = vector.shape_cast %18 : vector<128x1xi1> to vector<128x1xi1>
    %400 = vector.broadcast %399 : vector<128x1xi1> to vector<128x16xi1>
    %401 = vector.broadcast %cst_91 : f32 to vector<128x16xf32>
    %402 = arith.select %400, %398, %401 : vector<128x16xi1>, vector<128x16xf32>
    %c896 = arith.constant 896 : index
    %c0_92 = arith.constant 0 : index
    %403 = vector.load %arg16[%c896, %c0_92] : memref<1152x16xf32, #tpu.memory_space<vmem>>, vector<128x16xf32>
    tpu.vector_store %arg16[%c896, %c0_92], %402 {strides = array<i32>} : memref<1152x16xf32, #tpu.memory_space<vmem>>, vector<128x16xf32>,
    %404 = vector.extract_strided_slice %10 {offsets = [0, 0], sizes = [128, 1], strides = [1, 1]} : vector<128x2xf32> to vector<128x1xf32>
    %405 = vector.extract_strided_slice %12 {offsets = [0, 14], sizes = [1, 1], strides = [1, 1]} : vector<1x18xf32> to vector<1x1xf32>
    %406 = vector.broadcast %405 : vector<1x1xf32> to vector<128x1xf32>
    %407 = arith.subf %404, %406 : vector<128x1xf32>
    %408 = vector.extract_strided_slice %11 {offsets = [0, 0], sizes = [1, 128], strides = [1, 1]} : vector<2x128xf32> to vector<1x128xf32>
    %409 = vector.broadcast %407 : vector<128x1xf32> to vector<128x128xf32>
    %410 = vector.broadcast %408 : vector<1x128xf32> to vector<128x128xf32>
    %411 = arith.subf %409, %410 : vector<128x128xf32>
    %412 = arith.mulf %411, %411 : vector<128x128xf32>
    %413 = vector.extract_strided_slice %10 {offsets = [0, 1], sizes = [128, 1], strides = [1, 1]} : vector<128x2xf32> to vector<128x1xf32>
    %414 = vector.extract_strided_slice %12 {offsets = [0, 15], sizes = [1, 1], strides = [1, 1]} : vector<1x18xf32> to vector<1x1xf32>
    %415 = vector.broadcast %414 : vector<1x1xf32> to vector<128x1xf32>
    %416 = arith.subf %413, %415 : vector<128x1xf32>
    %417 = vector.extract_strided_slice %11 {offsets = [1, 0], sizes = [1, 128], strides = [1, 1]} : vector<2x128xf32> to vector<1x128xf32>
    %418 = vector.broadcast %416 : vector<128x1xf32> to vector<128x128xf32>
    %419 = vector.broadcast %417 : vector<1x128xf32> to vector<128x128xf32>
    %420 = arith.subf %418, %419 : vector<128x128xf32>
    %421 = arith.mulf %420, %420 : vector<128x128xf32>
    %422 = arith.addf %412, %421 : vector<128x128xf32>
    %cst_93 = arith.constant 0.000000e+00 : f32
    %423 = vector.broadcast %cst_93 : f32 to vector<128x128xf32>
    %424 = arith.subf %423, %422 : vector<128x128xf32>
    %425 = math.exp %424 : vector<128x128xf32>
    %c0_94 = arith.constant 0 : index
    %c896_95 = arith.constant 896 : index
    %426 = vector.load %arg15[%c0_94, %c896_95] : memref<128x1152xf32, #tpu.memory_space<vmem>>, vector<128x128xf32>
    tpu.vector_store %arg15[%c0_94, %c896_95], %425 {strides = array<i32>} : memref<128x1152xf32, #tpu.memory_space<vmem>>, vector<128x128xf32>,
    %427 = vector.extract_strided_slice %5 {offsets = [0, 128], sizes = [128, 16], strides = [1, 1]} : vector<128x144xf32> to vector<128x16xf32>
    %cst_96 = arith.constant dense<0.000000e+00> : vector<128xf32>
    %428 = vector.multi_reduction <add>, %427, %cst_96 [1] : vector<128x16xf32> to vector<128xf32>
    %429 = vector.shape_cast %428 : vector<128xf32> to vector<128x1xf32>
    %cst_97 = arith.constant 1.600000e+01 : f32
    %430 = vector.broadcast %cst_97 : f32 to vector<128x1xf32>
    %431 = arith.divf %429, %430 : vector<128x1xf32>
    %432 = vector.broadcast %431 : vector<128x1xf32> to vector<128x16xf32>
    %433 = arith.subf %427, %432 : vector<128x16xf32>
    %434 = arith.mulf %433, %433 : vector<128x16xf32>
    %cst_98 = arith.constant dense<0.000000e+00> : vector<128xf32>
    %435 = vector.multi_reduction <add>, %434, %cst_98 [1] : vector<128x16xf32> to vector<128xf32>
    %436 = vector.shape_cast %435 : vector<128xf32> to vector<128x1xf32>
    %cst_99 = arith.constant 1.600000e+01 : f32
    %437 = vector.broadcast %cst_99 : f32 to vector<128x1xf32>
    %438 = arith.divf %436, %437 : vector<128x1xf32>
    %439 = vector.broadcast %431 : vector<128x1xf32> to vector<128x16xf32>
    %440 = arith.subf %427, %439 : vector<128x16xf32>
    %cst_100 = arith.constant 9.99999974E-6 : f32
    %441 = vector.broadcast %cst_100 : f32 to vector<128x1xf32>
    %442 = arith.addf %438, %441 : vector<128x1xf32>
    %443 = math.rsqrt %442 : vector<128x1xf32>
    %444 = vector.broadcast %443 : vector<128x1xf32> to vector<128x16xf32>
    %445 = arith.mulf %440, %444 : vector<128x16xf32>
    %446 = vector.broadcast %6 : vector<1x16xf32> to vector<128x16xf32>
    %447 = arith.mulf %445, %446 : vector<128x16xf32>
    %448 = vector.broadcast %7 : vector<1x16xf32> to vector<128x16xf32>
    %449 = arith.addf %447, %448 : vector<128x16xf32>
    %cst_101 = arith.constant 0.000000e+00 : f32
    %450 = vector.shape_cast %18 : vector<128x1xi1> to vector<128x1xi1>
    %451 = vector.broadcast %450 : vector<128x1xi1> to vector<128x16xi1>
    %452 = vector.broadcast %cst_101 : f32 to vector<128x16xf32>
    %453 = arith.select %451, %449, %452 : vector<128x16xi1>, vector<128x16xf32>
    %c1024 = arith.constant 1024 : index
    %c0_102 = arith.constant 0 : index
    %454 = vector.load %arg16[%c1024, %c0_102] : memref<1152x16xf32, #tpu.memory_space<vmem>>, vector<128x16xf32>
    tpu.vector_store %arg16[%c1024, %c0_102], %453 {strides = array<i32>} : memref<1152x16xf32, #tpu.memory_space<vmem>>, vector<128x16xf32>,
    %455 = vector.extract_strided_slice %10 {offsets = [0, 0], sizes = [128, 1], strides = [1, 1]} : vector<128x2xf32> to vector<128x1xf32>
    %456 = vector.extract_strided_slice %12 {offsets = [0, 16], sizes = [1, 1], strides = [1, 1]} : vector<1x18xf32> to vector<1x1xf32>
    %457 = vector.broadcast %456 : vector<1x1xf32> to vector<128x1xf32>
    %458 = arith.subf %455, %457 : vector<128x1xf32>
    %459 = vector.extract_strided_slice %11 {offsets = [0, 0], sizes = [1, 128], strides = [1, 1]} : vector<2x128xf32> to vector<1x128xf32>
    %460 = vector.broadcast %458 : vector<128x1xf32> to vector<128x128xf32>
    %461 = vector.broadcast %459 : vector<1x128xf32> to vector<128x128xf32>
    %462 = arith.subf %460, %461 : vector<128x128xf32>
    %463 = arith.mulf %462, %462 : vector<128x128xf32>
    %464 = vector.extract_strided_slice %10 {offsets = [0, 1], sizes = [128, 1], strides = [1, 1]} : vector<128x2xf32> to vector<128x1xf32>
    %465 = vector.extract_strided_slice %12 {offsets = [0, 17], sizes = [1, 1], strides = [1, 1]} : vector<1x18xf32> to vector<1x1xf32>
    %466 = vector.broadcast %465 : vector<1x1xf32> to vector<128x1xf32>
    %467 = arith.subf %464, %466 : vector<128x1xf32>
    %468 = vector.extract_strided_slice %11 {offsets = [1, 0], sizes = [1, 128], strides = [1, 1]} : vector<2x128xf32> to vector<1x128xf32>
    %469 = vector.broadcast %467 : vector<128x1xf32> to vector<128x128xf32>
    %470 = vector.broadcast %468 : vector<1x128xf32> to vector<128x128xf32>
    %471 = arith.subf %469, %470 : vector<128x128xf32>
    %472 = arith.mulf %471, %471 : vector<128x128xf32>
    %473 = arith.addf %463, %472 : vector<128x128xf32>
    %cst_103 = arith.constant 0.000000e+00 : f32
    %474 = vector.broadcast %cst_103 : f32 to vector<128x128xf32>
    %475 = arith.subf %474, %473 : vector<128x128xf32>
    %476 = math.exp %475 : vector<128x128xf32>
    %c0_104 = arith.constant 0 : index
    %c1024_105 = arith.constant 1024 : index
    %477 = vector.load %arg15[%c0_104, %c1024_105] : memref<128x1152xf32, #tpu.memory_space<vmem>>, vector<128x128xf32>
    tpu.vector_store %arg15[%c0_104, %c1024_105], %476 {strides = array<i32>} : memref<128x1152xf32, #tpu.memory_space<vmem>>, vector<128x128xf32>,
    %c0_106 = arith.constant 0 : index
    %c0_107 = arith.constant 0 : index
    %478 = vector.load %arg14[%c0_106, %c0_107] : memref<128x16xf32, #tpu.memory_space<vmem>>, vector<128x16xf32>
    %c0_108 = arith.constant 0 : index
    %c0_109 = arith.constant 0 : index
    %479 = vector.load %arg15[%c0_108, %c0_109] : memref<128x1152xf32, #tpu.memory_space<vmem>>, vector<128x1152xf32>
    %c0_110 = arith.constant 0 : index
    %c0_111 = arith.constant 0 : index
    %480 = vector.load %arg16[%c0_110, %c0_111] : memref<1152x16xf32, #tpu.memory_space<vmem>>, vector<1152x16xf32>
    %cst_112 = arith.constant dense<0.000000e+00> : vector<128x16xf32>
    %481 = tpu.matmul %479, %480, %cst_112 {dimension_numbers = #tpu.dot_dimension_numbers<[1], [0], [0], [1], [0, 0, 1, 1], [], []>} : vector<128x1152xf32>, vector<1152x16xf32>, vector<128x16xf32> -> vector<128x16xf32>
    %482 = arith.addf %478, %481 : vector<128x16xf32>
    %c0_113 = arith.constant 0 : index
    %c0_114 = arith.constant 0 : index
    %483 = vector.load %arg14[%c0_113, %c0_114] : memref<128x16xf32, #tpu.memory_space<vmem>>, vector<128x16xf32>
    tpu.vector_store %arg14[%c0_113, %c0_114], %482 {strides = array<i32>} : memref<128x16xf32, #tpu.memory_space<vmem>>, vector<128x16xf32>,
    return
  }
  func.func @transform_0(%arg0: i32, %arg1: i32) -> (i32, i32) {
    %c0_i32 = arith.constant 0 : i32
    %c0_i32_0 = arith.constant 0 : i32
    return %arg0, %c0_i32 : i32, i32
  }
  func.func @transform_1(%arg0: i32, %arg1: i32) -> (i32, i32) {
    %c0_i32 = arith.constant 0 : i32
    %c0_i32_0 = arith.constant 0 : i32
    return %arg1, %c0_i32 : i32, i32
  }
  func.func @transform_2(%arg0: i32, %arg1: i32) -> (i32, i32) {
    %c0_i32 = arith.constant 0 : i32
    %c0_i32_0 = arith.constant 0 : i32
    return %c0_i32, %arg1 : i32, i32
  }
  func.func @transform_3(%arg0: i32, %arg1: i32) -> (i32, i32) {
    %c0_i32 = arith.constant 0 : i32
    %c0_i32_0 = arith.constant 0 : i32
    %c0_i32_1 = arith.constant 0 : i32
    return %c0_i32, %c0_i32_0 : i32, i32
  }
  func.func @transform_4(%arg0: i32, %arg1: i32) -> (i32, i32) {
    %c0_i32 = arith.constant 0 : i32
    %c0_i32_0 = arith.constant 0 : i32
    %c0_i32_1 = arith.constant 0 : i32
    return %c0_i32, %c0_i32_0 : i32, i32
  }
  func.func @transform_5(%arg0: i32, %arg1: i32) -> (i32, i32) {
    %c0_i32 = arith.constant 0 : i32
    %c0_i32_0 = arith.constant 0 : i32
    %c0_i32_1 = arith.constant 0 : i32
    return %c0_i32, %c0_i32_0 : i32, i32
  }
  func.func @transform_6(%arg0: i32, %arg1: i32) -> (i32, i32) {
    %c0_i32 = arith.constant 0 : i32
    %c0_i32_0 = arith.constant 0 : i32
    %c0_i32_1 = arith.constant 0 : i32
    return %c0_i32, %c0_i32_0 : i32, i32
  }
  func.func @transform_7(%arg0: i32, %arg1: i32) -> (i32, i32) {
    %c0_i32 = arith.constant 0 : i32
    %c0_i32_0 = arith.constant 0 : i32
    %c0_i32_1 = arith.constant 0 : i32
    return %c0_i32, %c0_i32_0 : i32, i32
  }
  func.func @transform_8(%arg0: i32, %arg1: i32) -> (i32, i32) {
    %c0_i32 = arith.constant 0 : i32
    %c0_i32_0 = arith.constant 0 : i32
    %c0_i32_1 = arith.constant 0 : i32
    return %c0_i32, %c0_i32_0 : i32, i32
  }
  func.func @transform_9(%arg0: i32, %arg1: i32) -> (i32, i32) {
    %c0_i32 = arith.constant 0 : i32
    %c0_i32_0 = arith.constant 0 : i32
    %c0_i32_1 = arith.constant 0 : i32
    return %c0_i32, %c0_i32_0 : i32, i32
  }
  func.func @transform_10(%arg0: i32, %arg1: i32) -> (i32, i32) {
    %c0_i32 = arith.constant 0 : i32
    %c0_i32_0 = arith.constant 0 : i32
    %c0_i32_1 = arith.constant 0 : i32
    return %c0_i32, %c0_i32_0 : i32, i32
  }
  func.func @transform_11(%arg0: i32, %arg1: i32) -> (i32, i32) {
    %c0_i32 = arith.constant 0 : i32
    %c0_i32_0 = arith.constant 0 : i32
    return %arg0, %c0_i32 : i32, i32
  }
  func.func @transform_12(%arg0: i32, %arg1: i32) -> (i32, i32) {
    %c0_i32 = arith.constant 0 : i32
    %c0_i32_0 = arith.constant 0 : i32
    return %arg0, %c0_i32 : i32, i32
  }
}

</mosaic_0001>

<llo_original>
// kernel: knn_block_forward.1
$region0: #{knn_block_forward.1}
  #allocation0 [shape = 'u32[]', space=smem, size = 0x4, offset = 0x4, fixed_abs, tag = 'smem constant byte address 0x4 - core index']
  #allocation1 [shape = 'u32[144,128]{1,0:T(1,128)}', space=vmem, size = 0x12000, scoped, tag = 'internal scratch']
  #allocation2 [shape = 'f32[128,1152]{1,0:T(8,128)}', space=vmem, size = 0x90000, scoped, tag = 'scratch operand']
  #allocation3 [shape = 'f32[1152,16]{1,0:T(8,128)}', space=vmem, size = 0x90000, scoped, tag = 'scratch operand']
  %s0 = inlined_call_operand.vmem [shape: f32[384,10], index: 0, kind: input, shape index: {}, may-alias: {0,1}]
  %s1 = inlined_call_operand.vmem [shape: f32[384,10], index: 1, kind: input, shape index: {}, may-alias: {0,1}]
  %s2 = inlined_call_operand.vmem [shape: f32[2,384], index: 2, kind: input, shape index: {}]
  %s3 = inlined_call_operand.vmem [shape: f32[1,18], index: 3, kind: input, shape index: {}]
  %s4 = inlined_call_operand.vmem [shape: f32[10,144], index: 4, kind: input, shape index: {}]
  %s5 = inlined_call_operand.vmem [shape: f32[1,16], index: 5, kind: input, shape index: {}]
  %s6 = inlined_call_operand.vmem [shape: f32[1,16], index: 6, kind: input, shape index: {}]
  %s7 = inlined_call_operand.vmem [shape: f32[10,32], index: 7, kind: input, shape index: {}]
  %s8 = inlined_call_operand.vmem [shape: f32[1,32], index: 8, kind: input, shape index: {}]
  %s9 = inlined_call_operand.vmem [shape: f32[32,10], index: 9, kind: input, shape index: {}]
  %s10 = inlined_call_operand.vmem [shape: f32[1,10], index: 10, kind: input, shape index: {}]
  %s11 = inlined_call_operand.vmem [shape: f32[384,10], index: 11, kind: output, shape index: {0}]
  %s12 = inlined_call_operand.vmem [shape: f32[384,16], index: 12, kind: output, shape index: {1}]
  %13 = xla_tuple %s11, %s12
  %s14 = sld [smem:[#allocation0]]
  $region89: #{knn_block_forward.1} parent=0
    _
  %s16 = ssub.s32 1, %s14
  %s17 = scalar_select 0, %s16, %s14
  loop: start=0, step=1, limit=11
  $region2: #{knn_block_forward.1} parent=0 // loop_pre_header
    _
  $region3: #{knn_block_forward.1} parent=0 // loop_header
    %s19 = sphi 0, %s23
    %p20 = scmp.ge.s32.totalorder %s19, 11
    %s26 = sphi 0, %s38
    %s27 = sphi 0, %s34
    %s28 = sphi 0, %s26
    %s29 = sphi 0, %s27
    %s30 = sphi 0, %s28
    %s31 = sphi 0, %s29
    %s41 = sphi 0, %s43
    %s44 = sphi 0, %s41
    %s45 = sphi 0, %s44
    %s61 = sphi 0, %s45
    %s67 = sphi 0, %s69
    %s70 = sphi 0, %s67
    %s71 = sphi 0, %s70
    %s87 = sphi 0, %s71
    %s93 = sphi 0, %s95
    %s96 = sphi 0, %s93
    %s97 = sphi 0, %s96
    %s113 = sphi 0, %s97
    %s117 = sphi 0, %s117
    %s119 = sphi 0, %s117
    %s120 = sphi 0, %s119
    %s134 = sphi 0, %s120
    %s138 = sphi 0, %s138
    %s140 = sphi 0, %s138
    %s141 = sphi 0, %s140
    %s155 = sphi 0, %s141
    %s159 = sphi 0, %s159
    %s161 = sphi 0, %s159
    %s162 = sphi 0, %s161
    %s176 = sphi 0, %s162
    %s180 = sphi 0, %s180
    %s182 = sphi 0, %s180
    %s183 = sphi 0, %s182
    %s197 = sphi 0, %s183
    %s201 = sphi 0, %s201
    %s203 = sphi 0, %s201
    %s204 = sphi 0, %s203
    %s218 = sphi 0, %s204
    %s222 = sphi 0, %s222
    %s224 = sphi 0, %s222
    %s225 = sphi 0, %s224
    %s239 = sphi 0, %s225
    %s243 = sphi 0, %s243
    %s245 = sphi 0, %s243
    %s246 = sphi 0, %s245
    %s260 = sphi 0, %s246
    %s264 = sphi 0, %s264
    %s266 = sphi 0, %s264
    %s267 = sphi 0, %s266
    %s281 = sphi 0, %s267
    %s287 = sphi 0, %s289
    %s290 = sphi 0, %s287
    %s291 = sphi 0, %s290
    %s307 = sphi 0, %s291
    %s313 = sphi 0, %s315
    %s316 = sphi 0, %s313
    %s317 = sphi 0, %s316
    %s333 = sphi 0, %s317
  $region4: #{knn_block_forward.1} parent=0 // loop_header_branch
    %22 = sbr.rel (%p20) target = $region8
  $region5: #{knn_block_forward.1} parent=0 // loop_body
    %s24 = ssub.s32 %s19, 1
    %s25 = ssub.s32 %s19, 2
    %s32 = sadd.s32 1, %s27
    %p33 = scmp.ge.s32.totalorder %s32, 3
    %s34 = scalar_select %p33, 0, %s32
    %s35 = sadd.s32 1, %s26
    %s36 = scalar_select %p33, %s35, %s26
    %p37 = scmp.ge.s32.totalorder %s36, 3
    %s38 = scalar_select %p37, 0, %s36
    %s39 = ssub.s32 %s26, %s38
    %p40 = scmp.eq.s32.totalorder %s39, 0
    %s42 = sadd.s32 %s41, 1
    %s43 = scalar_select %p40, %s41, %s42
    %p46 = pneg %p40
    %p47 = scmp.eq.s32.totalorder %s19, 8
    %p48 = por %p46, %p47
    %p49 = scmp.ne.s32.totalorder %s41, %s44
    %p50 = scmp.eq.s32.totalorder %s19, 0
    %p51 = por %p49, %p50
    %p52 = scmp.ne.s32.totalorder %s41, %s44
    %p53 = scmp.eq.s32.totalorder %s24, 8
    %p54 = por %p52, %p53
    %p55 = scmp.ne.s32.totalorder %s44, %s45
    %p56 = scmp.eq.s32.totalorder %s24, 0
    %p57 = por %p55, %p56
    %p58 = scmp.ne.s32.totalorder %s44, %s45
    %p59 = scmp.eq.s32.totalorder %s25, 8
    %p60 = por %p58, %p59
    %p62 = scmp.ne.s32.totalorder %s45, %s61
    %p63 = scmp.eq.s32.totalorder %s25, 0
    %p64 = por %p62, %p63
    %s65 = ssub.s32 %s27, %s34
    %p66 = scmp.eq.s32.totalorder %s65, 0
    %s68 = sadd.s32 %s67, 1
    %s69 = scalar_select %p66, %s67, %s68
    %p72 = pneg %p66
    %p73 = scmp.eq.s32.totalorder %s19, 8
    %p74 = por %p72, %p73
    %p75 = scmp.ne.s32.totalorder %s67, %s70
    %p76 = scmp.eq.s32.totalorder %s19, 0
    %p77 = por %p75, %p76
    %p78 = scmp.ne.s32.totalorder %s67, %s70
    %p79 = scmp.eq.s32.totalorder %s24, 8
    %p80 = por %p78, %p79
    %p81 = scmp.ne.s32.totalorder %s70, %s71
    %p82 = scmp.eq.s32.totalorder %s24, 0
    %p83 = por %p81, %p82
    %p84 = scmp.ne.s32.totalorder %s70, %s71
    %p85 = scmp.eq.s32.totalorder %s25, 8
    %p86 = por %p84, %p85
    %p88 = scmp.ne.s32.totalorder %s71, %s87
    %p89 = scmp.eq.s32.totalorder %s25, 0
    %p90 = por %p88, %p89
    %s91 = ssub.s32 %s27, %s34
    %p92 = scmp.eq.s32.totalorder %s91, 0
    %s94 = sadd.s32 %s93, 1
    %s95 = scalar_select %p92, %s93, %s94
    %p98 = pneg %p92
    %p99 = scmp.eq.s32.totalorder %s19, 8
    %p100 = por %p98, %p99
    %p101 = scmp.ne.s32.totalorder %s93, %s96
    %p102 = scmp.eq.s32.totalorder %s19, 0
    %p103 = por %p101, %p102
    %p104 = scmp.ne.s32.totalorder %s93, %s96
    %p105 = scmp.eq.s32.totalorder %s24, 8
    %p106 = por %p104, %p105
    %p107 = scmp.ne.s32.totalorder %s96, %s97
    %p108 = scmp.eq.s32.totalorder %s24, 0
    %p109 = por %p107, %p108
    %p110 = scmp.ne.s32.totalorder %s96, %s97
    %p111 = scmp.eq.s32.totalorder %s25, 8
    %p112 = por %p110, %p111
    %p114 = scmp.ne.s32.totalorder %s97, %s113
    %p115 = scmp.eq.s32.totalorder %s25, 0
    %p116 = por %p114, %p115
    %s118 = sadd.s32 %s117, 1
    %p121 = scmp.eq.s32.totalorder %s19, 8
    %p122 = scmp.ne.s32.totalorder %s117, %s119
    %p123 = scmp.eq.s32.totalorder %s19, 0
    %p124 = por %p122, %p123
    %p125 = scmp.ne.s32.totalorder %s117, %s119
    %p126 = scmp.eq.s32.totalorder %s24, 8
    %p127 = por %p125, %p126
    %p128 = scmp.ne.s32.totalorder %s119, %s120
    %p129 = scmp.eq.s32.totalorder %s24, 0
    %p130 = por %p128, %p129
    %p131 = scmp.ne.s32.totalorder %s119, %s120
    %p132 = scmp.eq.s32.totalorder %s25, 8
    %p133 = por %p131, %p132
    %p135 = scmp.ne.s32.totalorder %s120, %s134
    %p136 = scmp.eq.s32.totalorder %s25, 0
    %p137 = por %p135, %p136
    %s139 = sadd.s32 %s138, 1
    %p142 = scmp.eq.s32.totalorder %s19, 8
    %p143 = scmp.ne.s32.totalorder %s138, %s140
    %p144 = scmp.eq.s32.totalorder %s19, 0
    %p145 = por %p143, %p144
    %p146 = scmp.ne.s32.totalorder %s138, %s140
    %p147 = scmp.eq.s32.totalorder %s24, 8
    %p148 = por %p146, %p147
    %p149 = scmp.ne.s32.totalorder %s140, %s141
    %p150 = scmp.eq.s32.totalorder %s24, 0
    %p151 = por %p149, %p150
    %p152 = scmp.ne.s32.totalorder %s140, %s141
    %p153 = scmp.eq.s32.totalorder %s25, 8
    %p154 = por %p152, %p153
    %p156 = scmp.ne.s32.totalorder %s141, %s155
    %p157 = scmp.eq.s32.totalorder %s25, 0
    %p158 = por %p156, %p157
    %s160 = sadd.s32 %s159, 1
    %p163 = scmp.eq.s32.totalorder %s19, 8
    %p164 = scmp.ne.s32.totalorder %s159, %s161
    %p165 = scmp.eq.s32.totalorder %s19, 0
    %p166 = por %p164, %p165
    %p167 = scmp.ne.s32.totalorder %s159, %s161
    %p168 = scmp.eq.s32.totalorder %s24, 8
    %p169 = por %p167, %p168
    %p170 = scmp.ne.s32.totalorder %s161, %s162
    %p171 = scmp.eq.s32.totalorder %s24, 0
    %p172 = por %p170, %p171
    %p173 = scmp.ne.s32.totalorder %s161, %s162
    %p174 = scmp.eq.s32.totalorder %s25, 8
    %p175 = por %p173, %p174
    %p177 = scmp.ne.s32.totalorder %s162, %s176
    %p178 = scmp.eq.s32.totalorder %s25, 0
    %p179 = por %p177, %p178
    %s181 = sadd.s32 %s180, 1
    %p184 = scmp.eq.s32.totalorder %s19, 8
    %p185 = scmp.ne.s32.totalorder %s180, %s182
    %p186 = scmp.eq.s32.totalorder %s19, 0
    %p187 = por %p185, %p186
    %p188 = scmp.ne.s32.totalorder %s180, %s182
    %p189 = scmp.eq.s32.totalorder %s24, 8
    %p190 = por %p188, %p189
    %p191 = scmp.ne.s32.totalorder %s182, %s183
    %p192 = scmp.eq.s32.totalorder %s24, 0
    %p193 = por %p191, %p192
    %p194 = scmp.ne.s32.totalorder %s182, %s183
    %p195 = scmp.eq.s32.totalorder %s25, 8
    %p196 = por %p194, %p195
    %p198 = scmp.ne.s32.totalorder %s183, %s197
    %p199 = scmp.eq.s32.totalorder %s25, 0
    %p200 = por %p198, %p199
    %s202 = sadd.s32 %s201, 1
    %p205 = scmp.eq.s32.totalorder %s19, 8
    %p206 = scmp.ne.s32.totalorder %s201, %s203
    %p207 = scmp.eq.s32.totalorder %s19, 0
    %p208 = por %p206, %p207
    %p209 = scmp.ne.s32.totalorder %s201, %s203
    %p210 = scmp.eq.s32.totalorder %s24, 8
    %p211 = por %p209, %p210
    %p212 = scmp.ne.s32.totalorder %s203, %s204
    %p213 = scmp.eq.s32.totalorder %s24, 0
    %p214 = por %p212, %p213
    %p215 = scmp.ne.s32.totalorder %s203, %s204
    %p216 = scmp.eq.s32.totalorder %s25, 8
    %p217 = por %p215, %p216
    %p219 = scmp.ne.s32.totalorder %s204, %s218
    %p220 = scmp.eq.s32.totalorder %s25, 0
    %p221 = por %p219, %p220
    %s223 = sadd.s32 %s222, 1
    %p226 = scmp.eq.s32.totalorder %s19, 8
    %p227 = scmp.ne.s32.totalorder %s222, %s224
    %p228 = scmp.eq.s32.totalorder %s19, 0
    %p229 = por %p227, %p228
    %p230 = scmp.ne.s32.totalorder %s222, %s224
    %p231 = scmp.eq.s32.totalorder %s24, 8
    %p232 = por %p230, %p231
    %p233 = scmp.ne.s32.totalorder %s224, %s225
    %p234 = scmp.eq.s32.totalorder %s24, 0
    %p235 = por %p233, %p234
    %p236 = scmp.ne.s32.totalorder %s224, %s225
    %p237 = scmp.eq.s32.totalorder %s25, 8
    %p238 = por %p236, %p237
    %p240 = scmp.ne.s32.totalorder %s225, %s239
    %p241 = scmp.eq.s32.totalorder %s25, 0
    %p242 = por %p240, %p241
    %s244 = sadd.s32 %s243, 1
    %p247 = scmp.eq.s32.totalorder %s19, 8
    %p248 = scmp.ne.s32.totalorder %s243, %s245
    %p249 = scmp.eq.s32.totalorder %s19, 0
    %p250 = por %p248, %p249
    %p251 = scmp.ne.s32.totalorder %s243, %s245
    %p252 = scmp.eq.s32.totalorder %s24, 8
    %p253 = por %p251, %p252
    %p254 = scmp.ne.s32.totalorder %s245, %s246
    %p255 = scmp.eq.s32.totalorder %s24, 0
    %p256 = por %p254, %p255
    %p257 = scmp.ne.s32.totalorder %s245, %s246
    %p258 = scmp.eq.s32.totalorder %s25, 8
    %p259 = por %p257, %p258
    %p261 = scmp.ne.s32.totalorder %s246, %s260
    %p262 = scmp.eq.s32.totalorder %s25, 0
    %p263 = por %p261, %p262
    %s265 = sadd.s32 %s264, 1
    %p268 = scmp.eq.s32.totalorder %s19, 8
    %p269 = scmp.ne.s32.totalorder %s264, %s266
    %p270 = scmp.eq.s32.totalorder %s19, 0
    %p271 = por %p269, %p270
    %p272 = scmp.ne.s32.totalorder %s264, %s266
    %p273 = scmp.eq.s32.totalorder %s24, 8
    %p274 = por %p272, %p273
    %p275 = scmp.ne.s32.totalorder %s266, %s267
    %p276 = scmp.eq.s32.totalorder %s24, 0
    %p277 = por %p275, %p276
    %p278 = scmp.ne.s32.totalorder %s266, %s267
    %p279 = scmp.eq.s32.totalorder %s25, 8
    %p280 = por %p278, %p279
    %p282 = scmp.ne.s32.totalorder %s267, %s281
    %p283 = scmp.eq.s32.totalorder %s25, 0
    %p284 = por %p282, %p283
    %s285 = ssub.s32 %s26, %s38
    %p286 = scmp.eq.s32.totalorder %s285, 0
    %s288 = sadd.s32 %s287, 1
    %s289 = scalar_select %p286, %s287, %s288
    %p292 = pneg %p286
    %p293 = scmp.eq.s32.totalorder %s19, 8
    %p294 = por %p292, %p293
    %p295 = scmp.ne.s32.totalorder %s287, %s290
    %p296 = scmp.eq.s32.totalorder %s19, 0
    %p297 = por %p295, %p296
    %p298 = scmp.ne.s32.totalorder %s287, %s290
    %p299 = scmp.eq.s32.totalorder %s24, 8
    %p300 = por %p298, %p299
    %p301 = scmp.ne.s32.totalorder %s290, %s291
    %p302 = scmp.eq.s32.totalorder %s24, 0
    %p303 = por %p301, %p302
    %p304 = scmp.ne.s32.totalorder %s290, %s291
    %p305 = scmp.eq.s32.totalorder %s25, 8
    %p306 = por %p304, %p305
    %p308 = scmp.ne.s32.totalorder %s291, %s307
    %p309 = scmp.eq.s32.totalorder %s25, 0
    %p310 = por %p308, %p309
    %s311 = ssub.s32 %s26, %s38
    %p312 = scmp.eq.s32.totalorder %s311, 0
    %s314 = sadd.s32 %s313, 1
    %s315 = scalar_select %p312, %s313, %s314
    %p318 = pneg %p312
    %p319 = scmp.eq.s32.totalorder %s19, 8
    %p320 = por %p318, %p319
    %p321 = scmp.ne.s32.totalorder %s313, %s316
    %p322 = scmp.eq.s32.totalorder %s19, 0
    %p323 = por %p321, %p322
    %p324 = scmp.ne.s32.totalorder %s313, %s316
    %p325 = scmp.eq.s32.totalorder %s24, 8
    %p326 = por %p324, %p325
    %p327 = scmp.ne.s32.totalorder %s316, %s317
    %p328 = scmp.eq.s32.totalorder %s24, 0
    %p329 = por %p327, %p328
    %p330 = scmp.ne.s32.totalorder %s316, %s317
    %p331 = scmp.eq.s32.totalorder %s25, 8
    %p332 = por %p330, %p331
    %p334 = scmp.ne.s32.totalorder %s317, %s333
    %p335 = scmp.eq.s32.totalorder %s25, 0
    %p336 = por %p334, %p335
    %p337 = scmp.le.s32.totalorder 1, %s19
    %p338 = scmp.lt.s32.totalorder %s19, 10
    %p339 = pnand %p337, %p338
    %p340 = pneg %p339
    // Predicated region
    $region9: #{knn_block_forward.1} parent=5 // pred_check
      _
    $region10: #{knn_block_forward.1} parent=5 // pred_check_branch
      %342 = sbr.rel (%p339) target = $region12
    $region11: #{knn_block_forward.1} parent=5 // pred_region
      %s343 = ssub.s32 %s19, 1
      // Predicated region
      $region13: #{knn_block_forward.1} parent=11 // pred_check
        %p344 = pneg %p130
      $region14: #{knn_block_forward.1} parent=11 // pred_check_branch
        %346 = sbr.rel (%p344) target = $region16
      $region15: #{knn_block_forward.1} parent=11 // pred_region
        _
      $region16: #{knn_block_forward.1} parent=11 // pred_fallthru
        _
      // Predicated region
      $region17: #{knn_block_forward.1} parent=11 // pred_check
        %p347 = pneg %p151
      $region18: #{knn_block_forward.1} parent=11 // pred_check_branch
        %349 = sbr.rel (%p347) target = $region20
      $region19: #{knn_block_forward.1} parent=11 // pred_region
        _
      $region20: #{knn_block_forward.1} parent=11 // pred_fallthru
        _
      // Predicated region
      $region21: #{knn_block_forward.1} parent=11 // pred_check
        %p350 = pneg %p172
      $region22: #{knn_block_forward.1} parent=11 // pred_check_branch
        %352 = sbr.rel (%p350) target = $region24
      $region23: #{knn_block_forward.1} parent=11 // pred_region
        _
      $region24: #{knn_block_forward.1} parent=11 // pred_fallthru
        _
      // Predicated region
      $region25: #{knn_block_forward.1} parent=11 // pred_check
        %p353 = pneg %p193
      $region26: #{knn_block_forward.1} parent=11 // pred_check_branch
        %355 = sbr.rel (%p353) target = $region28
      $region27: #{knn_block_forward.1} parent=11 // pred_region
        _
      $region28: #{knn_block_forward.1} parent=11 // pred_fallthru
        _
      // Predicated region
      $region29: #{knn_block_forward.1} parent=11 // pred_check
        %p356 = pneg %p214
      $region30: #{knn_block_forward.1} parent=11 // pred_check_branch
        %358 = sbr.rel (%p356) target = $region32
      $region31: #{knn_block_forward.1} parent=11 // pred_region
        _
      $region32: #{knn_block_forward.1} parent=11 // pred_fallthru
        _
      // Predicated region
      $region33: #{knn_block_forward.1} parent=11 // pred_check
        %p359 = pneg %p235
      $region34: #{knn_block_forward.1} parent=11 // pred_check_branch
        %361 = sbr.rel (%p359) target = $region36
      $region35: #{knn_block_forward.1} parent=11 // pred_region
        _
      $region36: #{knn_block_forward.1} parent=11 // pred_fallthru
        _
      // Predicated region
      $region37: #{knn_block_forward.1} parent=11 // pred_check
        %p362 = pneg %p256
      $region38: #{knn_block_forward.1} parent=11 // pred_check_branch
        %364 = sbr.rel (%p362) target = $region40
      $region39: #{knn_block_forward.1} parent=11 // pred_region
        _
      $region40: #{knn_block_forward.1} parent=11 // pred_fallthru
        _
      // Predicated region
      $region41: #{knn_block_forward.1} parent=11 // pred_check
        %p365 = pneg %p277
      $region42: #{knn_block_forward.1} parent=11 // pred_check_branch
        %367 = sbr.rel (%p365) target = $region44
      $region43: #{knn_block_forward.1} parent=11 // pred_region
        _
      $region44: #{knn_block_forward.1} parent=11 // pred_fallthru
        _
    $region12: #{knn_block_forward.1} parent=5 // pred_fallthru
      _
    %p368 = scmp.lt.s32.totalorder %s19, 9
    // Predicated region
    $region45: #{knn_block_forward.1} parent=5 // pred_check
      %p369 = pneg %p368
    $region46: #{knn_block_forward.1} parent=5 // pred_check_branch
      %371 = sbr.rel (%p369) target = $region48
    $region47: #{knn_block_forward.1} parent=5 // pred_region
      // Predicated region
      $region49: #{knn_block_forward.1} parent=47 // pred_check
        %p372 = pneg %p51
      $region50: #{knn_block_forward.1} parent=47 // pred_check_branch
        %374 = sbr.rel (%p372) target = $region52
      $region51: #{knn_block_forward.1} parent=47 // pred_region
        %s375 = smul.u32 16, %s26
        %p376 = scmp.lt.s32.totalorder %s375, 47
        %s377 = scalar_select %p376, %s375, 47
        %s378 = smul.addr %s377, 8
        %s379 = scalar_lea.vmem %s0, %s378
        %s380 = smul.u32 16, %s26
      $region52: #{knn_block_forward.1} parent=47 // pred_fallthru
        _
      // Predicated region
      $region53: #{knn_block_forward.1} parent=47 // pred_check
        %p381 = pneg %p77
      $region54: #{knn_block_forward.1} parent=47 // pred_check_branch
        %383 = sbr.rel (%p381) target = $region56
      $region55: #{knn_block_forward.1} parent=47 // pred_region
        %s384 = smul.u32 16, %s27
        %p385 = scmp.lt.s32.totalorder %s384, 47
        %s386 = scalar_select %p385, %s384, 47
        %s387 = smul.addr %s386, 8
        %s388 = scalar_lea.vmem %s1, %s387
        %s389 = smul.u32 16, %s27
      $region56: #{knn_block_forward.1} parent=47 // pred_fallthru
        _
      // Predicated region
      $region57: #{knn_block_forward.1} parent=47 // pred_check
        %p390 = pneg %p103
      $region58: #{knn_block_forward.1} parent=47 // pred_check_branch
        %392 = sbr.rel (%p390) target = $region60
      $region59: #{knn_block_forward.1} parent=47 // pred_region
        %p393 = scmp.lt.s32.totalorder %s27, 2
        %s394 = scalar_select %p393, %s27, 2
        %s395 = smul.addr %s394, 2
        %s396 = scalar_lea.vmem %s2, %s395
      $region60: #{knn_block_forward.1} parent=47 // pred_fallthru
        _
    $region48: #{knn_block_forward.1} parent=5 // pred_fallthru
      _
    %p397 = scmp.le.s32.totalorder 1, %s19
    %p398 = scmp.lt.s32.totalorder %s19, 10
    %p399 = pnand %p397, %p398
    %p400 = pneg %p399
    // Predicated region
    $region61: #{knn_block_forward.1} parent=5 // pred_check
      _
    $region62: #{knn_block_forward.1} parent=5 // pred_check_branch
      %402 = sbr.rel (%p399) target = $region64
    $region63: #{knn_block_forward.1} parent=5 // pred_region
      %s403 = ssub.s32 %s19, 1
      %s404 = smul.u32 16, %s28
      %p405 = scmp.lt.s32.totalorder %s404, 47
      %s406 = scalar_select %p405, %s404, 47
      %s407 = smul.addr %s406, 8
      %s408 = scalar_lea.vmem %s0, %s407
      %p409 = pneg %p57
      %p410 = pneg %p54
      %s411 = smul.u32 16, %s29
      %p412 = scmp.lt.s32.totalorder %s411, 47
      %s413 = scalar_select %p412, %s411, 47
      %s414 = smul.addr %s413, 8
      %s415 = scalar_lea.vmem %s1, %s414
      %p416 = pneg %p83
      %p417 = pneg %p80
      %p418 = scmp.lt.s32.totalorder %s29, 2
      %s419 = scalar_select %p418, %s29, 2
      %s420 = smul.addr %s419, 2
      %s421 = scalar_lea.vmem %s2, %s420
      %p422 = pneg %p109
      %p423 = pneg %p106
      %p424 = pneg %p130
      %p425 = pneg %p127
      %p426 = pneg %p151
      %p427 = pneg %p148
      %p428 = pneg %p172
      %p429 = pneg %p169
      %p430 = pneg %p193
      %p431 = pneg %p190
      %p432 = pneg %p214
      %p433 = pneg %p211
      %p434 = pneg %p235
      %p435 = pneg %p232
      %p436 = pneg %p256
      %p437 = pneg %p253
      %p438 = pneg %p277
      %p439 = pneg %p274
      %p440 = pneg %p303
      %p441 = pneg %p300
      %s442 = smul.u32 16, %s28
      %p443 = scmp.lt.s32.totalorder %s442, 47
      %s444 = scalar_select %p443, %s442, 47
      %s445 = smul.addr %s444, 8
      %s446 = scalar_lea.vmem %s11, %s445
      %p447 = pneg %p329
      %p448 = pneg %p326
      %s449 = smul.u32 16, %s28
      %p450 = scmp.lt.s32.totalorder %s449, 47
      %s451 = scalar_select %p450, %s449, 47
      %s452 = smul.addr %s451, 8
      %s453 = scalar_lea.vmem %s12, %s452
      %s454 = smul.u32 16, %s28
      %p455 = scmp.lt.s32.totalorder %s454, 47
      %s456 = scalar_select %p455, %s454, 47
      %s457 = smul.addr %s456, 8
      %s458 = scalar_lea.vmem %s0, %s457
      %s459 = smul.u32 16, %s28
      %s460 = smul.u32 16, %s29
      %p461 = scmp.lt.s32.totalorder %s460, 47
      %s462 = scalar_select %p461, %s460, 47
      %s463 = smul.addr %s462, 8
      %s464 = scalar_lea.vmem %s1, %s463
      %s465 = smul.u32 16, %s29
      %p466 = scmp.lt.s32.totalorder %s29, 2
      %s467 = scalar_select %p466, %s29, 2
      %s468 = smul.addr %s467, 2
      %s469 = scalar_lea.vmem %s2, %s468
      %s470 = smul.u32 16, %s28
      %p471 = scmp.lt.s32.totalorder %s470, 47
      %s472 = scalar_select %p471, %s470, 47
      %s473 = smul.addr %s472, 8
      %s474 = scalar_lea.vmem %s11, %s473
      %s475 = smul.u32 16, %s28
      %s476 = smul.u32 16, %s28
      %p477 = scmp.lt.s32.totalorder %s476, 47
      %s478 = scalar_select %p477, %s476, 47
      %s479 = smul.addr %s478, 8
      %s480 = scalar_lea.vmem %s12, %s479
      %s481 = smul.u32 16, %s28
      %p482 = scmp.eq.s32.totalorder %s29, 0
      // Predicated region
      $region65: #{knn_block_forward.1} parent=63 // pred_check
        %p483 = pneg %p482
      $region66: #{knn_block_forward.1} parent=63 // pred_check_branch
        %485 = sbr.rel (%p483) target = $region68
      $region67: #{knn_block_forward.1} parent=63 // pred_region
        %v486 = vld [vmem:[%s458] sm:$0xff]
        %v487 = vld [vmem:[%s458 + $0x8] sm:$0xff]
        %v488 = vld [vmem:[%s458 + $0x10] sm:$0xff]
        %v489 = vld [vmem:[%s458 + $0x18] sm:$0xff]
        %v490 = vld [vmem:[%s458 + $0x20] sm:$0xff]
        %v491 = vld [vmem:[%s458 + $0x28] sm:$0xff]
        %v492 = vld [vmem:[%s458 + $0x30] sm:$0xff]
        %v493 = vld [vmem:[%s458 + $0x38] sm:$0xff]
        %v494 = vld [vmem:[%s458 + $0x40] sm:$0xff]
        %v495 = vld [vmem:[%s458 + $0x48] sm:$0xff]
        %v496 = vld [vmem:[%s458 + $0x50] sm:$0xff]
        %v497 = vld [vmem:[%s458 + $0x58] sm:$0xff]
        %v498 = vld [vmem:[%s458 + $0x60] sm:$0xff]
        %v499 = vld [vmem:[%s458 + $0x68] sm:$0xff]
        %v500 = vld [vmem:[%s458 + $0x70] sm:$0xff]
        %v501 = vld [vmem:[%s458 + $0x78] sm:$0xff]
        %v502 = vld [vmem:[%s7] sm:$0xff]
        %v503 = vld [vmem:[%s7 + $0x8] sm:$0x3]
        %v504 = vld [vmem:[%s8] sm:$0x1]
        %v506 = vlaneseq
        %v507 = vshrl.u32 %v506, 7
        %v508 = vsub.s32 0, %v507
        %v509 = vrot.slane %v504, %v508
        %vm511 = vcmask 80896
        %v513 = vsel %vm511, %v486, 0
        %v516 = vsel %vm511, %v487, 0
        %v519 = vsel %vm511, %v488, 0
        %v522 = vsel %vm511, %v489, 0
        %v525 = vsel %vm511, %v490, 0
        %v528 = vsel %vm511, %v491, 0
        %v531 = vsel %vm511, %v492, 0
        %v534 = vsel %vm511, %v493, 0
        %v537 = vsel %vm511, %v494, 0
        %v540 = vsel %vm511, %v495, 0
        %v543 = vsel %vm511, %v496, 0
        %v546 = vsel %vm511, %v497, 0
        %v549 = vsel %vm511, %v498, 0
        %v552 = vsel %vm511, %v499, 0
        %v555 = vsel %vm511, %v500, 0
        %v558 = vsel %vm511, %v501, 0
        %vm560 = vcmask 1041408
        %v562 = vsel %vm560, %v503, 0
        %564 = vmatprep.subr.mxu0 0.0
        %565 = vmatpush1.msra.mxu0 %v502
        %566 = vmatprep.subr.mxu0 0.0
        %567 = vmatpush1.msra.mxu0 %v562
        %568 = vmatprep.subr.mxu0 0.0
        %569 = vmatpush1.msra.mxu0 0.0
        %570 = vmatprep.subr.mxu0 0.0
        %571 = vmatpush1.msra.mxu0 0.0
        %572 = vmatprep.subr.mxu0 0.0
        %573 = vmatpush1.msra.mxu0 0.0
        %574 = vmatprep.subr.mxu0 0.0
        %575 = vmatpush1.msra.mxu0 0.0
        %576 = vmatprep.subr.mxu0 0.0
        %577 = vmatpush1.msra.mxu0 0.0
        %578 = vmatprep.subr.mxu0 0.0
        %579 = vmatpush1.msra.mxu0 0.0
        %580 = vmatprep.subr.mxu0 0.0
        %581 = vmatpush1.msra.mxu0 0.0
        %582 = vmatprep.subr.mxu0 0.0
        %583 = vmatpush1.msra.mxu0 0.0
        %584 = vmatprep.subr.mxu0 0.0
        %585 = vmatpush1.msra.mxu0 0.0
        %586 = vmatprep.subr.mxu0 0.0
        %587 = vmatpush1.msra.mxu0 0.0
        %588 = vmatprep.subr.mxu0 0.0
        %589 = vmatpush1.msra.mxu0 0.0
        %590 = vmatprep.subr.mxu0 0.0
        %591 = vmatpush1.msra.mxu0 0.0
        %592 = vmatprep.subr.mxu0 0.0
        %593 = vmatpush1.msra.mxu0 0.0
        %594 = vmatprep.subr.mxu0 0.0
        %595 = vmatpush1.msra.mxu0 0.0
        %596 = vmatprep.subr.mxu0 0.0
        %597 = vmatpush1.msra.mxu0 0.0
        %598 = vmatprep.subr.mxu0 0.0
        %599 = vmatpush1.msra.mxu0 0.0
        %600 = vmatprep.subr.mxu0 0.0
        %601 = vmatpush1.msra.mxu0 0.0
        %602 = vmatprep.subr.mxu0 0.0
        %603 = vmatpush1.msra.mxu0 0.0
        %604 = vmatprep.subr.mxu0 0.0
        %605 = vmatpush1.msra.mxu0 0.0
        %606 = vmatprep.subr.mxu0 0.0
        %607 = vmatpush1.msra.mxu0 0.0
        %608 = vmatprep.subr.mxu0 0.0
        %609 = vmatpush1.msra.mxu0 0.0
        %610 = vmatprep.subr.mxu0 0.0
        %611 = vmatpush1.msra.mxu0 0.0
        %612 = vmatprep.subr.mxu0 0.0
        %613 = vmatpush1.msra.mxu0 0.0
        %614 = vmatprep.subr.mxu0 0.0
        %615 = vmatpush1.msra.mxu0 0.0
        %616 = vmatprep.subr.mxu0 0.0
        %617 = vmatpush1.msra.mxu0 0.0
        %618 = vmatprep.subr.mxu0 0.0
        %619 = vmatpush1.msra.mxu0 0.0
        %620 = vmatprep.subr.mxu0 0.0
        %621 = vmatpush1.msra.mxu0 0.0
        %622 = vmatprep.subr.mxu0 0.0
        %623 = vmatpush1.msra.mxu0 0.0
        %624 = vmatprep.subr.mxu0 0.0
        %625 = vmatpush1.msra.mxu0 0.0
        %626 = vmatprep.subr.mxu0 0.0
        %627 = vmatpush1.msra.mxu0 0.0
        %628 = vmatprep.mubr.f32.mxu0 0.0
        %629 = vmatmul.mubr.f32.gmra.mrb[0].mxu0 %v513
        %v630 = vpop.f32.mrb[0].mxu0
        %v631 = vadd.f32 %v509, %v630
        %v632 = vpop.f32.mrb[0].mxu0
        %633 = vmatprep.mubr.f32.mxu0 0.0
        %634 = vmatmul.mubr.f32.gmra.mrb[0].mxu0 %v516
        %v635 = vpop.f32.mrb[0].mxu0
        %v636 = vadd.f32 %v509, %v635
        %v637 = vpop.f32.mrb[0].mxu0
        %638 = vmatprep.mubr.f32.mxu0 0.0
        %639 = vmatmul.mubr.f32.gmra.mrb[0].mxu0 %v519
        %v640 = vpop.f32.mrb[0].mxu0
        %v641 = vadd.f32 %v509, %v640
        %v642 = vpop.f32.mrb[0].mxu0
        %643 = vmatprep.mubr.f32.mxu0 0.0
        %644 = vmatmul.mubr.f32.gmra.mrb[0].mxu0 %v522
        %v645 = vpop.f32.mrb[0].mxu0
        %v646 = vadd.f32 %v509, %v645
        %v647 = vpop.f32.mrb[0].mxu0
        %648 = vmatprep.mubr.f32.mxu0 0.0
        %649 = vmatmul.mubr.f32.gmra.mrb[0].mxu0 %v525
        %v650 = vpop.f32.mrb[0].mxu0
        %v651 = vadd.f32 %v509, %v650
        %v652 = vpop.f32.mrb[0].mxu0
        %653 = vmatprep.mubr.f32.mxu0 0.0
        %654 = vmatmul.mubr.f32.gmra.mrb[0].mxu0 %v528
        %v655 = vpop.f32.mrb[0].mxu0
        %v656 = vadd.f32 %v509, %v655
        %v657 = vpop.f32.mrb[0].mxu0
        %658 = vmatprep.mubr.f32.mxu0 0.0
        %659 = vmatmul.mubr.f32.gmra.mrb[0].mxu0 %v531
        %v660 = vpop.f32.mrb[0].mxu0
        %v661 = vadd.f32 %v509, %v660
        %v662 = vpop.f32.mrb[0].mxu0
        %663 = vmatprep.mubr.f32.mxu0 0.0
        %664 = vmatmul.mubr.f32.gmra.mrb[0].mxu0 %v534
        %v665 = vpop.f32.mrb[0].mxu0
        %v666 = vadd.f32 %v509, %v665
        %v667 = vpop.f32.mrb[0].mxu0
        %668 = vmatprep.mubr.f32.mxu0 0.0
        %669 = vmatmul.mubr.f32.gmra.mrb[0].mxu0 %v537
        %v670 = vpop.f32.mrb[0].mxu0
        %v671 = vadd.f32 %v509, %v670
        %v672 = vpop.f32.mrb[0].mxu0
        %673 = vmatprep.mubr.f32.mxu0 0.0
        %674 = vmatmul.mubr.f32.gmra.mrb[0].mxu0 %v540
        %v675 = vpop.f32.mrb[0].mxu0
        %v676 = vadd.f32 %v509, %v675
        %v677 = vpop.f32.mrb[0].mxu0
        %678 = vmatprep.mubr.f32.mxu0 0.0
        %679 = vmatmul.mubr.f32.gmra.mrb[0].mxu0 %v543
        %v680 = vpop.f32.mrb[0].mxu0
        %v681 = vadd.f32 %v509, %v680
        %v682 = vpop.f32.mrb[0].mxu0
        %683 = vmatprep.mubr.f32.mxu0 0.0
        %684 = vmatmul.mubr.f32.gmra.mrb[0].mxu0 %v546
        %v685 = vpop.f32.mrb[0].mxu0
        %v686 = vadd.f32 %v509, %v685
        %v687 = vpop.f32.mrb[0].mxu0
        %688 = vmatprep.mubr.f32.mxu0 0.0
        %689 = vmatmul.mubr.f32.gmra.mrb[0].mxu0 %v549
        %v690 = vpop.f32.mrb[0].mxu0
        %v691 = vadd.f32 %v509, %v690
        %v692 = vpop.f32.mrb[0].mxu0
        %693 = vmatprep.mubr.f32.mxu0 0.0
        %694 = vmatmul.mubr.f32.gmra.mrb[0].mxu0 %v552
        %v695 = vpop.f32.mrb[0].mxu0
        %v696 = vadd.f32 %v509, %v695
        %v697 = vpop.f32.mrb[0].mxu0
        %698 = vmatprep.mubr.f32.mxu0 0.0
        %699 = vmatmul.mubr.f32.gmra.mrb[0].mxu0 %v555
        %v700 = vpop.f32.mrb[0].mxu0
        %v701 = vadd.f32 %v509, %v700
        %v702 = vpop.f32.mrb[0].mxu0
        %703 = vmatprep.mubr.f32.mxu0 0.0
        %704 = vmatmul.mubr.f32.gmra.mrb[0].mxu0 %v558
        %v705 = vpop.f32.mrb[0].mxu0
        %v706 = vadd.f32 %v509, %v705
        %v707 = vpop.f32.mrb[0].mxu0
        %708 = vdwg.mxu0
        %v709 = vmax.f32 %v631, 0.0
        %v710 = vmax.f32 %v636, 0.0
        %v711 = vmax.f32 %v641, 0.0
        %v712 = vmax.f32 %v646, 0.0
        %v713 = vmax.f32 %v651, 0.0
        %v714 = vmax.f32 %v656, 0.0
        %v715 = vmax.f32 %v661, 0.0
        %v716 = vmax.f32 %v666, 0.0
        %v717 = vmax.f32 %v671, 0.0
        %v718 = vmax.f32 %v676, 0.0
        %v719 = vmax.f32 %v681, 0.0
        %v720 = vmax.f32 %v686, 0.0
        %v721 = vmax.f32 %v691, 0.0
        %v722 = vmax.f32 %v696, 0.0
        %v723 = vmax.f32 %v701, 0.0
        %v724 = vmax.f32 %v706, 0.0
        %v725 = vld [vmem:[%s9] sm:$0xff]
        %v726 = vld [vmem:[%s9 + $0x8] sm:$0xff]
        %v727 = vld [vmem:[%s9 + $0x10] sm:$0xff]
        %v728 = vld [vmem:[%s9 + $0x18] sm:$0xff]
        %v729 = vld [vmem:[%s10] sm:$0x1]
        %v731 = vlaneseq
        %v732 = vshrl.u32 %v731, 7
        %v733 = vsub.s32 0, %v732
        %v734 = vrot.slane %v729, %v733
        %vm736 = vcmask 261120
        %v738 = vsel %vm736, %v709, 0
        %v741 = vsel %vm736, %v710, 0
        %v744 = vsel %vm736, %v711, 0
        %v747 = vsel %vm736, %v712, 0
        %v750 = vsel %vm736, %v713, 0
        %v753 = vsel %vm736, %v714, 0
        %v756 = vsel %vm736, %v715, 0
        %v759 = vsel %vm736, %v716, 0
        %v762 = vsel %vm736, %v717, 0
        %v765 = vsel %vm736, %v718, 0
        %v768 = vsel %vm736, %v719, 0
        %v771 = vsel %vm736, %v720, 0
        %v774 = vsel %vm736, %v721, 0
        %v777 = vsel %vm736, %v722, 0
        %v780 = vsel %vm736, %v723, 0
        %v783 = vsel %vm736, %v724, 0
        %785 = vmatprep.subr.mxu0 0.0
        %786 = vmatpush1.msra.mxu0 %v725
        %787 = vmatprep.subr.mxu0 0.0
        %788 = vmatpush1.msra.mxu0 %v726
        %789 = vmatprep.subr.mxu0 0.0
        %790 = vmatpush1.msra.mxu0 %v727
        %791 = vmatprep.subr.mxu0 0.0
        %792 = vmatpush1.msra.mxu0 %v728
        %793 = vmatprep.subr.mxu0 0.0
        %794 = vmatpush1.msra.mxu0 0.0
        %795 = vmatprep.subr.mxu0 0.0
        %796 = vmatpush1.msra.mxu0 0.0
        %797 = vmatprep.subr.mxu0 0.0
        %798 = vmatpush1.msra.mxu0 0.0
        %799 = vmatprep.subr.mxu0 0.0
        %800 = vmatpush1.msra.mxu0 0.0
        %801 = vmatprep.subr.mxu0 0.0
        %802 = vmatpush1.msra.mxu0 0.0
        %803 = vmatprep.subr.mxu0 0.0
        %804 = vmatpush1.msra.mxu0 0.0
        %805 = vmatprep.subr.mxu0 0.0
        %806 = vmatpush1.msra.mxu0 0.0
        %807 = vmatprep.subr.mxu0 0.0
        %808 = vmatpush1.msra.mxu0 0.0
        %809 = vmatprep.subr.mxu0 0.0
        %810 = vmatpush1.msra.mxu0 0.0
        %811 = vmatprep.subr.mxu0 0.0
        %812 = vmatpush1.msra.mxu0 0.0
        %813 = vmatprep.subr.mxu0 0.0
        %814 = vmatpush1.msra.mxu0 0.0
        %815 = vmatprep.subr.mxu0 0.0
        %816 = vmatpush1.msra.mxu0 0.0
        %817 = vmatprep.subr.mxu0 0.0
        %818 = vmatpush1.msra.mxu0 0.0
        %819 = vmatprep.subr.mxu0 0.0
        %820 = vmatpush1.msra.mxu0 0.0
        %821 = vmatprep.subr.mxu0 0.0
        %822 = vmatpush1.msra.mxu0 0.0
        %823 = vmatprep.subr.mxu0 0.0
        %824 = vmatpush1.msra.mxu0 0.0
        %825 = vmatprep.subr.mxu0 0.0
        %826 = vmatpush1.msra.mxu0 0.0
        %827 = vmatprep.subr.mxu0 0.0
        %828 = vmatpush1.msra.mxu0 0.0
        %829 = vmatprep.subr.mxu0 0.0
        %830 = vmatpush1.msra.mxu0 0.0
        %831 = vmatprep.subr.mxu0 0.0
        %832 = vmatpush1.msra.mxu0 0.0
        %833 = vmatprep.subr.mxu0 0.0
        %834 = vmatpush1.msra.mxu0 0.0
        %835 = vmatprep.subr.mxu0 0.0
        %836 = vmatpush1.msra.mxu0 0.0
        %837 = vmatprep.subr.mxu0 0.0
        %838 = vmatpush1.msra.mxu0 0.0
        %839 = vmatprep.subr.mxu0 0.0
        %840 = vmatpush1.msra.mxu0 0.0
        %841 = vmatprep.subr.mxu0 0.0
        %842 = vmatpush1.msra.mxu0 0.0
        %843 = vmatprep.subr.mxu0 0.0
        %844 = vmatpush1.msra.mxu0 0.0
        %845 = vmatprep.subr.mxu0 0.0
        %846 = vmatpush1.msra.mxu0 0.0
        %847 = vmatprep.subr.mxu0 0.0
        %848 = vmatpush1.msra.mxu0 0.0
        %849 = vmatprep.mubr.f32.mxu0 0.0
        %850 = vmatmul.mubr.f32.gmra.mrb[0].mxu0 %v738
        %v851 = vpop.f32.mrb[0].mxu0
        %v852 = vadd.f32 %v734, %v851
        %v853 = vpop.f32.mrb[0].mxu0
        %854 = vmatprep.mubr.f32.mxu0 0.0
        %855 = vmatmul.mubr.f32.gmra.mrb[0].mxu0 %v741
        %v856 = vpop.f32.mrb[0].mxu0
        %v857 = vadd.f32 %v734, %v856
        %v858 = vpop.f32.mrb[0].mxu0
        %859 = vmatprep.mubr.f32.mxu0 0.0
        %860 = vmatmul.mubr.f32.gmra.mrb[0].mxu0 %v744
        %v861 = vpop.f32.mrb[0].mxu0
        %v862 = vadd.f32 %v734, %v861
        %v863 = vpop.f32.mrb[0].mxu0
        %864 = vmatprep.mubr.f32.mxu0 0.0
        %865 = vmatmul.mubr.f32.gmra.mrb[0].mxu0 %v747
        %v866 = vpop.f32.mrb[0].mxu0
        %v867 = vadd.f32 %v734, %v866
        %v868 = vpop.f32.mrb[0].mxu0
        %869 = vmatprep.mubr.f32.mxu0 0.0
        %870 = vmatmul.mubr.f32.gmra.mrb[0].mxu0 %v750
        %v871 = vpop.f32.mrb[0].mxu0
        %v872 = vadd.f32 %v734, %v871
        %v873 = vpop.f32.mrb[0].mxu0
        %874 = vmatprep.mubr.f32.mxu0 0.0
        %875 = vmatmul.mubr.f32.gmra.mrb[0].mxu0 %v753
        %v876 = vpop.f32.mrb[0].mxu0
        %v877 = vadd.f32 %v734, %v876
        %v878 = vpop.f32.mrb[0].mxu0
        %879 = vmatprep.mubr.f32.mxu0 0.0
        %880 = vmatmul.mubr.f32.gmra.mrb[0].mxu0 %v756
        %v881 = vpop.f32.mrb[0].mxu0
        %v882 = vadd.f32 %v734, %v881
        %v883 = vpop.f32.mrb[0].mxu0
        %884 = vmatprep.mubr.f32.mxu0 0.0
        %885 = vmatmul.mubr.f32.gmra.mrb[0].mxu0 %v759
        %v886 = vpop.f32.mrb[0].mxu0
        %v887 = vadd.f32 %v734, %v886
        %v888 = vpop.f32.mrb[0].mxu0
        %889 = vmatprep.mubr.f32.mxu0 0.0
        %890 = vmatmul.mubr.f32.gmra.mrb[0].mxu0 %v762
        %v891 = vpop.f32.mrb[0].mxu0
        %v892 = vadd.f32 %v734, %v891
        %v893 = vpop.f32.mrb[0].mxu0
        %894 = vmatprep.mubr.f32.mxu0 0.0
        %895 = vmatmul.mubr.f32.gmra.mrb[0].mxu0 %v765
        %v896 = vpop.f32.mrb[0].mxu0
        %v897 = vadd.f32 %v734, %v896
        %v898 = vpop.f32.mrb[0].mxu0
        %899 = vmatprep.mubr.f32.mxu0 0.0
        %900 = vmatmul.mubr.f32.gmra.mrb[0].mxu0 %v768
        %v901 = vpop.f32.mrb[0].mxu0
        %v902 = vadd.f32 %v734, %v901
        %v903 = vpop.f32.mrb[0].mxu0
        %904 = vmatprep.mubr.f32.mxu0 0.0
        %905 = vmatmul.mubr.f32.gmra.mrb[0].mxu0 %v771
        %v906 = vpop.f32.mrb[0].mxu0
        %v907 = vadd.f32 %v734, %v906
        %v908 = vpop.f32.mrb[0].mxu0
        %909 = vmatprep.mubr.f32.mxu0 0.0
        %910 = vmatmul.mubr.f32.gmra.mrb[0].mxu0 %v774
        %v911 = vpop.f32.mrb[0].mxu0
        %v912 = vadd.f32 %v734, %v911
        %v913 = vpop.f32.mrb[0].mxu0
        %914 = vmatprep.mubr.f32.mxu0 0.0
        %915 = vmatmul.mubr.f32.gmra.mrb[0].mxu0 %v777
        %v916 = vpop.f32.mrb[0].mxu0
        %v917 = vadd.f32 %v734, %v916
        %v918 = vpop.f32.mrb[0].mxu0
        %919 = vmatprep.mubr.f32.mxu0 0.0
        %920 = vmatmul.mubr.f32.gmra.mrb[0].mxu0 %v780
        %v921 = vpop.f32.mrb[0].mxu0
        %v922 = vadd.f32 %v734, %v921
        %v923 = vpop.f32.mrb[0].mxu0
        %924 = vmatprep.mubr.f32.mxu0 0.0
        %925 = vmatmul.mubr.f32.gmra.mrb[0].mxu0 %v783
        %v926 = vpop.f32.mrb[0].mxu0
        %v927 = vadd.f32 %v734, %v926
        %v928 = vpop.f32.mrb[0].mxu0
        %929 = vdwg.mxu0
        %v930 = vadd.f32 %v486, %v852
        %v931 = vadd.f32 %v487, %v857
        %v932 = vadd.f32 %v488, %v862
        %v933 = vadd.f32 %v489, %v867
        %v934 = vadd.f32 %v490, %v872
        %v935 = vadd.f32 %v491, %v877
        %v936 = vadd.f32 %v492, %v882
        %v937 = vadd.f32 %v493, %v887
        %v938 = vadd.f32 %v494, %v892
        %v939 = vadd.f32 %v495, %v897
        %v940 = vadd.f32 %v496, %v902
        %v941 = vadd.f32 %v497, %v907
        %v942 = vadd.f32 %v498, %v912
        %v943 = vadd.f32 %v499, %v917
        %v944 = vadd.f32 %v500, %v922
        %v945 = vadd.f32 %v501, %v927
        %946 = vst.msk [vmem:[%s474] sm:$0xff] %vm511, %v930
        %947 = vst.msk [vmem:[%s474 + $0x8] sm:$0xff] %vm511, %v931
        %948 = vst.msk [vmem:[%s474 + $0x10] sm:$0xff] %vm511, %v932
        %949 = vst.msk [vmem:[%s474 + $0x18] sm:$0xff] %vm511, %v933
        %950 = vst.msk [vmem:[%s474 + $0x20] sm:$0xff] %vm511, %v934
        %951 = vst.msk [vmem:[%s474 + $0x28] sm:$0xff] %vm511, %v935
        %952 = vst.msk [vmem:[%s474 + $0x30] sm:$0xff] %vm511, %v936
        %953 = vst.msk [vmem:[%s474 + $0x38] sm:$0xff] %vm511, %v937
        %954 = vst.msk [vmem:[%s474 + $0x40] sm:$0xff] %vm511, %v938
        %955 = vst.msk [vmem:[%s474 + $0x48] sm:$0xff] %vm511, %v939
        %956 = vst.msk [vmem:[%s474 + $0x50] sm:$0xff] %vm511, %v940
        %957 = vst.msk [vmem:[%s474 + $0x58] sm:$0xff] %vm511, %v941
        %958 = vst.msk [vmem:[%s474 + $0x60] sm:$0xff] %vm511, %v942
        %959 = vst.msk [vmem:[%s474 + $0x68] sm:$0xff] %vm511, %v943
        %960 = vst.msk [vmem:[%s474 + $0x70] sm:$0xff] %vm511, %v944
        %961 = vst.msk [vmem:[%s474 + $0x78] sm:$0xff] %vm511, %v945
        %vm962 = vcmask 130048
        %963 = vst.msk [vmem:[%s480] sm:$0xff] %vm962, 0.0
        %964 = vst.msk [vmem:[%s480 + $0x8] sm:$0xff] %vm962, 0.0
        %965 = vst.msk [vmem:[%s480 + $0x10] sm:$0xff] %vm962, 0.0
        %966 = vst.msk [vmem:[%s480 + $0x18] sm:$0xff] %vm962, 0.0
        %967 = vst.msk [vmem:[%s480 + $0x20] sm:$0xff] %vm962, 0.0
        %968 = vst.msk [vmem:[%s480 + $0x28] sm:$0xff] %vm962, 0.0
        %969 = vst.msk [vmem:[%s480 + $0x30] sm:$0xff] %vm962, 0.0
        %970 = vst.msk [vmem:[%s480 + $0x38] sm:$0xff] %vm962, 0.0
        %971 = vst.msk [vmem:[%s480 + $0x40] sm:$0xff] %vm962, 0.0
        %972 = vst.msk [vmem:[%s480 + $0x48] sm:$0xff] %vm962, 0.0
        %973 = vst.msk [vmem:[%s480 + $0x50] sm:$0xff] %vm962, 0.0
        %974 = vst.msk [vmem:[%s480 + $0x58] sm:$0xff] %vm962, 0.0
        %975 = vst.msk [vmem:[%s480 + $0x60] sm:$0xff] %vm962, 0.0
        %976 = vst.msk [vmem:[%s480 + $0x68] sm:$0xff] %vm962, 0.0
        %977 = vst.msk [vmem:[%s480 + $0x70] sm:$0xff] %vm962, 0.0
        %978 = vst.msk [vmem:[%s480 + $0x78] sm:$0xff] %vm962, 0.0
      $region68: #{knn_block_forward.1} parent=63 // pred_fallthru
        _
      %v979 = vld [vmem:[%s464] sm:$0xff]
      %v980 = vld [vmem:[%s464 + $0x8] sm:$0xff]
      %v981 = vld [vmem:[%s464 + $0x10] sm:$0xff]
      %v982 = vld [vmem:[%s464 + $0x18] sm:$0xff]
      %v983 = vld [vmem:[%s464 + $0x20] sm:$0xff]
      %v984 = vld [vmem:[%s464 + $0x28] sm:$0xff]
      %v985 = vld [vmem:[%s464 + $0x30] sm:$0xff]
      %v986 = vld [vmem:[%s464 + $0x38] sm:$0xff]
      %v987 = vld [vmem:[%s464 + $0x40] sm:$0xff]
      %v988 = vld [vmem:[%s464 + $0x48] sm:$0xff]
      %v989 = vld [vmem:[%s464 + $0x50] sm:$0xff]
      %v990 = vld [vmem:[%s464 + $0x58] sm:$0xff]
      %v991 = vld [vmem:[%s464 + $0x60] sm:$0xff]
      %v992 = vld [vmem:[%s464 + $0x68] sm:$0xff]
      %v993 = vld [vmem:[%s464 + $0x70] sm:$0xff]
      %v994 = vld [vmem:[%s464 + $0x78] sm:$0xff]
      %v995 = vld [vmem:[%s4] sm:$0xff]
      %v996 = vld [vmem:[%s4 + $0x8] sm:$0xff]
      %v997 = vld [vmem:[%s4 + $0x10] sm:$0x3]
      %v998 = vld [vmem:[%s4 + $0x18] sm:$0x3]
      %vm999 = vcmask 80896
      %v1001 = vsel %vm999, %v979, 0
      %v1004 = vsel %vm999, %v980, 0
      %v1007 = vsel %vm999, %v981, 0
      %v1010 = vsel %vm999, %v982, 0
      %v1013 = vsel %vm999, %v983, 0
      %v1016 = vsel %vm999, %v984, 0
      %v1019 = vsel %vm999, %v985, 0
      %v1022 = vsel %vm999, %v986, 0
      %v1025 = vsel %vm999, %v987, 0
      %v1028 = vsel %vm999, %v988, 0
      %v1031 = vsel %vm999, %v989, 0
      %v1034 = vsel %vm999, %v990, 0
      %v1037 = vsel %vm999, %v991, 0
      %v1040 = vsel %vm999, %v992, 0
      %v1043 = vsel %vm999, %v993, 0
      %v1046 = vsel %vm999, %v994, 0
      %vm1048 = vcmask 1041408
      %v1050 = vsel %vm1048, %v997, 0
      %v1053 = vsel %vm1048, %v998, 0
      %1055 = vmatprep.subr.mxu0 %v996
      %1056 = vmatpush1.msra.mxu0 %v995
      %1057 = vmatprep.subr.mxu0 %v1053
      %1058 = vmatpush1.msra.mxu0 %v1050
      %1059 = vmatprep.subr.mxu0 0.0
      %1060 = vmatpush1.msra.mxu0 0.0
      %1061 = vmatprep.subr.mxu0 0.0
      %1062 = vmatpush1.msra.mxu0 0.0
      %1063 = vmatprep.subr.mxu0 0.0
      %1064 = vmatpush1.msra.mxu0 0.0
      %1065 = vmatprep.subr.mxu0 0.0
      %1066 = vmatpush1.msra.mxu0 0.0
      %1067 = vmatprep.subr.mxu0 0.0
      %1068 = vmatpush1.msra.mxu0 0.0
      %1069 = vmatprep.subr.mxu0 0.0
      %1070 = vmatpush1.msra.mxu0 0.0
      %1071 = vmatprep.subr.mxu0 0.0
      %1072 = vmatpush1.msra.mxu0 0.0
      %1073 = vmatprep.subr.mxu0 0.0
      %1074 = vmatpush1.msra.mxu0 0.0
      %1075 = vmatprep.subr.mxu0 0.0
      %1076 = vmatpush1.msra.mxu0 0.0
      %1077 = vmatprep.subr.mxu0 0.0
      %1078 = vmatpush1.msra.mxu0 0.0
      %1079 = vmatprep.subr.mxu0 0.0
      %1080 = vmatpush1.msra.mxu0 0.0
      %1081 = vmatprep.subr.mxu0 0.0
      %1082 = vmatpush1.msra.mxu0 0.0
      %1083 = vmatprep.subr.mxu0 0.0
      %1084 = vmatpush1.msra.mxu0 0.0
      %1085 = vmatprep.subr.mxu0 0.0
      %1086 = vmatpush1.msra.mxu0 0.0
      %1087 = vmatprep.subr.mxu0 0.0
      %1088 = vmatpush1.msra.mxu0 0.0
      %1089 = vmatprep.subr.mxu0 0.0
      %1090 = vmatpush1.msra.mxu0 0.0
      %1091 = vmatprep.subr.mxu0 0.0
      %1092 = vmatpush1.msra.mxu0 0.0
      %1093 = vmatprep.subr.mxu0 0.0
      %1094 = vmatpush1.msra.mxu0 0.0
      %1095 = vmatprep.subr.mxu0 0.0
      %1096 = vmatpush1.msra.mxu0 0.0
      %1097 = vmatprep.subr.mxu0 0.0
      %1098 = vmatpush1.msra.mxu0 0.0
      %1099 = vmatprep.subr.mxu0 0.0
      %1100 = vmatpush1.msra.mxu0 0.0
      %1101 = vmatprep.subr.mxu0 0.0
      %1102 = vmatpush1.msra.mxu0 0.0
      %1103 = vmatprep.subr.mxu0 0.0
      %1104 = vmatpush1.msra.mxu0 0.0
      %1105 = vmatprep.subr.mxu0 0.0
      %1106 = vmatpush1.msra.mxu0 0.0
      %1107 = vmatprep.subr.mxu0 0.0
      %1108 = vmatpush1.msra.mxu0 0.0
      %1109 = vmatprep.subr.mxu0 0.0
      %1110 = vmatpush1.msra.mxu0 0.0
      %1111 = vmatprep.subr.mxu0 0.0
      %1112 = vmatpush1.msra.mxu0 0.0
      %1113 = vmatprep.subr.mxu0 0.0
      %1114 = vmatpush1.msra.mxu0 0.0
      %1115 = vmatprep.subr.mxu0 0.0
      %1116 = vmatpush1.msra.mxu0 0.0
      %1117 = vmatprep.subr.mxu0 0.0
      %1118 = vmatpush1.msra.mxu0 0.0
      %1119 = vmatprep.mubr.f32.mxu0 0.0
      %1120 = vmatmul.mubr.f32.gmra.mrb[0].mxu0 %v1001
      %v1121 = vpop.f32.mrb[0].mxu0
      %v1122 = vadd.f32 0.0, %v1121
      %v1123 = vpop.f32.mrb[0].mxu0
      %v1124 = vadd.f32 0.0, %v1123
      %1125 = vmatprep.mubr.f32.mxu0 0.0
      %1126 = vmatmul.mubr.f32.gmra.mrb[0].mxu0 %v1004
      %v1127 = vpop.f32.mrb[0].mxu0
      %v1128 = vadd.f32 0.0, %v1127
      %v1129 = vpop.f32.mrb[0].mxu0
      %v1130 = vadd.f32 0.0, %v1129
      %1131 = vmatprep.mubr.f32.mxu0 0.0
      %1132 = vmatmul.mubr.f32.gmra.mrb[0].mxu0 %v1007
      %v1133 = vpop.f32.mrb[0].mxu0
      %v1134 = vadd.f32 0.0, %v1133
      %v1135 = vpop.f32.mrb[0].mxu0
      %v1136 = vadd.f32 0.0, %v1135
      %1137 = vmatprep.mubr.f32.mxu0 0.0
      %1138 = vmatmul.mubr.f32.gmra.mrb[0].mxu0 %v1010
      %v1139 = vpop.f32.mrb[0].mxu0
      %v1140 = vadd.f32 0.0, %v1139
      %v1141 = vpop.f32.mrb[0].mxu0
      %v1142 = vadd.f32 0.0, %v1141
      %1143 = vmatprep.mubr.f32.mxu0 0.0
      %1144 = vmatmul.mubr.f32.gmra.mrb[0].mxu0 %v1013
      %v1145 = vpop.f32.mrb[0].mxu0
      %v1146 = vadd.f32 0.0, %v1145
      %v1147 = vpop.f32.mrb[0].mxu0
      %v1148 = vadd.f32 0.0, %v1147
      %1149 = vmatprep.mubr.f32.mxu0 0.0
      %1150 = vmatmul.mubr.f32.gmra.mrb[0].mxu0 %v1016
      %v1151 = vpop.f32.mrb[0].mxu0
      %v1152 = vadd.f32 0.0, %v1151
      %v1153 = vpop.f32.mrb[0].mxu0
      %v1154 = vadd.f32 0.0, %v1153
      %1155 = vmatprep.mubr.f32.mxu0 0.0
      %1156 = vmatmul.mubr.f32.gmra.mrb[0].mxu0 %v1019
      %v1157 = vpop.f32.mrb[0].mxu0
      %v1158 = vadd.f32 0.0, %v1157
      %v1159 = vpop.f32.mrb[0].mxu0
      %v1160 = vadd.f32 0.0, %v1159
      %1161 = vmatprep.mubr.f32.mxu0 0.0
      %1162 = vmatmul.mubr.f32.gmra.mrb[0].mxu0 %v1022
      %v1163 = vpop.f32.mrb[0].mxu0
      %v1164 = vadd.f32 0.0, %v1163
      %v1165 = vpop.f32.mrb[0].mxu0
      %v1166 = vadd.f32 0.0, %v1165
      %1167 = vmatprep.mubr.f32.mxu0 0.0
      %1168 = vmatmul.mubr.f32.gmra.mrb[0].mxu0 %v1025
      %v1169 = vpop.f32.mrb[0].mxu0
      %v1170 = vadd.f32 0.0, %v1169
      %v1171 = vpop.f32.mrb[0].mxu0
      %v1172 = vadd.f32 0.0, %v1171
      %1173 = vmatprep.mubr.f32.mxu0 0.0
      %1174 = vmatmul.mubr.f32.gmra.mrb[0].mxu0 %v1028
      %v1175 = vpop.f32.mrb[0].mxu0
      %v1176 = vadd.f32 0.0, %v1175
      %v1177 = vpop.f32.mrb[0].mxu0
      %v1178 = vadd.f32 0.0, %v1177
      %1179 = vmatprep.mubr.f32.mxu0 0.0
      %1180 = vmatmul.mubr.f32.gmra.mrb[0].mxu0 %v1031
      %v1181 = vpop.f32.mrb[0].mxu0
      %v1182 = vadd.f32 0.0, %v1181
      %v1183 = vpop.f32.mrb[0].mxu0
      %v1184 = vadd.f32 0.0, %v1183
      %1185 = vmatprep.mubr.f32.mxu0 0.0
      %1186 = vmatmul.mubr.f32.gmra.mrb[0].mxu0 %v1034
      %v1187 = vpop.f32.mrb[0].mxu0
      %v1188 = vadd.f32 0.0, %v1187
      %v1189 = vpop.f32.mrb[0].mxu0
      %v1190 = vadd.f32 0.0, %v1189
      %1191 = vmatprep.mubr.f32.mxu0 0.0
      %1192 = vmatmul.mubr.f32.gmra.mrb[0].mxu0 %v1037
      %v1193 = vpop.f32.mrb[0].mxu0
      %v1194 = vadd.f32 0.0, %v1193
      %v1195 = vpop.f32.mrb[0].mxu0
      %v1196 = vadd.f32 0.0, %v1195
      %1197 = vmatprep.mubr.f32.mxu0 0.0
      %1198 = vmatmul.mubr.f32.gmra.mrb[0].mxu0 %v1040
      %v1199 = vpop.f32.mrb[0].mxu0
      %v1200 = vadd.f32 0.0, %v1199
      %v1201 = vpop.f32.mrb[0].mxu0
      %v1202 = vadd.f32 0.0, %v1201
      %1203 = vmatprep.mubr.f32.mxu0 0.0
      %1204 = vmatmul.mubr.f32.gmra.mrb[0].mxu0 %v1043
      %v1205 = vpop.f32.mrb[0].mxu0
      %v1206 = vadd.f32 0.0, %v1205
      %v1207 = vpop.f32.mrb[0].mxu0
      %v1208 = vadd.f32 0.0, %v1207
      %1209 = vmatprep.mubr.f32.mxu0 0.0
      %1210 = vmatmul.mubr.f32.gmra.mrb[0].mxu0 %v1046
      %v1211 = vpop.f32.mrb[0].mxu0
      %v1212 = vadd.f32 0.0, %v1211
      %v1213 = vpop.f32.mrb[0].mxu0
      %v1214 = vadd.f32 0.0, %v1213
      %1215 = vdwg.mxu0
      %v1216 = vld [vmem:[%s5] sm:$0x1]
      %v1217 = vld [vmem:[%s6] sm:$0x1]
      %v1218 = vld [vmem:[%s458] sm:$0xff]
      %v1219 = vld [vmem:[%s458 + $0x8] sm:$0xff]
      %v1220 = vld [vmem:[%s458 + $0x10] sm:$0xff]
      %v1221 = vld [vmem:[%s458 + $0x18] sm:$0xff]
      %v1222 = vld [vmem:[%s458 + $0x20] sm:$0xff]
      %v1223 = vld [vmem:[%s458 + $0x28] sm:$0xff]
      %v1224 = vld [vmem:[%s458 + $0x30] sm:$0xff]
      %v1225 = vld [vmem:[%s458 + $0x38] sm:$0xff]
      %v1226 = vld [vmem:[%s458 + $0x40] sm:$0xff]
      %v1227 = vld [vmem:[%s458 + $0x48] sm:$0xff]
      %v1228 = vld [vmem:[%s458 + $0x50] sm:$0xff]
      %v1229 = vld [vmem:[%s458 + $0x58] sm:$0xff]
      %v1230 = vld [vmem:[%s458 + $0x60] sm:$0xff]
      %v1231 = vld [vmem:[%s458 + $0x68] sm:$0xff]
      %v1232 = vld [vmem:[%s458 + $0x70] sm:$0xff]
      %v1233 = vld [vmem:[%s458 + $0x78] sm:$0xff]
      %v1234 = vmul.f32 %v1218, 0.70710677
      %v1235 = vmul.f32 %v1219, 0.70710677
      %v1236 = vmul.f32 %v1220, 0.70710677
      %v1237 = vmul.f32 %v1221, 0.70710677
      %v1238 = vmul.f32 %v1222, 0.70710677
      %v1239 = vmul.f32 %v1223, 0.70710677
      %v1240 = vmul.f32 %v1224, 0.70710677
      %v1241 = vmul.f32 %v1225, 0.70710677
      %v1242 = vmul.f32 %v1226, 0.70710677
      %v1243 = vmul.f32 %v1227, 0.70710677
      %v1244 = vmul.f32 %v1228, 0.70710677
      %v1245 = vmul.f32 %v1229, 0.70710677
      %v1246 = vmul.f32 %v1230, 0.70710677
      %v1247 = vmul.f32 %v1231, 0.70710677
      %v1248 = vmul.f32 %v1232, 0.70710677
      %v1249 = vmul.f32 %v1233, 0.70710677
      %v1250 = vld [vmem:[%s469] sm:$0x3]
      %v1251 = vld [vmem:[%s3] sm:$0x1]
      %v1252 = vlaneseq
      %v1253 = vshrl.u32 %v1252, 7
      %v1254 = vadd.s32 %v1253, 8
      %v1255 = vadd.s32 %v1253, 16
      %v1256 = vadd.s32 %v1253, 24
      %v1257 = vadd.s32 %v1253, 32
      %v1258 = vadd.s32 %v1253, 40
      %v1259 = vadd.s32 %v1253, 48
      %v1260 = vadd.s32 %v1253, 56
      %v1261 = vadd.s32 %v1253, 64
      %v1262 = vadd.s32 %v1253, 72
      %v1263 = vadd.s32 %v1253, 80
      %v1264 = vadd.s32 %v1253, 88
      %v1265 = vadd.s32 %v1253, 96
      %v1266 = vadd.s32 %v1253, 104
      %v1267 = vadd.s32 %v1253, 112
      %v1268 = vadd.s32 %v1253, 120
      %s1269 = smul.u32 %s29, 128
      %v1270 = vstv %s1269
      %v1271 = vadd.s32 %v1270, %v1253
      %v1272 = vadd.s32 %v1270, %v1254
      %v1273 = vadd.s32 %v1270, %v1255
      %v1274 = vadd.s32 %v1270, %v1256
      %v1275 = vadd.s32 %v1270, %v1257
      %v1276 = vadd.s32 %v1270, %v1258
      %v1277 = vadd.s32 %v1270, %v1259
      %v1278 = vadd.s32 %v1270, %v1260
      %v1279 = vadd.s32 %v1270, %v1261
      %v1280 = vadd.s32 %v1270, %v1262
      %v1281 = vadd.s32 %v1270, %v1263
      %v1282 = vadd.s32 %v1270, %v1264
      %v1283 = vadd.s32 %v1270, %v1265
      %v1284 = vadd.s32 %v1270, %v1266
      %v1285 = vadd.s32 %v1270, %v1267
      %v1286 = vadd.s32 %v1270, %v1268
      %vm1287 = vcmp.lt.s32.totalorder %v1271, 300
      %vm1288 = vcmp.lt.s32.totalorder %v1272, 300
      %vm1289 = vcmp.lt.s32.totalorder %v1273, 300
      %vm1290 = vcmp.lt.s32.totalorder %v1274, 300
      %vm1291 = vcmp.lt.s32.totalorder %v1275, 300
      %vm1292 = vcmp.lt.s32.totalorder %v1276, 300
      %vm1293 = vcmp.lt.s32.totalorder %v1277, 300
      %vm1294 = vcmp.lt.s32.totalorder %v1278, 300
      %vm1295 = vcmp.lt.s32.totalorder %v1279, 300
      %vm1296 = vcmp.lt.s32.totalorder %v1280, 300
      %vm1297 = vcmp.lt.s32.totalorder %v1281, 300
      %vm1298 = vcmp.lt.s32.totalorder %v1282, 300
      %vm1299 = vcmp.lt.s32.totalorder %v1283, 300
      %vm1300 = vcmp.lt.s32.totalorder %v1284, 300
      %vm1301 = vcmp.lt.s32.totalorder %v1285, 300
      %vm1302 = vcmp.lt.s32.totalorder %v1286, 300
      %vm1303 = vcmask 130048
      %v1304 = vsel %vm1303, %v1122, 0.0
      %1305 = vadd.xlane.f32.xlu0 %v1304
      %v1306 = vpop.xlane.xlu0 %1305
      %v1307 = vsel %vm1303, %v1128, 0.0
      %1308 = vadd.xlane.f32.xlu0 %v1307
      %v1309 = vpop.xlane.xlu0 %1308
      %v1310 = vsel %vm1303, %v1134, 0.0
      %1311 = vadd.xlane.f32.xlu0 %v1310
      %v1312 = vpop.xlane.xlu0 %1311
      %v1313 = vsel %vm1303, %v1140, 0.0
      %1314 = vadd.xlane.f32.xlu0 %v1313
      %v1315 = vpop.xlane.xlu0 %1314
      %v1316 = vsel %vm1303, %v1146, 0.0
      %1317 = vadd.xlane.f32.xlu0 %v1316
      %v1318 = vpop.xlane.xlu0 %1317
      %v1319 = vsel %vm1303, %v1152, 0.0
      %1320 = vadd.xlane.f32.xlu0 %v1319
      %v1321 = vpop.xlane.xlu0 %1320
      %v1322 = vsel %vm1303, %v1158, 0.0
      %1323 = vadd.xlane.f32.xlu0 %v1322
      %v1324 = vpop.xlane.xlu0 %1323
      %v1325 = vsel %vm1303, %v1164, 0.0
      %1326 = vadd.xlane.f32.xlu0 %v1325
      %v1327 = vpop.xlane.xlu0 %1326
      %v1328 = vsel %vm1303, %v1170, 0.0
      %1329 = vadd.xlane.f32.xlu0 %v1328
      %v1330 = vpop.xlane.xlu0 %1329
      %v1331 = vsel %vm1303, %v1176, 0.0
      %1332 = vadd.xlane.f32.xlu0 %v1331
      %v1333 = vpop.xlane.xlu0 %1332
      %v1334 = vsel %vm1303, %v1182, 0.0
      %1335 = vadd.xlane.f32.xlu0 %v1334
      %v1336 = vpop.xlane.xlu0 %1335
      %v1337 = vsel %vm1303, %v1188, 0.0
      %1338 = vadd.xlane.f32.xlu0 %v1337
      %v1339 = vpop.xlane.xlu0 %1338
      %v1340 = vsel %vm1303, %v1194, 0.0
      %1341 = vadd.xlane.f32.xlu0 %v1340
      %v1342 = vpop.xlane.xlu0 %1341
      %v1343 = vsel %vm1303, %v1200, 0.0
      %1344 = vadd.xlane.f32.xlu0 %v1343
      %v1345 = vpop.xlane.xlu0 %1344
      %v1346 = vsel %vm1303, %v1206, 0.0
      %1347 = vadd.xlane.f32.xlu0 %v1346
      %v1348 = vpop.xlane.xlu0 %1347
      %v1349 = vsel %vm1303, %v1212, 0.0
      %1350 = vadd.xlane.f32.xlu0 %v1349
      %v1351 = vpop.xlane.xlu0 %1350
      %v1352 = vrcp.pop 16.0
      %v1353 = vmul.f32 %v1306, %v1352
      %v1354 = vmul.f32 %v1309, %v1352
      %v1355 = vmul.f32 %v1312, %v1352
      %v1356 = vmul.f32 %v1315, %v1352
      %v1357 = vmul.f32 %v1318, %v1352
      %v1358 = vmul.f32 %v1321, %v1352
      %v1359 = vmul.f32 %v1324, %v1352
      %v1360 = vmul.f32 %v1327, %v1352
      %v1361 = vmul.f32 %v1330, %v1352
      %v1362 = vmul.f32 %v1333, %v1352
      %v1363 = vmul.f32 %v1336, %v1352
      %v1364 = vmul.f32 %v1339, %v1352
      %v1365 = vmul.f32 %v1342, %v1352
      %v1366 = vmul.f32 %v1345, %v1352
      %v1367 = vmul.f32 %v1348, %v1352
      %v1368 = vmul.f32 %v1351, %v1352
      %v1369 = vsub.f32 %v1122, %v1353
      %v1370 = vsub.f32 %v1128, %v1354
      %v1371 = vsub.f32 %v1134, %v1355
      %v1372 = vsub.f32 %v1140, %v1356
      %v1373 = vsub.f32 %v1146, %v1357
      %v1374 = vsub.f32 %v1152, %v1358
      %v1375 = vsub.f32 %v1158, %v1359
      %v1376 = vsub.f32 %v1164, %v1360
      %v1377 = vsub.f32 %v1170, %v1361
      %v1378 = vsub.f32 %v1176, %v1362
      %v1379 = vsub.f32 %v1182, %v1363
      %v1380 = vsub.f32 %v1188, %v1364
      %v1381 = vsub.f32 %v1194, %v1365
      %v1382 = vsub.f32 %v1200, %v1366
      %v1383 = vsub.f32 %v1206, %v1367
      %v1384 = vsub.f32 %v1212, %v1368
      %v1385 = vmul.f32 %v1369, %v1369
      %v1386 = vmul.f32 %v1370, %v1370
      %v1387 = vmul.f32 %v1371, %v1371
      %v1388 = vmul.f32 %v1372, %v1372
      %v1389 = vmul.f32 %v1373, %v1373
      %v1390 = vmul.f32 %v1374, %v1374
      %v1391 = vmul.f32 %v1375, %v1375
      %v1392 = vmul.f32 %v1376, %v1376
      %v1393 = vmul.f32 %v1377, %v1377
      %v1394 = vmul.f32 %v1378, %v1378
      %v1395 = vmul.f32 %v1379, %v1379
      %v1396 = vmul.f32 %v1380, %v1380
      %v1397 = vmul.f32 %v1381, %v1381
      %v1398 = vmul.f32 %v1382, %v1382
      %v1399 = vmul.f32 %v1383, %v1383
      %v1400 = vmul.f32 %v1384, %v1384
      %v1401 = vsel %vm1303, %v1385, 0.0
      %1402 = vadd.xlane.f32.xlu0 %v1401
      %v1403 = vpop.xlane.xlu0 %1402
      %v1404 = vsel %vm1303, %v1386, 0.0
      %1405 = vadd.xlane.f32.xlu0 %v1404
      %v1406 = vpop.xlane.xlu0 %1405
      %v1407 = vsel %vm1303, %v1387, 0.0
      %1408 = vadd.xlane.f32.xlu0 %v1407
      %v1409 = vpop.xlane.xlu0 %1408
      %v1410 = vsel %vm1303, %v1388, 0.0
      %1411 = vadd.xlane.f32.xlu0 %v1410
      %v1412 = vpop.xlane.xlu0 %1411
      %v1413 = vsel %vm1303, %v1389, 0.0
      %1414 = vadd.xlane.f32.xlu0 %v1413
      %v1415 = vpop.xlane.xlu0 %1414
      %v1416 = vsel %vm1303, %v1390, 0.0
      %1417 = vadd.xlane.f32.xlu0 %v1416
      %v1418 = vpop.xlane.xlu0 %1417
      %v1419 = vsel %vm1303, %v1391, 0.0
      %1420 = vadd.xlane.f32.xlu0 %v1419
      %v1421 = vpop.xlane.xlu0 %1420
      %v1422 = vsel %vm1303, %v1392, 0.0
      %1423 = vadd.xlane.f32.xlu0 %v1422
      %v1424 = vpop.xlane.xlu0 %1423
      %v1425 = vsel %vm1303, %v1393, 0.0
      %1426 = vadd.xlane.f32.xlu0 %v1425
      %v1427 = vpop.xlane.xlu0 %1426
      %v1428 = vsel %vm1303, %v1394, 0.0
      %1429 = vadd.xlane.f32.xlu0 %v1428
      %v1430 = vpop.xlane.xlu0 %1429
      %v1431 = vsel %vm1303, %v1395, 0.0
      %1432 = vadd.xlane.f32.xlu0 %v1431
      %v1433 = vpop.xlane.xlu0 %1432
      %v1434 = vsel %vm1303, %v1396, 0.0
      %1435 = vadd.xlane.f32.xlu0 %v1434
      %v1436 = vpop.xlane.xlu0 %1435
      %v1437 = vsel %vm1303, %v1397, 0.0
      %1438 = vadd.xlane.f32.xlu0 %v1437
      %v1439 = vpop.xlane.xlu0 %1438
      %v1440 = vsel %vm1303, %v1398, 0.0
      %1441 = vadd.xlane.f32.xlu0 %v1440
      %v1442 = vpop.xlane.xlu0 %1441
      %v1443 = vsel %vm1303, %v1399, 0.0
      %1444 = vadd.xlane.f32.xlu0 %v1443
      %v1445 = vpop.xlane.xlu0 %1444
      %v1446 = vsel %vm1303, %v1400, 0.0
      %1447 = vadd.xlane.f32.xlu0 %v1446
      %v1448 = vpop.xlane.xlu0 %1447
      %v1449 = vmul.f32 %v1403, %v1352
      %v1450 = vmul.f32 %v1406, %v1352
      %v1451 = vmul.f32 %v1409, %v1352
      %v1452 = vmul.f32 %v1412, %v1352
      %v1453 = vmul.f32 %v1415, %v1352
      %v1454 = vmul.f32 %v1418, %v1352
      %v1455 = vmul.f32 %v1421, %v1352
      %v1456 = vmul.f32 %v1424, %v1352
      %v1457 = vmul.f32 %v1427, %v1352
      %v1458 = vmul.f32 %v1430, %v1352
      %v1459 = vmul.f32 %v1433, %v1352
      %v1460 = vmul.f32 %v1436, %v1352
      %v1461 = vmul.f32 %v1439, %v1352
      %v1462 = vmul.f32 %v1442, %v1352
      %v1463 = vmul.f32 %v1445, %v1352
      %v1464 = vmul.f32 %v1448, %v1352
      %v1465 = vadd.f32 %v1449, 1e-05
      %v1466 = vadd.f32 %v1450, 1e-05
      %v1467 = vadd.f32 %v1451, 1e-05
      %v1468 = vadd.f32 %v1452, 1e-05
      %v1469 = vadd.f32 %v1453, 1e-05
      %v1470 = vadd.f32 %v1454, 1e-05
      %v1471 = vadd.f32 %v1455, 1e-05
      %v1472 = vadd.f32 %v1456, 1e-05
      %v1473 = vadd.f32 %v1457, 1e-05
      %v1474 = vadd.f32 %v1458, 1e-05
      %v1475 = vadd.f32 %v1459, 1e-05
      %v1476 = vadd.f32 %v1460, 1e-05
      %v1477 = vadd.f32 %v1461, 1e-05
      %v1478 = vadd.f32 %v1462, 1e-05
      %v1479 = vadd.f32 %v1463, 1e-05
      %v1480 = vadd.f32 %v1464, 1e-05
      %v1481 = vrsqrt.pop %v1465
      %v1482 = vrsqrt.pop %v1466
      %v1483 = vrsqrt.pop %v1467
      %v1484 = vrsqrt.pop %v1468
      %v1485 = vrsqrt.pop %v1469
      %v1486 = vrsqrt.pop %v1470
      %v1487 = vrsqrt.pop %v1471
      %v1488 = vrsqrt.pop %v1472
      %v1489 = vrsqrt.pop %v1473
      %v1490 = vrsqrt.pop %v1474
      %v1491 = vrsqrt.pop %v1475
      %v1492 = vrsqrt.pop %v1476
      %v1493 = vrsqrt.pop %v1477
      %v1494 = vrsqrt.pop %v1478
      %v1495 = vrsqrt.pop %v1479
      %v1496 = vrsqrt.pop %v1480
      %v1497 = vmul.f32 %v1369, %v1481
      %v1498 = vmul.f32 %v1370, %v1482
      %v1499 = vmul.f32 %v1371, %v1483
      %v1500 = vmul.f32 %v1372, %v1484
      %v1501 = vmul.f32 %v1373, %v1485
      %v1502 = vmul.f32 %v1374, %v1486
      %v1503 = vmul.f32 %v1375, %v1487
      %v1504 = vmul.f32 %v1376, %v1488
      %v1505 = vmul.f32 %v1377, %v1489
      %v1506 = vmul.f32 %v1378, %v1490
      %v1507 = vmul.f32 %v1379, %v1491
      %v1508 = vmul.f32 %v1380, %v1492
      %v1509 = vmul.f32 %v1381, %v1493
      %v1510 = vmul.f32 %v1382, %v1494
      %v1511 = vmul.f32 %v1383, %v1495
      %v1512 = vmul.f32 %v1384, %v1496
      %v1514 = vlaneseq
      %v1515 = vshrl.u32 %v1514, 7
      %v1516 = vsub.s32 0, %v1515
      %v1517 = vrot.slane %v1216, %v1516
      %v1519 = vmul.f32 %v1497, %v1517
      %v1520 = vmul.f32 %v1498, %v1517
      %v1521 = vmul.f32 %v1499, %v1517
      %v1522 = vmul.f32 %v1500, %v1517
      %v1523 = vmul.f32 %v1501, %v1517
      %v1524 = vmul.f32 %v1502, %v1517
      %v1525 = vmul.f32 %v1503, %v1517
      %v1526 = vmul.f32 %v1504, %v1517
      %v1527 = vmul.f32 %v1505, %v1517
      %v1528 = vmul.f32 %v1506, %v1517
      %v1529 = vmul.f32 %v1507, %v1517
      %v1530 = vmul.f32 %v1508, %v1517
      %v1531 = vmul.f32 %v1509, %v1517
      %v1532 = vmul.f32 %v1510, %v1517
      %v1533 = vmul.f32 %v1511, %v1517
      %v1534 = vmul.f32 %v1512, %v1517
      %v1536 = vlaneseq
      %v1537 = vshrl.u32 %v1536, 7
      %v1538 = vsub.s32 0, %v1537
      %v1539 = vrot.slane %v1217, %v1538
      %v1541 = vadd.f32 %v1519, %v1539
      %v1542 = vadd.f32 %v1520, %v1539
      %v1543 = vadd.f32 %v1521, %v1539
      %v1544 = vadd.f32 %v1522, %v1539
      %v1545 = vadd.f32 %v1523, %v1539
      %v1546 = vadd.f32 %v1524, %v1539
      %v1547 = vadd.f32 %v1525, %v1539
      %v1548 = vadd.f32 %v1526, %v1539
      %v1549 = vadd.f32 %v1527, %v1539
      %v1550 = vadd.f32 %v1528, %v1539
      %v1551 = vadd.f32 %v1529, %v1539
      %v1552 = vadd.f32 %v1530, %v1539
      %v1553 = vadd.f32 %v1531, %v1539
      %v1554 = vadd.f32 %v1532, %v1539
      %v1555 = vadd.f32 %v1533, %v1539
      %v1556 = vadd.f32 %v1534, %v1539
      %v1557 = vsel %vm1287, 1, 0
      %v1558 = vsel %vm1288, 1, 0
      %v1559 = vsel %vm1289, 1, 0
      %v1560 = vsel %vm1290, 1, 0
      %v1561 = vsel %vm1291, 1, 0
      %v1562 = vsel %vm1292, 1, 0
      %v1563 = vsel %vm1293, 1, 0
      %v1564 = vsel %vm1294, 1, 0
      %v1565 = vsel %vm1295, 1, 0
      %v1566 = vsel %vm1296, 1, 0
      %v1567 = vsel %vm1297, 1, 0
      %v1568 = vsel %vm1298, 1, 0
      %v1569 = vsel %vm1299, 1, 0
      %v1570 = vsel %vm1300, 1, 0
      %v1571 = vsel %vm1301, 1, 0
      %v1572 = vsel %vm1302, 1, 0
      %vm1573 = vcmp.eq.s32.totalorder %v1557, 1
      %vm1574 = vcmp.eq.s32.totalorder %v1558, 1
      %vm1575 = vcmp.eq.s32.totalorder %v1559, 1
      %vm1576 = vcmp.eq.s32.totalorder %v1560, 1
      %vm1577 = vcmp.eq.s32.totalorder %v1561, 1
      %vm1578 = vcmp.eq.s32.totalorder %v1562, 1
      %vm1579 = vcmp.eq.s32.totalorder %v1563, 1
      %vm1580 = vcmp.eq.s32.totalorder %v1564, 1
      %vm1581 = vcmp.eq.s32.totalorder %v1565, 1
      %vm1582 = vcmp.eq.s32.totalorder %v1566, 1
      %vm1583 = vcmp.eq.s32.totalorder %v1567, 1
      %vm1584 = vcmp.eq.s32.totalorder %v1568, 1
      %vm1585 = vcmp.eq.s32.totalorder %v1569, 1
      %vm1586 = vcmp.eq.s32.totalorder %v1570, 1
      %vm1587 = vcmp.eq.s32.totalorder %v1571, 1
      %vm1588 = vcmp.eq.s32.totalorder %v1572, 1
      %v1589 = vsel %vm1573, %v1541, 0.0
      %v1590 = vsel %vm1574, %v1542, 0.0
      %v1591 = vsel %vm1575, %v1543, 0.0
      %v1592 = vsel %vm1576, %v1544, 0.0
      %v1593 = vsel %vm1577, %v1545, 0.0
      %v1594 = vsel %vm1578, %v1546, 0.0
      %v1595 = vsel %vm1579, %v1547, 0.0
      %v1596 = vsel %vm1580, %v1548, 0.0
      %v1597 = vsel %vm1581, %v1549, 0.0
      %v1598 = vsel %vm1582, %v1550, 0.0
      %v1599 = vsel %vm1583, %v1551, 0.0
      %v1600 = vsel %vm1584, %v1552, 0.0
      %v1601 = vsel %vm1585, %v1553, 0.0
      %v1602 = vsel %vm1586, %v1554, 0.0
      %v1603 = vsel %vm1587, %v1555, 0.0
      %v1604 = vsel %vm1588, %v1556, 0.0
      %1605 = vst.msk [vmem:[#allocation3] sm:$0xff] %vm1303, %v1589
      %1606 = vst.msk [vmem:[#allocation3 + $0x8] sm:$0xff] %vm1303, %v1590
      %1607 = vst.msk [vmem:[#allocation3 + $0x10] sm:$0xff] %vm1303, %v1591
      %1608 = vst.msk [vmem:[#allocation3 + $0x18] sm:$0xff] %vm1303, %v1592
      %1609 = vst.msk [vmem:[#allocation3 + $0x20] sm:$0xff] %vm1303, %v1593
      %1610 = vst.msk [vmem:[#allocation3 + $0x28] sm:$0xff] %vm1303, %v1594
      %1611 = vst.msk [vmem:[#allocation3 + $0x30] sm:$0xff] %vm1303, %v1595
      %1612 = vst.msk [vmem:[#allocation3 + $0x38] sm:$0xff] %vm1303, %v1596
      %1613 = vst.msk [vmem:[#allocation3 + $0x40] sm:$0xff] %vm1303, %v1597
      %1614 = vst.msk [vmem:[#allocation3 + $0x48] sm:$0xff] %vm1303, %v1598
      %1615 = vst.msk [vmem:[#allocation3 + $0x50] sm:$0xff] %vm1303, %v1599
      %1616 = vst.msk [vmem:[#allocation3 + $0x58] sm:$0xff] %vm1303, %v1600
      %1617 = vst.msk [vmem:[#allocation3 + $0x60] sm:$0xff] %vm1303, %v1601
      %1618 = vst.msk [vmem:[#allocation3 + $0x68] sm:$0xff] %vm1303, %v1602
      %1619 = vst.msk [vmem:[#allocation3 + $0x70] sm:$0xff] %vm1303, %v1603
      %1620 = vst.msk [vmem:[#allocation3 + $0x78] sm:$0xff] %vm1303, %v1604
      %v1622 = vlaneseq
      %v1623 = vshrl.u32 %v1622, 7
      %v1624 = vsub.s32 0, %v1623
      %v1625 = vrot.slane %v1251, %v1624
      %v1627 = vsub.f32 %v1234, %v1625
      %v1628 = vsub.f32 %v1235, %v1625
      %v1629 = vsub.f32 %v1236, %v1625
      %v1630 = vsub.f32 %v1237, %v1625
      %v1631 = vsub.f32 %v1238, %v1625
      %v1632 = vsub.f32 %v1239, %v1625
      %v1633 = vsub.f32 %v1240, %v1625
      %v1634 = vsub.f32 %v1241, %v1625
      %v1635 = vsub.f32 %v1242, %v1625
      %v1636 = vsub.f32 %v1243, %v1625
      %v1637 = vsub.f32 %v1244, %v1625
      %v1638 = vsub.f32 %v1245, %v1625
      %v1639 = vsub.f32 %v1246, %v1625
      %v1640 = vsub.f32 %v1247, %v1625
      %v1641 = vsub.f32 %v1248, %v1625
      %v1642 = vsub.f32 %v1249, %v1625
      %1644 = vset.pattern.permute.xlu0 0
      %1645 = vperm.xlu0 %1644, %v1627
      %v1646 = vpop.permute.xlu0 %1645
      %1649 = vset.pattern.permute.xlu0 0
      %1650 = vperm.xlu0 %1649, %v1628
      %v1651 = vpop.permute.xlu0 %1650
      %1654 = vset.pattern.permute.xlu0 0
      %1655 = vperm.xlu0 %1654, %v1629
      %v1656 = vpop.permute.xlu0 %1655
      %1659 = vset.pattern.permute.xlu0 0
      %1660 = vperm.xlu0 %1659, %v1630
      %v1661 = vpop.permute.xlu0 %1660
      %1664 = vset.pattern.permute.xlu0 0
      %1665 = vperm.xlu0 %1664, %v1631
      %v1666 = vpop.permute.xlu0 %1665
      %1669 = vset.pattern.permute.xlu0 0
      %1670 = vperm.xlu0 %1669, %v1632
      %v1671 = vpop.permute.xlu0 %1670
      %1674 = vset.pattern.permute.xlu0 0
      %1675 = vperm.xlu0 %1674, %v1633
      %v1676 = vpop.permute.xlu0 %1675
      %1679 = vset.pattern.permute.xlu0 0
      %1680 = vperm.xlu0 %1679, %v1634
      %v1681 = vpop.permute.xlu0 %1680
      %1684 = vset.pattern.permute.xlu0 0
      %1685 = vperm.xlu0 %1684, %v1635
      %v1686 = vpop.permute.xlu0 %1685
      %1689 = vset.pattern.permute.xlu0 0
      %1690 = vperm.xlu0 %1689, %v1636
      %v1691 = vpop.permute.xlu0 %1690
      %1694 = vset.pattern.permute.xlu0 0
      %1695 = vperm.xlu0 %1694, %v1637
      %v1696 = vpop.permute.xlu0 %1695
      %1699 = vset.pattern.permute.xlu0 0
      %1700 = vperm.xlu0 %1699, %v1638
      %v1701 = vpop.permute.xlu0 %1700
      %1704 = vset.pattern.permute.xlu0 0
      %1705 = vperm.xlu0 %1704, %v1639
      %v1706 = vpop.permute.xlu0 %1705
      %1709 = vset.pattern.permute.xlu0 0
      %1710 = vperm.xlu0 %1709, %v1640
      %v1711 = vpop.permute.xlu0 %1710
      %1714 = vset.pattern.permute.xlu0 0
      %1715 = vperm.xlu0 %1714, %v1641
      %v1716 = vpop.permute.xlu0 %1715
      %1719 = vset.pattern.permute.xlu0 0
      %1720 = vperm.xlu0 %1719, %v1642
      %v1721 = vpop.permute.xlu0 %1720
      %v1723 = vlaneseq
      %v1724 = vshrl.u32 %v1723, 7
      %v1725 = vsub.s32 0, %v1724
      %v1726 = vrot.slane %v1250, %v1725
      %v1727 = vsub.f32 %v1646, %v1726
      %v1728 = vsub.f32 %v1651, %v1726
      %v1729 = vsub.f32 %v1656, %v1726
      %v1730 = vsub.f32 %v1661, %v1726
      %v1731 = vsub.f32 %v1666, %v1726
      %v1732 = vsub.f32 %v1671, %v1726
      %v1733 = vsub.f32 %v1676, %v1726
      %v1734 = vsub.f32 %v1681, %v1726
      %v1735 = vsub.f32 %v1686, %v1726
      %v1736 = vsub.f32 %v1691, %v1726
      %v1737 = vsub.f32 %v1696, %v1726
      %v1738 = vsub.f32 %v1701, %v1726
      %v1739 = vsub.f32 %v1706, %v1726
      %v1740 = vsub.f32 %v1711, %v1726
      %v1741 = vsub.f32 %v1716, %v1726
      %v1742 = vsub.f32 %v1721, %v1726
      %v1743 = vmul.f32 %v1727, %v1727
      %v1744 = vmul.f32 %v1728, %v1728
      %v1745 = vmul.f32 %v1729, %v1729
      %v1746 = vmul.f32 %v1730, %v1730
      %v1747 = vmul.f32 %v1731, %v1731
      %v1748 = vmul.f32 %v1732, %v1732
      %v1749 = vmul.f32 %v1733, %v1733
      %v1750 = vmul.f32 %v1734, %v1734
      %v1751 = vmul.f32 %v1735, %v1735
      %v1752 = vmul.f32 %v1736, %v1736
      %v1753 = vmul.f32 %v1737, %v1737
      %v1754 = vmul.f32 %v1738, %v1738
      %v1755 = vmul.f32 %v1739, %v1739
      %v1756 = vmul.f32 %v1740, %v1740
      %v1757 = vmul.f32 %v1741, %v1741
      %v1758 = vmul.f32 %v1742, %v1742
      %1759 = vset.pattern.permute.xlu0 1
      %1760 = vperm.xlu0 %1759, %v1627
      %v1761 = vpop.permute.xlu0 %1760
      %1763 = vset.pattern.permute.xlu0 1
      %1764 = vperm.xlu0 %1763, %v1628
      %v1765 = vpop.permute.xlu0 %1764
      %1767 = vset.pattern.permute.xlu0 1
      %1768 = vperm.xlu0 %1767, %v1629
      %v1769 = vpop.permute.xlu0 %1768
      %1771 = vset.pattern.permute.xlu0 1
      %1772 = vperm.xlu0 %1771, %v1630
      %v1773 = vpop.permute.xlu0 %1772
      %1775 = vset.pattern.permute.xlu0 1
      %1776 = vperm.xlu0 %1775, %v1631
      %v1777 = vpop.permute.xlu0 %1776
      %1779 = vset.pattern.permute.xlu0 1
      %1780 = vperm.xlu0 %1779, %v1632
      %v1781 = vpop.permute.xlu0 %1780
      %1783 = vset.pattern.permute.xlu0 1
      %1784 = vperm.xlu0 %1783, %v1633
      %v1785 = vpop.permute.xlu0 %1784
      %1787 = vset.pattern.permute.xlu0 1
      %1788 = vperm.xlu0 %1787, %v1634
      %v1789 = vpop.permute.xlu0 %1788
      %1791 = vset.pattern.permute.xlu0 1
      %1792 = vperm.xlu0 %1791, %v1635
      %v1793 = vpop.permute.xlu0 %1792
      %1795 = vset.pattern.permute.xlu0 1
      %1796 = vperm.xlu0 %1795, %v1636
      %v1797 = vpop.permute.xlu0 %1796
      %1799 = vset.pattern.permute.xlu0 1
      %1800 = vperm.xlu0 %1799, %v1637
      %v1801 = vpop.permute.xlu0 %1800
      %1803 = vset.pattern.permute.xlu0 1
      %1804 = vperm.xlu0 %1803, %v1638
      %v1805 = vpop.permute.xlu0 %1804
      %1807 = vset.pattern.permute.xlu0 1
      %1808 = vperm.xlu0 %1807, %v1639
      %v1809 = vpop.permute.xlu0 %1808
      %1811 = vset.pattern.permute.xlu0 1
      %1812 = vperm.xlu0 %1811, %v1640
      %v1813 = vpop.permute.xlu0 %1812
      %1815 = vset.pattern.permute.xlu0 1
      %1816 = vperm.xlu0 %1815, %v1641
      %v1817 = vpop.permute.xlu0 %1816
      %1819 = vset.pattern.permute.xlu0 1
      %1820 = vperm.xlu0 %1819, %v1642
      %v1821 = vpop.permute.xlu0 %1820
      %v1823 = vlaneseq
      %v1824 = vshrl.u32 %v1823, 7
      %v1825 = vsub.s32 1, %v1824
      %v1826 = vrot.slane %v1250, %v1825
      %v1827 = vsub.f32 %v1761, %v1826
      %v1828 = vsub.f32 %v1765, %v1826
      %v1829 = vsub.f32 %v1769, %v1826
      %v1830 = vsub.f32 %v1773, %v1826
      %v1831 = vsub.f32 %v1777, %v1826
      %v1832 = vsub.f32 %v1781, %v1826
      %v1833 = vsub.f32 %v1785, %v1826
      %v1834 = vsub.f32 %v1789, %v1826
      %v1835 = vsub.f32 %v1793, %v1826
      %v1836 = vsub.f32 %v1797, %v1826
      %v1837 = vsub.f32 %v1801, %v1826
      %v1838 = vsub.f32 %v1805, %v1826
      %v1839 = vsub.f32 %v1809, %v1826
      %v1840 = vsub.f32 %v1813, %v1826
      %v1841 = vsub.f32 %v1817, %v1826
      %v1842 = vsub.f32 %v1821, %v1826
      %v1843 = vmul.f32 %v1827, %v1827
      %v1844 = vmul.f32 %v1828, %v1828
      %v1845 = vmul.f32 %v1829, %v1829
      %v1846 = vmul.f32 %v1830, %v1830
      %v1847 = vmul.f32 %v1831, %v1831
      %v1848 = vmul.f32 %v1832, %v1832
      %v1849 = vmul.f32 %v1833, %v1833
      %v1850 = vmul.f32 %v1834, %v1834
      %v1851 = vmul.f32 %v1835, %v1835
      %v1852 = vmul.f32 %v1836, %v1836
      %v1853 = vmul.f32 %v1837, %v1837
      %v1854 = vmul.f32 %v1838, %v1838
      %v1855 = vmul.f32 %v1839, %v1839
      %v1856 = vmul.f32 %v1840, %v1840
      %v1857 = vmul.f32 %v1841, %v1841
      %v1858 = vmul.f32 %v1842, %v1842
      %v1859 = vadd.f32 %v1743, %v1843
      %v1860 = vadd.f32 %v1744, %v1844
      %v1861 = vadd.f32 %v1745, %v1845
      %v1862 = vadd.f32 %v1746, %v1846
      %v1863 = vadd.f32 %v1747, %v1847
      %v1864 = vadd.f32 %v1748, %v1848
      %v1865 = vadd.f32 %v1749, %v1849
      %v1866 = vadd.f32 %v1750, %v1850
      %v1867 = vadd.f32 %v1751, %v1851
      %v1868 = vadd.f32 %v1752, %v1852
      %v1869 = vadd.f32 %v1753, %v1853
      %v1870 = vadd.f32 %v1754, %v1854
      %v1871 = vadd.f32 %v1755, %v1855
      %v1872 = vadd.f32 %v1756, %v1856
      %v1873 = vadd.f32 %v1757, %v1857
      %v1874 = vadd.f32 %v1758, %v1858
      %v1875 = vsub.f32 0.0, %v1859
      %v1876 = vsub.f32 0.0, %v1860
      %v1877 = vsub.f32 0.0, %v1861
      %v1878 = vsub.f32 0.0, %v1862
      %v1879 = vsub.f32 0.0, %v1863
      %v1880 = vsub.f32 0.0, %v1864
      %v1881 = vsub.f32 0.0, %v1865
      %v1882 = vsub.f32 0.0, %v1866
      %v1883 = vsub.f32 0.0, %v1867
      %v1884 = vsub.f32 0.0, %v1868
      %v1885 = vsub.f32 0.0, %v1869
      %v1886 = vsub.f32 0.0, %v1870
      %v1887 = vsub.f32 0.0, %v1871
      %v1888 = vsub.f32 0.0, %v1872
      %v1889 = vsub.f32 0.0, %v1873
      %v1890 = vsub.f32 0.0, %v1874
      %v1891 = vmul.f32 %v1875, 1.442695
      %v1892 = vpow.pop %v1891
      %v1893 = vmul.f32 %v1876, 1.442695
      %v1894 = vpow.pop %v1893
      %v1895 = vmul.f32 %v1877, 1.442695
      %v1896 = vpow.pop %v1895
      %v1897 = vmul.f32 %v1878, 1.442695
      %v1898 = vpow.pop %v1897
      %v1899 = vmul.f32 %v1879, 1.442695
      %v1900 = vpow.pop %v1899
      %v1901 = vmul.f32 %v1880, 1.442695
      %v1902 = vpow.pop %v1901
      %v1903 = vmul.f32 %v1881, 1.442695
      %v1904 = vpow.pop %v1903
      %v1905 = vmul.f32 %v1882, 1.442695
      %v1906 = vpow.pop %v1905
      %v1907 = vmul.f32 %v1883, 1.442695
      %v1908 = vpow.pop %v1907
      %v1909 = vmul.f32 %v1884, 1.442695
      %v1910 = vpow.pop %v1909
      %v1911 = vmul.f32 %v1885, 1.442695
      %v1912 = vpow.pop %v1911
      %v1913 = vmul.f32 %v1886, 1.442695
      %v1914 = vpow.pop %v1913
      %v1915 = vmul.f32 %v1887, 1.442695
      %v1916 = vpow.pop %v1915
      %v1917 = vmul.f32 %v1888, 1.442695
      %v1918 = vpow.pop %v1917
      %v1919 = vmul.f32 %v1889, 1.442695
      %v1920 = vpow.pop %v1919
      %v1921 = vmul.f32 %v1890, 1.442695
      %v1922 = vpow.pop %v1921
      %1923 = vst [vmem:[#allocation2] sm:$0xff] %v1892
      %1924 = vst [vmem:[#allocation2 + $0x48] sm:$0xff] %v1894
      %1925 = vst [vmem:[#allocation2 + $0x90] sm:$0xff] %v1896
      %1926 = vst [vmem:[#allocation2 + $0xd8] sm:$0xff] %v1898
      %1927 = vst [vmem:[#allocation2 + $0x120] sm:$0xff] %v1900
      %1928 = vst [vmem:[#allocation2 + $0x168] sm:$0xff] %v1902
      %1929 = vst [vmem:[#allocation2 + $0x1b0] sm:$0xff] %v1904
      %1930 = vst [vmem:[#allocation2 + $0x1f8] sm:$0xff] %v1906
      %1931 = vst [vmem:[#allocation2 + $0x240] sm:$0xff] %v1908
      %1932 = vst [vmem:[#allocation2 + $0x288] sm:$0xff] %v1910
      %1933 = vst [vmem:[#allocation2 + $0x2d0] sm:$0xff] %v1912
      %1934 = vst [vmem:[#allocation2 + $0x318] sm:$0xff] %v1914
      %1935 = vst [vmem:[#allocation2 + $0x360] sm:$0xff] %v1916
      %1936 = vst [vmem:[#allocation2 + $0x3a8] sm:$0xff] %v1918
      %1937 = vst [vmem:[#allocation2 + $0x3f0] sm:$0xff] %v1920
      %1938 = vst [vmem:[#allocation2 + $0x438] sm:$0xff] %v1922
      %1955 = vrot.lane.b32.xlu0 %v1122, 112
      %v1956 = vpop.permute.xlu0 %1955
      %1957 = vrot.lane.b32.xlu0 %v1128, 112
      %v1958 = vpop.permute.xlu0 %1957
      %1959 = vrot.lane.b32.xlu0 %v1134, 112
      %v1960 = vpop.permute.xlu0 %1959
      %1961 = vrot.lane.b32.xlu0 %v1140, 112
      %v1962 = vpop.permute.xlu0 %1961
      %1963 = vrot.lane.b32.xlu0 %v1146, 112
      %v1964 = vpop.permute.xlu0 %1963
      %1965 = vrot.lane.b32.xlu0 %v1152, 112
      %v1966 = vpop.permute.xlu0 %1965
      %1967 = vrot.lane.b32.xlu0 %v1158, 112
      %v1968 = vpop.permute.xlu0 %1967
      %1969 = vrot.lane.b32.xlu0 %v1164, 112
      %v1970 = vpop.permute.xlu0 %1969
      %1971 = vrot.lane.b32.xlu0 %v1170, 112
      %v1972 = vpop.permute.xlu0 %1971
      %1973 = vrot.lane.b32.xlu0 %v1176, 112
      %v1974 = vpop.permute.xlu0 %1973
      %1975 = vrot.lane.b32.xlu0 %v1182, 112
      %v1976 = vpop.permute.xlu0 %1975
      %1977 = vrot.lane.b32.xlu0 %v1188, 112
      %v1978 = vpop.permute.xlu0 %1977
      %1979 = vrot.lane.b32.xlu0 %v1194, 112
      %v1980 = vpop.permute.xlu0 %1979
      %1981 = vrot.lane.b32.xlu0 %v1200, 112
      %v1982 = vpop.permute.xlu0 %1981
      %1983 = vrot.lane.b32.xlu0 %v1206, 112
      %v1984 = vpop.permute.xlu0 %1983
      %1985 = vrot.lane.b32.xlu0 %v1212, 112
      %v1986 = vpop.permute.xlu0 %1985
      %v2003 = vsel %vm1303, %v1956, 0.0
      %2004 = vadd.xlane.f32.xlu0 %v2003
      %v2005 = vpop.xlane.xlu0 %2004
      %v2006 = vsel %vm1303, %v1958, 0.0
      %2007 = vadd.xlane.f32.xlu0 %v2006
      %v2008 = vpop.xlane.xlu0 %2007
      %v2009 = vsel %vm1303, %v1960, 0.0
      %2010 = vadd.xlane.f32.xlu0 %v2009
      %v2011 = vpop.xlane.xlu0 %2010
      %v2012 = vsel %vm1303, %v1962, 0.0
      %2013 = vadd.xlane.f32.xlu0 %v2012
      %v2014 = vpop.xlane.xlu0 %2013
      %v2015 = vsel %vm1303, %v1964, 0.0
      %2016 = vadd.xlane.f32.xlu0 %v2015
      %v2017 = vpop.xlane.xlu0 %2016
      %v2018 = vsel %vm1303, %v1966, 0.0
      %2019 = vadd.xlane.f32.xlu0 %v2018
      %v2020 = vpop.xlane.xlu0 %2019
      %v2021 = vsel %vm1303, %v1968, 0.0
      %2022 = vadd.xlane.f32.xlu0 %v2021
      %v2023 = vpop.xlane.xlu0 %2022
      %v2024 = vsel %vm1303, %v1970, 0.0
      %2025 = vadd.xlane.f32.xlu0 %v2024
      %v2026 = vpop.xlane.xlu0 %2025
      %v2027 = vsel %vm1303, %v1972, 0.0
      %2028 = vadd.xlane.f32.xlu0 %v2027
      %v2029 = vpop.xlane.xlu0 %2028
      %v2030 = vsel %vm1303, %v1974, 0.0
      %2031 = vadd.xlane.f32.xlu0 %v2030
      %v2032 = vpop.xlane.xlu0 %2031
      %v2033 = vsel %vm1303, %v1976, 0.0
      %2034 = vadd.xlane.f32.xlu0 %v2033
      %v2035 = vpop.xlane.xlu0 %2034
      %v2036 = vsel %vm1303, %v1978, 0.0
      %2037 = vadd.xlane.f32.xlu0 %v2036
      %v2038 = vpop.xlane.xlu0 %2037
      %v2039 = vsel %vm1303, %v1980, 0.0
      %2040 = vadd.xlane.f32.xlu0 %v2039
      %v2041 = vpop.xlane.xlu0 %2040
      %v2042 = vsel %vm1303, %v1982, 0.0
      %2043 = vadd.xlane.f32.xlu0 %v2042
      %v2044 = vpop.xlane.xlu0 %2043
      %v2045 = vsel %vm1303, %v1984, 0.0
      %2046 = vadd.xlane.f32.xlu0 %v2045
      %v2047 = vpop.xlane.xlu0 %2046
      %v2048 = vsel %vm1303, %v1986, 0.0
      %2049 = vadd.xlane.f32.xlu0 %v2048
      %v2050 = vpop.xlane.xlu0 %2049
      %v2051 = vmul.f32 %v2005, %v1352
      %v2052 = vmul.f32 %v2008, %v1352
      %v2053 = vmul.f32 %v2011, %v1352
      %v2054 = vmul.f32 %v2014, %v1352
      %v2055 = vmul.f32 %v2017, %v1352
      %v2056 = vmul.f32 %v2020, %v1352
      %v2057 = vmul.f32 %v2023, %v1352
      %v2058 = vmul.f32 %v2026, %v1352
      %v2059 = vmul.f32 %v2029, %v1352
      %v2060 = vmul.f32 %v2032, %v1352
      %v2061 = vmul.f32 %v2035, %v1352
      %v2062 = vmul.f32 %v2038, %v1352
      %v2063 = vmul.f32 %v2041, %v1352
      %v2064 = vmul.f32 %v2044, %v1352
      %v2065 = vmul.f32 %v2047, %v1352
      %v2066 = vmul.f32 %v2050, %v1352
      %v2067 = vsub.f32 %v1122, %v2051
      %v2068 = vsub.f32 %v1128, %v2052
      %v2069 = vsub.f32 %v1134, %v2053
      %v2070 = vsub.f32 %v1140, %v2054
      %v2071 = vsub.f32 %v1146, %v2055
      %v2072 = vsub.f32 %v1152, %v2056
      %v2073 = vsub.f32 %v1158, %v2057
      %v2074 = vsub.f32 %v1164, %v2058
      %v2075 = vsub.f32 %v1170, %v2059
      %v2076 = vsub.f32 %v1176, %v2060
      %v2077 = vsub.f32 %v1182, %v2061
      %v2078 = vsub.f32 %v1188, %v2062
      %v2079 = vsub.f32 %v1194, %v2063
      %v2080 = vsub.f32 %v1200, %v2064
      %v2081 = vsub.f32 %v1206, %v2065
      %v2082 = vsub.f32 %v1212, %v2066
      %v2083 = vmul.f32 %v2067, %v2067
      %v2084 = vmul.f32 %v2068, %v2068
      %v2085 = vmul.f32 %v2069, %v2069
      %v2086 = vmul.f32 %v2070, %v2070
      %v2087 = vmul.f32 %v2071, %v2071
      %v2088 = vmul.f32 %v2072, %v2072
      %v2089 = vmul.f32 %v2073, %v2073
      %v2090 = vmul.f32 %v2074, %v2074
      %v2091 = vmul.f32 %v2075, %v2075
      %v2092 = vmul.f32 %v2076, %v2076
      %v2093 = vmul.f32 %v2077, %v2077
      %v2094 = vmul.f32 %v2078, %v2078
      %v2095 = vmul.f32 %v2079, %v2079
      %v2096 = vmul.f32 %v2080, %v2080
      %v2097 = vmul.f32 %v2081, %v2081
      %v2098 = vmul.f32 %v2082, %v2082
      %2115 = vrot.lane.b32.xlu0 %v2083, 112
      %v2116 = vpop.permute.xlu0 %2115
      %2117 = vrot.lane.b32.xlu0 %v2084, 112
      %v2118 = vpop.permute.xlu0 %2117
      %2119 = vrot.lane.b32.xlu0 %v2085, 112
      %v2120 = vpop.permute.xlu0 %2119
      %2121 = vrot.lane.b32.xlu0 %v2086, 112
      %v2122 = vpop.permute.xlu0 %2121
      %2123 = vrot.lane.b32.xlu0 %v2087, 112
      %v2124 = vpop.permute.xlu0 %2123
      %2125 = vrot.lane.b32.xlu0 %v2088, 112
      %v2126 = vpop.permute.xlu0 %2125
      %2127 = vrot.lane.b32.xlu0 %v2089, 112
      %v2128 = vpop.permute.xlu0 %2127
      %2129 = vrot.lane.b32.xlu0 %v2090, 112
      %v2130 = vpop.permute.xlu0 %2129
      %2131 = vrot.lane.b32.xlu0 %v2091, 112
      %v2132 = vpop.permute.xlu0 %2131
      %2133 = vrot.lane.b32.xlu0 %v2092, 112
      %v2134 = vpop.permute.xlu0 %2133
      %2135 = vrot.lane.b32.xlu0 %v2093, 112
      %v2136 = vpop.permute.xlu0 %2135
      %2137 = vrot.lane.b32.xlu0 %v2094, 112
      %v2138 = vpop.permute.xlu0 %2137
      %2139 = vrot.lane.b32.xlu0 %v2095, 112
      %v2140 = vpop.permute.xlu0 %2139
      %2141 = vrot.lane.b32.xlu0 %v2096, 112
      %v2142 = vpop.permute.xlu0 %2141
      %2143 = vrot.lane.b32.xlu0 %v2097, 112
      %v2144 = vpop.permute.xlu0 %2143
      %2145 = vrot.lane.b32.xlu0 %v2098, 112
      %v2146 = vpop.permute.xlu0 %2145
      %v2163 = vsel %vm1303, %v2116, 0.0
      %2164 = vadd.xlane.f32.xlu0 %v2163
      %v2165 = vpop.xlane.xlu0 %2164
      %v2166 = vsel %vm1303, %v2118, 0.0
      %2167 = vadd.xlane.f32.xlu0 %v2166
      %v2168 = vpop.xlane.xlu0 %2167
      %v2169 = vsel %vm1303, %v2120, 0.0
      %2170 = vadd.xlane.f32.xlu0 %v2169
      %v2171 = vpop.xlane.xlu0 %2170
      %v2172 = vsel %vm1303, %v2122, 0.0
      %2173 = vadd.xlane.f32.xlu0 %v2172
      %v2174 = vpop.xlane.xlu0 %2173
      %v2175 = vsel %vm1303, %v2124, 0.0
      %2176 = vadd.xlane.f32.xlu0 %v2175
      %v2177 = vpop.xlane.xlu0 %2176
      %v2178 = vsel %vm1303, %v2126, 0.0
      %2179 = vadd.xlane.f32.xlu0 %v2178
      %v2180 = vpop.xlane.xlu0 %2179
      %v2181 = vsel %vm1303, %v2128, 0.0
      %2182 = vadd.xlane.f32.xlu0 %v2181
      %v2183 = vpop.xlane.xlu0 %2182
      %v2184 = vsel %vm1303, %v2130, 0.0
      %2185 = vadd.xlane.f32.xlu0 %v2184
      %v2186 = vpop.xlane.xlu0 %2185
      %v2187 = vsel %vm1303, %v2132, 0.0
      %2188 = vadd.xlane.f32.xlu0 %v2187
      %v2189 = vpop.xlane.xlu0 %2188
      %v2190 = vsel %vm1303, %v2134, 0.0
      %2191 = vadd.xlane.f32.xlu0 %v2190
      %v2192 = vpop.xlane.xlu0 %2191
      %v2193 = vsel %vm1303, %v2136, 0.0
      %2194 = vadd.xlane.f32.xlu0 %v2193
      %v2195 = vpop.xlane.xlu0 %2194
      %v2196 = vsel %vm1303, %v2138, 0.0
      %2197 = vadd.xlane.f32.xlu0 %v2196
      %v2198 = vpop.xlane.xlu0 %2197
      %v2199 = vsel %vm1303, %v2140, 0.0
      %2200 = vadd.xlane.f32.xlu0 %v2199
      %v2201 = vpop.xlane.xlu0 %2200
      %v2202 = vsel %vm1303, %v2142, 0.0
      %2203 = vadd.xlane.f32.xlu0 %v2202
      %v2204 = vpop.xlane.xlu0 %2203
      %v2205 = vsel %vm1303, %v2144, 0.0
      %2206 = vadd.xlane.f32.xlu0 %v2205
      %v2207 = vpop.xlane.xlu0 %2206
      %v2208 = vsel %vm1303, %v2146, 0.0
      %2209 = vadd.xlane.f32.xlu0 %v2208
      %v2210 = vpop.xlane.xlu0 %2209
      %v2211 = vmul.f32 %v2165, %v1352
      %v2212 = vmul.f32 %v2168, %v1352
      %v2213 = vmul.f32 %v2171, %v1352
      %v2214 = vmul.f32 %v2174, %v1352
      %v2215 = vmul.f32 %v2177, %v1352
      %v2216 = vmul.f32 %v2180, %v1352
      %v2217 = vmul.f32 %v2183, %v1352
      %v2218 = vmul.f32 %v2186, %v1352
      %v2219 = vmul.f32 %v2189, %v1352
      %v2220 = vmul.f32 %v2192, %v1352
      %v2221 = vmul.f32 %v2195, %v1352
      %v2222 = vmul.f32 %v2198, %v1352
      %v2223 = vmul.f32 %v2201, %v1352
      %v2224 = vmul.f32 %v2204, %v1352
      %v2225 = vmul.f32 %v2207, %v1352
      %v2226 = vmul.f32 %v2210, %v1352
      %v2227 = vadd.f32 %v2211, 1e-05
      %v2228 = vadd.f32 %v2212, 1e-05
      %v2229 = vadd.f32 %v2213, 1e-05
      %v2230 = vadd.f32 %v2214, 1e-05
      %v2231 = vadd.f32 %v2215, 1e-05
      %v2232 = vadd.f32 %v2216, 1e-05
      %v2233 = vadd.f32 %v2217, 1e-05
      %v2234 = vadd.f32 %v2218, 1e-05
      %v2235 = vadd.f32 %v2219, 1e-05
      %v2236 = vadd.f32 %v2220, 1e-05
      %v2237 = vadd.f32 %v2221, 1e-05
      %v2238 = vadd.f32 %v2222, 1e-05
      %v2239 = vadd.f32 %v2223, 1e-05
      %v2240 = vadd.f32 %v2224, 1e-05
      %v2241 = vadd.f32 %v2225, 1e-05
      %v2242 = vadd.f32 %v2226, 1e-05
      %v2243 = vrsqrt.pop %v2227
      %v2244 = vrsqrt.pop %v2228
      %v2245 = vrsqrt.pop %v2229
      %v2246 = vrsqrt.pop %v2230
      %v2247 = vrsqrt.pop %v2231
      %v2248 = vrsqrt.pop %v2232
      %v2249 = vrsqrt.pop %v2233
      %v2250 = vrsqrt.pop %v2234
      %v2251 = vrsqrt.pop %v2235
      %v2252 = vrsqrt.pop %v2236
      %v2253 = vrsqrt.pop %v2237
      %v2254 = vrsqrt.pop %v2238
      %v2255 = vrsqrt.pop %v2239
      %v2256 = vrsqrt.pop %v2240
      %v2257 = vrsqrt.pop %v2241
      %v2258 = vrsqrt.pop %v2242
      %v2259 = vmul.f32 %v2067, %v2243
      %v2260 = vmul.f32 %v2068, %v2244
      %v2261 = vmul.f32 %v2069, %v2245
      %v2262 = vmul.f32 %v2070, %v2246
      %v2263 = vmul.f32 %v2071, %v2247
      %v2264 = vmul.f32 %v2072, %v2248
      %v2265 = vmul.f32 %v2073, %v2249
      %v2266 = vmul.f32 %v2074, %v2250
      %v2267 = vmul.f32 %v2075, %v2251
      %v2268 = vmul.f32 %v2076, %v2252
      %v2269 = vmul.f32 %v2077, %v2253
      %v2270 = vmul.f32 %v2078, %v2254
      %v2271 = vmul.f32 %v2079, %v2255
      %v2272 = vmul.f32 %v2080, %v2256
      %v2273 = vmul.f32 %v2081, %v2257
      %v2274 = vmul.f32 %v2082, %v2258
      %2275 = vrot.lane.b32.xlu0 %v1517, 16
      %v2276 = vpop.permute.xlu0 %2275
      %v2278 = vmul.f32 %v2259, %v2276
      %v2279 = vmul.f32 %v2260, %v2276
      %v2280 = vmul.f32 %v2261, %v2276
      %v2281 = vmul.f32 %v2262, %v2276
      %v2282 = vmul.f32 %v2263, %v2276
      %v2283 = vmul.f32 %v2264, %v2276
      %v2284 = vmul.f32 %v2265, %v2276
      %v2285 = vmul.f32 %v2266, %v2276
      %v2286 = vmul.f32 %v2267, %v2276
      %v2287 = vmul.f32 %v2268, %v2276
      %v2288 = vmul.f32 %v2269, %v2276
      %v2289 = vmul.f32 %v2270, %v2276
      %v2290 = vmul.f32 %v2271, %v2276
      %v2291 = vmul.f32 %v2272, %v2276
      %v2292 = vmul.f32 %v2273, %v2276
      %v2293 = vmul.f32 %v2274, %v2276
      %2294 = vrot.lane.b32.xlu0 %v1539, 16
      %v2295 = vpop.permute.xlu0 %2294
      %v2297 = vadd.f32 %v2278, %v2295
      %v2298 = vadd.f32 %v2279, %v2295
      %v2299 = vadd.f32 %v2280, %v2295
      %v2300 = vadd.f32 %v2281, %v2295
      %v2301 = vadd.f32 %v2282, %v2295
      %v2302 = vadd.f32 %v2283, %v2295
      %v2303 = vadd.f32 %v2284, %v2295
      %v2304 = vadd.f32 %v2285, %v2295
      %v2305 = vadd.f32 %v2286, %v2295
      %v2306 = vadd.f32 %v2287, %v2295
      %v2307 = vadd.f32 %v2288, %v2295
      %v2308 = vadd.f32 %v2289, %v2295
      %v2309 = vadd.f32 %v2290, %v2295
      %v2310 = vadd.f32 %v2291, %v2295
      %v2311 = vadd.f32 %v2292, %v2295
      %v2312 = vadd.f32 %v2293, %v2295
      %v2313 = vsel %vm1573, %v2297, 0.0
      %v2314 = vsel %vm1574, %v2298, 0.0
      %v2315 = vsel %vm1575, %v2299, 0.0
      %v2316 = vsel %vm1576, %v2300, 0.0
      %v2317 = vsel %vm1577, %v2301, 0.0
      %v2318 = vsel %vm1578, %v2302, 0.0
      %v2319 = vsel %vm1579, %v2303, 0.0
      %v2320 = vsel %vm1580, %v2304, 0.0
      %v2321 = vsel %vm1581, %v2305, 0.0
      %v2322 = vsel %vm1582, %v2306, 0.0
      %v2323 = vsel %vm1583, %v2307, 0.0
      %v2324 = vsel %vm1584, %v2308, 0.0
      %v2325 = vsel %vm1585, %v2309, 0.0
      %v2326 = vsel %vm1586, %v2310, 0.0
      %v2327 = vsel %vm1587, %v2311, 0.0
      %v2328 = vsel %vm1588, %v2312, 0.0
      %2345 = vrot.lane.b32.xlu0 %v2313, 112
      %v2346 = vpop.permute.xlu0 %2345
      %2347 = vrot.lane.b32.xlu0 %v2314, 112
      %v2348 = vpop.permute.xlu0 %2347
      %2349 = vrot.lane.b32.xlu0 %v2315, 112
      %v2350 = vpop.permute.xlu0 %2349
      %2351 = vrot.lane.b32.xlu0 %v2316, 112
      %v2352 = vpop.permute.xlu0 %2351
      %2353 = vrot.lane.b32.xlu0 %v2317, 112
      %v2354 = vpop.permute.xlu0 %2353
      %2355 = vrot.lane.b32.xlu0 %v2318, 112
      %v2356 = vpop.permute.xlu0 %2355
      %2357 = vrot.lane.b32.xlu0 %v2319, 112
      %v2358 = vpop.permute.xlu0 %2357
      %2359 = vrot.lane.b32.xlu0 %v2320, 112
      %v2360 = vpop.permute.xlu0 %2359
      %2361 = vrot.lane.b32.xlu0 %v2321, 112
      %v2362 = vpop.permute.xlu0 %2361
      %2363 = vrot.lane.b32.xlu0 %v2322, 112
      %v2364 = vpop.permute.xlu0 %2363
      %2365 = vrot.lane.b32.xlu0 %v2323, 112
      %v2366 = vpop.permute.xlu0 %2365
      %2367 = vrot.lane.b32.xlu0 %v2324, 112
      %v2368 = vpop.permute.xlu0 %2367
      %2369 = vrot.lane.b32.xlu0 %v2325, 112
      %v2370 = vpop.permute.xlu0 %2369
      %2371 = vrot.lane.b32.xlu0 %v2326, 112
      %v2372 = vpop.permute.xlu0 %2371
      %2373 = vrot.lane.b32.xlu0 %v2327, 112
      %v2374 = vpop.permute.xlu0 %2373
      %2375 = vrot.lane.b32.xlu0 %v2328, 112
      %v2376 = vpop.permute.xlu0 %2375
      %2393 = vst.msk [vmem:[#allocation3 + $0x80] sm:$0xff] %vm1303, %v2346
      %2394 = vst.msk [vmem:[#allocation3 + $0x88] sm:$0xff] %vm1303, %v2348
      %2395 = vst.msk [vmem:[#allocation3 + $0x90] sm:$0xff] %vm1303, %v2350
      %2396 = vst.msk [vmem:[#allocation3 + $0x98] sm:$0xff] %vm1303, %v2352
      %2397 = vst.msk [vmem:[#allocation3 + $0xa0] sm:$0xff] %vm1303, %v2354
      %2398 = vst.msk [vmem:[#allocation3 + $0xa8] sm:$0xff] %vm1303, %v2356
      %2399 = vst.msk [vmem:[#allocation3 + $0xb0] sm:$0xff] %vm1303, %v2358
      %2400 = vst.msk [vmem:[#allocation3 + $0xb8] sm:$0xff] %vm1303, %v2360
      %2401 = vst.msk [vmem:[#allocation3 + $0xc0] sm:$0xff] %vm1303, %v2362
      %2402 = vst.msk [vmem:[#allocation3 + $0xc8] sm:$0xff] %vm1303, %v2364
      %2403 = vst.msk [vmem:[#allocation3 + $0xd0] sm:$0xff] %vm1303, %v2366
      %2404 = vst.msk [vmem:[#allocation3 + $0xd8] sm:$0xff] %vm1303, %v2368
      %2405 = vst.msk [vmem:[#allocation3 + $0xe0] sm:$0xff] %vm1303, %v2370
      %2406 = vst.msk [vmem:[#allocation3 + $0xe8] sm:$0xff] %vm1303, %v2372
      %2407 = vst.msk [vmem:[#allocation3 + $0xf0] sm:$0xff] %vm1303, %v2374
      %2408 = vst.msk [vmem:[#allocation3 + $0xf8] sm:$0xff] %vm1303, %v2376
      %2409 = vrot.lane.b32.xlu0 %v1625, 126
      %v2410 = vpop.permute.xlu0 %2409
      %v2412 = vsub.f32 %v1234, %v2410
      %v2413 = vsub.f32 %v1235, %v2410
      %v2414 = vsub.f32 %v1236, %v2410
      %v2415 = vsub.f32 %v1237, %v2410
      %v2416 = vsub.f32 %v1238, %v2410
      %v2417 = vsub.f32 %v1239, %v2410
      %v2418 = vsub.f32 %v1240, %v2410
      %v2419 = vsub.f32 %v1241, %v2410
      %v2420 = vsub.f32 %v1242, %v2410
      %v2421 = vsub.f32 %v1243, %v2410
      %v2422 = vsub.f32 %v1244, %v2410
      %v2423 = vsub.f32 %v1245, %v2410
      %v2424 = vsub.f32 %v1246, %v2410
      %v2425 = vsub.f32 %v1247, %v2410
      %v2426 = vsub.f32 %v1248, %v2410
      %v2427 = vsub.f32 %v1249, %v2410
      %2429 = vset.pattern.permute.xlu0 0
      %2430 = vperm.xlu0 %2429, %v2412
      %v2431 = vpop.permute.xlu0 %2430
      %2434 = vset.pattern.permute.xlu0 0
      %2435 = vperm.xlu0 %2434, %v2413
      %v2436 = vpop.permute.xlu0 %2435
      %2439 = vset.pattern.permute.xlu0 0
      %2440 = vperm.xlu0 %2439, %v2414
      %v2441 = vpop.permute.xlu0 %2440
      %2444 = vset.pattern.permute.xlu0 0
      %2445 = vperm.xlu0 %2444, %v2415
      %v2446 = vpop.permute.xlu0 %2445
      %2449 = vset.pattern.permute.xlu0 0
      %2450 = vperm.xlu0 %2449, %v2416
      %v2451 = vpop.permute.xlu0 %2450
      %2454 = vset.pattern.permute.xlu0 0
      %2455 = vperm.xlu0 %2454, %v2417
      %v2456 = vpop.permute.xlu0 %2455
      %2459 = vset.pattern.permute.xlu0 0
      %2460 = vperm.xlu0 %2459, %v2418
      %v2461 = vpop.permute.xlu0 %2460
      %2464 = vset.pattern.permute.xlu0 0
      %2465 = vperm.xlu0 %2464, %v2419
      %v2466 = vpop.permute.xlu0 %2465
      %2469 = vset.pattern.permute.xlu0 0
      %2470 = vperm.xlu0 %2469, %v2420
      %v2471 = vpop.permute.xlu0 %2470
      %2474 = vset.pattern.permute.xlu0 0
      %2475 = vperm.xlu0 %2474, %v2421
      %v2476 = vpop.permute.xlu0 %2475
      %2479 = vset.pattern.permute.xlu0 0
      %2480 = vperm.xlu0 %2479, %v2422
      %v2481 = vpop.permute.xlu0 %2480
      %2484 = vset.pattern.permute.xlu0 0
      %2485 = vperm.xlu0 %2484, %v2423
      %v2486 = vpop.permute.xlu0 %2485
      %2489 = vset.pattern.permute.xlu0 0
      %2490 = vperm.xlu0 %2489, %v2424
      %v2491 = vpop.permute.xlu0 %2490
      %2494 = vset.pattern.permute.xlu0 0
      %2495 = vperm.xlu0 %2494, %v2425
      %v2496 = vpop.permute.xlu0 %2495
      %2499 = vset.pattern.permute.xlu0 0
      %2500 = vperm.xlu0 %2499, %v2426
      %v2501 = vpop.permute.xlu0 %2500
      %2504 = vset.pattern.permute.xlu0 0
      %2505 = vperm.xlu0 %2504, %v2427
      %v2506 = vpop.permute.xlu0 %2505
      %v2508 = vsub.f32 %v2431, %v1726
      %v2509 = vsub.f32 %v2436, %v1726
      %v2510 = vsub.f32 %v2441, %v1726
      %v2511 = vsub.f32 %v2446, %v1726
      %v2512 = vsub.f32 %v2451, %v1726
      %v2513 = vsub.f32 %v2456, %v1726
      %v2514 = vsub.f32 %v2461, %v1726
      %v2515 = vsub.f32 %v2466, %v1726
      %v2516 = vsub.f32 %v2471, %v1726
      %v2517 = vsub.f32 %v2476, %v1726
      %v2518 = vsub.f32 %v2481, %v1726
      %v2519 = vsub.f32 %v2486, %v1726
      %v2520 = vsub.f32 %v2491, %v1726
      %v2521 = vsub.f32 %v2496, %v1726
      %v2522 = vsub.f32 %v2501, %v1726
      %v2523 = vsub.f32 %v2506, %v1726
      %v2524 = vmul.f32 %v2508, %v2508
      %v2525 = vmul.f32 %v2509, %v2509
      %v2526 = vmul.f32 %v2510, %v2510
      %v2527 = vmul.f32 %v2511, %v2511
      %v2528 = vmul.f32 %v2512, %v2512
      %v2529 = vmul.f32 %v2513, %v2513
      %v2530 = vmul.f32 %v2514, %v2514
      %v2531 = vmul.f32 %v2515, %v2515
      %v2532 = vmul.f32 %v2516, %v2516
      %v2533 = vmul.f32 %v2517, %v2517
      %v2534 = vmul.f32 %v2518, %v2518
      %v2535 = vmul.f32 %v2519, %v2519
      %v2536 = vmul.f32 %v2520, %v2520
      %v2537 = vmul.f32 %v2521, %v2521
      %v2538 = vmul.f32 %v2522, %v2522
      %v2539 = vmul.f32 %v2523, %v2523
      %2540 = vset.pattern.permute.xlu0 1
      %2541 = vperm.xlu0 %2540, %v2412
      %v2542 = vpop.permute.xlu0 %2541
      %2544 = vset.pattern.permute.xlu0 1
      %2545 = vperm.xlu0 %2544, %v2413
      %v2546 = vpop.permute.xlu0 %2545
      %2548 = vset.pattern.permute.xlu0 1
      %2549 = vperm.xlu0 %2548, %v2414
      %v2550 = vpop.permute.xlu0 %2549
      %2552 = vset.pattern.permute.xlu0 1
      %2553 = vperm.xlu0 %2552, %v2415
      %v2554 = vpop.permute.xlu0 %2553
      %2556 = vset.pattern.permute.xlu0 1
      %2557 = vperm.xlu0 %2556, %v2416
      %v2558 = vpop.permute.xlu0 %2557
      %2560 = vset.pattern.permute.xlu0 1
      %2561 = vperm.xlu0 %2560, %v2417
      %v2562 = vpop.permute.xlu0 %2561
      %2564 = vset.pattern.permute.xlu0 1
      %2565 = vperm.xlu0 %2564, %v2418
      %v2566 = vpop.permute.xlu0 %2565
      %2568 = vset.pattern.permute.xlu0 1
      %2569 = vperm.xlu0 %2568, %v2419
      %v2570 = vpop.permute.xlu0 %2569
      %2572 = vset.pattern.permute.xlu0 1
      %2573 = vperm.xlu0 %2572, %v2420
      %v2574 = vpop.permute.xlu0 %2573
      %2576 = vset.pattern.permute.xlu0 1
      %2577 = vperm.xlu0 %2576, %v2421
      %v2578 = vpop.permute.xlu0 %2577
      %2580 = vset.pattern.permute.xlu0 1
      %2581 = vperm.xlu0 %2580, %v2422
      %v2582 = vpop.permute.xlu0 %2581
      %2584 = vset.pattern.permute.xlu0 1
      %2585 = vperm.xlu0 %2584, %v2423
      %v2586 = vpop.permute.xlu0 %2585
      %2588 = vset.pattern.permute.xlu0 1
      %2589 = vperm.xlu0 %2588, %v2424
      %v2590 = vpop.permute.xlu0 %2589
      %2592 = vset.pattern.permute.xlu0 1
      %2593 = vperm.xlu0 %2592, %v2425
      %v2594 = vpop.permute.xlu0 %2593
      %2596 = vset.pattern.permute.xlu0 1
      %2597 = vperm.xlu0 %2596, %v2426
      %v2598 = vpop.permute.xlu0 %2597
      %2600 = vset.pattern.permute.xlu0 1
      %2601 = vperm.xlu0 %2600, %v2427
      %v2602 = vpop.permute.xlu0 %2601
      %v2604 = vsub.f32 %v2542, %v1826
      %v2605 = vsub.f32 %v2546, %v1826
      %v2606 = vsub.f32 %v2550, %v1826
      %v2607 = vsub.f32 %v2554, %v1826
      %v2608 = vsub.f32 %v2558, %v1826
      %v2609 = vsub.f32 %v2562, %v1826
      %v2610 = vsub.f32 %v2566, %v1826
      %v2611 = vsub.f32 %v2570, %v1826
      %v2612 = vsub.f32 %v2574, %v1826
      %v2613 = vsub.f32 %v2578, %v1826
      %v2614 = vsub.f32 %v2582, %v1826
      %v2615 = vsub.f32 %v2586, %v1826
      %v2616 = vsub.f32 %v2590, %v1826
      %v2617 = vsub.f32 %v2594, %v1826
      %v2618 = vsub.f32 %v2598, %v1826
      %v2619 = vsub.f32 %v2602, %v1826
      %v2620 = vmul.f32 %v2604, %v2604
      %v2621 = vmul.f32 %v2605, %v2605
      %v2622 = vmul.f32 %v2606, %v2606
      %v2623 = vmul.f32 %v2607, %v2607
      %v2624 = vmul.f32 %v2608, %v2608
      %v2625 = vmul.f32 %v2609, %v2609
      %v2626 = vmul.f32 %v2610, %v2610
      %v2627 = vmul.f32 %v2611, %v2611
      %v2628 = vmul.f32 %v2612, %v2612
      %v2629 = vmul.f32 %v2613, %v2613
      %v2630 = vmul.f32 %v2614, %v2614
      %v2631 = vmul.f32 %v2615, %v2615
      %v2632 = vmul.f32 %v2616, %v2616
      %v2633 = vmul.f32 %v2617, %v2617
      %v2634 = vmul.f32 %v2618, %v2618
      %v2635 = vmul.f32 %v2619, %v2619
      %v2636 = vadd.f32 %v2524, %v2620
      %v2637 = vadd.f32 %v2525, %v2621
      %v2638 = vadd.f32 %v2526, %v2622
      %v2639 = vadd.f32 %v2527, %v2623
      %v2640 = vadd.f32 %v2528, %v2624
      %v2641 = vadd.f32 %v2529, %v2625
      %v2642 = vadd.f32 %v2530, %v2626
      %v2643 = vadd.f32 %v2531, %v2627
      %v2644 = vadd.f32 %v2532, %v2628
      %v2645 = vadd.f32 %v2533, %v2629
      %v2646 = vadd.f32 %v2534, %v2630
      %v2647 = vadd.f32 %v2535, %v2631
      %v2648 = vadd.f32 %v2536, %v2632
      %v2649 = vadd.f32 %v2537, %v2633
      %v2650 = vadd.f32 %v2538, %v2634
      %v2651 = vadd.f32 %v2539, %v2635
      %v2652 = vsub.f32 0.0, %v2636
      %v2653 = vsub.f32 0.0, %v2637
      %v2654 = vsub.f32 0.0, %v2638
      %v2655 = vsub.f32 0.0, %v2639
      %v2656 = vsub.f32 0.0, %v2640
      %v2657 = vsub.f32 0.0, %v2641
      %v2658 = vsub.f32 0.0, %v2642
      %v2659 = vsub.f32 0.0, %v2643
      %v2660 = vsub.f32 0.0, %v2644
      %v2661 = vsub.f32 0.0, %v2645
      %v2662 = vsub.f32 0.0, %v2646
      %v2663 = vsub.f32 0.0, %v2647
      %v2664 = vsub.f32 0.0, %v2648
      %v2665 = vsub.f32 0.0, %v2649
      %v2666 = vsub.f32 0.0, %v2650
      %v2667 = vsub.f32 0.0, %v2651
      %v2668 = vmul.f32 %v2652, 1.442695
      %v2669 = vpow.pop %v2668
      %v2670 = vmul.f32 %v2653, 1.442695
      %v2671 = vpow.pop %v2670
      %v2672 = vmul.f32 %v2654, 1.442695
      %v2673 = vpow.pop %v2672
      %v2674 = vmul.f32 %v2655, 1.442695
      %v2675 = vpow.pop %v2674
      %v2676 = vmul.f32 %v2656, 1.442695
      %v2677 = vpow.pop %v2676
      %v2678 = vmul.f32 %v2657, 1.442695
      %v2679 = vpow.pop %v2678
      %v2680 = vmul.f32 %v2658, 1.442695
      %v2681 = vpow.pop %v2680
      %v2682 = vmul.f32 %v2659, 1.442695
      %v2683 = vpow.pop %v2682
      %v2684 = vmul.f32 %v2660, 1.442695
      %v2685 = vpow.pop %v2684
      %v2686 = vmul.f32 %v2661, 1.442695
      %v2687 = vpow.pop %v2686
      %v2688 = vmul.f32 %v2662, 1.442695
      %v2689 = vpow.pop %v2688
      %v2690 = vmul.f32 %v2663, 1.442695
      %v2691 = vpow.pop %v2690
      %v2692 = vmul.f32 %v2664, 1.442695
      %v2693 = vpow.pop %v2692
      %v2694 = vmul.f32 %v2665, 1.442695
      %v2695 = vpow.pop %v2694
      %v2696 = vmul.f32 %v2666, 1.442695
      %v2697 = vpow.pop %v2696
      %v2698 = vmul.f32 %v2667, 1.442695
      %v2699 = vpow.pop %v2698
      %2700 = vst [vmem:[#allocation2 + $0x8] sm:$0xff] %v2669
      %2701 = vst [vmem:[#allocation2 + $0x50] sm:$0xff] %v2671
      %2702 = vst [vmem:[#allocation2 + $0x98] sm:$0xff] %v2673
      %2703 = vst [vmem:[#allocation2 + $0xe0] sm:$0xff] %v2675
      %2704 = vst [vmem:[#allocation2 + $0x128] sm:$0xff] %v2677
      %2705 = vst [vmem:[#allocation2 + $0x170] sm:$0xff] %v2679
      %2706 = vst [vmem:[#allocation2 + $0x1b8] sm:$0xff] %v2681
      %2707 = vst [vmem:[#allocation2 + $0x200] sm:$0xff] %v2683
      %2708 = vst [vmem:[#allocation2 + $0x248] sm:$0xff] %v2685
      %2709 = vst [vmem:[#allocation2 + $0x290] sm:$0xff] %v2687
      %2710 = vst [vmem:[#allocation2 + $0x2d8] sm:$0xff] %v2689
      %2711 = vst [vmem:[#allocation2 + $0x320] sm:$0xff] %v2691
      %2712 = vst [vmem:[#allocation2 + $0x368] sm:$0xff] %v2693
      %2713 = vst [vmem:[#allocation2 + $0x3b0] sm:$0xff] %v2695
      %2714 = vst [vmem:[#allocation2 + $0x3f8] sm:$0xff] %v2697
      %2715 = vst [vmem:[#allocation2 + $0x440] sm:$0xff] %v2699
      %2716 = vrot.lane.b32.xlu0 %v1122, 96
      %v2717 = vpop.permute.xlu0 %2716
      %2718 = vrot.lane.b32.xlu0 %v1128, 96
      %v2719 = vpop.permute.xlu0 %2718
      %2720 = vrot.lane.b32.xlu0 %v1134, 96
      %v2721 = vpop.permute.xlu0 %2720
      %2722 = vrot.lane.b32.xlu0 %v1140, 96
      %v2723 = vpop.permute.xlu0 %2722
      %2724 = vrot.lane.b32.xlu0 %v1146, 96
      %v2725 = vpop.permute.xlu0 %2724
      %2726 = vrot.lane.b32.xlu0 %v1152, 96
      %v2727 = vpop.permute.xlu0 %2726
      %2728 = vrot.lane.b32.xlu0 %v1158, 96
      %v2729 = vpop.permute.xlu0 %2728
      %2730 = vrot.lane.b32.xlu0 %v1164, 96
      %v2731 = vpop.permute.xlu0 %2730
      %2732 = vrot.lane.b32.xlu0 %v1170, 96
      %v2733 = vpop.permute.xlu0 %2732
      %2734 = vrot.lane.b32.xlu0 %v1176, 96
      %v2735 = vpop.permute.xlu0 %2734
      %2736 = vrot.lane.b32.xlu0 %v1182, 96
      %v2737 = vpop.permute.xlu0 %2736
      %2738 = vrot.lane.b32.xlu0 %v1188, 96
      %v2739 = vpop.permute.xlu0 %2738
      %2740 = vrot.lane.b32.xlu0 %v1194, 96
      %v2741 = vpop.permute.xlu0 %2740
      %2742 = vrot.lane.b32.xlu0 %v1200, 96
      %v2743 = vpop.permute.xlu0 %2742
      %2744 = vrot.lane.b32.xlu0 %v1206, 96
      %v2745 = vpop.permute.xlu0 %2744
      %2746 = vrot.lane.b32.xlu0 %v1212, 96
      %v2747 = vpop.permute.xlu0 %2746
      %v2764 = vsel %vm1303, %v2717, 0.0
      %2765 = vadd.xlane.f32.xlu0 %v2764
      %v2766 = vpop.xlane.xlu0 %2765
      %v2767 = vsel %vm1303, %v2719, 0.0
      %2768 = vadd.xlane.f32.xlu0 %v2767
      %v2769 = vpop.xlane.xlu0 %2768
      %v2770 = vsel %vm1303, %v2721, 0.0
      %2771 = vadd.xlane.f32.xlu0 %v2770
      %v2772 = vpop.xlane.xlu0 %2771
      %v2773 = vsel %vm1303, %v2723, 0.0
      %2774 = vadd.xlane.f32.xlu0 %v2773
      %v2775 = vpop.xlane.xlu0 %2774
      %v2776 = vsel %vm1303, %v2725, 0.0
      %2777 = vadd.xlane.f32.xlu0 %v2776
      %v2778 = vpop.xlane.xlu0 %2777
      %v2779 = vsel %vm1303, %v2727, 0.0
      %2780 = vadd.xlane.f32.xlu0 %v2779
      %v2781 = vpop.xlane.xlu0 %2780
      %v2782 = vsel %vm1303, %v2729, 0.0
      %2783 = vadd.xlane.f32.xlu0 %v2782
      %v2784 = vpop.xlane.xlu0 %2783
      %v2785 = vsel %vm1303, %v2731, 0.0
      %2786 = vadd.xlane.f32.xlu0 %v2785
      %v2787 = vpop.xlane.xlu0 %2786
      %v2788 = vsel %vm1303, %v2733, 0.0
      %2789 = vadd.xlane.f32.xlu0 %v2788
      %v2790 = vpop.xlane.xlu0 %2789
      %v2791 = vsel %vm1303, %v2735, 0.0
      %2792 = vadd.xlane.f32.xlu0 %v2791
      %v2793 = vpop.xlane.xlu0 %2792
      %v2794 = vsel %vm1303, %v2737, 0.0
      %2795 = vadd.xlane.f32.xlu0 %v2794
      %v2796 = vpop.xlane.xlu0 %2795
      %v2797 = vsel %vm1303, %v2739, 0.0
      %2798 = vadd.xlane.f32.xlu0 %v2797
      %v2799 = vpop.xlane.xlu0 %2798
      %v2800 = vsel %vm1303, %v2741, 0.0
      %2801 = vadd.xlane.f32.xlu0 %v2800
      %v2802 = vpop.xlane.xlu0 %2801
      %v2803 = vsel %vm1303, %v2743, 0.0
      %2804 = vadd.xlane.f32.xlu0 %v2803
      %v2805 = vpop.xlane.xlu0 %2804
      %v2806 = vsel %vm1303, %v2745, 0.0
      %2807 = vadd.xlane.f32.xlu0 %v2806
      %v2808 = vpop.xlane.xlu0 %2807
      %v2809 = vsel %vm1303, %v2747, 0.0
      %2810 = vadd.xlane.f32.xlu0 %v2809
      %v2811 = vpop.xlane.xlu0 %2810
      %v2812 = vmul.f32 %v2766, %v1352
      %v2813 = vmul.f32 %v2769, %v1352
      %v2814 = vmul.f32 %v2772, %v1352
      %v2815 = vmul.f32 %v2775, %v1352
      %v2816 = vmul.f32 %v2778, %v1352
      %v2817 = vmul.f32 %v2781, %v1352
      %v2818 = vmul.f32 %v2784, %v1352
      %v2819 = vmul.f32 %v2787, %v1352
      %v2820 = vmul.f32 %v2790, %v1352
      %v2821 = vmul.f32 %v2793, %v1352
      %v2822 = vmul.f32 %v2796, %v1352
      %v2823 = vmul.f32 %v2799, %v1352
      %v2824 = vmul.f32 %v2802, %v1352
      %v2825 = vmul.f32 %v2805, %v1352
      %v2826 = vmul.f32 %v2808, %v1352
      %v2827 = vmul.f32 %v2811, %v1352
      %v2828 = vsub.f32 %v1122, %v2812
      %v2829 = vsub.f32 %v1128, %v2813
      %v2830 = vsub.f32 %v1134, %v2814
      %v2831 = vsub.f32 %v1140, %v2815
      %v2832 = vsub.f32 %v1146, %v2816
      %v2833 = vsub.f32 %v1152, %v2817
      %v2834 = vsub.f32 %v1158, %v2818
      %v2835 = vsub.f32 %v1164, %v2819
      %v2836 = vsub.f32 %v1170, %v2820
      %v2837 = vsub.f32 %v1176, %v2821
      %v2838 = vsub.f32 %v1182, %v2822
      %v2839 = vsub.f32 %v1188, %v2823
      %v2840 = vsub.f32 %v1194, %v2824
      %v2841 = vsub.f32 %v1200, %v2825
      %v2842 = vsub.f32 %v1206, %v2826
      %v2843 = vsub.f32 %v1212, %v2827
      %v2844 = vmul.f32 %v2828, %v2828
      %v2845 = vmul.f32 %v2829, %v2829
      %v2846 = vmul.f32 %v2830, %v2830
      %v2847 = vmul.f32 %v2831, %v2831
      %v2848 = vmul.f32 %v2832, %v2832
      %v2849 = vmul.f32 %v2833, %v2833
      %v2850 = vmul.f32 %v2834, %v2834
      %v2851 = vmul.f32 %v2835, %v2835
      %v2852 = vmul.f32 %v2836, %v2836
      %v2853 = vmul.f32 %v2837, %v2837
      %v2854 = vmul.f32 %v2838, %v2838
      %v2855 = vmul.f32 %v2839, %v2839
      %v2856 = vmul.f32 %v2840, %v2840
      %v2857 = vmul.f32 %v2841, %v2841
      %v2858 = vmul.f32 %v2842, %v2842
      %v2859 = vmul.f32 %v2843, %v2843
      %2876 = vrot.lane.b32.xlu0 %v2844, 96
      %v2877 = vpop.permute.xlu0 %2876
      %2878 = vrot.lane.b32.xlu0 %v2845, 96
      %v2879 = vpop.permute.xlu0 %2878
      %2880 = vrot.lane.b32.xlu0 %v2846, 96
      %v2881 = vpop.permute.xlu0 %2880
      %2882 = vrot.lane.b32.xlu0 %v2847, 96
      %v2883 = vpop.permute.xlu0 %2882
      %2884 = vrot.lane.b32.xlu0 %v2848, 96
      %v2885 = vpop.permute.xlu0 %2884
      %2886 = vrot.lane.b32.xlu0 %v2849, 96
      %v2887 = vpop.permute.xlu0 %2886
      %2888 = vrot.lane.b32.xlu0 %v2850, 96
      %v2889 = vpop.permute.xlu0 %2888
      %2890 = vrot.lane.b32.xlu0 %v2851, 96
      %v2891 = vpop.permute.xlu0 %2890
      %2892 = vrot.lane.b32.xlu0 %v2852, 96
      %v2893 = vpop.permute.xlu0 %2892
      %2894 = vrot.lane.b32.xlu0 %v2853, 96
      %v2895 = vpop.permute.xlu0 %2894
      %2896 = vrot.lane.b32.xlu0 %v2854, 96
      %v2897 = vpop.permute.xlu0 %2896
      %2898 = vrot.lane.b32.xlu0 %v2855, 96
      %v2899 = vpop.permute.xlu0 %2898
      %2900 = vrot.lane.b32.xlu0 %v2856, 96
      %v2901 = vpop.permute.xlu0 %2900
      %2902 = vrot.lane.b32.xlu0 %v2857, 96
      %v2903 = vpop.permute.xlu0 %2902
      %2904 = vrot.lane.b32.xlu0 %v2858, 96
      %v2905 = vpop.permute.xlu0 %2904
      %2906 = vrot.lane.b32.xlu0 %v2859, 96
      %v2907 = vpop.permute.xlu0 %2906
      %v2924 = vsel %vm1303, %v2877, 0.0
      %2925 = vadd.xlane.f32.xlu0 %v2924
      %v2926 = vpop.xlane.xlu0 %2925
      %v2927 = vsel %vm1303, %v2879, 0.0
      %2928 = vadd.xlane.f32.xlu0 %v2927
      %v2929 = vpop.xlane.xlu0 %2928
      %v2930 = vsel %vm1303, %v2881, 0.0
      %2931 = vadd.xlane.f32.xlu0 %v2930
      %v2932 = vpop.xlane.xlu0 %2931
      %v2933 = vsel %vm1303, %v2883, 0.0
      %2934 = vadd.xlane.f32.xlu0 %v2933
      %v2935 = vpop.xlane.xlu0 %2934
      %v2936 = vsel %vm1303, %v2885, 0.0
      %2937 = vadd.xlane.f32.xlu0 %v2936
      %v2938 = vpop.xlane.xlu0 %2937
      %v2939 = vsel %vm1303, %v2887, 0.0
      %2940 = vadd.xlane.f32.xlu0 %v2939
      %v2941 = vpop.xlane.xlu0 %2940
      %v2942 = vsel %vm1303, %v2889, 0.0
      %2943 = vadd.xlane.f32.xlu0 %v2942
      %v2944 = vpop.xlane.xlu0 %2943
      %v2945 = vsel %vm1303, %v2891, 0.0
      %2946 = vadd.xlane.f32.xlu0 %v2945
      %v2947 = vpop.xlane.xlu0 %2946
      %v2948 = vsel %vm1303, %v2893, 0.0
      %2949 = vadd.xlane.f32.xlu0 %v2948
      %v2950 = vpop.xlane.xlu0 %2949
      %v2951 = vsel %vm1303, %v2895, 0.0
      %2952 = vadd.xlane.f32.xlu0 %v2951
      %v2953 = vpop.xlane.xlu0 %2952
      %v2954 = vsel %vm1303, %v2897, 0.0
      %2955 = vadd.xlane.f32.xlu0 %v2954
      %v2956 = vpop.xlane.xlu0 %2955
      %v2957 = vsel %vm1303, %v2899, 0.0
      %2958 = vadd.xlane.f32.xlu0 %v2957
      %v2959 = vpop.xlane.xlu0 %2958
      %v2960 = vsel %vm1303, %v2901, 0.0
      %2961 = vadd.xlane.f32.xlu0 %v2960
      %v2962 = vpop.xlane.xlu0 %2961
      %v2963 = vsel %vm1303, %v2903, 0.0
      %2964 = vadd.xlane.f32.xlu0 %v2963
      %v2965 = vpop.xlane.xlu0 %2964
      %v2966 = vsel %vm1303, %v2905, 0.0
      %2967 = vadd.xlane.f32.xlu0 %v2966
      %v2968 = vpop.xlane.xlu0 %2967
      %v2969 = vsel %vm1303, %v2907, 0.0
      %2970 = vadd.xlane.f32.xlu0 %v2969
      %v2971 = vpop.xlane.xlu0 %2970
      %v2972 = vmul.f32 %v2926, %v1352
      %v2973 = vmul.f32 %v2929, %v1352
      %v2974 = vmul.f32 %v2932, %v1352
      %v2975 = vmul.f32 %v2935, %v1352
      %v2976 = vmul.f32 %v2938, %v1352
      %v2977 = vmul.f32 %v2941, %v1352
      %v2978 = vmul.f32 %v2944, %v1352
      %v2979 = vmul.f32 %v2947, %v1352
      %v2980 = vmul.f32 %v2950, %v1352
      %v2981 = vmul.f32 %v2953, %v1352
      %v2982 = vmul.f32 %v2956, %v1352
      %v2983 = vmul.f32 %v2959, %v1352
      %v2984 = vmul.f32 %v2962, %v1352
      %v2985 = vmul.f32 %v2965, %v1352
      %v2986 = vmul.f32 %v2968, %v1352
      %v2987 = vmul.f32 %v2971, %v1352
      %v2988 = vadd.f32 %v2972, 1e-05
      %v2989 = vadd.f32 %v2973, 1e-05
      %v2990 = vadd.f32 %v2974, 1e-05
      %v2991 = vadd.f32 %v2975, 1e-05
      %v2992 = vadd.f32 %v2976, 1e-05
      %v2993 = vadd.f32 %v2977, 1e-05
      %v2994 = vadd.f32 %v2978, 1e-05
      %v2995 = vadd.f32 %v2979, 1e-05
      %v2996 = vadd.f32 %v2980, 1e-05
      %v2997 = vadd.f32 %v2981, 1e-05
      %v2998 = vadd.f32 %v2982, 1e-05
      %v2999 = vadd.f32 %v2983, 1e-05
      %v3000 = vadd.f32 %v2984, 1e-05
      %v3001 = vadd.f32 %v2985, 1e-05
      %v3002 = vadd.f32 %v2986, 1e-05
      %v3003 = vadd.f32 %v2987, 1e-05
      %v3004 = vrsqrt.pop %v2988
      %v3005 = vrsqrt.pop %v2989
      %v3006 = vrsqrt.pop %v2990
      %v3007 = vrsqrt.pop %v2991
      %v3008 = vrsqrt.pop %v2992
      %v3009 = vrsqrt.pop %v2993
      %v3010 = vrsqrt.pop %v2994
      %v3011 = vrsqrt.pop %v2995
      %v3012 = vrsqrt.pop %v2996
      %v3013 = vrsqrt.pop %v2997
      %v3014 = vrsqrt.pop %v2998
      %v3015 = vrsqrt.pop %v2999
      %v3016 = vrsqrt.pop %v3000
      %v3017 = vrsqrt.pop %v3001
      %v3018 = vrsqrt.pop %v3002
      %v3019 = vrsqrt.pop %v3003
      %v3020 = vmul.f32 %v2828, %v3004
      %v3021 = vmul.f32 %v2829, %v3005
      %v3022 = vmul.f32 %v2830, %v3006
      %v3023 = vmul.f32 %v2831, %v3007
      %v3024 = vmul.f32 %v2832, %v3008
      %v3025 = vmul.f32 %v2833, %v3009
      %v3026 = vmul.f32 %v2834, %v3010
      %v3027 = vmul.f32 %v2835, %v3011
      %v3028 = vmul.f32 %v2836, %v3012
      %v3029 = vmul.f32 %v2837, %v3013
      %v3030 = vmul.f32 %v2838, %v3014
      %v3031 = vmul.f32 %v2839, %v3015
      %v3032 = vmul.f32 %v2840, %v3016
      %v3033 = vmul.f32 %v2841, %v3017
      %v3034 = vmul.f32 %v2842, %v3018
      %v3035 = vmul.f32 %v2843, %v3019
      %3036 = vrot.lane.b32.xlu0 %v1517, 32
      %v3037 = vpop.permute.xlu0 %3036
      %v3039 = vmul.f32 %v3020, %v3037
      %v3040 = vmul.f32 %v3021, %v3037
      %v3041 = vmul.f32 %v3022, %v3037
      %v3042 = vmul.f32 %v3023, %v3037
      %v3043 = vmul.f32 %v3024, %v3037
      %v3044 = vmul.f32 %v3025, %v3037
      %v3045 = vmul.f32 %v3026, %v3037
      %v3046 = vmul.f32 %v3027, %v3037
      %v3047 = vmul.f32 %v3028, %v3037
      %v3048 = vmul.f32 %v3029, %v3037
      %v3049 = vmul.f32 %v3030, %v3037
      %v3050 = vmul.f32 %v3031, %v3037
      %v3051 = vmul.f32 %v3032, %v3037
      %v3052 = vmul.f32 %v3033, %v3037
      %v3053 = vmul.f32 %v3034, %v3037
      %v3054 = vmul.f32 %v3035, %v3037
      %3055 = vrot.lane.b32.xlu0 %v1539, 32
      %v3056 = vpop.permute.xlu0 %3055
      %v3058 = vadd.f32 %v3039, %v3056
      %v3059 = vadd.f32 %v3040, %v3056
      %v3060 = vadd.f32 %v3041, %v3056
      %v3061 = vadd.f32 %v3042, %v3056
      %v3062 = vadd.f32 %v3043, %v3056
      %v3063 = vadd.f32 %v3044, %v3056
      %v3064 = vadd.f32 %v3045, %v3056
      %v3065 = vadd.f32 %v3046, %v3056
      %v3066 = vadd.f32 %v3047, %v3056
      %v3067 = vadd.f32 %v3048, %v3056
      %v3068 = vadd.f32 %v3049, %v3056
      %v3069 = vadd.f32 %v3050, %v3056
      %v3070 = vadd.f32 %v3051, %v3056
      %v3071 = vadd.f32 %v3052, %v3056
      %v3072 = vadd.f32 %v3053, %v3056
      %v3073 = vadd.f32 %v3054, %v3056
      %v3074 = vsel %vm1573, %v3058, 0.0
      %v3075 = vsel %vm1574, %v3059, 0.0
      %v3076 = vsel %vm1575, %v3060, 0.0
      %v3077 = vsel %vm1576, %v3061, 0.0
      %v3078 = vsel %vm1577, %v3062, 0.0
      %v3079 = vsel %vm1578, %v3063, 0.0
      %v3080 = vsel %vm1579, %v3064, 0.0
      %v3081 = vsel %vm1580, %v3065, 0.0
      %v3082 = vsel %vm1581, %v3066, 0.0
      %v3083 = vsel %vm1582, %v3067, 0.0
      %v3084 = vsel %vm1583, %v3068, 0.0
      %v3085 = vsel %vm1584, %v3069, 0.0
      %v3086 = vsel %vm1585, %v3070, 0.0
      %v3087 = vsel %vm1586, %v3071, 0.0
      %v3088 = vsel %vm1587, %v3072, 0.0
      %v3089 = vsel %vm1588, %v3073, 0.0
      %3106 = vrot.lane.b32.xlu0 %v3074, 96
      %v3107 = vpop.permute.xlu0 %3106
      %3108 = vrot.lane.b32.xlu0 %v3075, 96
      %v3109 = vpop.permute.xlu0 %3108
      %3110 = vrot.lane.b32.xlu0 %v3076, 96
      %v3111 = vpop.permute.xlu0 %3110
      %3112 = vrot.lane.b32.xlu0 %v3077, 96
      %v3113 = vpop.permute.xlu0 %3112
      %3114 = vrot.lane.b32.xlu0 %v3078, 96
      %v3115 = vpop.permute.xlu0 %3114
      %3116 = vrot.lane.b32.xlu0 %v3079, 96
      %v3117 = vpop.permute.xlu0 %3116
      %3118 = vrot.lane.b32.xlu0 %v3080, 96
      %v3119 = vpop.permute.xlu0 %3118
      %3120 = vrot.lane.b32.xlu0 %v3081, 96
      %v3121 = vpop.permute.xlu0 %3120
      %3122 = vrot.lane.b32.xlu0 %v3082, 96
      %v3123 = vpop.permute.xlu0 %3122
      %3124 = vrot.lane.b32.xlu0 %v3083, 96
      %v3125 = vpop.permute.xlu0 %3124
      %3126 = vrot.lane.b32.xlu0 %v3084, 96
      %v3127 = vpop.permute.xlu0 %3126
      %3128 = vrot.lane.b32.xlu0 %v3085, 96
      %v3129 = vpop.permute.xlu0 %3128
      %3130 = vrot.lane.b32.xlu0 %v3086, 96
      %v3131 = vpop.permute.xlu0 %3130
      %3132 = vrot.lane.b32.xlu0 %v3087, 96
      %v3133 = vpop.permute.xlu0 %3132
      %3134 = vrot.lane.b32.xlu0 %v3088, 96
      %v3135 = vpop.permute.xlu0 %3134
      %3136 = vrot.lane.b32.xlu0 %v3089, 96
      %v3137 = vpop.permute.xlu0 %3136
      %3154 = vst.msk [vmem:[#allocation3 + $0x100] sm:$0xff] %vm1303, %v3107
      %3155 = vst.msk [vmem:[#allocation3 + $0x108] sm:$0xff] %vm1303, %v3109
      %3156 = vst.msk [vmem:[#allocation3 + $0x110] sm:$0xff] %vm1303, %v3111
      %3157 = vst.msk [vmem:[#allocation3 + $0x118] sm:$0xff] %vm1303, %v3113
      %3158 = vst.msk [vmem:[#allocation3 + $0x120] sm:$0xff] %vm1303, %v3115
      %3159 = vst.msk [vmem:[#allocation3 + $0x128] sm:$0xff] %vm1303, %v3117
      %3160 = vst.msk [vmem:[#allocation3 + $0x130] sm:$0xff] %vm1303, %v3119
      %3161 = vst.msk [vmem:[#allocation3 + $0x138] sm:$0xff] %vm1303, %v3121
      %3162 = vst.msk [vmem:[#allocation3 + $0x140] sm:$0xff] %vm1303, %v3123
      %3163 = vst.msk [vmem:[#allocation3 + $0x148] sm:$0xff] %vm1303, %v3125
      %3164 = vst.msk [vmem:[#allocation3 + $0x150] sm:$0xff] %vm1303, %v3127
      %3165 = vst.msk [vmem:[#allocation3 + $0x158] sm:$0xff] %vm1303, %v3129
      %3166 = vst.msk [vmem:[#allocation3 + $0x160] sm:$0xff] %vm1303, %v3131
      %3167 = vst.msk [vmem:[#allocation3 + $0x168] sm:$0xff] %vm1303, %v3133
      %3168 = vst.msk [vmem:[#allocation3 + $0x170] sm:$0xff] %vm1303, %v3135
      %3169 = vst.msk [vmem:[#allocation3 + $0x178] sm:$0xff] %vm1303, %v3137
      %3170 = vrot.lane.b32.xlu0 %v1625, 124
      %v3171 = vpop.permute.xlu0 %3170
      %v3173 = vsub.f32 %v1234, %v3171
      %v3174 = vsub.f32 %v1235, %v3171
      %v3175 = vsub.f32 %v1236, %v3171
      %v3176 = vsub.f32 %v1237, %v3171
      %v3177 = vsub.f32 %v1238, %v3171
      %v3178 = vsub.f32 %v1239, %v3171
      %v3179 = vsub.f32 %v1240, %v3171
      %v3180 = vsub.f32 %v1241, %v3171
      %v3181 = vsub.f32 %v1242, %v3171
      %v3182 = vsub.f32 %v1243, %v3171
      %v3183 = vsub.f32 %v1244, %v3171
      %v3184 = vsub.f32 %v1245, %v3171
      %v3185 = vsub.f32 %v1246, %v3171
      %v3186 = vsub.f32 %v1247, %v3171
      %v3187 = vsub.f32 %v1248, %v3171
      %v3188 = vsub.f32 %v1249, %v3171
      %3190 = vset.pattern.permute.xlu0 0
      %3191 = vperm.xlu0 %3190, %v3173
      %v3192 = vpop.permute.xlu0 %3191
      %3195 = vset.pattern.permute.xlu0 0
      %3196 = vperm.xlu0 %3195, %v3174
      %v3197 = vpop.permute.xlu0 %3196
      %3200 = vset.pattern.permute.xlu0 0
      %3201 = vperm.xlu0 %3200, %v3175
      %v3202 = vpop.permute.xlu0 %3201
      %3205 = vset.pattern.permute.xlu0 0
      %3206 = vperm.xlu0 %3205, %v3176
      %v3207 = vpop.permute.xlu0 %3206
      %3210 = vset.pattern.permute.xlu0 0
      %3211 = vperm.xlu0 %3210, %v3177
      %v3212 = vpop.permute.xlu0 %3211
      %3215 = vset.pattern.permute.xlu0 0
      %3216 = vperm.xlu0 %3215, %v3178
      %v3217 = vpop.permute.xlu0 %3216
      %3220 = vset.pattern.permute.xlu0 0
      %3221 = vperm.xlu0 %3220, %v3179
      %v3222 = vpop.permute.xlu0 %3221
      %3225 = vset.pattern.permute.xlu0 0
      %3226 = vperm.xlu0 %3225, %v3180
      %v3227 = vpop.permute.xlu0 %3226
      %3230 = vset.pattern.permute.xlu0 0
      %3231 = vperm.xlu0 %3230, %v3181
      %v3232 = vpop.permute.xlu0 %3231
      %3235 = vset.pattern.permute.xlu0 0
      %3236 = vperm.xlu0 %3235, %v3182
      %v3237 = vpop.permute.xlu0 %3236
      %3240 = vset.pattern.permute.xlu0 0
      %3241 = vperm.xlu0 %3240, %v3183
      %v3242 = vpop.permute.xlu0 %3241
      %3245 = vset.pattern.permute.xlu0 0
      %3246 = vperm.xlu0 %3245, %v3184
      %v3247 = vpop.permute.xlu0 %3246
      %3250 = vset.pattern.permute.xlu0 0
      %3251 = vperm.xlu0 %3250, %v3185
      %v3252 = vpop.permute.xlu0 %3251
      %3255 = vset.pattern.permute.xlu0 0
      %3256 = vperm.xlu0 %3255, %v3186
      %v3257 = vpop.permute.xlu0 %3256
      %3260 = vset.pattern.permute.xlu0 0
      %3261 = vperm.xlu0 %3260, %v3187
      %v3262 = vpop.permute.xlu0 %3261
      %3265 = vset.pattern.permute.xlu0 0
      %3266 = vperm.xlu0 %3265, %v3188
      %v3267 = vpop.permute.xlu0 %3266
      %v3269 = vsub.f32 %v3192, %v1726
      %v3270 = vsub.f32 %v3197, %v1726
      %v3271 = vsub.f32 %v3202, %v1726
      %v3272 = vsub.f32 %v3207, %v1726
      %v3273 = vsub.f32 %v3212, %v1726
      %v3274 = vsub.f32 %v3217, %v1726
      %v3275 = vsub.f32 %v3222, %v1726
      %v3276 = vsub.f32 %v3227, %v1726
      %v3277 = vsub.f32 %v3232, %v1726
      %v3278 = vsub.f32 %v3237, %v1726
      %v3279 = vsub.f32 %v3242, %v1726
      %v3280 = vsub.f32 %v3247, %v1726
      %v3281 = vsub.f32 %v3252, %v1726
      %v3282 = vsub.f32 %v3257, %v1726
      %v3283 = vsub.f32 %v3262, %v1726
      %v3284 = vsub.f32 %v3267, %v1726
      %v3285 = vmul.f32 %v3269, %v3269
      %v3286 = vmul.f32 %v3270, %v3270
      %v3287 = vmul.f32 %v3271, %v3271
      %v3288 = vmul.f32 %v3272, %v3272
      %v3289 = vmul.f32 %v3273, %v3273
      %v3290 = vmul.f32 %v3274, %v3274
      %v3291 = vmul.f32 %v3275, %v3275
      %v3292 = vmul.f32 %v3276, %v3276
      %v3293 = vmul.f32 %v3277, %v3277
      %v3294 = vmul.f32 %v3278, %v3278
      %v3295 = vmul.f32 %v3279, %v3279
      %v3296 = vmul.f32 %v3280, %v3280
      %v3297 = vmul.f32 %v3281, %v3281
      %v3298 = vmul.f32 %v3282, %v3282
      %v3299 = vmul.f32 %v3283, %v3283
      %v3300 = vmul.f32 %v3284, %v3284
      %3301 = vset.pattern.permute.xlu0 1
      %3302 = vperm.xlu0 %3301, %v3173
      %v3303 = vpop.permute.xlu0 %3302
      %3305 = vset.pattern.permute.xlu0 1
      %3306 = vperm.xlu0 %3305, %v3174
      %v3307 = vpop.permute.xlu0 %3306
      %3309 = vset.pattern.permute.xlu0 1
      %3310 = vperm.xlu0 %3309, %v3175
      %v3311 = vpop.permute.xlu0 %3310
      %3313 = vset.pattern.permute.xlu0 1
      %3314 = vperm.xlu0 %3313, %v3176
      %v3315 = vpop.permute.xlu0 %3314
      %3317 = vset.pattern.permute.xlu0 1
      %3318 = vperm.xlu0 %3317, %v3177
      %v3319 = vpop.permute.xlu0 %3318
      %3321 = vset.pattern.permute.xlu0 1
      %3322 = vperm.xlu0 %3321, %v3178
      %v3323 = vpop.permute.xlu0 %3322
      %3325 = vset.pattern.permute.xlu0 1
      %3326 = vperm.xlu0 %3325, %v3179
      %v3327 = vpop.permute.xlu0 %3326
      %3329 = vset.pattern.permute.xlu0 1
      %3330 = vperm.xlu0 %3329, %v3180
      %v3331 = vpop.permute.xlu0 %3330
      %3333 = vset.pattern.permute.xlu0 1
      %3334 = vperm.xlu0 %3333, %v3181
      %v3335 = vpop.permute.xlu0 %3334
      %3337 = vset.pattern.permute.xlu0 1
      %3338 = vperm.xlu0 %3337, %v3182
      %v3339 = vpop.permute.xlu0 %3338
      %3341 = vset.pattern.permute.xlu0 1
      %3342 = vperm.xlu0 %3341, %v3183
      %v3343 = vpop.permute.xlu0 %3342
      %3345 = vset.pattern.permute.xlu0 1
      %3346 = vperm.xlu0 %3345, %v3184
      %v3347 = vpop.permute.xlu0 %3346
      %3349 = vset.pattern.permute.xlu0 1
      %3350 = vperm.xlu0 %3349, %v3185
      %v3351 = vpop.permute.xlu0 %3350
      %3353 = vset.pattern.permute.xlu0 1
      %3354 = vperm.xlu0 %3353, %v3186
      %v3355 = vpop.permute.xlu0 %3354
      %3357 = vset.pattern.permute.xlu0 1
      %3358 = vperm.xlu0 %3357, %v3187
      %v3359 = vpop.permute.xlu0 %3358
      %3361 = vset.pattern.permute.xlu0 1
      %3362 = vperm.xlu0 %3361, %v3188
      %v3363 = vpop.permute.xlu0 %3362
      %v3365 = vsub.f32 %v3303, %v1826
      %v3366 = vsub.f32 %v3307, %v1826
      %v3367 = vsub.f32 %v3311, %v1826
      %v3368 = vsub.f32 %v3315, %v1826
      %v3369 = vsub.f32 %v3319, %v1826
      %v3370 = vsub.f32 %v3323, %v1826
      %v3371 = vsub.f32 %v3327, %v1826
      %v3372 = vsub.f32 %v3331, %v1826
      %v3373 = vsub.f32 %v3335, %v1826
      %v3374 = vsub.f32 %v3339, %v1826
      %v3375 = vsub.f32 %v3343, %v1826
      %v3376 = vsub.f32 %v3347, %v1826
      %v3377 = vsub.f32 %v3351, %v1826
      %v3378 = vsub.f32 %v3355, %v1826
      %v3379 = vsub.f32 %v3359, %v1826
      %v3380 = vsub.f32 %v3363, %v1826
      %v3381 = vmul.f32 %v3365, %v3365
      %v3382 = vmul.f32 %v3366, %v3366
      %v3383 = vmul.f32 %v3367, %v3367
      %v3384 = vmul.f32 %v3368, %v3368
      %v3385 = vmul.f32 %v3369, %v3369
      %v3386 = vmul.f32 %v3370, %v3370
      %v3387 = vmul.f32 %v3371, %v3371
      %v3388 = vmul.f32 %v3372, %v3372
      %v3389 = vmul.f32 %v3373, %v3373
      %v3390 = vmul.f32 %v3374, %v3374
      %v3391 = vmul.f32 %v3375, %v3375
      %v3392 = vmul.f32 %v3376, %v3376
      %v3393 = vmul.f32 %v3377, %v3377
      %v3394 = vmul.f32 %v3378, %v3378
      %v3395 = vmul.f32 %v3379, %v3379
      %v3396 = vmul.f32 %v3380, %v3380
      %v3397 = vadd.f32 %v3285, %v3381
      %v3398 = vadd.f32 %v3286, %v3382
      %v3399 = vadd.f32 %v3287, %v3383
      %v3400 = vadd.f32 %v3288, %v3384
      %v3401 = vadd.f32 %v3289, %v3385
      %v3402 = vadd.f32 %v3290, %v3386
      %v3403 = vadd.f32 %v3291, %v3387
      %v3404 = vadd.f32 %v3292, %v3388
      %v3405 = vadd.f32 %v3293, %v3389
      %v3406 = vadd.f32 %v3294, %v3390
      %v3407 = vadd.f32 %v3295, %v3391
      %v3408 = vadd.f32 %v3296, %v3392
      %v3409 = vadd.f32 %v3297, %v3393
      %v3410 = vadd.f32 %v3298, %v3394
      %v3411 = vadd.f32 %v3299, %v3395
      %v3412 = vadd.f32 %v3300, %v3396
      %v3413 = vsub.f32 0.0, %v3397
      %v3414 = vsub.f32 0.0, %v3398
      %v3415 = vsub.f32 0.0, %v3399
      %v3416 = vsub.f32 0.0, %v3400
      %v3417 = vsub.f32 0.0, %v3401
      %v3418 = vsub.f32 0.0, %v3402
      %v3419 = vsub.f32 0.0, %v3403
      %v3420 = vsub.f32 0.0, %v3404
      %v3421 = vsub.f32 0.0, %v3405
      %v3422 = vsub.f32 0.0, %v3406
      %v3423 = vsub.f32 0.0, %v3407
      %v3424 = vsub.f32 0.0, %v3408
      %v3425 = vsub.f32 0.0, %v3409
      %v3426 = vsub.f32 0.0, %v3410
      %v3427 = vsub.f32 0.0, %v3411
      %v3428 = vsub.f32 0.0, %v3412
      %v3429 = vmul.f32 %v3413, 1.442695
      %v3430 = vpow.pop %v3429
      %v3431 = vmul.f32 %v3414, 1.442695
      %v3432 = vpow.pop %v3431
      %v3433 = vmul.f32 %v3415, 1.442695
      %v3434 = vpow.pop %v3433
      %v3435 = vmul.f32 %v3416, 1.442695
      %v3436 = vpow.pop %v3435
      %v3437 = vmul.f32 %v3417, 1.442695
      %v3438 = vpow.pop %v3437
      %v3439 = vmul.f32 %v3418, 1.442695
      %v3440 = vpow.pop %v3439
      %v3441 = vmul.f32 %v3419, 1.442695
      %v3442 = vpow.pop %v3441
      %v3443 = vmul.f32 %v3420, 1.442695
      %v3444 = vpow.pop %v3443
      %v3445 = vmul.f32 %v3421, 1.442695
      %v3446 = vpow.pop %v3445
      %v3447 = vmul.f32 %v3422, 1.442695
      %v3448 = vpow.pop %v3447
      %v3449 = vmul.f32 %v3423, 1.442695
      %v3450 = vpow.pop %v3449
      %v3451 = vmul.f32 %v3424, 1.442695
      %v3452 = vpow.pop %v3451
      %v3453 = vmul.f32 %v3425, 1.442695
      %v3454 = vpow.pop %v3453
      %v3455 = vmul.f32 %v3426, 1.442695
      %v3456 = vpow.pop %v3455
      %v3457 = vmul.f32 %v3427, 1.442695
      %v3458 = vpow.pop %v3457
      %v3459 = vmul.f32 %v3428, 1.442695
      %v3460 = vpow.pop %v3459
      %3461 = vst [vmem:[#allocation2 + $0x10] sm:$0xff] %v3430
      %3462 = vst [vmem:[#allocation2 + $0x58] sm:$0xff] %v3432
      %3463 = vst [vmem:[#allocation2 + $0xa0] sm:$0xff] %v3434
      %3464 = vst [vmem:[#allocation2 + $0xe8] sm:$0xff] %v3436
      %3465 = vst [vmem:[#allocation2 + $0x130] sm:$0xff] %v3438
      %3466 = vst [vmem:[#allocation2 + $0x178] sm:$0xff] %v3440
      %3467 = vst [vmem:[#allocation2 + $0x1c0] sm:$0xff] %v3442
      %3468 = vst [vmem:[#allocation2 + $0x208] sm:$0xff] %v3444
      %3469 = vst [vmem:[#allocation2 + $0x250] sm:$0xff] %v3446
      %3470 = vst [vmem:[#allocation2 + $0x298] sm:$0xff] %v3448
      %3471 = vst [vmem:[#allocation2 + $0x2e0] sm:$0xff] %v3450
      %3472 = vst [vmem:[#allocation2 + $0x328] sm:$0xff] %v3452
      %3473 = vst [vmem:[#allocation2 + $0x370] sm:$0xff] %v3454
      %3474 = vst [vmem:[#allocation2 + $0x3b8] sm:$0xff] %v3456
      %3475 = vst [vmem:[#allocation2 + $0x400] sm:$0xff] %v3458
      %3476 = vst [vmem:[#allocation2 + $0x448] sm:$0xff] %v3460
      %3477 = vrot.lane.b32.xlu0 %v1122, 80
      %v3478 = vpop.permute.xlu0 %3477
      %3479 = vrot.lane.b32.xlu0 %v1128, 80
      %v3480 = vpop.permute.xlu0 %3479
      %3481 = vrot.lane.b32.xlu0 %v1134, 80
      %v3482 = vpop.permute.xlu0 %3481
      %3483 = vrot.lane.b32.xlu0 %v1140, 80
      %v3484 = vpop.permute.xlu0 %3483
      %3485 = vrot.lane.b32.xlu0 %v1146, 80
      %v3486 = vpop.permute.xlu0 %3485
      %3487 = vrot.lane.b32.xlu0 %v1152, 80
      %v3488 = vpop.permute.xlu0 %3487
      %3489 = vrot.lane.b32.xlu0 %v1158, 80
      %v3490 = vpop.permute.xlu0 %3489
      %3491 = vrot.lane.b32.xlu0 %v1164, 80
      %v3492 = vpop.permute.xlu0 %3491
      %3493 = vrot.lane.b32.xlu0 %v1170, 80
      %v3494 = vpop.permute.xlu0 %3493
      %3495 = vrot.lane.b32.xlu0 %v1176, 80
      %v3496 = vpop.permute.xlu0 %3495
      %3497 = vrot.lane.b32.xlu0 %v1182, 80
      %v3498 = vpop.permute.xlu0 %3497
      %3499 = vrot.lane.b32.xlu0 %v1188, 80
      %v3500 = vpop.permute.xlu0 %3499
      %3501 = vrot.lane.b32.xlu0 %v1194, 80
      %v3502 = vpop.permute.xlu0 %3501
      %3503 = vrot.lane.b32.xlu0 %v1200, 80
      %v3504 = vpop.permute.xlu0 %3503
      %3505 = vrot.lane.b32.xlu0 %v1206, 80
      %v3506 = vpop.permute.xlu0 %3505
      %3507 = vrot.lane.b32.xlu0 %v1212, 80
      %v3508 = vpop.permute.xlu0 %3507
      %v3525 = vsel %vm1303, %v3478, 0.0
      %3526 = vadd.xlane.f32.xlu0 %v3525
      %v3527 = vpop.xlane.xlu0 %3526
      %v3528 = vsel %vm1303, %v3480, 0.0
      %3529 = vadd.xlane.f32.xlu0 %v3528
      %v3530 = vpop.xlane.xlu0 %3529
      %v3531 = vsel %vm1303, %v3482, 0.0
      %3532 = vadd.xlane.f32.xlu0 %v3531
      %v3533 = vpop.xlane.xlu0 %3532
      %v3534 = vsel %vm1303, %v3484, 0.0
      %3535 = vadd.xlane.f32.xlu0 %v3534
      %v3536 = vpop.xlane.xlu0 %3535
      %v3537 = vsel %vm1303, %v3486, 0.0
      %3538 = vadd.xlane.f32.xlu0 %v3537
      %v3539 = vpop.xlane.xlu0 %3538
      %v3540 = vsel %vm1303, %v3488, 0.0
      %3541 = vadd.xlane.f32.xlu0 %v3540
      %v3542 = vpop.xlane.xlu0 %3541
      %v3543 = vsel %vm1303, %v3490, 0.0
      %3544 = vadd.xlane.f32.xlu0 %v3543
      %v3545 = vpop.xlane.xlu0 %3544
      %v3546 = vsel %vm1303, %v3492, 0.0
      %3547 = vadd.xlane.f32.xlu0 %v3546
      %v3548 = vpop.xlane.xlu0 %3547
      %v3549 = vsel %vm1303, %v3494, 0.0
      %3550 = vadd.xlane.f32.xlu0 %v3549
      %v3551 = vpop.xlane.xlu0 %3550
      %v3552 = vsel %vm1303, %v3496, 0.0
      %3553 = vadd.xlane.f32.xlu0 %v3552
      %v3554 = vpop.xlane.xlu0 %3553
      %v3555 = vsel %vm1303, %v3498, 0.0
      %3556 = vadd.xlane.f32.xlu0 %v3555
      %v3557 = vpop.xlane.xlu0 %3556
      %v3558 = vsel %vm1303, %v3500, 0.0
      %3559 = vadd.xlane.f32.xlu0 %v3558
      %v3560 = vpop.xlane.xlu0 %3559
      %v3561 = vsel %vm1303, %v3502, 0.0
      %3562 = vadd.xlane.f32.xlu0 %v3561
      %v3563 = vpop.xlane.xlu0 %3562
      %v3564 = vsel %vm1303, %v3504, 0.0
      %3565 = vadd.xlane.f32.xlu0 %v3564
      %v3566 = vpop.xlane.xlu0 %3565
      %v3567 = vsel %vm1303, %v3506, 0.0
      %3568 = vadd.xlane.f32.xlu0 %v3567
      %v3569 = vpop.xlane.xlu0 %3568
      %v3570 = vsel %vm1303, %v3508, 0.0
      %3571 = vadd.xlane.f32.xlu0 %v3570
      %v3572 = vpop.xlane.xlu0 %3571
      %v3573 = vmul.f32 %v3527, %v1352
      %v3574 = vmul.f32 %v3530, %v1352
      %v3575 = vmul.f32 %v3533, %v1352
      %v3576 = vmul.f32 %v3536, %v1352
      %v3577 = vmul.f32 %v3539, %v1352
      %v3578 = vmul.f32 %v3542, %v1352
      %v3579 = vmul.f32 %v3545, %v1352
      %v3580 = vmul.f32 %v3548, %v1352
      %v3581 = vmul.f32 %v3551, %v1352
      %v3582 = vmul.f32 %v3554, %v1352
      %v3583 = vmul.f32 %v3557, %v1352
      %v3584 = vmul.f32 %v3560, %v1352
      %v3585 = vmul.f32 %v3563, %v1352
      %v3586 = vmul.f32 %v3566, %v1352
      %v3587 = vmul.f32 %v3569, %v1352
      %v3588 = vmul.f32 %v3572, %v1352
      %v3589 = vsub.f32 %v1122, %v3573
      %v3590 = vsub.f32 %v1128, %v3574
      %v3591 = vsub.f32 %v1134, %v3575
      %v3592 = vsub.f32 %v1140, %v3576
      %v3593 = vsub.f32 %v1146, %v3577
      %v3594 = vsub.f32 %v1152, %v3578
      %v3595 = vsub.f32 %v1158, %v3579
      %v3596 = vsub.f32 %v1164, %v3580
      %v3597 = vsub.f32 %v1170, %v3581
      %v3598 = vsub.f32 %v1176, %v3582
      %v3599 = vsub.f32 %v1182, %v3583
      %v3600 = vsub.f32 %v1188, %v3584
      %v3601 = vsub.f32 %v1194, %v3585
      %v3602 = vsub.f32 %v1200, %v3586
      %v3603 = vsub.f32 %v1206, %v3587
      %v3604 = vsub.f32 %v1212, %v3588
      %v3605 = vmul.f32 %v3589, %v3589
      %v3606 = vmul.f32 %v3590, %v3590
      %v3607 = vmul.f32 %v3591, %v3591
      %v3608 = vmul.f32 %v3592, %v3592
      %v3609 = vmul.f32 %v3593, %v3593
      %v3610 = vmul.f32 %v3594, %v3594
      %v3611 = vmul.f32 %v3595, %v3595
      %v3612 = vmul.f32 %v3596, %v3596
      %v3613 = vmul.f32 %v3597, %v3597
      %v3614 = vmul.f32 %v3598, %v3598
      %v3615 = vmul.f32 %v3599, %v3599
      %v3616 = vmul.f32 %v3600, %v3600
      %v3617 = vmul.f32 %v3601, %v3601
      %v3618 = vmul.f32 %v3602, %v3602
      %v3619 = vmul.f32 %v3603, %v3603
      %v3620 = vmul.f32 %v3604, %v3604
      %3637 = vrot.lane.b32.xlu0 %v3605, 80
      %v3638 = vpop.permute.xlu0 %3637
      %3639 = vrot.lane.b32.xlu0 %v3606, 80
      %v3640 = vpop.permute.xlu0 %3639
      %3641 = vrot.lane.b32.xlu0 %v3607, 80
      %v3642 = vpop.permute.xlu0 %3641
      %3643 = vrot.lane.b32.xlu0 %v3608, 80
      %v3644 = vpop.permute.xlu0 %3643
      %3645 = vrot.lane.b32.xlu0 %v3609, 80
      %v3646 = vpop.permute.xlu0 %3645
      %3647 = vrot.lane.b32.xlu0 %v3610, 80
      %v3648 = vpop.permute.xlu0 %3647
      %3649 = vrot.lane.b32.xlu0 %v3611, 80
      %v3650 = vpop.permute.xlu0 %3649
      %3651 = vrot.lane.b32.xlu0 %v3612, 80
      %v3652 = vpop.permute.xlu0 %3651
      %3653 = vrot.lane.b32.xlu0 %v3613, 80
      %v3654 = vpop.permute.xlu0 %3653
      %3655 = vrot.lane.b32.xlu0 %v3614, 80
      %v3656 = vpop.permute.xlu0 %3655
      %3657 = vrot.lane.b32.xlu0 %v3615, 80
      %v3658 = vpop.permute.xlu0 %3657
      %3659 = vrot.lane.b32.xlu0 %v3616, 80
      %v3660 = vpop.permute.xlu0 %3659
      %3661 = vrot.lane.b32.xlu0 %v3617, 80
      %v3662 = vpop.permute.xlu0 %3661
      %3663 = vrot.lane.b32.xlu0 %v3618, 80
      %v3664 = vpop.permute.xlu0 %3663
      %3665 = vrot.lane.b32.xlu0 %v3619, 80
      %v3666 = vpop.permute.xlu0 %3665
      %3667 = vrot.lane.b32.xlu0 %v3620, 80
      %v3668 = vpop.permute.xlu0 %3667
      %v3685 = vsel %vm1303, %v3638, 0.0
      %3686 = vadd.xlane.f32.xlu0 %v3685
      %v3687 = vpop.xlane.xlu0 %3686
      %v3688 = vsel %vm1303, %v3640, 0.0
      %3689 = vadd.xlane.f32.xlu0 %v3688
      %v3690 = vpop.xlane.xlu0 %3689
      %v3691 = vsel %vm1303, %v3642, 0.0
      %3692 = vadd.xlane.f32.xlu0 %v3691
      %v3693 = vpop.xlane.xlu0 %3692
      %v3694 = vsel %vm1303, %v3644, 0.0
      %3695 = vadd.xlane.f32.xlu0 %v3694
      %v3696 = vpop.xlane.xlu0 %3695
      %v3697 = vsel %vm1303, %v3646, 0.0
      %3698 = vadd.xlane.f32.xlu0 %v3697
      %v3699 = vpop.xlane.xlu0 %3698
      %v3700 = vsel %vm1303, %v3648, 0.0
      %3701 = vadd.xlane.f32.xlu0 %v3700
      %v3702 = vpop.xlane.xlu0 %3701
      %v3703 = vsel %vm1303, %v3650, 0.0
      %3704 = vadd.xlane.f32.xlu0 %v3703
      %v3705 = vpop.xlane.xlu0 %3704
      %v3706 = vsel %vm1303, %v3652, 0.0
      %3707 = vadd.xlane.f32.xlu0 %v3706
      %v3708 = vpop.xlane.xlu0 %3707
      %v3709 = vsel %vm1303, %v3654, 0.0
      %3710 = vadd.xlane.f32.xlu0 %v3709
      %v3711 = vpop.xlane.xlu0 %3710
      %v3712 = vsel %vm1303, %v3656, 0.0
      %3713 = vadd.xlane.f32.xlu0 %v3712
      %v3714 = vpop.xlane.xlu0 %3713
      %v3715 = vsel %vm1303, %v3658, 0.0
      %3716 = vadd.xlane.f32.xlu0 %v3715
      %v3717 = vpop.xlane.xlu0 %3716
      %v3718 = vsel %vm1303, %v3660, 0.0
      %3719 = vadd.xlane.f32.xlu0 %v3718
      %v3720 = vpop.xlane.xlu0 %3719
      %v3721 = vsel %vm1303, %v3662, 0.0
      %3722 = vadd.xlane.f32.xlu0 %v3721
      %v3723 = vpop.xlane.xlu0 %3722
      %v3724 = vsel %vm1303, %v3664, 0.0
      %3725 = vadd.xlane.f32.xlu0 %v3724
      %v3726 = vpop.xlane.xlu0 %3725
      %v3727 = vsel %vm1303, %v3666, 0.0
      %3728 = vadd.xlane.f32.xlu0 %v3727
      %v3729 = vpop.xlane.xlu0 %3728
      %v3730 = vsel %vm1303, %v3668, 0.0
      %3731 = vadd.xlane.f32.xlu0 %v3730
      %v3732 = vpop.xlane.xlu0 %3731
      %v3733 = vmul.f32 %v3687, %v1352
      %v3734 = vmul.f32 %v3690, %v1352
      %v3735 = vmul.f32 %v3693, %v1352
      %v3736 = vmul.f32 %v3696, %v1352
      %v3737 = vmul.f32 %v3699, %v1352
      %v3738 = vmul.f32 %v3702, %v1352
      %v3739 = vmul.f32 %v3705, %v1352
      %v3740 = vmul.f32 %v3708, %v1352
      %v3741 = vmul.f32 %v3711, %v1352
      %v3742 = vmul.f32 %v3714, %v1352
      %v3743 = vmul.f32 %v3717, %v1352
      %v3744 = vmul.f32 %v3720, %v1352
      %v3745 = vmul.f32 %v3723, %v1352
      %v3746 = vmul.f32 %v3726, %v1352
      %v3747 = vmul.f32 %v3729, %v1352
      %v3748 = vmul.f32 %v3732, %v1352
      %v3749 = vadd.f32 %v3733, 1e-05
      %v3750 = vadd.f32 %v3734, 1e-05
      %v3751 = vadd.f32 %v3735, 1e-05
      %v3752 = vadd.f32 %v3736, 1e-05
      %v3753 = vadd.f32 %v3737, 1e-05
      %v3754 = vadd.f32 %v3738, 1e-05
      %v3755 = vadd.f32 %v3739, 1e-05
      %v3756 = vadd.f32 %v3740, 1e-05
      %v3757 = vadd.f32 %v3741, 1e-05
      %v3758 = vadd.f32 %v3742, 1e-05
      %v3759 = vadd.f32 %v3743, 1e-05
      %v3760 = vadd.f32 %v3744, 1e-05
      %v3761 = vadd.f32 %v3745, 1e-05
      %v3762 = vadd.f32 %v3746, 1e-05
      %v3763 = vadd.f32 %v3747, 1e-05
      %v3764 = vadd.f32 %v3748, 1e-05
      %v3765 = vrsqrt.pop %v3749
      %v3766 = vrsqrt.pop %v3750
      %v3767 = vrsqrt.pop %v3751
      %v3768 = vrsqrt.pop %v3752
      %v3769 = vrsqrt.pop %v3753
      %v3770 = vrsqrt.pop %v3754
      %v3771 = vrsqrt.pop %v3755
      %v3772 = vrsqrt.pop %v3756
      %v3773 = vrsqrt.pop %v3757
      %v3774 = vrsqrt.pop %v3758
      %v3775 = vrsqrt.pop %v3759
      %v3776 = vrsqrt.pop %v3760
      %v3777 = vrsqrt.pop %v3761
      %v3778 = vrsqrt.pop %v3762
      %v3779 = vrsqrt.pop %v3763
      %v3780 = vrsqrt.pop %v3764
      %v3781 = vmul.f32 %v3589, %v3765
      %v3782 = vmul.f32 %v3590, %v3766
      %v3783 = vmul.f32 %v3591, %v3767
      %v3784 = vmul.f32 %v3592, %v3768
      %v3785 = vmul.f32 %v3593, %v3769
      %v3786 = vmul.f32 %v3594, %v3770
      %v3787 = vmul.f32 %v3595, %v3771
      %v3788 = vmul.f32 %v3596, %v3772
      %v3789 = vmul.f32 %v3597, %v3773
      %v3790 = vmul.f32 %v3598, %v3774
      %v3791 = vmul.f32 %v3599, %v3775
      %v3792 = vmul.f32 %v3600, %v3776
      %v3793 = vmul.f32 %v3601, %v3777
      %v3794 = vmul.f32 %v3602, %v3778
      %v3795 = vmul.f32 %v3603, %v3779
      %v3796 = vmul.f32 %v3604, %v3780
      %3797 = vrot.lane.b32.xlu0 %v1517, 48
      %v3798 = vpop.permute.xlu0 %3797
      %v3800 = vmul.f32 %v3781, %v3798
      %v3801 = vmul.f32 %v3782, %v3798
      %v3802 = vmul.f32 %v3783, %v3798
      %v3803 = vmul.f32 %v3784, %v3798
      %v3804 = vmul.f32 %v3785, %v3798
      %v3805 = vmul.f32 %v3786, %v3798
      %v3806 = vmul.f32 %v3787, %v3798
      %v3807 = vmul.f32 %v3788, %v3798
      %v3808 = vmul.f32 %v3789, %v3798
      %v3809 = vmul.f32 %v3790, %v3798
      %v3810 = vmul.f32 %v3791, %v3798
      %v3811 = vmul.f32 %v3792, %v3798
      %v3812 = vmul.f32 %v3793, %v3798
      %v3813 = vmul.f32 %v3794, %v3798
      %v3814 = vmul.f32 %v3795, %v3798
      %v3815 = vmul.f32 %v3796, %v3798
      %3816 = vrot.lane.b32.xlu0 %v1539, 48
      %v3817 = vpop.permute.xlu0 %3816
      %v3819 = vadd.f32 %v3800, %v3817
      %v3820 = vadd.f32 %v3801, %v3817
      %v3821 = vadd.f32 %v3802, %v3817
      %v3822 = vadd.f32 %v3803, %v3817
      %v3823 = vadd.f32 %v3804, %v3817
      %v3824 = vadd.f32 %v3805, %v3817
      %v3825 = vadd.f32 %v3806, %v3817
      %v3826 = vadd.f32 %v3807, %v3817
      %v3827 = vadd.f32 %v3808, %v3817
      %v3828 = vadd.f32 %v3809, %v3817
      %v3829 = vadd.f32 %v3810, %v3817
      %v3830 = vadd.f32 %v3811, %v3817
      %v3831 = vadd.f32 %v3812, %v3817
      %v3832 = vadd.f32 %v3813, %v3817
      %v3833 = vadd.f32 %v3814, %v3817
      %v3834 = vadd.f32 %v3815, %v3817
      %v3835 = vsel %vm1573, %v3819, 0.0
      %v3836 = vsel %vm1574, %v3820, 0.0
      %v3837 = vsel %vm1575, %v3821, 0.0
      %v3838 = vsel %vm1576, %v3822, 0.0
      %v3839 = vsel %vm1577, %v3823, 0.0
      %v3840 = vsel %vm1578, %v3824, 0.0
      %v3841 = vsel %vm1579, %v3825, 0.0
      %v3842 = vsel %vm1580, %v3826, 0.0
      %v3843 = vsel %vm1581, %v3827, 0.0
      %v3844 = vsel %vm1582, %v3828, 0.0
      %v3845 = vsel %vm1583, %v3829, 0.0
      %v3846 = vsel %vm1584, %v3830, 0.0
      %v3847 = vsel %vm1585, %v3831, 0.0
      %v3848 = vsel %vm1586, %v3832, 0.0
      %v3849 = vsel %vm1587, %v3833, 0.0
      %v3850 = vsel %vm1588, %v3834, 0.0
      %3867 = vrot.lane.b32.xlu0 %v3835, 80
      %v3868 = vpop.permute.xlu0 %3867
      %3869 = vrot.lane.b32.xlu0 %v3836, 80
      %v3870 = vpop.permute.xlu0 %3869
      %3871 = vrot.lane.b32.xlu0 %v3837, 80
      %v3872 = vpop.permute.xlu0 %3871
      %3873 = vrot.lane.b32.xlu0 %v3838, 80
      %v3874 = vpop.permute.xlu0 %3873
      %3875 = vrot.lane.b32.xlu0 %v3839, 80
      %v3876 = vpop.permute.xlu0 %3875
      %3877 = vrot.lane.b32.xlu0 %v3840, 80
      %v3878 = vpop.permute.xlu0 %3877
      %3879 = vrot.lane.b32.xlu0 %v3841, 80
      %v3880 = vpop.permute.xlu0 %3879
      %3881 = vrot.lane.b32.xlu0 %v3842, 80
      %v3882 = vpop.permute.xlu0 %3881
      %3883 = vrot.lane.b32.xlu0 %v3843, 80
      %v3884 = vpop.permute.xlu0 %3883
      %3885 = vrot.lane.b32.xlu0 %v3844, 80
      %v3886 = vpop.permute.xlu0 %3885
      %3887 = vrot.lane.b32.xlu0 %v3845, 80
      %v3888 = vpop.permute.xlu0 %3887
      %3889 = vrot.lane.b32.xlu0 %v3846, 80
      %v3890 = vpop.permute.xlu0 %3889
      %3891 = vrot.lane.b32.xlu0 %v3847, 80
      %v3892 = vpop.permute.xlu0 %3891
      %3893 = vrot.lane.b32.xlu0 %v3848, 80
      %v3894 = vpop.permute.xlu0 %3893
      %3895 = vrot.lane.b32.xlu0 %v3849, 80
      %v3896 = vpop.permute.xlu0 %3895
      %3897 = vrot.lane.b32.xlu0 %v3850, 80
      %v3898 = vpop.permute.xlu0 %3897
      %3915 = vst.msk [vmem:[#allocation3 + $0x180] sm:$0xff] %vm1303, %v3868
      %3916 = vst.msk [vmem:[#allocation3 + $0x188] sm:$0xff] %vm1303, %v3870
      %3917 = vst.msk [vmem:[#allocation3 + $0x190] sm:$0xff] %vm1303, %v3872
      %3918 = vst.msk [vmem:[#allocation3 + $0x198] sm:$0xff] %vm1303, %v3874
      %3919 = vst.msk [vmem:[#allocation3 + $0x1a0] sm:$0xff] %vm1303, %v3876
      %3920 = vst.msk [vmem:[#allocation3 + $0x1a8] sm:$0xff] %vm1303, %v3878
      %3921 = vst.msk [vmem:[#allocation3 + $0x1b0] sm:$0xff] %vm1303, %v3880
      %3922 = vst.msk [vmem:[#allocation3 + $0x1b8] sm:$0xff] %vm1303, %v3882
      %3923 = vst.msk [vmem:[#allocation3 + $0x1c0] sm:$0xff] %vm1303, %v3884
      %3924 = vst.msk [vmem:[#allocation3 + $0x1c8] sm:$0xff] %vm1303, %v3886
      %3925 = vst.msk [vmem:[#allocation3 + $0x1d0] sm:$0xff] %vm1303, %v3888
      %3926 = vst.msk [vmem:[#allocation3 + $0x1d8] sm:$0xff] %vm1303, %v3890
      %3927 = vst.msk [vmem:[#allocation3 + $0x1e0] sm:$0xff] %vm1303, %v3892
      %3928 = vst.msk [vmem:[#allocation3 + $0x1e8] sm:$0xff] %vm1303, %v3894
      %3929 = vst.msk [vmem:[#allocation3 + $0x1f0] sm:$0xff] %vm1303, %v3896
      %3930 = vst.msk [vmem:[#allocation3 + $0x1f8] sm:$0xff] %vm1303, %v3898
      %3931 = vrot.lane.b32.xlu0 %v1625, 122
      %v3932 = vpop.permute.xlu0 %3931
      %v3934 = vsub.f32 %v1234, %v3932
      %v3935 = vsub.f32 %v1235, %v3932
      %v3936 = vsub.f32 %v1236, %v3932
      %v3937 = vsub.f32 %v1237, %v3932
      %v3938 = vsub.f32 %v1238, %v3932
      %v3939 = vsub.f32 %v1239, %v3932
      %v3940 = vsub.f32 %v1240, %v3932
      %v3941 = vsub.f32 %v1241, %v3932
      %v3942 = vsub.f32 %v1242, %v3932
      %v3943 = vsub.f32 %v1243, %v3932
      %v3944 = vsub.f32 %v1244, %v3932
      %v3945 = vsub.f32 %v1245, %v3932
      %v3946 = vsub.f32 %v1246, %v3932
      %v3947 = vsub.f32 %v1247, %v3932
      %v3948 = vsub.f32 %v1248, %v3932
      %v3949 = vsub.f32 %v1249, %v3932
      %3951 = vset.pattern.permute.xlu0 0
      %3952 = vperm.xlu0 %3951, %v3934
      %v3953 = vpop.permute.xlu0 %3952
      %3956 = vset.pattern.permute.xlu0 0
      %3957 = vperm.xlu0 %3956, %v3935
      %v3958 = vpop.permute.xlu0 %3957
      %3961 = vset.pattern.permute.xlu0 0
      %3962 = vperm.xlu0 %3961, %v3936
      %v3963 = vpop.permute.xlu0 %3962
      %3966 = vset.pattern.permute.xlu0 0
      %3967 = vperm.xlu0 %3966, %v3937
      %v3968 = vpop.permute.xlu0 %3967
      %3971 = vset.pattern.permute.xlu0 0
      %3972 = vperm.xlu0 %3971, %v3938
      %v3973 = vpop.permute.xlu0 %3972
      %3976 = vset.pattern.permute.xlu0 0
      %3977 = vperm.xlu0 %3976, %v3939
      %v3978 = vpop.permute.xlu0 %3977
      %3981 = vset.pattern.permute.xlu0 0
      %3982 = vperm.xlu0 %3981, %v3940
      %v3983 = vpop.permute.xlu0 %3982
      %3986 = vset.pattern.permute.xlu0 0
      %3987 = vperm.xlu0 %3986, %v3941
      %v3988 = vpop.permute.xlu0 %3987
      %3991 = vset.pattern.permute.xlu0 0
      %3992 = vperm.xlu0 %3991, %v3942
      %v3993 = vpop.permute.xlu0 %3992
      %3996 = vset.pattern.permute.xlu0 0
      %3997 = vperm.xlu0 %3996, %v3943
      %v3998 = vpop.permute.xlu0 %3997
      %4001 = vset.pattern.permute.xlu0 0
      %4002 = vperm.xlu0 %4001, %v3944
      %v4003 = vpop.permute.xlu0 %4002
      %4006 = vset.pattern.permute.xlu0 0
      %4007 = vperm.xlu0 %4006, %v3945
      %v4008 = vpop.permute.xlu0 %4007
      %4011 = vset.pattern.permute.xlu0 0
      %4012 = vperm.xlu0 %4011, %v3946
      %v4013 = vpop.permute.xlu0 %4012
      %4016 = vset.pattern.permute.xlu0 0
      %4017 = vperm.xlu0 %4016, %v3947
      %v4018 = vpop.permute.xlu0 %4017
      %4021 = vset.pattern.permute.xlu0 0
      %4022 = vperm.xlu0 %4021, %v3948
      %v4023 = vpop.permute.xlu0 %4022
      %4026 = vset.pattern.permute.xlu0 0
      %4027 = vperm.xlu0 %4026, %v3949
      %v4028 = vpop.permute.xlu0 %4027
      %v4030 = vsub.f32 %v3953, %v1726
      %v4031 = vsub.f32 %v3958, %v1726
      %v4032 = vsub.f32 %v3963, %v1726
      %v4033 = vsub.f32 %v3968, %v1726
      %v4034 = vsub.f32 %v3973, %v1726
      %v4035 = vsub.f32 %v3978, %v1726
      %v4036 = vsub.f32 %v3983, %v1726
      %v4037 = vsub.f32 %v3988, %v1726
      %v4038 = vsub.f32 %v3993, %v1726
      %v4039 = vsub.f32 %v3998, %v1726
      %v4040 = vsub.f32 %v4003, %v1726
      %v4041 = vsub.f32 %v4008, %v1726
      %v4042 = vsub.f32 %v4013, %v1726
      %v4043 = vsub.f32 %v4018, %v1726
      %v4044 = vsub.f32 %v4023, %v1726
      %v4045 = vsub.f32 %v4028, %v1726
      %v4046 = vmul.f32 %v4030, %v4030
      %v4047 = vmul.f32 %v4031, %v4031
      %v4048 = vmul.f32 %v4032, %v4032
      %v4049 = vmul.f32 %v4033, %v4033
      %v4050 = vmul.f32 %v4034, %v4034
      %v4051 = vmul.f32 %v4035, %v4035
      %v4052 = vmul.f32 %v4036, %v4036
      %v4053 = vmul.f32 %v4037, %v4037
      %v4054 = vmul.f32 %v4038, %v4038
      %v4055 = vmul.f32 %v4039, %v4039
      %v4056 = vmul.f32 %v4040, %v4040
      %v4057 = vmul.f32 %v4041, %v4041
      %v4058 = vmul.f32 %v4042, %v4042
      %v4059 = vmul.f32 %v4043, %v4043
      %v4060 = vmul.f32 %v4044, %v4044
      %v4061 = vmul.f32 %v4045, %v4045
      %4062 = vset.pattern.permute.xlu0 1
      %4063 = vperm.xlu0 %4062, %v3934
      %v4064 = vpop.permute.xlu0 %4063
      %4066 = vset.pattern.permute.xlu0 1
      %4067 = vperm.xlu0 %4066, %v3935
      %v4068 = vpop.permute.xlu0 %4067
      %4070 = vset.pattern.permute.xlu0 1
      %4071 = vperm.xlu0 %4070, %v3936
      %v4072 = vpop.permute.xlu0 %4071
      %4074 = vset.pattern.permute.xlu0 1
      %4075 = vperm.xlu0 %4074, %v3937
      %v4076 = vpop.permute.xlu0 %4075
      %4078 = vset.pattern.permute.xlu0 1
      %4079 = vperm.xlu0 %4078, %v3938
      %v4080 = vpop.permute.xlu0 %4079
      %4082 = vset.pattern.permute.xlu0 1
      %4083 = vperm.xlu0 %4082, %v3939
      %v4084 = vpop.permute.xlu0 %4083
      %4086 = vset.pattern.permute.xlu0 1
      %4087 = vperm.xlu0 %4086, %v3940
      %v4088 = vpop.permute.xlu0 %4087
      %4090 = vset.pattern.permute.xlu0 1
      %4091 = vperm.xlu0 %4090, %v3941
      %v4092 = vpop.permute.xlu0 %4091
      %4094 = vset.pattern.permute.xlu0 1
      %4095 = vperm.xlu0 %4094, %v3942
      %v4096 = vpop.permute.xlu0 %4095
      %4098 = vset.pattern.permute.xlu0 1
      %4099 = vperm.xlu0 %4098, %v3943
      %v4100 = vpop.permute.xlu0 %4099
      %4102 = vset.pattern.permute.xlu0 1
      %4103 = vperm.xlu0 %4102, %v3944
      %v4104 = vpop.permute.xlu0 %4103
      %4106 = vset.pattern.permute.xlu0 1
      %4107 = vperm.xlu0 %4106, %v3945
      %v4108 = vpop.permute.xlu0 %4107
      %4110 = vset.pattern.permute.xlu0 1
      %4111 = vperm.xlu0 %4110, %v3946
      %v4112 = vpop.permute.xlu0 %4111
      %4114 = vset.pattern.permute.xlu0 1
      %4115 = vperm.xlu0 %4114, %v3947
      %v4116 = vpop.permute.xlu0 %4115
      %4118 = vset.pattern.permute.xlu0 1
      %4119 = vperm.xlu0 %4118, %v3948
      %v4120 = vpop.permute.xlu0 %4119
      %4122 = vset.pattern.permute.xlu0 1
      %4123 = vperm.xlu0 %4122, %v3949
      %v4124 = vpop.permute.xlu0 %4123
      %v4126 = vsub.f32 %v4064, %v1826
      %v4127 = vsub.f32 %v4068, %v1826
      %v4128 = vsub.f32 %v4072, %v1826
      %v4129 = vsub.f32 %v4076, %v1826
      %v4130 = vsub.f32 %v4080, %v1826
      %v4131 = vsub.f32 %v4084, %v1826
      %v4132 = vsub.f32 %v4088, %v1826
      %v4133 = vsub.f32 %v4092, %v1826
      %v4134 = vsub.f32 %v4096, %v1826
      %v4135 = vsub.f32 %v4100, %v1826
      %v4136 = vsub.f32 %v4104, %v1826
      %v4137 = vsub.f32 %v4108, %v1826
      %v4138 = vsub.f32 %v4112, %v1826
      %v4139 = vsub.f32 %v4116, %v1826
      %v4140 = vsub.f32 %v4120, %v1826
      %v4141 = vsub.f32 %v4124, %v1826
      %v4142 = vmul.f32 %v4126, %v4126
      %v4143 = vmul.f32 %v4127, %v4127
      %v4144 = vmul.f32 %v4128, %v4128
      %v4145 = vmul.f32 %v4129, %v4129
      %v4146 = vmul.f32 %v4130, %v4130
      %v4147 = vmul.f32 %v4131, %v4131
      %v4148 = vmul.f32 %v4132, %v4132
      %v4149 = vmul.f32 %v4133, %v4133
      %v4150 = vmul.f32 %v4134, %v4134
      %v4151 = vmul.f32 %v4135, %v4135
      %v4152 = vmul.f32 %v4136, %v4136
      %v4153 = vmul.f32 %v4137, %v4137
      %v4154 = vmul.f32 %v4138, %v4138
      %v4155 = vmul.f32 %v4139, %v4139
      %v4156 = vmul.f32 %v4140, %v4140
      %v4157 = vmul.f32 %v4141, %v4141
      %v4158 = vadd.f32 %v4046, %v4142
      %v4159 = vadd.f32 %v4047, %v4143
      %v4160 = vadd.f32 %v4048, %v4144
      %v4161 = vadd.f32 %v4049, %v4145
      %v4162 = vadd.f32 %v4050, %v4146
      %v4163 = vadd.f32 %v4051, %v4147
      %v4164 = vadd.f32 %v4052, %v4148
      %v4165 = vadd.f32 %v4053, %v4149
      %v4166 = vadd.f32 %v4054, %v4150
      %v4167 = vadd.f32 %v4055, %v4151
      %v4168 = vadd.f32 %v4056, %v4152
      %v4169 = vadd.f32 %v4057, %v4153
      %v4170 = vadd.f32 %v4058, %v4154
      %v4171 = vadd.f32 %v4059, %v4155
      %v4172 = vadd.f32 %v4060, %v4156
      %v4173 = vadd.f32 %v4061, %v4157
      %v4174 = vsub.f32 0.0, %v4158
      %v4175 = vsub.f32 0.0, %v4159
      %v4176 = vsub.f32 0.0, %v4160
      %v4177 = vsub.f32 0.0, %v4161
      %v4178 = vsub.f32 0.0, %v4162
      %v4179 = vsub.f32 0.0, %v4163
      %v4180 = vsub.f32 0.0, %v4164
      %v4181 = vsub.f32 0.0, %v4165
      %v4182 = vsub.f32 0.0, %v4166
      %v4183 = vsub.f32 0.0, %v4167
      %v4184 = vsub.f32 0.0, %v4168
      %v4185 = vsub.f32 0.0, %v4169
      %v4186 = vsub.f32 0.0, %v4170
      %v4187 = vsub.f32 0.0, %v4171
      %v4188 = vsub.f32 0.0, %v4172
      %v4189 = vsub.f32 0.0, %v4173
      %v4190 = vmul.f32 %v4174, 1.442695
      %v4191 = vpow.pop %v4190
      %v4192 = vmul.f32 %v4175, 1.442695
      %v4193 = vpow.pop %v4192
      %v4194 = vmul.f32 %v4176, 1.442695
      %v4195 = vpow.pop %v4194
      %v4196 = vmul.f32 %v4177, 1.442695
      %v4197 = vpow.pop %v4196
      %v4198 = vmul.f32 %v4178, 1.442695
      %v4199 = vpow.pop %v4198
      %v4200 = vmul.f32 %v4179, 1.442695
      %v4201 = vpow.pop %v4200
      %v4202 = vmul.f32 %v4180, 1.442695
      %v4203 = vpow.pop %v4202
      %v4204 = vmul.f32 %v4181, 1.442695
      %v4205 = vpow.pop %v4204
      %v4206 = vmul.f32 %v4182, 1.442695
      %v4207 = vpow.pop %v4206
      %v4208 = vmul.f32 %v4183, 1.442695
      %v4209 = vpow.pop %v4208
      %v4210 = vmul.f32 %v4184, 1.442695
      %v4211 = vpow.pop %v4210
      %v4212 = vmul.f32 %v4185, 1.442695
      %v4213 = vpow.pop %v4212
      %v4214 = vmul.f32 %v4186, 1.442695
      %v4215 = vpow.pop %v4214
      %v4216 = vmul.f32 %v4187, 1.442695
      %v4217 = vpow.pop %v4216
      %v4218 = vmul.f32 %v4188, 1.442695
      %v4219 = vpow.pop %v4218
      %v4220 = vmul.f32 %v4189, 1.442695
      %v4221 = vpow.pop %v4220
      %4222 = vst [vmem:[#allocation2 + $0x18] sm:$0xff] %v4191
      %4223 = vst [vmem:[#allocation2 + $0x60] sm:$0xff] %v4193
      %4224 = vst [vmem:[#allocation2 + $0xa8] sm:$0xff] %v4195
      %4225 = vst [vmem:[#allocation2 + $0xf0] sm:$0xff] %v4197
      %4226 = vst [vmem:[#allocation2 + $0x138] sm:$0xff] %v4199
      %4227 = vst [vmem:[#allocation2 + $0x180] sm:$0xff] %v4201
      %4228 = vst [vmem:[#allocation2 + $0x1c8] sm:$0xff] %v4203
      %4229 = vst [vmem:[#allocation2 + $0x210] sm:$0xff] %v4205
      %4230 = vst [vmem:[#allocation2 + $0x258] sm:$0xff] %v4207
      %4231 = vst [vmem:[#allocation2 + $0x2a0] sm:$0xff] %v4209
      %4232 = vst [vmem:[#allocation2 + $0x2e8] sm:$0xff] %v4211
      %4233 = vst [vmem:[#allocation2 + $0x330] sm:$0xff] %v4213
      %4234 = vst [vmem:[#allocation2 + $0x378] sm:$0xff] %v4215
      %4235 = vst [vmem:[#allocation2 + $0x3c0] sm:$0xff] %v4217
      %4236 = vst [vmem:[#allocation2 + $0x408] sm:$0xff] %v4219
      %4237 = vst [vmem:[#allocation2 + $0x450] sm:$0xff] %v4221
      %4238 = vrot.lane.b32.xlu0 %v1122, 64
      %v4239 = vpop.permute.xlu0 %4238
      %4240 = vrot.lane.b32.xlu0 %v1128, 64
      %v4241 = vpop.permute.xlu0 %4240
      %4242 = vrot.lane.b32.xlu0 %v1134, 64
      %v4243 = vpop.permute.xlu0 %4242
      %4244 = vrot.lane.b32.xlu0 %v1140, 64
      %v4245 = vpop.permute.xlu0 %4244
      %4246 = vrot.lane.b32.xlu0 %v1146, 64
      %v4247 = vpop.permute.xlu0 %4246
      %4248 = vrot.lane.b32.xlu0 %v1152, 64
      %v4249 = vpop.permute.xlu0 %4248
      %4250 = vrot.lane.b32.xlu0 %v1158, 64
      %v4251 = vpop.permute.xlu0 %4250
      %4252 = vrot.lane.b32.xlu0 %v1164, 64
      %v4253 = vpop.permute.xlu0 %4252
      %4254 = vrot.lane.b32.xlu0 %v1170, 64
      %v4255 = vpop.permute.xlu0 %4254
      %4256 = vrot.lane.b32.xlu0 %v1176, 64
      %v4257 = vpop.permute.xlu0 %4256
      %4258 = vrot.lane.b32.xlu0 %v1182, 64
      %v4259 = vpop.permute.xlu0 %4258
      %4260 = vrot.lane.b32.xlu0 %v1188, 64
      %v4261 = vpop.permute.xlu0 %4260
      %4262 = vrot.lane.b32.xlu0 %v1194, 64
      %v4263 = vpop.permute.xlu0 %4262
      %4264 = vrot.lane.b32.xlu0 %v1200, 64
      %v4265 = vpop.permute.xlu0 %4264
      %4266 = vrot.lane.b32.xlu0 %v1206, 64
      %v4267 = vpop.permute.xlu0 %4266
      %4268 = vrot.lane.b32.xlu0 %v1212, 64
      %v4269 = vpop.permute.xlu0 %4268
      %v4286 = vsel %vm1303, %v4239, 0.0
      %4287 = vadd.xlane.f32.xlu0 %v4286
      %v4288 = vpop.xlane.xlu0 %4287
      %v4289 = vsel %vm1303, %v4241, 0.0
      %4290 = vadd.xlane.f32.xlu0 %v4289
      %v4291 = vpop.xlane.xlu0 %4290
      %v4292 = vsel %vm1303, %v4243, 0.0
      %4293 = vadd.xlane.f32.xlu0 %v4292
      %v4294 = vpop.xlane.xlu0 %4293
      %v4295 = vsel %vm1303, %v4245, 0.0
      %4296 = vadd.xlane.f32.xlu0 %v4295
      %v4297 = vpop.xlane.xlu0 %4296
      %v4298 = vsel %vm1303, %v4247, 0.0
      %4299 = vadd.xlane.f32.xlu0 %v4298
      %v4300 = vpop.xlane.xlu0 %4299
      %v4301 = vsel %vm1303, %v4249, 0.0
      %4302 = vadd.xlane.f32.xlu0 %v4301
      %v4303 = vpop.xlane.xlu0 %4302
      %v4304 = vsel %vm1303, %v4251, 0.0
      %4305 = vadd.xlane.f32.xlu0 %v4304
      %v4306 = vpop.xlane.xlu0 %4305
      %v4307 = vsel %vm1303, %v4253, 0.0
      %4308 = vadd.xlane.f32.xlu0 %v4307
      %v4309 = vpop.xlane.xlu0 %4308
      %v4310 = vsel %vm1303, %v4255, 0.0
      %4311 = vadd.xlane.f32.xlu0 %v4310
      %v4312 = vpop.xlane.xlu0 %4311
      %v4313 = vsel %vm1303, %v4257, 0.0
      %4314 = vadd.xlane.f32.xlu0 %v4313
      %v4315 = vpop.xlane.xlu0 %4314
      %v4316 = vsel %vm1303, %v4259, 0.0
      %4317 = vadd.xlane.f32.xlu0 %v4316
      %v4318 = vpop.xlane.xlu0 %4317
      %v4319 = vsel %vm1303, %v4261, 0.0
      %4320 = vadd.xlane.f32.xlu0 %v4319
      %v4321 = vpop.xlane.xlu0 %4320
      %v4322 = vsel %vm1303, %v4263, 0.0
      %4323 = vadd.xlane.f32.xlu0 %v4322
      %v4324 = vpop.xlane.xlu0 %4323
      %v4325 = vsel %vm1303, %v4265, 0.0
      %4326 = vadd.xlane.f32.xlu0 %v4325
      %v4327 = vpop.xlane.xlu0 %4326
      %v4328 = vsel %vm1303, %v4267, 0.0
      %4329 = vadd.xlane.f32.xlu0 %v4328
      %v4330 = vpop.xlane.xlu0 %4329
      %v4331 = vsel %vm1303, %v4269, 0.0
      %4332 = vadd.xlane.f32.xlu0 %v4331
      %v4333 = vpop.xlane.xlu0 %4332
      %v4334 = vmul.f32 %v4288, %v1352
      %v4335 = vmul.f32 %v4291, %v1352
      %v4336 = vmul.f32 %v4294, %v1352
      %v4337 = vmul.f32 %v4297, %v1352
      %v4338 = vmul.f32 %v4300, %v1352
      %v4339 = vmul.f32 %v4303, %v1352
      %v4340 = vmul.f32 %v4306, %v1352
      %v4341 = vmul.f32 %v4309, %v1352
      %v4342 = vmul.f32 %v4312, %v1352
      %v4343 = vmul.f32 %v4315, %v1352
      %v4344 = vmul.f32 %v4318, %v1352
      %v4345 = vmul.f32 %v4321, %v1352
      %v4346 = vmul.f32 %v4324, %v1352
      %v4347 = vmul.f32 %v4327, %v1352
      %v4348 = vmul.f32 %v4330, %v1352
      %v4349 = vmul.f32 %v4333, %v1352
      %v4350 = vsub.f32 %v1122, %v4334
      %v4351 = vsub.f32 %v1128, %v4335
      %v4352 = vsub.f32 %v1134, %v4336
      %v4353 = vsub.f32 %v1140, %v4337
      %v4354 = vsub.f32 %v1146, %v4338
      %v4355 = vsub.f32 %v1152, %v4339
      %v4356 = vsub.f32 %v1158, %v4340
      %v4357 = vsub.f32 %v1164, %v4341
      %v4358 = vsub.f32 %v1170, %v4342
      %v4359 = vsub.f32 %v1176, %v4343
      %v4360 = vsub.f32 %v1182, %v4344
      %v4361 = vsub.f32 %v1188, %v4345
      %v4362 = vsub.f32 %v1194, %v4346
      %v4363 = vsub.f32 %v1200, %v4347
      %v4364 = vsub.f32 %v1206, %v4348
      %v4365 = vsub.f32 %v1212, %v4349
      %v4366 = vmul.f32 %v4350, %v4350
      %v4367 = vmul.f32 %v4351, %v4351
      %v4368 = vmul.f32 %v4352, %v4352
      %v4369 = vmul.f32 %v4353, %v4353
      %v4370 = vmul.f32 %v4354, %v4354
      %v4371 = vmul.f32 %v4355, %v4355
      %v4372 = vmul.f32 %v4356, %v4356
      %v4373 = vmul.f32 %v4357, %v4357
      %v4374 = vmul.f32 %v4358, %v4358
      %v4375 = vmul.f32 %v4359, %v4359
      %v4376 = vmul.f32 %v4360, %v4360
      %v4377 = vmul.f32 %v4361, %v4361
      %v4378 = vmul.f32 %v4362, %v4362
      %v4379 = vmul.f32 %v4363, %v4363
      %v4380 = vmul.f32 %v4364, %v4364
      %v4381 = vmul.f32 %v4365, %v4365
      %4398 = vrot.lane.b32.xlu0 %v4366, 64
      %v4399 = vpop.permute.xlu0 %4398
      %4400 = vrot.lane.b32.xlu0 %v4367, 64
      %v4401 = vpop.permute.xlu0 %4400
      %4402 = vrot.lane.b32.xlu0 %v4368, 64
      %v4403 = vpop.permute.xlu0 %4402
      %4404 = vrot.lane.b32.xlu0 %v4369, 64
      %v4405 = vpop.permute.xlu0 %4404
      %4406 = vrot.lane.b32.xlu0 %v4370, 64
      %v4407 = vpop.permute.xlu0 %4406
      %4408 = vrot.lane.b32.xlu0 %v4371, 64
      %v4409 = vpop.permute.xlu0 %4408
      %4410 = vrot.lane.b32.xlu0 %v4372, 64
      %v4411 = vpop.permute.xlu0 %4410
      %4412 = vrot.lane.b32.xlu0 %v4373, 64
      %v4413 = vpop.permute.xlu0 %4412
      %4414 = vrot.lane.b32.xlu0 %v4374, 64
      %v4415 = vpop.permute.xlu0 %4414
      %4416 = vrot.lane.b32.xlu0 %v4375, 64
      %v4417 = vpop.permute.xlu0 %4416
      %4418 = vrot.lane.b32.xlu0 %v4376, 64
      %v4419 = vpop.permute.xlu0 %4418
      %4420 = vrot.lane.b32.xlu0 %v4377, 64
      %v4421 = vpop.permute.xlu0 %4420
      %4422 = vrot.lane.b32.xlu0 %v4378, 64
      %v4423 = vpop.permute.xlu0 %4422
      %4424 = vrot.lane.b32.xlu0 %v4379, 64
      %v4425 = vpop.permute.xlu0 %4424
      %4426 = vrot.lane.b32.xlu0 %v4380, 64
      %v4427 = vpop.permute.xlu0 %4426
      %4428 = vrot.lane.b32.xlu0 %v4381, 64
      %v4429 = vpop.permute.xlu0 %4428
      %v4446 = vsel %vm1303, %v4399, 0.0
      %4447 = vadd.xlane.f32.xlu0 %v4446
      %v4448 = vpop.xlane.xlu0 %4447
      %v4449 = vsel %vm1303, %v4401, 0.0
      %4450 = vadd.xlane.f32.xlu0 %v4449
      %v4451 = vpop.xlane.xlu0 %4450
      %v4452 = vsel %vm1303, %v4403, 0.0
      %4453 = vadd.xlane.f32.xlu0 %v4452
      %v4454 = vpop.xlane.xlu0 %4453
      %v4455 = vsel %vm1303, %v4405, 0.0
      %4456 = vadd.xlane.f32.xlu0 %v4455
      %v4457 = vpop.xlane.xlu0 %4456
      %v4458 = vsel %vm1303, %v4407, 0.0
      %4459 = vadd.xlane.f32.xlu0 %v4458
      %v4460 = vpop.xlane.xlu0 %4459
      %v4461 = vsel %vm1303, %v4409, 0.0
      %4462 = vadd.xlane.f32.xlu0 %v4461
      %v4463 = vpop.xlane.xlu0 %4462
      %v4464 = vsel %vm1303, %v4411, 0.0
      %4465 = vadd.xlane.f32.xlu0 %v4464
      %v4466 = vpop.xlane.xlu0 %4465
      %v4467 = vsel %vm1303, %v4413, 0.0
      %4468 = vadd.xlane.f32.xlu0 %v4467
      %v4469 = vpop.xlane.xlu0 %4468
      %v4470 = vsel %vm1303, %v4415, 0.0
      %4471 = vadd.xlane.f32.xlu0 %v4470
      %v4472 = vpop.xlane.xlu0 %4471
      %v4473 = vsel %vm1303, %v4417, 0.0
      %4474 = vadd.xlane.f32.xlu0 %v4473
      %v4475 = vpop.xlane.xlu0 %4474
      %v4476 = vsel %vm1303, %v4419, 0.0
      %4477 = vadd.xlane.f32.xlu0 %v4476
      %v4478 = vpop.xlane.xlu0 %4477
      %v4479 = vsel %vm1303, %v4421, 0.0
      %4480 = vadd.xlane.f32.xlu0 %v4479
      %v4481 = vpop.xlane.xlu0 %4480
      %v4482 = vsel %vm1303, %v4423, 0.0
      %4483 = vadd.xlane.f32.xlu0 %v4482
      %v4484 = vpop.xlane.xlu0 %4483
      %v4485 = vsel %vm1303, %v4425, 0.0
      %4486 = vadd.xlane.f32.xlu0 %v4485
      %v4487 = vpop.xlane.xlu0 %4486
      %v4488 = vsel %vm1303, %v4427, 0.0
      %4489 = vadd.xlane.f32.xlu0 %v4488
      %v4490 = vpop.xlane.xlu0 %4489
      %v4491 = vsel %vm1303, %v4429, 0.0
      %4492 = vadd.xlane.f32.xlu0 %v4491
      %v4493 = vpop.xlane.xlu0 %4492
      %v4494 = vmul.f32 %v4448, %v1352
      %v4495 = vmul.f32 %v4451, %v1352
      %v4496 = vmul.f32 %v4454, %v1352
      %v4497 = vmul.f32 %v4457, %v1352
      %v4498 = vmul.f32 %v4460, %v1352
      %v4499 = vmul.f32 %v4463, %v1352
      %v4500 = vmul.f32 %v4466, %v1352
      %v4501 = vmul.f32 %v4469, %v1352
      %v4502 = vmul.f32 %v4472, %v1352
      %v4503 = vmul.f32 %v4475, %v1352
      %v4504 = vmul.f32 %v4478, %v1352
      %v4505 = vmul.f32 %v4481, %v1352
      %v4506 = vmul.f32 %v4484, %v1352
      %v4507 = vmul.f32 %v4487, %v1352
      %v4508 = vmul.f32 %v4490, %v1352
      %v4509 = vmul.f32 %v4493, %v1352
      %v4510 = vadd.f32 %v4494, 1e-05
      %v4511 = vadd.f32 %v4495, 1e-05
      %v4512 = vadd.f32 %v4496, 1e-05
      %v4513 = vadd.f32 %v4497, 1e-05
      %v4514 = vadd.f32 %v4498, 1e-05
      %v4515 = vadd.f32 %v4499, 1e-05
      %v4516 = vadd.f32 %v4500, 1e-05
      %v4517 = vadd.f32 %v4501, 1e-05
      %v4518 = vadd.f32 %v4502, 1e-05
      %v4519 = vadd.f32 %v4503, 1e-05
      %v4520 = vadd.f32 %v4504, 1e-05
      %v4521 = vadd.f32 %v4505, 1e-05
      %v4522 = vadd.f32 %v4506, 1e-05
      %v4523 = vadd.f32 %v4507, 1e-05
      %v4524 = vadd.f32 %v4508, 1e-05
      %v4525 = vadd.f32 %v4509, 1e-05
      %v4526 = vrsqrt.pop %v4510
      %v4527 = vrsqrt.pop %v4511
      %v4528 = vrsqrt.pop %v4512
      %v4529 = vrsqrt.pop %v4513
      %v4530 = vrsqrt.pop %v4514
      %v4531 = vrsqrt.pop %v4515
      %v4532 = vrsqrt.pop %v4516
      %v4533 = vrsqrt.pop %v4517
      %v4534 = vrsqrt.pop %v4518
      %v4535 = vrsqrt.pop %v4519
      %v4536 = vrsqrt.pop %v4520
      %v4537 = vrsqrt.pop %v4521
      %v4538 = vrsqrt.pop %v4522
      %v4539 = vrsqrt.pop %v4523
      %v4540 = vrsqrt.pop %v4524
      %v4541 = vrsqrt.pop %v4525
      %v4542 = vmul.f32 %v4350, %v4526
      %v4543 = vmul.f32 %v4351, %v4527
      %v4544 = vmul.f32 %v4352, %v4528
      %v4545 = vmul.f32 %v4353, %v4529
      %v4546 = vmul.f32 %v4354, %v4530
      %v4547 = vmul.f32 %v4355, %v4531
      %v4548 = vmul.f32 %v4356, %v4532
      %v4549 = vmul.f32 %v4357, %v4533
      %v4550 = vmul.f32 %v4358, %v4534
      %v4551 = vmul.f32 %v4359, %v4535
      %v4552 = vmul.f32 %v4360, %v4536
      %v4553 = vmul.f32 %v4361, %v4537
      %v4554 = vmul.f32 %v4362, %v4538
      %v4555 = vmul.f32 %v4363, %v4539
      %v4556 = vmul.f32 %v4364, %v4540
      %v4557 = vmul.f32 %v4365, %v4541
      %4558 = vrot.lane.b32.xlu0 %v1517, 64
      %v4559 = vpop.permute.xlu0 %4558
      %v4561 = vmul.f32 %v4542, %v4559
      %v4562 = vmul.f32 %v4543, %v4559
      %v4563 = vmul.f32 %v4544, %v4559
      %v4564 = vmul.f32 %v4545, %v4559
      %v4565 = vmul.f32 %v4546, %v4559
      %v4566 = vmul.f32 %v4547, %v4559
      %v4567 = vmul.f32 %v4548, %v4559
      %v4568 = vmul.f32 %v4549, %v4559
      %v4569 = vmul.f32 %v4550, %v4559
      %v4570 = vmul.f32 %v4551, %v4559
      %v4571 = vmul.f32 %v4552, %v4559
      %v4572 = vmul.f32 %v4553, %v4559
      %v4573 = vmul.f32 %v4554, %v4559
      %v4574 = vmul.f32 %v4555, %v4559
      %v4575 = vmul.f32 %v4556, %v4559
      %v4576 = vmul.f32 %v4557, %v4559
      %4577 = vrot.lane.b32.xlu0 %v1539, 64
      %v4578 = vpop.permute.xlu0 %4577
      %v4580 = vadd.f32 %v4561, %v4578
      %v4581 = vadd.f32 %v4562, %v4578
      %v4582 = vadd.f32 %v4563, %v4578
      %v4583 = vadd.f32 %v4564, %v4578
      %v4584 = vadd.f32 %v4565, %v4578
      %v4585 = vadd.f32 %v4566, %v4578
      %v4586 = vadd.f32 %v4567, %v4578
      %v4587 = vadd.f32 %v4568, %v4578
      %v4588 = vadd.f32 %v4569, %v4578
      %v4589 = vadd.f32 %v4570, %v4578
      %v4590 = vadd.f32 %v4571, %v4578
      %v4591 = vadd.f32 %v4572, %v4578
      %v4592 = vadd.f32 %v4573, %v4578
      %v4593 = vadd.f32 %v4574, %v4578
      %v4594 = vadd.f32 %v4575, %v4578
      %v4595 = vadd.f32 %v4576, %v4578
      %v4596 = vsel %vm1573, %v4580, 0.0
      %v4597 = vsel %vm1574, %v4581, 0.0
      %v4598 = vsel %vm1575, %v4582, 0.0
      %v4599 = vsel %vm1576, %v4583, 0.0
      %v4600 = vsel %vm1577, %v4584, 0.0
      %v4601 = vsel %vm1578, %v4585, 0.0
      %v4602 = vsel %vm1579, %v4586, 0.0
      %v4603 = vsel %vm1580, %v4587, 0.0
      %v4604 = vsel %vm1581, %v4588, 0.0
      %v4605 = vsel %vm1582, %v4589, 0.0
      %v4606 = vsel %vm1583, %v4590, 0.0
      %v4607 = vsel %vm1584, %v4591, 0.0
      %v4608 = vsel %vm1585, %v4592, 0.0
      %v4609 = vsel %vm1586, %v4593, 0.0
      %v4610 = vsel %vm1587, %v4594, 0.0
      %v4611 = vsel %vm1588, %v4595, 0.0
      %4628 = vrot.lane.b32.xlu0 %v4596, 64
      %v4629 = vpop.permute.xlu0 %4628
      %4630 = vrot.lane.b32.xlu0 %v4597, 64
      %v4631 = vpop.permute.xlu0 %4630
      %4632 = vrot.lane.b32.xlu0 %v4598, 64
      %v4633 = vpop.permute.xlu0 %4632
      %4634 = vrot.lane.b32.xlu0 %v4599, 64
      %v4635 = vpop.permute.xlu0 %4634
      %4636 = vrot.lane.b32.xlu0 %v4600, 64
      %v4637 = vpop.permute.xlu0 %4636
      %4638 = vrot.lane.b32.xlu0 %v4601, 64
      %v4639 = vpop.permute.xlu0 %4638
      %4640 = vrot.lane.b32.xlu0 %v4602, 64
      %v4641 = vpop.permute.xlu0 %4640
      %4642 = vrot.lane.b32.xlu0 %v4603, 64
      %v4643 = vpop.permute.xlu0 %4642
      %4644 = vrot.lane.b32.xlu0 %v4604, 64
      %v4645 = vpop.permute.xlu0 %4644
      %4646 = vrot.lane.b32.xlu0 %v4605, 64
      %v4647 = vpop.permute.xlu0 %4646
      %4648 = vrot.lane.b32.xlu0 %v4606, 64
      %v4649 = vpop.permute.xlu0 %4648
      %4650 = vrot.lane.b32.xlu0 %v4607, 64
      %v4651 = vpop.permute.xlu0 %4650
      %4652 = vrot.lane.b32.xlu0 %v4608, 64
      %v4653 = vpop.permute.xlu0 %4652
      %4654 = vrot.lane.b32.xlu0 %v4609, 64
      %v4655 = vpop.permute.xlu0 %4654
      %4656 = vrot.lane.b32.xlu0 %v4610, 64
      %v4657 = vpop.permute.xlu0 %4656
      %4658 = vrot.lane.b32.xlu0 %v4611, 64
      %v4659 = vpop.permute.xlu0 %4658
      %4676 = vst.msk [vmem:[#allocation3 + $0x200] sm:$0xff] %vm1303, %v4629
      %4677 = vst.msk [vmem:[#allocation3 + $0x208] sm:$0xff] %vm1303, %v4631
      %4678 = vst.msk [vmem:[#allocation3 + $0x210] sm:$0xff] %vm1303, %v4633
      %4679 = vst.msk [vmem:[#allocation3 + $0x218] sm:$0xff] %vm1303, %v4635
      %4680 = vst.msk [vmem:[#allocation3 + $0x220] sm:$0xff] %vm1303, %v4637
      %4681 = vst.msk [vmem:[#allocation3 + $0x228] sm:$0xff] %vm1303, %v4639
      %4682 = vst.msk [vmem:[#allocation3 + $0x230] sm:$0xff] %vm1303, %v4641
      %4683 = vst.msk [vmem:[#allocation3 + $0x238] sm:$0xff] %vm1303, %v4643
      %4684 = vst.msk [vmem:[#allocation3 + $0x240] sm:$0xff] %vm1303, %v4645
      %4685 = vst.msk [vmem:[#allocation3 + $0x248] sm:$0xff] %vm1303, %v4647
      %4686 = vst.msk [vmem:[#allocation3 + $0x250] sm:$0xff] %vm1303, %v4649
      %4687 = vst.msk [vmem:[#allocation3 + $0x258] sm:$0xff] %vm1303, %v4651
      %4688 = vst.msk [vmem:[#allocation3 + $0x260] sm:$0xff] %vm1303, %v4653
      %4689 = vst.msk [vmem:[#allocation3 + $0x268] sm:$0xff] %vm1303, %v4655
      %4690 = vst.msk [vmem:[#allocation3 + $0x270] sm:$0xff] %vm1303, %v4657
      %4691 = vst.msk [vmem:[#allocation3 + $0x278] sm:$0xff] %vm1303, %v4659
      %4692 = vrot.lane.b32.xlu0 %v1625, 120
      %v4693 = vpop.permute.xlu0 %4692
      %v4695 = vsub.f32 %v1234, %v4693
      %v4696 = vsub.f32 %v1235, %v4693
      %v4697 = vsub.f32 %v1236, %v4693
      %v4698 = vsub.f32 %v1237, %v4693
      %v4699 = vsub.f32 %v1238, %v4693
      %v4700 = vsub.f32 %v1239, %v4693
      %v4701 = vsub.f32 %v1240, %v4693
      %v4702 = vsub.f32 %v1241, %v4693
      %v4703 = vsub.f32 %v1242, %v4693
      %v4704 = vsub.f32 %v1243, %v4693
      %v4705 = vsub.f32 %v1244, %v4693
      %v4706 = vsub.f32 %v1245, %v4693
      %v4707 = vsub.f32 %v1246, %v4693
      %v4708 = vsub.f32 %v1247, %v4693
      %v4709 = vsub.f32 %v1248, %v4693
      %v4710 = vsub.f32 %v1249, %v4693
      %4712 = vset.pattern.permute.xlu0 0
      %4713 = vperm.xlu0 %4712, %v4695
      %v4714 = vpop.permute.xlu0 %4713
      %4717 = vset.pattern.permute.xlu0 0
      %4718 = vperm.xlu0 %4717, %v4696
      %v4719 = vpop.permute.xlu0 %4718
      %4722 = vset.pattern.permute.xlu0 0
      %4723 = vperm.xlu0 %4722, %v4697
      %v4724 = vpop.permute.xlu0 %4723
      %4727 = vset.pattern.permute.xlu0 0
      %4728 = vperm.xlu0 %4727, %v4698
      %v4729 = vpop.permute.xlu0 %4728
      %4732 = vset.pattern.permute.xlu0 0
      %4733 = vperm.xlu0 %4732, %v4699
      %v4734 = vpop.permute.xlu0 %4733
      %4737 = vset.pattern.permute.xlu0 0
      %4738 = vperm.xlu0 %4737, %v4700
      %v4739 = vpop.permute.xlu0 %4738
      %4742 = vset.pattern.permute.xlu0 0
      %4743 = vperm.xlu0 %4742, %v4701
      %v4744 = vpop.permute.xlu0 %4743
      %4747 = vset.pattern.permute.xlu0 0
      %4748 = vperm.xlu0 %4747, %v4702
      %v4749 = vpop.permute.xlu0 %4748
      %4752 = vset.pattern.permute.xlu0 0
      %4753 = vperm.xlu0 %4752, %v4703
      %v4754 = vpop.permute.xlu0 %4753
      %4757 = vset.pattern.permute.xlu0 0
      %4758 = vperm.xlu0 %4757, %v4704
      %v4759 = vpop.permute.xlu0 %4758
      %4762 = vset.pattern.permute.xlu0 0
      %4763 = vperm.xlu0 %4762, %v4705
      %v4764 = vpop.permute.xlu0 %4763
      %4767 = vset.pattern.permute.xlu0 0
      %4768 = vperm.xlu0 %4767, %v4706
      %v4769 = vpop.permute.xlu0 %4768
      %4772 = vset.pattern.permute.xlu0 0
      %4773 = vperm.xlu0 %4772, %v4707
      %v4774 = vpop.permute.xlu0 %4773
      %4777 = vset.pattern.permute.xlu0 0
      %4778 = vperm.xlu0 %4777, %v4708
      %v4779 = vpop.permute.xlu0 %4778
      %4782 = vset.pattern.permute.xlu0 0
      %4783 = vperm.xlu0 %4782, %v4709
      %v4784 = vpop.permute.xlu0 %4783
      %4787 = vset.pattern.permute.xlu0 0
      %4788 = vperm.xlu0 %4787, %v4710
      %v4789 = vpop.permute.xlu0 %4788
      %v4791 = vsub.f32 %v4714, %v1726
      %v4792 = vsub.f32 %v4719, %v1726
      %v4793 = vsub.f32 %v4724, %v1726
      %v4794 = vsub.f32 %v4729, %v1726
      %v4795 = vsub.f32 %v4734, %v1726
      %v4796 = vsub.f32 %v4739, %v1726
      %v4797 = vsub.f32 %v4744, %v1726
      %v4798 = vsub.f32 %v4749, %v1726
      %v4799 = vsub.f32 %v4754, %v1726
      %v4800 = vsub.f32 %v4759, %v1726
      %v4801 = vsub.f32 %v4764, %v1726
      %v4802 = vsub.f32 %v4769, %v1726
      %v4803 = vsub.f32 %v4774, %v1726
      %v4804 = vsub.f32 %v4779, %v1726
      %v4805 = vsub.f32 %v4784, %v1726
      %v4806 = vsub.f32 %v4789, %v1726
      %v4807 = vmul.f32 %v4791, %v4791
      %v4808 = vmul.f32 %v4792, %v4792
      %v4809 = vmul.f32 %v4793, %v4793
      %v4810 = vmul.f32 %v4794, %v4794
      %v4811 = vmul.f32 %v4795, %v4795
      %v4812 = vmul.f32 %v4796, %v4796
      %v4813 = vmul.f32 %v4797, %v4797
      %v4814 = vmul.f32 %v4798, %v4798
      %v4815 = vmul.f32 %v4799, %v4799
      %v4816 = vmul.f32 %v4800, %v4800
      %v4817 = vmul.f32 %v4801, %v4801
      %v4818 = vmul.f32 %v4802, %v4802
      %v4819 = vmul.f32 %v4803, %v4803
      %v4820 = vmul.f32 %v4804, %v4804
      %v4821 = vmul.f32 %v4805, %v4805
      %v4822 = vmul.f32 %v4806, %v4806
      %4823 = vset.pattern.permute.xlu0 1
      %4824 = vperm.xlu0 %4823, %v4695
      %v4825 = vpop.permute.xlu0 %4824
      %4827 = vset.pattern.permute.xlu0 1
      %4828 = vperm.xlu0 %4827, %v4696
      %v4829 = vpop.permute.xlu0 %4828
      %4831 = vset.pattern.permute.xlu0 1
      %4832 = vperm.xlu0 %4831, %v4697
      %v4833 = vpop.permute.xlu0 %4832
      %4835 = vset.pattern.permute.xlu0 1
      %4836 = vperm.xlu0 %4835, %v4698
      %v4837 = vpop.permute.xlu0 %4836
      %4839 = vset.pattern.permute.xlu0 1
      %4840 = vperm.xlu0 %4839, %v4699
      %v4841 = vpop.permute.xlu0 %4840
      %4843 = vset.pattern.permute.xlu0 1
      %4844 = vperm.xlu0 %4843, %v4700
      %v4845 = vpop.permute.xlu0 %4844
      %4847 = vset.pattern.permute.xlu0 1
      %4848 = vperm.xlu0 %4847, %v4701
      %v4849 = vpop.permute.xlu0 %4848
      %4851 = vset.pattern.permute.xlu0 1
      %4852 = vperm.xlu0 %4851, %v4702
      %v4853 = vpop.permute.xlu0 %4852
      %4855 = vset.pattern.permute.xlu0 1
      %4856 = vperm.xlu0 %4855, %v4703
      %v4857 = vpop.permute.xlu0 %4856
      %4859 = vset.pattern.permute.xlu0 1
      %4860 = vperm.xlu0 %4859, %v4704
      %v4861 = vpop.permute.xlu0 %4860
      %4863 = vset.pattern.permute.xlu0 1
      %4864 = vperm.xlu0 %4863, %v4705
      %v4865 = vpop.permute.xlu0 %4864
      %4867 = vset.pattern.permute.xlu0 1
      %4868 = vperm.xlu0 %4867, %v4706
      %v4869 = vpop.permute.xlu0 %4868
      %4871 = vset.pattern.permute.xlu0 1
      %4872 = vperm.xlu0 %4871, %v4707
      %v4873 = vpop.permute.xlu0 %4872
      %4875 = vset.pattern.permute.xlu0 1
      %4876 = vperm.xlu0 %4875, %v4708
      %v4877 = vpop.permute.xlu0 %4876
      %4879 = vset.pattern.permute.xlu0 1
      %4880 = vperm.xlu0 %4879, %v4709
      %v4881 = vpop.permute.xlu0 %4880
      %4883 = vset.pattern.permute.xlu0 1
      %4884 = vperm.xlu0 %4883, %v4710
      %v4885 = vpop.permute.xlu0 %4884
      %v4887 = vsub.f32 %v4825, %v1826
      %v4888 = vsub.f32 %v4829, %v1826
      %v4889 = vsub.f32 %v4833, %v1826
      %v4890 = vsub.f32 %v4837, %v1826
      %v4891 = vsub.f32 %v4841, %v1826
      %v4892 = vsub.f32 %v4845, %v1826
      %v4893 = vsub.f32 %v4849, %v1826
      %v4894 = vsub.f32 %v4853, %v1826
      %v4895 = vsub.f32 %v4857, %v1826
      %v4896 = vsub.f32 %v4861, %v1826
      %v4897 = vsub.f32 %v4865, %v1826
      %v4898 = vsub.f32 %v4869, %v1826
      %v4899 = vsub.f32 %v4873, %v1826
      %v4900 = vsub.f32 %v4877, %v1826
      %v4901 = vsub.f32 %v4881, %v1826
      %v4902 = vsub.f32 %v4885, %v1826
      %v4903 = vmul.f32 %v4887, %v4887
      %v4904 = vmul.f32 %v4888, %v4888
      %v4905 = vmul.f32 %v4889, %v4889
      %v4906 = vmul.f32 %v4890, %v4890
      %v4907 = vmul.f32 %v4891, %v4891
      %v4908 = vmul.f32 %v4892, %v4892
      %v4909 = vmul.f32 %v4893, %v4893
      %v4910 = vmul.f32 %v4894, %v4894
      %v4911 = vmul.f32 %v4895, %v4895
      %v4912 = vmul.f32 %v4896, %v4896
      %v4913 = vmul.f32 %v4897, %v4897
      %v4914 = vmul.f32 %v4898, %v4898
      %v4915 = vmul.f32 %v4899, %v4899
      %v4916 = vmul.f32 %v4900, %v4900
      %v4917 = vmul.f32 %v4901, %v4901
      %v4918 = vmul.f32 %v4902, %v4902
      %v4919 = vadd.f32 %v4807, %v4903
      %v4920 = vadd.f32 %v4808, %v4904
      %v4921 = vadd.f32 %v4809, %v4905
      %v4922 = vadd.f32 %v4810, %v4906
      %v4923 = vadd.f32 %v4811, %v4907
      %v4924 = vadd.f32 %v4812, %v4908
      %v4925 = vadd.f32 %v4813, %v4909
      %v4926 = vadd.f32 %v4814, %v4910
      %v4927 = vadd.f32 %v4815, %v4911
      %v4928 = vadd.f32 %v4816, %v4912
      %v4929 = vadd.f32 %v4817, %v4913
      %v4930 = vadd.f32 %v4818, %v4914
      %v4931 = vadd.f32 %v4819, %v4915
      %v4932 = vadd.f32 %v4820, %v4916
      %v4933 = vadd.f32 %v4821, %v4917
      %v4934 = vadd.f32 %v4822, %v4918
      %v4935 = vsub.f32 0.0, %v4919
      %v4936 = vsub.f32 0.0, %v4920
      %v4937 = vsub.f32 0.0, %v4921
      %v4938 = vsub.f32 0.0, %v4922
      %v4939 = vsub.f32 0.0, %v4923
      %v4940 = vsub.f32 0.0, %v4924
      %v4941 = vsub.f32 0.0, %v4925
      %v4942 = vsub.f32 0.0, %v4926
      %v4943 = vsub.f32 0.0, %v4927
      %v4944 = vsub.f32 0.0, %v4928
      %v4945 = vsub.f32 0.0, %v4929
      %v4946 = vsub.f32 0.0, %v4930
      %v4947 = vsub.f32 0.0, %v4931
      %v4948 = vsub.f32 0.0, %v4932
      %v4949 = vsub.f32 0.0, %v4933
      %v4950 = vsub.f32 0.0, %v4934
      %v4951 = vmul.f32 %v4935, 1.442695
      %v4952 = vpow.pop %v4951
      %v4953 = vmul.f32 %v4936, 1.442695
      %v4954 = vpow.pop %v4953
      %v4955 = vmul.f32 %v4937, 1.442695
      %v4956 = vpow.pop %v4955
      %v4957 = vmul.f32 %v4938, 1.442695
      %v4958 = vpow.pop %v4957
      %v4959 = vmul.f32 %v4939, 1.442695
      %v4960 = vpow.pop %v4959
      %v4961 = vmul.f32 %v4940, 1.442695
      %v4962 = vpow.pop %v4961
      %v4963 = vmul.f32 %v4941, 1.442695
      %v4964 = vpow.pop %v4963
      %v4965 = vmul.f32 %v4942, 1.442695
      %v4966 = vpow.pop %v4965
      %v4967 = vmul.f32 %v4943, 1.442695
      %v4968 = vpow.pop %v4967
      %v4969 = vmul.f32 %v4944, 1.442695
      %v4970 = vpow.pop %v4969
      %v4971 = vmul.f32 %v4945, 1.442695
      %v4972 = vpow.pop %v4971
      %v4973 = vmul.f32 %v4946, 1.442695
      %v4974 = vpow.pop %v4973
      %v4975 = vmul.f32 %v4947, 1.442695
      %v4976 = vpow.pop %v4975
      %v4977 = vmul.f32 %v4948, 1.442695
      %v4978 = vpow.pop %v4977
      %v4979 = vmul.f32 %v4949, 1.442695
      %v4980 = vpow.pop %v4979
      %v4981 = vmul.f32 %v4950, 1.442695
      %v4982 = vpow.pop %v4981
      %4983 = vst [vmem:[#allocation2 + $0x20] sm:$0xff] %v4952
      %4984 = vst [vmem:[#allocation2 + $0x68] sm:$0xff] %v4954
      %4985 = vst [vmem:[#allocation2 + $0xb0] sm:$0xff] %v4956
      %4986 = vst [vmem:[#allocation2 + $0xf8] sm:$0xff] %v4958
      %4987 = vst [vmem:[#allocation2 + $0x140] sm:$0xff] %v4960
      %4988 = vst [vmem:[#allocation2 + $0x188] sm:$0xff] %v4962
      %4989 = vst [vmem:[#allocation2 + $0x1d0] sm:$0xff] %v4964
      %4990 = vst [vmem:[#allocation2 + $0x218] sm:$0xff] %v4966
      %4991 = vst [vmem:[#allocation2 + $0x260] sm:$0xff] %v4968
      %4992 = vst [vmem:[#allocation2 + $0x2a8] sm:$0xff] %v4970
      %4993 = vst [vmem:[#allocation2 + $0x2f0] sm:$0xff] %v4972
      %4994 = vst [vmem:[#allocation2 + $0x338] sm:$0xff] %v4974
      %4995 = vst [vmem:[#allocation2 + $0x380] sm:$0xff] %v4976
      %4996 = vst [vmem:[#allocation2 + $0x3c8] sm:$0xff] %v4978
      %4997 = vst [vmem:[#allocation2 + $0x410] sm:$0xff] %v4980
      %4998 = vst [vmem:[#allocation2 + $0x458] sm:$0xff] %v4982
      %4999 = vrot.lane.b32.xlu0 %v1122, 48
      %v5000 = vpop.permute.xlu0 %4999
      %5001 = vrot.lane.b32.xlu0 %v1128, 48
      %v5002 = vpop.permute.xlu0 %5001
      %5003 = vrot.lane.b32.xlu0 %v1134, 48
      %v5004 = vpop.permute.xlu0 %5003
      %5005 = vrot.lane.b32.xlu0 %v1140, 48
      %v5006 = vpop.permute.xlu0 %5005
      %5007 = vrot.lane.b32.xlu0 %v1146, 48
      %v5008 = vpop.permute.xlu0 %5007
      %5009 = vrot.lane.b32.xlu0 %v1152, 48
      %v5010 = vpop.permute.xlu0 %5009
      %5011 = vrot.lane.b32.xlu0 %v1158, 48
      %v5012 = vpop.permute.xlu0 %5011
      %5013 = vrot.lane.b32.xlu0 %v1164, 48
      %v5014 = vpop.permute.xlu0 %5013
      %5015 = vrot.lane.b32.xlu0 %v1170, 48
      %v5016 = vpop.permute.xlu0 %5015
      %5017 = vrot.lane.b32.xlu0 %v1176, 48
      %v5018 = vpop.permute.xlu0 %5017
      %5019 = vrot.lane.b32.xlu0 %v1182, 48
      %v5020 = vpop.permute.xlu0 %5019
      %5021 = vrot.lane.b32.xlu0 %v1188, 48
      %v5022 = vpop.permute.xlu0 %5021
      %5023 = vrot.lane.b32.xlu0 %v1194, 48
      %v5024 = vpop.permute.xlu0 %5023
      %5025 = vrot.lane.b32.xlu0 %v1200, 48
      %v5026 = vpop.permute.xlu0 %5025
      %5027 = vrot.lane.b32.xlu0 %v1206, 48
      %v5028 = vpop.permute.xlu0 %5027
      %5029 = vrot.lane.b32.xlu0 %v1212, 48
      %v5030 = vpop.permute.xlu0 %5029
      %v5047 = vsel %vm1303, %v5000, 0.0
      %5048 = vadd.xlane.f32.xlu0 %v5047
      %v5049 = vpop.xlane.xlu0 %5048
      %v5050 = vsel %vm1303, %v5002, 0.0
      %5051 = vadd.xlane.f32.xlu0 %v5050
      %v5052 = vpop.xlane.xlu0 %5051
      %v5053 = vsel %vm1303, %v5004, 0.0
      %5054 = vadd.xlane.f32.xlu0 %v5053
      %v5055 = vpop.xlane.xlu0 %5054
      %v5056 = vsel %vm1303, %v5006, 0.0
      %5057 = vadd.xlane.f32.xlu0 %v5056
      %v5058 = vpop.xlane.xlu0 %5057
      %v5059 = vsel %vm1303, %v5008, 0.0
      %5060 = vadd.xlane.f32.xlu0 %v5059
      %v5061 = vpop.xlane.xlu0 %5060
      %v5062 = vsel %vm1303, %v5010, 0.0
      %5063 = vadd.xlane.f32.xlu0 %v5062
      %v5064 = vpop.xlane.xlu0 %5063
      %v5065 = vsel %vm1303, %v5012, 0.0
      %5066 = vadd.xlane.f32.xlu0 %v5065
      %v5067 = vpop.xlane.xlu0 %5066
      %v5068 = vsel %vm1303, %v5014, 0.0
      %5069 = vadd.xlane.f32.xlu0 %v5068
      %v5070 = vpop.xlane.xlu0 %5069
      %v5071 = vsel %vm1303, %v5016, 0.0
      %5072 = vadd.xlane.f32.xlu0 %v5071
      %v5073 = vpop.xlane.xlu0 %5072
      %v5074 = vsel %vm1303, %v5018, 0.0
      %5075 = vadd.xlane.f32.xlu0 %v5074
      %v5076 = vpop.xlane.xlu0 %5075
      %v5077 = vsel %vm1303, %v5020, 0.0
      %5078 = vadd.xlane.f32.xlu0 %v5077
      %v5079 = vpop.xlane.xlu0 %5078
      %v5080 = vsel %vm1303, %v5022, 0.0
      %5081 = vadd.xlane.f32.xlu0 %v5080
      %v5082 = vpop.xlane.xlu0 %5081
      %v5083 = vsel %vm1303, %v5024, 0.0
      %5084 = vadd.xlane.f32.xlu0 %v5083
      %v5085 = vpop.xlane.xlu0 %5084
      %v5086 = vsel %vm1303, %v5026, 0.0
      %5087 = vadd.xlane.f32.xlu0 %v5086
      %v5088 = vpop.xlane.xlu0 %5087
      %v5089 = vsel %vm1303, %v5028, 0.0
      %5090 = vadd.xlane.f32.xlu0 %v5089
      %v5091 = vpop.xlane.xlu0 %5090
      %v5092 = vsel %vm1303, %v5030, 0.0
      %5093 = vadd.xlane.f32.xlu0 %v5092
      %v5094 = vpop.xlane.xlu0 %5093
      %v5095 = vmul.f32 %v5049, %v1352
      %v5096 = vmul.f32 %v5052, %v1352
      %v5097 = vmul.f32 %v5055, %v1352
      %v5098 = vmul.f32 %v5058, %v1352
      %v5099 = vmul.f32 %v5061, %v1352
      %v5100 = vmul.f32 %v5064, %v1352
      %v5101 = vmul.f32 %v5067, %v1352
      %v5102 = vmul.f32 %v5070, %v1352
      %v5103 = vmul.f32 %v5073, %v1352
      %v5104 = vmul.f32 %v5076, %v1352
      %v5105 = vmul.f32 %v5079, %v1352
      %v5106 = vmul.f32 %v5082, %v1352
      %v5107 = vmul.f32 %v5085, %v1352
      %v5108 = vmul.f32 %v5088, %v1352
      %v5109 = vmul.f32 %v5091, %v1352
      %v5110 = vmul.f32 %v5094, %v1352
      %v5111 = vsub.f32 %v1122, %v5095
      %v5112 = vsub.f32 %v1128, %v5096
      %v5113 = vsub.f32 %v1134, %v5097
      %v5114 = vsub.f32 %v1140, %v5098
      %v5115 = vsub.f32 %v1146, %v5099
      %v5116 = vsub.f32 %v1152, %v5100
      %v5117 = vsub.f32 %v1158, %v5101
      %v5118 = vsub.f32 %v1164, %v5102
      %v5119 = vsub.f32 %v1170, %v5103
      %v5120 = vsub.f32 %v1176, %v5104
      %v5121 = vsub.f32 %v1182, %v5105
      %v5122 = vsub.f32 %v1188, %v5106
      %v5123 = vsub.f32 %v1194, %v5107
      %v5124 = vsub.f32 %v1200, %v5108
      %v5125 = vsub.f32 %v1206, %v5109
      %v5126 = vsub.f32 %v1212, %v5110
      %v5127 = vmul.f32 %v5111, %v5111
      %v5128 = vmul.f32 %v5112, %v5112
      %v5129 = vmul.f32 %v5113, %v5113
      %v5130 = vmul.f32 %v5114, %v5114
      %v5131 = vmul.f32 %v5115, %v5115
      %v5132 = vmul.f32 %v5116, %v5116
      %v5133 = vmul.f32 %v5117, %v5117
      %v5134 = vmul.f32 %v5118, %v5118
      %v5135 = vmul.f32 %v5119, %v5119
      %v5136 = vmul.f32 %v5120, %v5120
      %v5137 = vmul.f32 %v5121, %v5121
      %v5138 = vmul.f32 %v5122, %v5122
      %v5139 = vmul.f32 %v5123, %v5123
      %v5140 = vmul.f32 %v5124, %v5124
      %v5141 = vmul.f32 %v5125, %v5125
      %v5142 = vmul.f32 %v5126, %v5126
      %5159 = vrot.lane.b32.xlu0 %v5127, 48
      %v5160 = vpop.permute.xlu0 %5159
      %5161 = vrot.lane.b32.xlu0 %v5128, 48
      %v5162 = vpop.permute.xlu0 %5161
      %5163 = vrot.lane.b32.xlu0 %v5129, 48
      %v5164 = vpop.permute.xlu0 %5163
      %5165 = vrot.lane.b32.xlu0 %v5130, 48
      %v5166 = vpop.permute.xlu0 %5165
      %5167 = vrot.lane.b32.xlu0 %v5131, 48
      %v5168 = vpop.permute.xlu0 %5167
      %5169 = vrot.lane.b32.xlu0 %v5132, 48
      %v5170 = vpop.permute.xlu0 %5169
      %5171 = vrot.lane.b32.xlu0 %v5133, 48
      %v5172 = vpop.permute.xlu0 %5171
      %5173 = vrot.lane.b32.xlu0 %v5134, 48
      %v5174 = vpop.permute.xlu0 %5173
      %5175 = vrot.lane.b32.xlu0 %v5135, 48
      %v5176 = vpop.permute.xlu0 %5175
      %5177 = vrot.lane.b32.xlu0 %v5136, 48
      %v5178 = vpop.permute.xlu0 %5177
      %5179 = vrot.lane.b32.xlu0 %v5137, 48
      %v5180 = vpop.permute.xlu0 %5179
      %5181 = vrot.lane.b32.xlu0 %v5138, 48
      %v5182 = vpop.permute.xlu0 %5181
      %5183 = vrot.lane.b32.xlu0 %v5139, 48
      %v5184 = vpop.permute.xlu0 %5183
      %5185 = vrot.lane.b32.xlu0 %v5140, 48
      %v5186 = vpop.permute.xlu0 %5185
      %5187 = vrot.lane.b32.xlu0 %v5141, 48
      %v5188 = vpop.permute.xlu0 %5187
      %5189 = vrot.lane.b32.xlu0 %v5142, 48
      %v5190 = vpop.permute.xlu0 %5189
      %v5207 = vsel %vm1303, %v5160, 0.0
      %5208 = vadd.xlane.f32.xlu0 %v5207
      %v5209 = vpop.xlane.xlu0 %5208
      %v5210 = vsel %vm1303, %v5162, 0.0
      %5211 = vadd.xlane.f32.xlu0 %v5210
      %v5212 = vpop.xlane.xlu0 %5211
      %v5213 = vsel %vm1303, %v5164, 0.0
      %5214 = vadd.xlane.f32.xlu0 %v5213
      %v5215 = vpop.xlane.xlu0 %5214
      %v5216 = vsel %vm1303, %v5166, 0.0
      %5217 = vadd.xlane.f32.xlu0 %v5216
      %v5218 = vpop.xlane.xlu0 %5217
      %v5219 = vsel %vm1303, %v5168, 0.0
      %5220 = vadd.xlane.f32.xlu0 %v5219
      %v5221 = vpop.xlane.xlu0 %5220
      %v5222 = vsel %vm1303, %v5170, 0.0
      %5223 = vadd.xlane.f32.xlu0 %v5222
      %v5224 = vpop.xlane.xlu0 %5223
      %v5225 = vsel %vm1303, %v5172, 0.0
      %5226 = vadd.xlane.f32.xlu0 %v5225
      %v5227 = vpop.xlane.xlu0 %5226
      %v5228 = vsel %vm1303, %v5174, 0.0
      %5229 = vadd.xlane.f32.xlu0 %v5228
      %v5230 = vpop.xlane.xlu0 %5229
      %v5231 = vsel %vm1303, %v5176, 0.0
      %5232 = vadd.xlane.f32.xlu0 %v5231
      %v5233 = vpop.xlane.xlu0 %5232
      %v5234 = vsel %vm1303, %v5178, 0.0
      %5235 = vadd.xlane.f32.xlu0 %v5234
      %v5236 = vpop.xlane.xlu0 %5235
      %v5237 = vsel %vm1303, %v5180, 0.0
      %5238 = vadd.xlane.f32.xlu0 %v5237
      %v5239 = vpop.xlane.xlu0 %5238
      %v5240 = vsel %vm1303, %v5182, 0.0
      %5241 = vadd.xlane.f32.xlu0 %v5240
      %v5242 = vpop.xlane.xlu0 %5241
      %v5243 = vsel %vm1303, %v5184, 0.0
      %5244 = vadd.xlane.f32.xlu0 %v5243
      %v5245 = vpop.xlane.xlu0 %5244
      %v5246 = vsel %vm1303, %v5186, 0.0
      %5247 = vadd.xlane.f32.xlu0 %v5246
      %v5248 = vpop.xlane.xlu0 %5247
      %v5249 = vsel %vm1303, %v5188, 0.0
      %5250 = vadd.xlane.f32.xlu0 %v5249
      %v5251 = vpop.xlane.xlu0 %5250
      %v5252 = vsel %vm1303, %v5190, 0.0
      %5253 = vadd.xlane.f32.xlu0 %v5252
      %v5254 = vpop.xlane.xlu0 %5253
      %v5255 = vmul.f32 %v5209, %v1352
      %v5256 = vmul.f32 %v5212, %v1352
      %v5257 = vmul.f32 %v5215, %v1352
      %v5258 = vmul.f32 %v5218, %v1352
      %v5259 = vmul.f32 %v5221, %v1352
      %v5260 = vmul.f32 %v5224, %v1352
      %v5261 = vmul.f32 %v5227, %v1352
      %v5262 = vmul.f32 %v5230, %v1352
      %v5263 = vmul.f32 %v5233, %v1352
      %v5264 = vmul.f32 %v5236, %v1352
      %v5265 = vmul.f32 %v5239, %v1352
      %v5266 = vmul.f32 %v5242, %v1352
      %v5267 = vmul.f32 %v5245, %v1352
      %v5268 = vmul.f32 %v5248, %v1352
      %v5269 = vmul.f32 %v5251, %v1352
      %v5270 = vmul.f32 %v5254, %v1352
      %v5271 = vadd.f32 %v5255, 1e-05
      %v5272 = vadd.f32 %v5256, 1e-05
      %v5273 = vadd.f32 %v5257, 1e-05
      %v5274 = vadd.f32 %v5258, 1e-05
      %v5275 = vadd.f32 %v5259, 1e-05
      %v5276 = vadd.f32 %v5260, 1e-05
      %v5277 = vadd.f32 %v5261, 1e-05
      %v5278 = vadd.f32 %v5262, 1e-05
      %v5279 = vadd.f32 %v5263, 1e-05
      %v5280 = vadd.f32 %v5264, 1e-05
      %v5281 = vadd.f32 %v5265, 1e-05
      %v5282 = vadd.f32 %v5266, 1e-05
      %v5283 = vadd.f32 %v5267, 1e-05
      %v5284 = vadd.f32 %v5268, 1e-05
      %v5285 = vadd.f32 %v5269, 1e-05
      %v5286 = vadd.f32 %v5270, 1e-05
      %v5287 = vrsqrt.pop %v5271
      %v5288 = vrsqrt.pop %v5272
      %v5289 = vrsqrt.pop %v5273
      %v5290 = vrsqrt.pop %v5274
      %v5291 = vrsqrt.pop %v5275
      %v5292 = vrsqrt.pop %v5276
      %v5293 = vrsqrt.pop %v5277
      %v5294 = vrsqrt.pop %v5278
      %v5295 = vrsqrt.pop %v5279
      %v5296 = vrsqrt.pop %v5280
      %v5297 = vrsqrt.pop %v5281
      %v5298 = vrsqrt.pop %v5282
      %v5299 = vrsqrt.pop %v5283
      %v5300 = vrsqrt.pop %v5284
      %v5301 = vrsqrt.pop %v5285
      %v5302 = vrsqrt.pop %v5286
      %v5303 = vmul.f32 %v5111, %v5287
      %v5304 = vmul.f32 %v5112, %v5288
      %v5305 = vmul.f32 %v5113, %v5289
      %v5306 = vmul.f32 %v5114, %v5290
      %v5307 = vmul.f32 %v5115, %v5291
      %v5308 = vmul.f32 %v5116, %v5292
      %v5309 = vmul.f32 %v5117, %v5293
      %v5310 = vmul.f32 %v5118, %v5294
      %v5311 = vmul.f32 %v5119, %v5295
      %v5312 = vmul.f32 %v5120, %v5296
      %v5313 = vmul.f32 %v5121, %v5297
      %v5314 = vmul.f32 %v5122, %v5298
      %v5315 = vmul.f32 %v5123, %v5299
      %v5316 = vmul.f32 %v5124, %v5300
      %v5317 = vmul.f32 %v5125, %v5301
      %v5318 = vmul.f32 %v5126, %v5302
      %5319 = vrot.lane.b32.xlu0 %v1517, 80
      %v5320 = vpop.permute.xlu0 %5319
      %v5322 = vmul.f32 %v5303, %v5320
      %v5323 = vmul.f32 %v5304, %v5320
      %v5324 = vmul.f32 %v5305, %v5320
      %v5325 = vmul.f32 %v5306, %v5320
      %v5326 = vmul.f32 %v5307, %v5320
      %v5327 = vmul.f32 %v5308, %v5320
      %v5328 = vmul.f32 %v5309, %v5320
      %v5329 = vmul.f32 %v5310, %v5320
      %v5330 = vmul.f32 %v5311, %v5320
      %v5331 = vmul.f32 %v5312, %v5320
      %v5332 = vmul.f32 %v5313, %v5320
      %v5333 = vmul.f32 %v5314, %v5320
      %v5334 = vmul.f32 %v5315, %v5320
      %v5335 = vmul.f32 %v5316, %v5320
      %v5336 = vmul.f32 %v5317, %v5320
      %v5337 = vmul.f32 %v5318, %v5320
      %5338 = vrot.lane.b32.xlu0 %v1539, 80
      %v5339 = vpop.permute.xlu0 %5338
      %v5341 = vadd.f32 %v5322, %v5339
      %v5342 = vadd.f32 %v5323, %v5339
      %v5343 = vadd.f32 %v5324, %v5339
      %v5344 = vadd.f32 %v5325, %v5339
      %v5345 = vadd.f32 %v5326, %v5339
      %v5346 = vadd.f32 %v5327, %v5339
      %v5347 = vadd.f32 %v5328, %v5339
      %v5348 = vadd.f32 %v5329, %v5339
      %v5349 = vadd.f32 %v5330, %v5339
      %v5350 = vadd.f32 %v5331, %v5339
      %v5351 = vadd.f32 %v5332, %v5339
      %v5352 = vadd.f32 %v5333, %v5339
      %v5353 = vadd.f32 %v5334, %v5339
      %v5354 = vadd.f32 %v5335, %v5339
      %v5355 = vadd.f32 %v5336, %v5339
      %v5356 = vadd.f32 %v5337, %v5339
      %v5357 = vsel %vm1573, %v5341, 0.0
      %v5358 = vsel %vm1574, %v5342, 0.0
      %v5359 = vsel %vm1575, %v5343, 0.0
      %v5360 = vsel %vm1576, %v5344, 0.0
      %v5361 = vsel %vm1577, %v5345, 0.0
      %v5362 = vsel %vm1578, %v5346, 0.0
      %v5363 = vsel %vm1579, %v5347, 0.0
      %v5364 = vsel %vm1580, %v5348, 0.0
      %v5365 = vsel %vm1581, %v5349, 0.0
      %v5366 = vsel %vm1582, %v5350, 0.0
      %v5367 = vsel %vm1583, %v5351, 0.0
      %v5368 = vsel %vm1584, %v5352, 0.0
      %v5369 = vsel %vm1585, %v5353, 0.0
      %v5370 = vsel %vm1586, %v5354, 0.0
      %v5371 = vsel %vm1587, %v5355, 0.0
      %v5372 = vsel %vm1588, %v5356, 0.0
      %5389 = vrot.lane.b32.xlu0 %v5357, 48
      %v5390 = vpop.permute.xlu0 %5389
      %5391 = vrot.lane.b32.xlu0 %v5358, 48
      %v5392 = vpop.permute.xlu0 %5391
      %5393 = vrot.lane.b32.xlu0 %v5359, 48
      %v5394 = vpop.permute.xlu0 %5393
      %5395 = vrot.lane.b32.xlu0 %v5360, 48
      %v5396 = vpop.permute.xlu0 %5395
      %5397 = vrot.lane.b32.xlu0 %v5361, 48
      %v5398 = vpop.permute.xlu0 %5397
      %5399 = vrot.lane.b32.xlu0 %v5362, 48
      %v5400 = vpop.permute.xlu0 %5399
      %5401 = vrot.lane.b32.xlu0 %v5363, 48
      %v5402 = vpop.permute.xlu0 %5401
      %5403 = vrot.lane.b32.xlu0 %v5364, 48
      %v5404 = vpop.permute.xlu0 %5403
      %5405 = vrot.lane.b32.xlu0 %v5365, 48
      %v5406 = vpop.permute.xlu0 %5405
      %5407 = vrot.lane.b32.xlu0 %v5366, 48
      %v5408 = vpop.permute.xlu0 %5407
      %5409 = vrot.lane.b32.xlu0 %v5367, 48
      %v5410 = vpop.permute.xlu0 %5409
      %5411 = vrot.lane.b32.xlu0 %v5368, 48
      %v5412 = vpop.permute.xlu0 %5411
      %5413 = vrot.lane.b32.xlu0 %v5369, 48
      %v5414 = vpop.permute.xlu0 %5413
      %5415 = vrot.lane.b32.xlu0 %v5370, 48
      %v5416 = vpop.permute.xlu0 %5415
      %5417 = vrot.lane.b32.xlu0 %v5371, 48
      %v5418 = vpop.permute.xlu0 %5417
      %5419 = vrot.lane.b32.xlu0 %v5372, 48
      %v5420 = vpop.permute.xlu0 %5419
      %5437 = vst.msk [vmem:[#allocation3 + $0x280] sm:$0xff] %vm1303, %v5390
      %5438 = vst.msk [vmem:[#allocation3 + $0x288] sm:$0xff] %vm1303, %v5392
      %5439 = vst.msk [vmem:[#allocation3 + $0x290] sm:$0xff] %vm1303, %v5394
      %5440 = vst.msk [vmem:[#allocation3 + $0x298] sm:$0xff] %vm1303, %v5396
      %5441 = vst.msk [vmem:[#allocation3 + $0x2a0] sm:$0xff] %vm1303, %v5398
      %5442 = vst.msk [vmem:[#allocation3 + $0x2a8] sm:$0xff] %vm1303, %v5400
      %5443 = vst.msk [vmem:[#allocation3 + $0x2b0] sm:$0xff] %vm1303, %v5402
      %5444 = vst.msk [vmem:[#allocation3 + $0x2b8] sm:$0xff] %vm1303, %v5404
      %5445 = vst.msk [vmem:[#allocation3 + $0x2c0] sm:$0xff] %vm1303, %v5406
      %5446 = vst.msk [vmem:[#allocation3 + $0x2c8] sm:$0xff] %vm1303, %v5408
      %5447 = vst.msk [vmem:[#allocation3 + $0x2d0] sm:$0xff] %vm1303, %v5410
      %5448 = vst.msk [vmem:[#allocation3 + $0x2d8] sm:$0xff] %vm1303, %v5412
      %5449 = vst.msk [vmem:[#allocation3 + $0x2e0] sm:$0xff] %vm1303, %v5414
      %5450 = vst.msk [vmem:[#allocation3 + $0x2e8] sm:$0xff] %vm1303, %v5416
      %5451 = vst.msk [vmem:[#allocation3 + $0x2f0] sm:$0xff] %vm1303, %v5418
      %5452 = vst.msk [vmem:[#allocation3 + $0x2f8] sm:$0xff] %vm1303, %v5420
      %5453 = vrot.lane.b32.xlu0 %v1625, 118
      %v5454 = vpop.permute.xlu0 %5453
      %v5456 = vsub.f32 %v1234, %v5454
      %v5457 = vsub.f32 %v1235, %v5454
      %v5458 = vsub.f32 %v1236, %v5454
      %v5459 = vsub.f32 %v1237, %v5454
      %v5460 = vsub.f32 %v1238, %v5454
      %v5461 = vsub.f32 %v1239, %v5454
      %v5462 = vsub.f32 %v1240, %v5454
      %v5463 = vsub.f32 %v1241, %v5454
      %v5464 = vsub.f32 %v1242, %v5454
      %v5465 = vsub.f32 %v1243, %v5454
      %v5466 = vsub.f32 %v1244, %v5454
      %v5467 = vsub.f32 %v1245, %v5454
      %v5468 = vsub.f32 %v1246, %v5454
      %v5469 = vsub.f32 %v1247, %v5454
      %v5470 = vsub.f32 %v1248, %v5454
      %v5471 = vsub.f32 %v1249, %v5454
      %5473 = vset.pattern.permute.xlu0 0
      %5474 = vperm.xlu0 %5473, %v5456
      %v5475 = vpop.permute.xlu0 %5474
      %5478 = vset.pattern.permute.xlu0 0
      %5479 = vperm.xlu0 %5478, %v5457
      %v5480 = vpop.permute.xlu0 %5479
      %5483 = vset.pattern.permute.xlu0 0
      %5484 = vperm.xlu0 %5483, %v5458
      %v5485 = vpop.permute.xlu0 %5484
      %5488 = vset.pattern.permute.xlu0 0
      %5489 = vperm.xlu0 %5488, %v5459
      %v5490 = vpop.permute.xlu0 %5489
      %5493 = vset.pattern.permute.xlu0 0
      %5494 = vperm.xlu0 %5493, %v5460
      %v5495 = vpop.permute.xlu0 %5494
      %5498 = vset.pattern.permute.xlu0 0
      %5499 = vperm.xlu0 %5498, %v5461
      %v5500 = vpop.permute.xlu0 %5499
      %5503 = vset.pattern.permute.xlu0 0
      %5504 = vperm.xlu0 %5503, %v5462
      %v5505 = vpop.permute.xlu0 %5504
      %5508 = vset.pattern.permute.xlu0 0
      %5509 = vperm.xlu0 %5508, %v5463
      %v5510 = vpop.permute.xlu0 %5509
      %5513 = vset.pattern.permute.xlu0 0
      %5514 = vperm.xlu0 %5513, %v5464
      %v5515 = vpop.permute.xlu0 %5514
      %5518 = vset.pattern.permute.xlu0 0
      %5519 = vperm.xlu0 %5518, %v5465
      %v5520 = vpop.permute.xlu0 %5519
      %5523 = vset.pattern.permute.xlu0 0
      %5524 = vperm.xlu0 %5523, %v5466
      %v5525 = vpop.permute.xlu0 %5524
      %5528 = vset.pattern.permute.xlu0 0
      %5529 = vperm.xlu0 %5528, %v5467
      %v5530 = vpop.permute.xlu0 %5529
      %5533 = vset.pattern.permute.xlu0 0
      %5534 = vperm.xlu0 %5533, %v5468
      %v5535 = vpop.permute.xlu0 %5534
      %5538 = vset.pattern.permute.xlu0 0
      %5539 = vperm.xlu0 %5538, %v5469
      %v5540 = vpop.permute.xlu0 %5539
      %5543 = vset.pattern.permute.xlu0 0
      %5544 = vperm.xlu0 %5543, %v5470
      %v5545 = vpop.permute.xlu0 %5544
      %5548 = vset.pattern.permute.xlu0 0
      %5549 = vperm.xlu0 %5548, %v5471
      %v5550 = vpop.permute.xlu0 %5549
      %v5552 = vsub.f32 %v5475, %v1726
      %v5553 = vsub.f32 %v5480, %v1726
      %v5554 = vsub.f32 %v5485, %v1726
      %v5555 = vsub.f32 %v5490, %v1726
      %v5556 = vsub.f32 %v5495, %v1726
      %v5557 = vsub.f32 %v5500, %v1726
      %v5558 = vsub.f32 %v5505, %v1726
      %v5559 = vsub.f32 %v5510, %v1726
      %v5560 = vsub.f32 %v5515, %v1726
      %v5561 = vsub.f32 %v5520, %v1726
      %v5562 = vsub.f32 %v5525, %v1726
      %v5563 = vsub.f32 %v5530, %v1726
      %v5564 = vsub.f32 %v5535, %v1726
      %v5565 = vsub.f32 %v5540, %v1726
      %v5566 = vsub.f32 %v5545, %v1726
      %v5567 = vsub.f32 %v5550, %v1726
      %v5568 = vmul.f32 %v5552, %v5552
      %v5569 = vmul.f32 %v5553, %v5553
      %v5570 = vmul.f32 %v5554, %v5554
      %v5571 = vmul.f32 %v5555, %v5555
      %v5572 = vmul.f32 %v5556, %v5556
      %v5573 = vmul.f32 %v5557, %v5557
      %v5574 = vmul.f32 %v5558, %v5558
      %v5575 = vmul.f32 %v5559, %v5559
      %v5576 = vmul.f32 %v5560, %v5560
      %v5577 = vmul.f32 %v5561, %v5561
      %v5578 = vmul.f32 %v5562, %v5562
      %v5579 = vmul.f32 %v5563, %v5563
      %v5580 = vmul.f32 %v5564, %v5564
      %v5581 = vmul.f32 %v5565, %v5565
      %v5582 = vmul.f32 %v5566, %v5566
      %v5583 = vmul.f32 %v5567, %v5567
      %5584 = vset.pattern.permute.xlu0 1
      %5585 = vperm.xlu0 %5584, %v5456
      %v5586 = vpop.permute.xlu0 %5585
      %5588 = vset.pattern.permute.xlu0 1
      %5589 = vperm.xlu0 %5588, %v5457
      %v5590 = vpop.permute.xlu0 %5589
      %5592 = vset.pattern.permute.xlu0 1
      %5593 = vperm.xlu0 %5592, %v5458
      %v5594 = vpop.permute.xlu0 %5593
      %5596 = vset.pattern.permute.xlu0 1
      %5597 = vperm.xlu0 %5596, %v5459
      %v5598 = vpop.permute.xlu0 %5597
      %5600 = vset.pattern.permute.xlu0 1
      %5601 = vperm.xlu0 %5600, %v5460
      %v5602 = vpop.permute.xlu0 %5601
      %5604 = vset.pattern.permute.xlu0 1
      %5605 = vperm.xlu0 %5604, %v5461
      %v5606 = vpop.permute.xlu0 %5605
      %5608 = vset.pattern.permute.xlu0 1
      %5609 = vperm.xlu0 %5608, %v5462
      %v5610 = vpop.permute.xlu0 %5609
      %5612 = vset.pattern.permute.xlu0 1
      %5613 = vperm.xlu0 %5612, %v5463
      %v5614 = vpop.permute.xlu0 %5613
      %5616 = vset.pattern.permute.xlu0 1
      %5617 = vperm.xlu0 %5616, %v5464
      %v5618 = vpop.permute.xlu0 %5617
      %5620 = vset.pattern.permute.xlu0 1
      %5621 = vperm.xlu0 %5620, %v5465
      %v5622 = vpop.permute.xlu0 %5621
      %5624 = vset.pattern.permute.xlu0 1
      %5625 = vperm.xlu0 %5624, %v5466
      %v5626 = vpop.permute.xlu0 %5625
      %5628 = vset.pattern.permute.xlu0 1
      %5629 = vperm.xlu0 %5628, %v5467
      %v5630 = vpop.permute.xlu0 %5629
      %5632 = vset.pattern.permute.xlu0 1
      %5633 = vperm.xlu0 %5632, %v5468
      %v5634 = vpop.permute.xlu0 %5633
      %5636 = vset.pattern.permute.xlu0 1
      %5637 = vperm.xlu0 %5636, %v5469
      %v5638 = vpop.permute.xlu0 %5637
      %5640 = vset.pattern.permute.xlu0 1
      %5641 = vperm.xlu0 %5640, %v5470
      %v5642 = vpop.permute.xlu0 %5641
      %5644 = vset.pattern.permute.xlu0 1
      %5645 = vperm.xlu0 %5644, %v5471
      %v5646 = vpop.permute.xlu0 %5645
      %v5648 = vsub.f32 %v5586, %v1826
      %v5649 = vsub.f32 %v5590, %v1826
      %v5650 = vsub.f32 %v5594, %v1826
      %v5651 = vsub.f32 %v5598, %v1826
      %v5652 = vsub.f32 %v5602, %v1826
      %v5653 = vsub.f32 %v5606, %v1826
      %v5654 = vsub.f32 %v5610, %v1826
      %v5655 = vsub.f32 %v5614, %v1826
      %v5656 = vsub.f32 %v5618, %v1826
      %v5657 = vsub.f32 %v5622, %v1826
      %v5658 = vsub.f32 %v5626, %v1826
      %v5659 = vsub.f32 %v5630, %v1826
      %v5660 = vsub.f32 %v5634, %v1826
      %v5661 = vsub.f32 %v5638, %v1826
      %v5662 = vsub.f32 %v5642, %v1826
      %v5663 = vsub.f32 %v5646, %v1826
      %v5664 = vmul.f32 %v5648, %v5648
      %v5665 = vmul.f32 %v5649, %v5649
      %v5666 = vmul.f32 %v5650, %v5650
      %v5667 = vmul.f32 %v5651, %v5651
      %v5668 = vmul.f32 %v5652, %v5652
      %v5669 = vmul.f32 %v5653, %v5653
      %v5670 = vmul.f32 %v5654, %v5654
      %v5671 = vmul.f32 %v5655, %v5655
      %v5672 = vmul.f32 %v5656, %v5656
      %v5673 = vmul.f32 %v5657, %v5657
      %v5674 = vmul.f32 %v5658, %v5658
      %v5675 = vmul.f32 %v5659, %v5659
      %v5676 = vmul.f32 %v5660, %v5660
      %v5677 = vmul.f32 %v5661, %v5661
      %v5678 = vmul.f32 %v5662, %v5662
      %v5679 = vmul.f32 %v5663, %v5663
      %v5680 = vadd.f32 %v5568, %v5664
      %v5681 = vadd.f32 %v5569, %v5665
      %v5682 = vadd.f32 %v5570, %v5666
      %v5683 = vadd.f32 %v5571, %v5667
      %v5684 = vadd.f32 %v5572, %v5668
      %v5685 = vadd.f32 %v5573, %v5669
      %v5686 = vadd.f32 %v5574, %v5670
      %v5687 = vadd.f32 %v5575, %v5671
      %v5688 = vadd.f32 %v5576, %v5672
      %v5689 = vadd.f32 %v5577, %v5673
      %v5690 = vadd.f32 %v5578, %v5674
      %v5691 = vadd.f32 %v5579, %v5675
      %v5692 = vadd.f32 %v5580, %v5676
      %v5693 = vadd.f32 %v5581, %v5677
      %v5694 = vadd.f32 %v5582, %v5678
      %v5695 = vadd.f32 %v5583, %v5679
      %v5696 = vsub.f32 0.0, %v5680
      %v5697 = vsub.f32 0.0, %v5681
      %v5698 = vsub.f32 0.0, %v5682
      %v5699 = vsub.f32 0.0, %v5683
      %v5700 = vsub.f32 0.0, %v5684
      %v5701 = vsub.f32 0.0, %v5685
      %v5702 = vsub.f32 0.0, %v5686
      %v5703 = vsub.f32 0.0, %v5687
      %v5704 = vsub.f32 0.0, %v5688
      %v5705 = vsub.f32 0.0, %v5689
      %v5706 = vsub.f32 0.0, %v5690
      %v5707 = vsub.f32 0.0, %v5691
      %v5708 = vsub.f32 0.0, %v5692
      %v5709 = vsub.f32 0.0, %v5693
      %v5710 = vsub.f32 0.0, %v5694
      %v5711 = vsub.f32 0.0, %v5695
      %v5712 = vmul.f32 %v5696, 1.442695
      %v5713 = vpow.pop %v5712
      %v5714 = vmul.f32 %v5697, 1.442695
      %v5715 = vpow.pop %v5714
      %v5716 = vmul.f32 %v5698, 1.442695
      %v5717 = vpow.pop %v5716
      %v5718 = vmul.f32 %v5699, 1.442695
      %v5719 = vpow.pop %v5718
      %v5720 = vmul.f32 %v5700, 1.442695
      %v5721 = vpow.pop %v5720
      %v5722 = vmul.f32 %v5701, 1.442695
      %v5723 = vpow.pop %v5722
      %v5724 = vmul.f32 %v5702, 1.442695
      %v5725 = vpow.pop %v5724
      %v5726 = vmul.f32 %v5703, 1.442695
      %v5727 = vpow.pop %v5726
      %v5728 = vmul.f32 %v5704, 1.442695
      %v5729 = vpow.pop %v5728
      %v5730 = vmul.f32 %v5705, 1.442695
      %v5731 = vpow.pop %v5730
      %v5732 = vmul.f32 %v5706, 1.442695
      %v5733 = vpow.pop %v5732
      %v5734 = vmul.f32 %v5707, 1.442695
      %v5735 = vpow.pop %v5734
      %v5736 = vmul.f32 %v5708, 1.442695
      %v5737 = vpow.pop %v5736
      %v5738 = vmul.f32 %v5709, 1.442695
      %v5739 = vpow.pop %v5738
      %v5740 = vmul.f32 %v5710, 1.442695
      %v5741 = vpow.pop %v5740
      %v5742 = vmul.f32 %v5711, 1.442695
      %v5743 = vpow.pop %v5742
      %5744 = vst [vmem:[#allocation2 + $0x28] sm:$0xff] %v5713
      %5745 = vst [vmem:[#allocation2 + $0x70] sm:$0xff] %v5715
      %5746 = vst [vmem:[#allocation2 + $0xb8] sm:$0xff] %v5717
      %5747 = vst [vmem:[#allocation2 + $0x100] sm:$0xff] %v5719
      %5748 = vst [vmem:[#allocation2 + $0x148] sm:$0xff] %v5721
      %5749 = vst [vmem:[#allocation2 + $0x190] sm:$0xff] %v5723
      %5750 = vst [vmem:[#allocation2 + $0x1d8] sm:$0xff] %v5725
      %5751 = vst [vmem:[#allocation2 + $0x220] sm:$0xff] %v5727
      %5752 = vst [vmem:[#allocation2 + $0x268] sm:$0xff] %v5729
      %5753 = vst [vmem:[#allocation2 + $0x2b0] sm:$0xff] %v5731
      %5754 = vst [vmem:[#allocation2 + $0x2f8] sm:$0xff] %v5733
      %5755 = vst [vmem:[#allocation2 + $0x340] sm:$0xff] %v5735
      %5756 = vst [vmem:[#allocation2 + $0x388] sm:$0xff] %v5737
      %5757 = vst [vmem:[#allocation2 + $0x3d0] sm:$0xff] %v5739
      %5758 = vst [vmem:[#allocation2 + $0x418] sm:$0xff] %v5741
      %5759 = vst [vmem:[#allocation2 + $0x460] sm:$0xff] %v5743
      %5760 = vrot.lane.b32.xlu0 %v1122, 32
      %v5761 = vpop.permute.xlu0 %5760
      %5762 = vrot.lane.b32.xlu0 %v1128, 32
      %v5763 = vpop.permute.xlu0 %5762
      %5764 = vrot.lane.b32.xlu0 %v1134, 32
      %v5765 = vpop.permute.xlu0 %5764
      %5766 = vrot.lane.b32.xlu0 %v1140, 32
      %v5767 = vpop.permute.xlu0 %5766
      %5768 = vrot.lane.b32.xlu0 %v1146, 32
      %v5769 = vpop.permute.xlu0 %5768
      %5770 = vrot.lane.b32.xlu0 %v1152, 32
      %v5771 = vpop.permute.xlu0 %5770
      %5772 = vrot.lane.b32.xlu0 %v1158, 32
      %v5773 = vpop.permute.xlu0 %5772
      %5774 = vrot.lane.b32.xlu0 %v1164, 32
      %v5775 = vpop.permute.xlu0 %5774
      %5776 = vrot.lane.b32.xlu0 %v1170, 32
      %v5777 = vpop.permute.xlu0 %5776
      %5778 = vrot.lane.b32.xlu0 %v1176, 32
      %v5779 = vpop.permute.xlu0 %5778
      %5780 = vrot.lane.b32.xlu0 %v1182, 32
      %v5781 = vpop.permute.xlu0 %5780
      %5782 = vrot.lane.b32.xlu0 %v1188, 32
      %v5783 = vpop.permute.xlu0 %5782
      %5784 = vrot.lane.b32.xlu0 %v1194, 32
      %v5785 = vpop.permute.xlu0 %5784
      %5786 = vrot.lane.b32.xlu0 %v1200, 32
      %v5787 = vpop.permute.xlu0 %5786
      %5788 = vrot.lane.b32.xlu0 %v1206, 32
      %v5789 = vpop.permute.xlu0 %5788
      %5790 = vrot.lane.b32.xlu0 %v1212, 32
      %v5791 = vpop.permute.xlu0 %5790
      %v5808 = vsel %vm1303, %v5761, 0.0
      %5809 = vadd.xlane.f32.xlu0 %v5808
      %v5810 = vpop.xlane.xlu0 %5809
      %v5811 = vsel %vm1303, %v5763, 0.0
      %5812 = vadd.xlane.f32.xlu0 %v5811
      %v5813 = vpop.xlane.xlu0 %5812
      %v5814 = vsel %vm1303, %v5765, 0.0
      %5815 = vadd.xlane.f32.xlu0 %v5814
      %v5816 = vpop.xlane.xlu0 %5815
      %v5817 = vsel %vm1303, %v5767, 0.0
      %5818 = vadd.xlane.f32.xlu0 %v5817
      %v5819 = vpop.xlane.xlu0 %5818
      %v5820 = vsel %vm1303, %v5769, 0.0
      %5821 = vadd.xlane.f32.xlu0 %v5820
      %v5822 = vpop.xlane.xlu0 %5821
      %v5823 = vsel %vm1303, %v5771, 0.0
      %5824 = vadd.xlane.f32.xlu0 %v5823
      %v5825 = vpop.xlane.xlu0 %5824
      %v5826 = vsel %vm1303, %v5773, 0.0
      %5827 = vadd.xlane.f32.xlu0 %v5826
      %v5828 = vpop.xlane.xlu0 %5827
      %v5829 = vsel %vm1303, %v5775, 0.0
      %5830 = vadd.xlane.f32.xlu0 %v5829
      %v5831 = vpop.xlane.xlu0 %5830
      %v5832 = vsel %vm1303, %v5777, 0.0
      %5833 = vadd.xlane.f32.xlu0 %v5832
      %v5834 = vpop.xlane.xlu0 %5833
      %v5835 = vsel %vm1303, %v5779, 0.0
      %5836 = vadd.xlane.f32.xlu0 %v5835
      %v5837 = vpop.xlane.xlu0 %5836
      %v5838 = vsel %vm1303, %v5781, 0.0
      %5839 = vadd.xlane.f32.xlu0 %v5838
      %v5840 = vpop.xlane.xlu0 %5839
      %v5841 = vsel %vm1303, %v5783, 0.0
      %5842 = vadd.xlane.f32.xlu0 %v5841
      %v5843 = vpop.xlane.xlu0 %5842
      %v5844 = vsel %vm1303, %v5785, 0.0
      %5845 = vadd.xlane.f32.xlu0 %v5844
      %v5846 = vpop.xlane.xlu0 %5845
      %v5847 = vsel %vm1303, %v5787, 0.0
      %5848 = vadd.xlane.f32.xlu0 %v5847
      %v5849 = vpop.xlane.xlu0 %5848
      %v5850 = vsel %vm1303, %v5789, 0.0
      %5851 = vadd.xlane.f32.xlu0 %v5850
      %v5852 = vpop.xlane.xlu0 %5851
      %v5853 = vsel %vm1303, %v5791, 0.0
      %5854 = vadd.xlane.f32.xlu0 %v5853
      %v5855 = vpop.xlane.xlu0 %5854
      %v5856 = vmul.f32 %v5810, %v1352
      %v5857 = vmul.f32 %v5813, %v1352
      %v5858 = vmul.f32 %v5816, %v1352
      %v5859 = vmul.f32 %v5819, %v1352
      %v5860 = vmul.f32 %v5822, %v1352
      %v5861 = vmul.f32 %v5825, %v1352
      %v5862 = vmul.f32 %v5828, %v1352
      %v5863 = vmul.f32 %v5831, %v1352
      %v5864 = vmul.f32 %v5834, %v1352
      %v5865 = vmul.f32 %v5837, %v1352
      %v5866 = vmul.f32 %v5840, %v1352
      %v5867 = vmul.f32 %v5843, %v1352
      %v5868 = vmul.f32 %v5846, %v1352
      %v5869 = vmul.f32 %v5849, %v1352
      %v5870 = vmul.f32 %v5852, %v1352
      %v5871 = vmul.f32 %v5855, %v1352
      %v5872 = vsub.f32 %v1122, %v5856
      %v5873 = vsub.f32 %v1128, %v5857
      %v5874 = vsub.f32 %v1134, %v5858
      %v5875 = vsub.f32 %v1140, %v5859
      %v5876 = vsub.f32 %v1146, %v5860
      %v5877 = vsub.f32 %v1152, %v5861
      %v5878 = vsub.f32 %v1158, %v5862
      %v5879 = vsub.f32 %v1164, %v5863
      %v5880 = vsub.f32 %v1170, %v5864
      %v5881 = vsub.f32 %v1176, %v5865
      %v5882 = vsub.f32 %v1182, %v5866
      %v5883 = vsub.f32 %v1188, %v5867
      %v5884 = vsub.f32 %v1194, %v5868
      %v5885 = vsub.f32 %v1200, %v5869
      %v5886 = vsub.f32 %v1206, %v5870
      %v5887 = vsub.f32 %v1212, %v5871
      %v5888 = vmul.f32 %v5872, %v5872
      %v5889 = vmul.f32 %v5873, %v5873
      %v5890 = vmul.f32 %v5874, %v5874
      %v5891 = vmul.f32 %v5875, %v5875
      %v5892 = vmul.f32 %v5876, %v5876
      %v5893 = vmul.f32 %v5877, %v5877
      %v5894 = vmul.f32 %v5878, %v5878
      %v5895 = vmul.f32 %v5879, %v5879
      %v5896 = vmul.f32 %v5880, %v5880
      %v5897 = vmul.f32 %v5881, %v5881
      %v5898 = vmul.f32 %v5882, %v5882
      %v5899 = vmul.f32 %v5883, %v5883
      %v5900 = vmul.f32 %v5884, %v5884
      %v5901 = vmul.f32 %v5885, %v5885
      %v5902 = vmul.f32 %v5886, %v5886
      %v5903 = vmul.f32 %v5887, %v5887
      %5920 = vrot.lane.b32.xlu0 %v5888, 32
      %v5921 = vpop.permute.xlu0 %5920
      %5922 = vrot.lane.b32.xlu0 %v5889, 32
      %v5923 = vpop.permute.xlu0 %5922
      %5924 = vrot.lane.b32.xlu0 %v5890, 32
      %v5925 = vpop.permute.xlu0 %5924
      %5926 = vrot.lane.b32.xlu0 %v5891, 32
      %v5927 = vpop.permute.xlu0 %5926
      %5928 = vrot.lane.b32.xlu0 %v5892, 32
      %v5929 = vpop.permute.xlu0 %5928
      %5930 = vrot.lane.b32.xlu0 %v5893, 32
      %v5931 = vpop.permute.xlu0 %5930
      %5932 = vrot.lane.b32.xlu0 %v5894, 32
      %v5933 = vpop.permute.xlu0 %5932
      %5934 = vrot.lane.b32.xlu0 %v5895, 32
      %v5935 = vpop.permute.xlu0 %5934
      %5936 = vrot.lane.b32.xlu0 %v5896, 32
      %v5937 = vpop.permute.xlu0 %5936
      %5938 = vrot.lane.b32.xlu0 %v5897, 32
      %v5939 = vpop.permute.xlu0 %5938
      %5940 = vrot.lane.b32.xlu0 %v5898, 32
      %v5941 = vpop.permute.xlu0 %5940
      %5942 = vrot.lane.b32.xlu0 %v5899, 32
      %v5943 = vpop.permute.xlu0 %5942
      %5944 = vrot.lane.b32.xlu0 %v5900, 32
      %v5945 = vpop.permute.xlu0 %5944
      %5946 = vrot.lane.b32.xlu0 %v5901, 32
      %v5947 = vpop.permute.xlu0 %5946
      %5948 = vrot.lane.b32.xlu0 %v5902, 32
      %v5949 = vpop.permute.xlu0 %5948
      %5950 = vrot.lane.b32.xlu0 %v5903, 32
      %v5951 = vpop.permute.xlu0 %5950
      %v5968 = vsel %vm1303, %v5921, 0.0
      %5969 = vadd.xlane.f32.xlu0 %v5968
      %v5970 = vpop.xlane.xlu0 %5969
      %v5971 = vsel %vm1303, %v5923, 0.0
      %5972 = vadd.xlane.f32.xlu0 %v5971
      %v5973 = vpop.xlane.xlu0 %5972
      %v5974 = vsel %vm1303, %v5925, 0.0
      %5975 = vadd.xlane.f32.xlu0 %v5974
      %v5976 = vpop.xlane.xlu0 %5975
      %v5977 = vsel %vm1303, %v5927, 0.0
      %5978 = vadd.xlane.f32.xlu0 %v5977
      %v5979 = vpop.xlane.xlu0 %5978
      %v5980 = vsel %vm1303, %v5929, 0.0
      %5981 = vadd.xlane.f32.xlu0 %v5980
      %v5982 = vpop.xlane.xlu0 %5981
      %v5983 = vsel %vm1303, %v5931, 0.0
      %5984 = vadd.xlane.f32.xlu0 %v5983
      %v5985 = vpop.xlane.xlu0 %5984
      %v5986 = vsel %vm1303, %v5933, 0.0
      %5987 = vadd.xlane.f32.xlu0 %v5986
      %v5988 = vpop.xlane.xlu0 %5987
      %v5989 = vsel %vm1303, %v5935, 0.0
      %5990 = vadd.xlane.f32.xlu0 %v5989
      %v5991 = vpop.xlane.xlu0 %5990
      %v5992 = vsel %vm1303, %v5937, 0.0
      %5993 = vadd.xlane.f32.xlu0 %v5992
      %v5994 = vpop.xlane.xlu0 %5993
      %v5995 = vsel %vm1303, %v5939, 0.0
      %5996 = vadd.xlane.f32.xlu0 %v5995
      %v5997 = vpop.xlane.xlu0 %5996
      %v5998 = vsel %vm1303, %v5941, 0.0
      %5999 = vadd.xlane.f32.xlu0 %v5998
      %v6000 = vpop.xlane.xlu0 %5999
      %v6001 = vsel %vm1303, %v5943, 0.0
      %6002 = vadd.xlane.f32.xlu0 %v6001
      %v6003 = vpop.xlane.xlu0 %6002
      %v6004 = vsel %vm1303, %v5945, 0.0
      %6005 = vadd.xlane.f32.xlu0 %v6004
      %v6006 = vpop.xlane.xlu0 %6005
      %v6007 = vsel %vm1303, %v5947, 0.0
      %6008 = vadd.xlane.f32.xlu0 %v6007
      %v6009 = vpop.xlane.xlu0 %6008
      %v6010 = vsel %vm1303, %v5949, 0.0
      %6011 = vadd.xlane.f32.xlu0 %v6010
      %v6012 = vpop.xlane.xlu0 %6011
      %v6013 = vsel %vm1303, %v5951, 0.0
      %6014 = vadd.xlane.f32.xlu0 %v6013
      %v6015 = vpop.xlane.xlu0 %6014
      %v6016 = vmul.f32 %v5970, %v1352
      %v6017 = vmul.f32 %v5973, %v1352
      %v6018 = vmul.f32 %v5976, %v1352
      %v6019 = vmul.f32 %v5979, %v1352
      %v6020 = vmul.f32 %v5982, %v1352
      %v6021 = vmul.f32 %v5985, %v1352
      %v6022 = vmul.f32 %v5988, %v1352
      %v6023 = vmul.f32 %v5991, %v1352
      %v6024 = vmul.f32 %v5994, %v1352
      %v6025 = vmul.f32 %v5997, %v1352
      %v6026 = vmul.f32 %v6000, %v1352
      %v6027 = vmul.f32 %v6003, %v1352
      %v6028 = vmul.f32 %v6006, %v1352
      %v6029 = vmul.f32 %v6009, %v1352
      %v6030 = vmul.f32 %v6012, %v1352
      %v6031 = vmul.f32 %v6015, %v1352
      %v6032 = vadd.f32 %v6016, 1e-05
      %v6033 = vadd.f32 %v6017, 1e-05
      %v6034 = vadd.f32 %v6018, 1e-05
      %v6035 = vadd.f32 %v6019, 1e-05
      %v6036 = vadd.f32 %v6020, 1e-05
      %v6037 = vadd.f32 %v6021, 1e-05
      %v6038 = vadd.f32 %v6022, 1e-05
      %v6039 = vadd.f32 %v6023, 1e-05
      %v6040 = vadd.f32 %v6024, 1e-05
      %v6041 = vadd.f32 %v6025, 1e-05
      %v6042 = vadd.f32 %v6026, 1e-05
      %v6043 = vadd.f32 %v6027, 1e-05
      %v6044 = vadd.f32 %v6028, 1e-05
      %v6045 = vadd.f32 %v6029, 1e-05
      %v6046 = vadd.f32 %v6030, 1e-05
      %v6047 = vadd.f32 %v6031, 1e-05
      %v6048 = vrsqrt.pop %v6032
      %v6049 = vrsqrt.pop %v6033
      %v6050 = vrsqrt.pop %v6034
      %v6051 = vrsqrt.pop %v6035
      %v6052 = vrsqrt.pop %v6036
      %v6053 = vrsqrt.pop %v6037
      %v6054 = vrsqrt.pop %v6038
      %v6055 = vrsqrt.pop %v6039
      %v6056 = vrsqrt.pop %v6040
      %v6057 = vrsqrt.pop %v6041
      %v6058 = vrsqrt.pop %v6042
      %v6059 = vrsqrt.pop %v6043
      %v6060 = vrsqrt.pop %v6044
      %v6061 = vrsqrt.pop %v6045
      %v6062 = vrsqrt.pop %v6046
      %v6063 = vrsqrt.pop %v6047
      %v6064 = vmul.f32 %v5872, %v6048
      %v6065 = vmul.f32 %v5873, %v6049
      %v6066 = vmul.f32 %v5874, %v6050
      %v6067 = vmul.f32 %v5875, %v6051
      %v6068 = vmul.f32 %v5876, %v6052
      %v6069 = vmul.f32 %v5877, %v6053
      %v6070 = vmul.f32 %v5878, %v6054
      %v6071 = vmul.f32 %v5879, %v6055
      %v6072 = vmul.f32 %v5880, %v6056
      %v6073 = vmul.f32 %v5881, %v6057
      %v6074 = vmul.f32 %v5882, %v6058
      %v6075 = vmul.f32 %v5883, %v6059
      %v6076 = vmul.f32 %v5884, %v6060
      %v6077 = vmul.f32 %v5885, %v6061
      %v6078 = vmul.f32 %v5886, %v6062
      %v6079 = vmul.f32 %v5887, %v6063
      %6080 = vrot.lane.b32.xlu0 %v1517, 96
      %v6081 = vpop.permute.xlu0 %6080
      %v6083 = vmul.f32 %v6064, %v6081
      %v6084 = vmul.f32 %v6065, %v6081
      %v6085 = vmul.f32 %v6066, %v6081
      %v6086 = vmul.f32 %v6067, %v6081
      %v6087 = vmul.f32 %v6068, %v6081
      %v6088 = vmul.f32 %v6069, %v6081
      %v6089 = vmul.f32 %v6070, %v6081
      %v6090 = vmul.f32 %v6071, %v6081
      %v6091 = vmul.f32 %v6072, %v6081
      %v6092 = vmul.f32 %v6073, %v6081
      %v6093 = vmul.f32 %v6074, %v6081
      %v6094 = vmul.f32 %v6075, %v6081
      %v6095 = vmul.f32 %v6076, %v6081
      %v6096 = vmul.f32 %v6077, %v6081
      %v6097 = vmul.f32 %v6078, %v6081
      %v6098 = vmul.f32 %v6079, %v6081
      %6099 = vrot.lane.b32.xlu0 %v1539, 96
      %v6100 = vpop.permute.xlu0 %6099
      %v6102 = vadd.f32 %v6083, %v6100
      %v6103 = vadd.f32 %v6084, %v6100
      %v6104 = vadd.f32 %v6085, %v6100
      %v6105 = vadd.f32 %v6086, %v6100
      %v6106 = vadd.f32 %v6087, %v6100
      %v6107 = vadd.f32 %v6088, %v6100
      %v6108 = vadd.f32 %v6089, %v6100
      %v6109 = vadd.f32 %v6090, %v6100
      %v6110 = vadd.f32 %v6091, %v6100
      %v6111 = vadd.f32 %v6092, %v6100
      %v6112 = vadd.f32 %v6093, %v6100
      %v6113 = vadd.f32 %v6094, %v6100
      %v6114 = vadd.f32 %v6095, %v6100
      %v6115 = vadd.f32 %v6096, %v6100
      %v6116 = vadd.f32 %v6097, %v6100
      %v6117 = vadd.f32 %v6098, %v6100
      %v6118 = vsel %vm1573, %v6102, 0.0
      %v6119 = vsel %vm1574, %v6103, 0.0
      %v6120 = vsel %vm1575, %v6104, 0.0
      %v6121 = vsel %vm1576, %v6105, 0.0
      %v6122 = vsel %vm1577, %v6106, 0.0
      %v6123 = vsel %vm1578, %v6107, 0.0
      %v6124 = vsel %vm1579, %v6108, 0.0
      %v6125 = vsel %vm1580, %v6109, 0.0
      %v6126 = vsel %vm1581, %v6110, 0.0
      %v6127 = vsel %vm1582, %v6111, 0.0
      %v6128 = vsel %vm1583, %v6112, 0.0
      %v6129 = vsel %vm1584, %v6113, 0.0
      %v6130 = vsel %vm1585, %v6114, 0.0
      %v6131 = vsel %vm1586, %v6115, 0.0
      %v6132 = vsel %vm1587, %v6116, 0.0
      %v6133 = vsel %vm1588, %v6117, 0.0
      %6150 = vrot.lane.b32.xlu0 %v6118, 32
      %v6151 = vpop.permute.xlu0 %6150
      %6152 = vrot.lane.b32.xlu0 %v6119, 32
      %v6153 = vpop.permute.xlu0 %6152
      %6154 = vrot.lane.b32.xlu0 %v6120, 32
      %v6155 = vpop.permute.xlu0 %6154
      %6156 = vrot.lane.b32.xlu0 %v6121, 32
      %v6157 = vpop.permute.xlu0 %6156
      %6158 = vrot.lane.b32.xlu0 %v6122, 32
      %v6159 = vpop.permute.xlu0 %6158
      %6160 = vrot.lane.b32.xlu0 %v6123, 32
      %v6161 = vpop.permute.xlu0 %6160
      %6162 = vrot.lane.b32.xlu0 %v6124, 32
      %v6163 = vpop.permute.xlu0 %6162
      %6164 = vrot.lane.b32.xlu0 %v6125, 32
      %v6165 = vpop.permute.xlu0 %6164
      %6166 = vrot.lane.b32.xlu0 %v6126, 32
      %v6167 = vpop.permute.xlu0 %6166
      %6168 = vrot.lane.b32.xlu0 %v6127, 32
      %v6169 = vpop.permute.xlu0 %6168
      %6170 = vrot.lane.b32.xlu0 %v6128, 32
      %v6171 = vpop.permute.xlu0 %6170
      %6172 = vrot.lane.b32.xlu0 %v6129, 32
      %v6173 = vpop.permute.xlu0 %6172
      %6174 = vrot.lane.b32.xlu0 %v6130, 32
      %v6175 = vpop.permute.xlu0 %6174
      %6176 = vrot.lane.b32.xlu0 %v6131, 32
      %v6177 = vpop.permute.xlu0 %6176
      %6178 = vrot.lane.b32.xlu0 %v6132, 32
      %v6179 = vpop.permute.xlu0 %6178
      %6180 = vrot.lane.b32.xlu0 %v6133, 32
      %v6181 = vpop.permute.xlu0 %6180
      %6198 = vst.msk [vmem:[#allocation3 + $0x300] sm:$0xff] %vm1303, %v6151
      %6199 = vst.msk [vmem:[#allocation3 + $0x308] sm:$0xff] %vm1303, %v6153
      %6200 = vst.msk [vmem:[#allocation3 + $0x310] sm:$0xff] %vm1303, %v6155
      %6201 = vst.msk [vmem:[#allocation3 + $0x318] sm:$0xff] %vm1303, %v6157
      %6202 = vst.msk [vmem:[#allocation3 + $0x320] sm:$0xff] %vm1303, %v6159
      %6203 = vst.msk [vmem:[#allocation3 + $0x328] sm:$0xff] %vm1303, %v6161
      %6204 = vst.msk [vmem:[#allocation3 + $0x330] sm:$0xff] %vm1303, %v6163
      %6205 = vst.msk [vmem:[#allocation3 + $0x338] sm:$0xff] %vm1303, %v6165
      %6206 = vst.msk [vmem:[#allocation3 + $0x340] sm:$0xff] %vm1303, %v6167
      %6207 = vst.msk [vmem:[#allocation3 + $0x348] sm:$0xff] %vm1303, %v6169
      %6208 = vst.msk [vmem:[#allocation3 + $0x350] sm:$0xff] %vm1303, %v6171
      %6209 = vst.msk [vmem:[#allocation3 + $0x358] sm:$0xff] %vm1303, %v6173
      %6210 = vst.msk [vmem:[#allocation3 + $0x360] sm:$0xff] %vm1303, %v6175
      %6211 = vst.msk [vmem:[#allocation3 + $0x368] sm:$0xff] %vm1303, %v6177
      %6212 = vst.msk [vmem:[#allocation3 + $0x370] sm:$0xff] %vm1303, %v6179
      %6213 = vst.msk [vmem:[#allocation3 + $0x378] sm:$0xff] %vm1303, %v6181
      %6214 = vrot.lane.b32.xlu0 %v1625, 116
      %v6215 = vpop.permute.xlu0 %6214
      %v6217 = vsub.f32 %v1234, %v6215
      %v6218 = vsub.f32 %v1235, %v6215
      %v6219 = vsub.f32 %v1236, %v6215
      %v6220 = vsub.f32 %v1237, %v6215
      %v6221 = vsub.f32 %v1238, %v6215
      %v6222 = vsub.f32 %v1239, %v6215
      %v6223 = vsub.f32 %v1240, %v6215
      %v6224 = vsub.f32 %v1241, %v6215
      %v6225 = vsub.f32 %v1242, %v6215
      %v6226 = vsub.f32 %v1243, %v6215
      %v6227 = vsub.f32 %v1244, %v6215
      %v6228 = vsub.f32 %v1245, %v6215
      %v6229 = vsub.f32 %v1246, %v6215
      %v6230 = vsub.f32 %v1247, %v6215
      %v6231 = vsub.f32 %v1248, %v6215
      %v6232 = vsub.f32 %v1249, %v6215
      %6234 = vset.pattern.permute.xlu0 0
      %6235 = vperm.xlu0 %6234, %v6217
      %v6236 = vpop.permute.xlu0 %6235
      %6239 = vset.pattern.permute.xlu0 0
      %6240 = vperm.xlu0 %6239, %v6218
      %v6241 = vpop.permute.xlu0 %6240
      %6244 = vset.pattern.permute.xlu0 0
      %6245 = vperm.xlu0 %6244, %v6219
      %v6246 = vpop.permute.xlu0 %6245
      %6249 = vset.pattern.permute.xlu0 0
      %6250 = vperm.xlu0 %6249, %v6220
      %v6251 = vpop.permute.xlu0 %6250
      %6254 = vset.pattern.permute.xlu0 0
      %6255 = vperm.xlu0 %6254, %v6221
      %v6256 = vpop.permute.xlu0 %6255
      %6259 = vset.pattern.permute.xlu0 0
      %6260 = vperm.xlu0 %6259, %v6222
      %v6261 = vpop.permute.xlu0 %6260
      %6264 = vset.pattern.permute.xlu0 0
      %6265 = vperm.xlu0 %6264, %v6223
      %v6266 = vpop.permute.xlu0 %6265
      %6269 = vset.pattern.permute.xlu0 0
      %6270 = vperm.xlu0 %6269, %v6224
      %v6271 = vpop.permute.xlu0 %6270
      %6274 = vset.pattern.permute.xlu0 0
      %6275 = vperm.xlu0 %6274, %v6225
      %v6276 = vpop.permute.xlu0 %6275
      %6279 = vset.pattern.permute.xlu0 0
      %6280 = vperm.xlu0 %6279, %v6226
      %v6281 = vpop.permute.xlu0 %6280
      %6284 = vset.pattern.permute.xlu0 0
      %6285 = vperm.xlu0 %6284, %v6227
      %v6286 = vpop.permute.xlu0 %6285
      %6289 = vset.pattern.permute.xlu0 0
      %6290 = vperm.xlu0 %6289, %v6228
      %v6291 = vpop.permute.xlu0 %6290
      %6294 = vset.pattern.permute.xlu0 0
      %6295 = vperm.xlu0 %6294, %v6229
      %v6296 = vpop.permute.xlu0 %6295
      %6299 = vset.pattern.permute.xlu0 0
      %6300 = vperm.xlu0 %6299, %v6230
      %v6301 = vpop.permute.xlu0 %6300
      %6304 = vset.pattern.permute.xlu0 0
      %6305 = vperm.xlu0 %6304, %v6231
      %v6306 = vpop.permute.xlu0 %6305
      %6309 = vset.pattern.permute.xlu0 0
      %6310 = vperm.xlu0 %6309, %v6232
      %v6311 = vpop.permute.xlu0 %6310
      %v6313 = vsub.f32 %v6236, %v1726
      %v6314 = vsub.f32 %v6241, %v1726
      %v6315 = vsub.f32 %v6246, %v1726
      %v6316 = vsub.f32 %v6251, %v1726
      %v6317 = vsub.f32 %v6256, %v1726
      %v6318 = vsub.f32 %v6261, %v1726
      %v6319 = vsub.f32 %v6266, %v1726
      %v6320 = vsub.f32 %v6271, %v1726
      %v6321 = vsub.f32 %v6276, %v1726
      %v6322 = vsub.f32 %v6281, %v1726
      %v6323 = vsub.f32 %v6286, %v1726
      %v6324 = vsub.f32 %v6291, %v1726
      %v6325 = vsub.f32 %v6296, %v1726
      %v6326 = vsub.f32 %v6301, %v1726
      %v6327 = vsub.f32 %v6306, %v1726
      %v6328 = vsub.f32 %v6311, %v1726
      %v6329 = vmul.f32 %v6313, %v6313
      %v6330 = vmul.f32 %v6314, %v6314
      %v6331 = vmul.f32 %v6315, %v6315
      %v6332 = vmul.f32 %v6316, %v6316
      %v6333 = vmul.f32 %v6317, %v6317
      %v6334 = vmul.f32 %v6318, %v6318
      %v6335 = vmul.f32 %v6319, %v6319
      %v6336 = vmul.f32 %v6320, %v6320
      %v6337 = vmul.f32 %v6321, %v6321
      %v6338 = vmul.f32 %v6322, %v6322
      %v6339 = vmul.f32 %v6323, %v6323
      %v6340 = vmul.f32 %v6324, %v6324
      %v6341 = vmul.f32 %v6325, %v6325
      %v6342 = vmul.f32 %v6326, %v6326
      %v6343 = vmul.f32 %v6327, %v6327
      %v6344 = vmul.f32 %v6328, %v6328
      %6345 = vset.pattern.permute.xlu0 1
      %6346 = vperm.xlu0 %6345, %v6217
      %v6347 = vpop.permute.xlu0 %6346
      %6349 = vset.pattern.permute.xlu0 1
      %6350 = vperm.xlu0 %6349, %v6218
      %v6351 = vpop.permute.xlu0 %6350
      %6353 = vset.pattern.permute.xlu0 1
      %6354 = vperm.xlu0 %6353, %v6219
      %v6355 = vpop.permute.xlu0 %6354
      %6357 = vset.pattern.permute.xlu0 1
      %6358 = vperm.xlu0 %6357, %v6220
      %v6359 = vpop.permute.xlu0 %6358
      %6361 = vset.pattern.permute.xlu0 1
      %6362 = vperm.xlu0 %6361, %v6221
      %v6363 = vpop.permute.xlu0 %6362
      %6365 = vset.pattern.permute.xlu0 1
      %6366 = vperm.xlu0 %6365, %v6222
      %v6367 = vpop.permute.xlu0 %6366
      %6369 = vset.pattern.permute.xlu0 1
      %6370 = vperm.xlu0 %6369, %v6223
      %v6371 = vpop.permute.xlu0 %6370
      %6373 = vset.pattern.permute.xlu0 1
      %6374 = vperm.xlu0 %6373, %v6224
      %v6375 = vpop.permute.xlu0 %6374
      %6377 = vset.pattern.permute.xlu0 1
      %6378 = vperm.xlu0 %6377, %v6225
      %v6379 = vpop.permute.xlu0 %6378
      %6381 = vset.pattern.permute.xlu0 1
      %6382 = vperm.xlu0 %6381, %v6226
      %v6383 = vpop.permute.xlu0 %6382
      %6385 = vset.pattern.permute.xlu0 1
      %6386 = vperm.xlu0 %6385, %v6227
      %v6387 = vpop.permute.xlu0 %6386
      %6389 = vset.pattern.permute.xlu0 1
      %6390 = vperm.xlu0 %6389, %v6228
      %v6391 = vpop.permute.xlu0 %6390
      %6393 = vset.pattern.permute.xlu0 1
      %6394 = vperm.xlu0 %6393, %v6229
      %v6395 = vpop.permute.xlu0 %6394
      %6397 = vset.pattern.permute.xlu0 1
      %6398 = vperm.xlu0 %6397, %v6230
      %v6399 = vpop.permute.xlu0 %6398
      %6401 = vset.pattern.permute.xlu0 1
      %6402 = vperm.xlu0 %6401, %v6231
      %v6403 = vpop.permute.xlu0 %6402
      %6405 = vset.pattern.permute.xlu0 1
      %6406 = vperm.xlu0 %6405, %v6232
      %v6407 = vpop.permute.xlu0 %6406
      %v6409 = vsub.f32 %v6347, %v1826
      %v6410 = vsub.f32 %v6351, %v1826
      %v6411 = vsub.f32 %v6355, %v1826
      %v6412 = vsub.f32 %v6359, %v1826
      %v6413 = vsub.f32 %v6363, %v1826
      %v6414 = vsub.f32 %v6367, %v1826
      %v6415 = vsub.f32 %v6371, %v1826
      %v6416 = vsub.f32 %v6375, %v1826
      %v6417 = vsub.f32 %v6379, %v1826
      %v6418 = vsub.f32 %v6383, %v1826
      %v6419 = vsub.f32 %v6387, %v1826
      %v6420 = vsub.f32 %v6391, %v1826
      %v6421 = vsub.f32 %v6395, %v1826
      %v6422 = vsub.f32 %v6399, %v1826
      %v6423 = vsub.f32 %v6403, %v1826
      %v6424 = vsub.f32 %v6407, %v1826
      %v6425 = vmul.f32 %v6409, %v6409
      %v6426 = vmul.f32 %v6410, %v6410
      %v6427 = vmul.f32 %v6411, %v6411
      %v6428 = vmul.f32 %v6412, %v6412
      %v6429 = vmul.f32 %v6413, %v6413
      %v6430 = vmul.f32 %v6414, %v6414
      %v6431 = vmul.f32 %v6415, %v6415
      %v6432 = vmul.f32 %v6416, %v6416
      %v6433 = vmul.f32 %v6417, %v6417
      %v6434 = vmul.f32 %v6418, %v6418
      %v6435 = vmul.f32 %v6419, %v6419
      %v6436 = vmul.f32 %v6420, %v6420
      %v6437 = vmul.f32 %v6421, %v6421
      %v6438 = vmul.f32 %v6422, %v6422
      %v6439 = vmul.f32 %v6423, %v6423
      %v6440 = vmul.f32 %v6424, %v6424
      %v6441 = vadd.f32 %v6329, %v6425
      %v6442 = vadd.f32 %v6330, %v6426
      %v6443 = vadd.f32 %v6331, %v6427
      %v6444 = vadd.f32 %v6332, %v6428
      %v6445 = vadd.f32 %v6333, %v6429
      %v6446 = vadd.f32 %v6334, %v6430
      %v6447 = vadd.f32 %v6335, %v6431
      %v6448 = vadd.f32 %v6336, %v6432
      %v6449 = vadd.f32 %v6337, %v6433
      %v6450 = vadd.f32 %v6338, %v6434
      %v6451 = vadd.f32 %v6339, %v6435
      %v6452 = vadd.f32 %v6340, %v6436
      %v6453 = vadd.f32 %v6341, %v6437
      %v6454 = vadd.f32 %v6342, %v6438
      %v6455 = vadd.f32 %v6343, %v6439
      %v6456 = vadd.f32 %v6344, %v6440
      %v6457 = vsub.f32 0.0, %v6441
      %v6458 = vsub.f32 0.0, %v6442
      %v6459 = vsub.f32 0.0, %v6443
      %v6460 = vsub.f32 0.0, %v6444
      %v6461 = vsub.f32 0.0, %v6445
      %v6462 = vsub.f32 0.0, %v6446
      %v6463 = vsub.f32 0.0, %v6447
      %v6464 = vsub.f32 0.0, %v6448
      %v6465 = vsub.f32 0.0, %v6449
      %v6466 = vsub.f32 0.0, %v6450
      %v6467 = vsub.f32 0.0, %v6451
      %v6468 = vsub.f32 0.0, %v6452
      %v6469 = vsub.f32 0.0, %v6453
      %v6470 = vsub.f32 0.0, %v6454
      %v6471 = vsub.f32 0.0, %v6455
      %v6472 = vsub.f32 0.0, %v6456
      %v6473 = vmul.f32 %v6457, 1.442695
      %v6474 = vpow.pop %v6473
      %v6475 = vmul.f32 %v6458, 1.442695
      %v6476 = vpow.pop %v6475
      %v6477 = vmul.f32 %v6459, 1.442695
      %v6478 = vpow.pop %v6477
      %v6479 = vmul.f32 %v6460, 1.442695
      %v6480 = vpow.pop %v6479
      %v6481 = vmul.f32 %v6461, 1.442695
      %v6482 = vpow.pop %v6481
      %v6483 = vmul.f32 %v6462, 1.442695
      %v6484 = vpow.pop %v6483
      %v6485 = vmul.f32 %v6463, 1.442695
      %v6486 = vpow.pop %v6485
      %v6487 = vmul.f32 %v6464, 1.442695
      %v6488 = vpow.pop %v6487
      %v6489 = vmul.f32 %v6465, 1.442695
      %v6490 = vpow.pop %v6489
      %v6491 = vmul.f32 %v6466, 1.442695
      %v6492 = vpow.pop %v6491
      %v6493 = vmul.f32 %v6467, 1.442695
      %v6494 = vpow.pop %v6493
      %v6495 = vmul.f32 %v6468, 1.442695
      %v6496 = vpow.pop %v6495
      %v6497 = vmul.f32 %v6469, 1.442695
      %v6498 = vpow.pop %v6497
      %v6499 = vmul.f32 %v6470, 1.442695
      %v6500 = vpow.pop %v6499
      %v6501 = vmul.f32 %v6471, 1.442695
      %v6502 = vpow.pop %v6501
      %v6503 = vmul.f32 %v6472, 1.442695
      %v6504 = vpow.pop %v6503
      %6505 = vst [vmem:[#allocation2 + $0x30] sm:$0xff] %v6474
      %6506 = vst [vmem:[#allocation2 + $0x78] sm:$0xff] %v6476
      %6507 = vst [vmem:[#allocation2 + $0xc0] sm:$0xff] %v6478
      %6508 = vst [vmem:[#allocation2 + $0x108] sm:$0xff] %v6480
      %6509 = vst [vmem:[#allocation2 + $0x150] sm:$0xff] %v6482
      %6510 = vst [vmem:[#allocation2 + $0x198] sm:$0xff] %v6484
      %6511 = vst [vmem:[#allocation2 + $0x1e0] sm:$0xff] %v6486
      %6512 = vst [vmem:[#allocation2 + $0x228] sm:$0xff] %v6488
      %6513 = vst [vmem:[#allocation2 + $0x270] sm:$0xff] %v6490
      %6514 = vst [vmem:[#allocation2 + $0x2b8] sm:$0xff] %v6492
      %6515 = vst [vmem:[#allocation2 + $0x300] sm:$0xff] %v6494
      %6516 = vst [vmem:[#allocation2 + $0x348] sm:$0xff] %v6496
      %6517 = vst [vmem:[#allocation2 + $0x390] sm:$0xff] %v6498
      %6518 = vst [vmem:[#allocation2 + $0x3d8] sm:$0xff] %v6500
      %6519 = vst [vmem:[#allocation2 + $0x420] sm:$0xff] %v6502
      %6520 = vst [vmem:[#allocation2 + $0x468] sm:$0xff] %v6504
      %6521 = vrot.lane.b32.xlu0 %v1122, 16
      %v6522 = vpop.permute.xlu0 %6521
      %6523 = vrot.lane.b32.xlu0 %v1128, 16
      %v6524 = vpop.permute.xlu0 %6523
      %6525 = vrot.lane.b32.xlu0 %v1134, 16
      %v6526 = vpop.permute.xlu0 %6525
      %6527 = vrot.lane.b32.xlu0 %v1140, 16
      %v6528 = vpop.permute.xlu0 %6527
      %6529 = vrot.lane.b32.xlu0 %v1146, 16
      %v6530 = vpop.permute.xlu0 %6529
      %6531 = vrot.lane.b32.xlu0 %v1152, 16
      %v6532 = vpop.permute.xlu0 %6531
      %6533 = vrot.lane.b32.xlu0 %v1158, 16
      %v6534 = vpop.permute.xlu0 %6533
      %6535 = vrot.lane.b32.xlu0 %v1164, 16
      %v6536 = vpop.permute.xlu0 %6535
      %6537 = vrot.lane.b32.xlu0 %v1170, 16
      %v6538 = vpop.permute.xlu0 %6537
      %6539 = vrot.lane.b32.xlu0 %v1176, 16
      %v6540 = vpop.permute.xlu0 %6539
      %6541 = vrot.lane.b32.xlu0 %v1182, 16
      %v6542 = vpop.permute.xlu0 %6541
      %6543 = vrot.lane.b32.xlu0 %v1188, 16
      %v6544 = vpop.permute.xlu0 %6543
      %6545 = vrot.lane.b32.xlu0 %v1194, 16
      %v6546 = vpop.permute.xlu0 %6545
      %6547 = vrot.lane.b32.xlu0 %v1200, 16
      %v6548 = vpop.permute.xlu0 %6547
      %6549 = vrot.lane.b32.xlu0 %v1206, 16
      %v6550 = vpop.permute.xlu0 %6549
      %6551 = vrot.lane.b32.xlu0 %v1212, 16
      %v6552 = vpop.permute.xlu0 %6551
      %v6569 = vsel %vm1303, %v6522, 0.0
      %6570 = vadd.xlane.f32.xlu0 %v6569
      %v6571 = vpop.xlane.xlu0 %6570
      %v6572 = vsel %vm1303, %v6524, 0.0
      %6573 = vadd.xlane.f32.xlu0 %v6572
      %v6574 = vpop.xlane.xlu0 %6573
      %v6575 = vsel %vm1303, %v6526, 0.0
      %6576 = vadd.xlane.f32.xlu0 %v6575
      %v6577 = vpop.xlane.xlu0 %6576
      %v6578 = vsel %vm1303, %v6528, 0.0
      %6579 = vadd.xlane.f32.xlu0 %v6578
      %v6580 = vpop.xlane.xlu0 %6579
      %v6581 = vsel %vm1303, %v6530, 0.0
      %6582 = vadd.xlane.f32.xlu0 %v6581
      %v6583 = vpop.xlane.xlu0 %6582
      %v6584 = vsel %vm1303, %v6532, 0.0
      %6585 = vadd.xlane.f32.xlu0 %v6584
      %v6586 = vpop.xlane.xlu0 %6585
      %v6587 = vsel %vm1303, %v6534, 0.0
      %6588 = vadd.xlane.f32.xlu0 %v6587
      %v6589 = vpop.xlane.xlu0 %6588
      %v6590 = vsel %vm1303, %v6536, 0.0
      %6591 = vadd.xlane.f32.xlu0 %v6590
      %v6592 = vpop.xlane.xlu0 %6591
      %v6593 = vsel %vm1303, %v6538, 0.0
      %6594 = vadd.xlane.f32.xlu0 %v6593
      %v6595 = vpop.xlane.xlu0 %6594
      %v6596 = vsel %vm1303, %v6540, 0.0
      %6597 = vadd.xlane.f32.xlu0 %v6596
      %v6598 = vpop.xlane.xlu0 %6597
      %v6599 = vsel %vm1303, %v6542, 0.0
      %6600 = vadd.xlane.f32.xlu0 %v6599
      %v6601 = vpop.xlane.xlu0 %6600
      %v6602 = vsel %vm1303, %v6544, 0.0
      %6603 = vadd.xlane.f32.xlu0 %v6602
      %v6604 = vpop.xlane.xlu0 %6603
      %v6605 = vsel %vm1303, %v6546, 0.0
      %6606 = vadd.xlane.f32.xlu0 %v6605
      %v6607 = vpop.xlane.xlu0 %6606
      %v6608 = vsel %vm1303, %v6548, 0.0
      %6609 = vadd.xlane.f32.xlu0 %v6608
      %v6610 = vpop.xlane.xlu0 %6609
      %v6611 = vsel %vm1303, %v6550, 0.0
      %6612 = vadd.xlane.f32.xlu0 %v6611
      %v6613 = vpop.xlane.xlu0 %6612
      %v6614 = vsel %vm1303, %v6552, 0.0
      %6615 = vadd.xlane.f32.xlu0 %v6614
      %v6616 = vpop.xlane.xlu0 %6615
      %v6617 = vmul.f32 %v6571, %v1352
      %v6618 = vmul.f32 %v6574, %v1352
      %v6619 = vmul.f32 %v6577, %v1352
      %v6620 = vmul.f32 %v6580, %v1352
      %v6621 = vmul.f32 %v6583, %v1352
      %v6622 = vmul.f32 %v6586, %v1352
      %v6623 = vmul.f32 %v6589, %v1352
      %v6624 = vmul.f32 %v6592, %v1352
      %v6625 = vmul.f32 %v6595, %v1352
      %v6626 = vmul.f32 %v6598, %v1352
      %v6627 = vmul.f32 %v6601, %v1352
      %v6628 = vmul.f32 %v6604, %v1352
      %v6629 = vmul.f32 %v6607, %v1352
      %v6630 = vmul.f32 %v6610, %v1352
      %v6631 = vmul.f32 %v6613, %v1352
      %v6632 = vmul.f32 %v6616, %v1352
      %v6633 = vsub.f32 %v1122, %v6617
      %v6634 = vsub.f32 %v1128, %v6618
      %v6635 = vsub.f32 %v1134, %v6619
      %v6636 = vsub.f32 %v1140, %v6620
      %v6637 = vsub.f32 %v1146, %v6621
      %v6638 = vsub.f32 %v1152, %v6622
      %v6639 = vsub.f32 %v1158, %v6623
      %v6640 = vsub.f32 %v1164, %v6624
      %v6641 = vsub.f32 %v1170, %v6625
      %v6642 = vsub.f32 %v1176, %v6626
      %v6643 = vsub.f32 %v1182, %v6627
      %v6644 = vsub.f32 %v1188, %v6628
      %v6645 = vsub.f32 %v1194, %v6629
      %v6646 = vsub.f32 %v1200, %v6630
      %v6647 = vsub.f32 %v1206, %v6631
      %v6648 = vsub.f32 %v1212, %v6632
      %v6649 = vmul.f32 %v6633, %v6633
      %v6650 = vmul.f32 %v6634, %v6634
      %v6651 = vmul.f32 %v6635, %v6635
      %v6652 = vmul.f32 %v6636, %v6636
      %v6653 = vmul.f32 %v6637, %v6637
      %v6654 = vmul.f32 %v6638, %v6638
      %v6655 = vmul.f32 %v6639, %v6639
      %v6656 = vmul.f32 %v6640, %v6640
      %v6657 = vmul.f32 %v6641, %v6641
      %v6658 = vmul.f32 %v6642, %v6642
      %v6659 = vmul.f32 %v6643, %v6643
      %v6660 = vmul.f32 %v6644, %v6644
      %v6661 = vmul.f32 %v6645, %v6645
      %v6662 = vmul.f32 %v6646, %v6646
      %v6663 = vmul.f32 %v6647, %v6647
      %v6664 = vmul.f32 %v6648, %v6648
      %6681 = vrot.lane.b32.xlu0 %v6649, 16
      %v6682 = vpop.permute.xlu0 %6681
      %6683 = vrot.lane.b32.xlu0 %v6650, 16
      %v6684 = vpop.permute.xlu0 %6683
      %6685 = vrot.lane.b32.xlu0 %v6651, 16
      %v6686 = vpop.permute.xlu0 %6685
      %6687 = vrot.lane.b32.xlu0 %v6652, 16
      %v6688 = vpop.permute.xlu0 %6687
      %6689 = vrot.lane.b32.xlu0 %v6653, 16
      %v6690 = vpop.permute.xlu0 %6689
      %6691 = vrot.lane.b32.xlu0 %v6654, 16
      %v6692 = vpop.permute.xlu0 %6691
      %6693 = vrot.lane.b32.xlu0 %v6655, 16
      %v6694 = vpop.permute.xlu0 %6693
      %6695 = vrot.lane.b32.xlu0 %v6656, 16
      %v6696 = vpop.permute.xlu0 %6695
      %6697 = vrot.lane.b32.xlu0 %v6657, 16
      %v6698 = vpop.permute.xlu0 %6697
      %6699 = vrot.lane.b32.xlu0 %v6658, 16
      %v6700 = vpop.permute.xlu0 %6699
      %6701 = vrot.lane.b32.xlu0 %v6659, 16
      %v6702 = vpop.permute.xlu0 %6701
      %6703 = vrot.lane.b32.xlu0 %v6660, 16
      %v6704 = vpop.permute.xlu0 %6703
      %6705 = vrot.lane.b32.xlu0 %v6661, 16
      %v6706 = vpop.permute.xlu0 %6705
      %6707 = vrot.lane.b32.xlu0 %v6662, 16
      %v6708 = vpop.permute.xlu0 %6707
      %6709 = vrot.lane.b32.xlu0 %v6663, 16
      %v6710 = vpop.permute.xlu0 %6709
      %6711 = vrot.lane.b32.xlu0 %v6664, 16
      %v6712 = vpop.permute.xlu0 %6711
      %v6729 = vsel %vm1303, %v6682, 0.0
      %6730 = vadd.xlane.f32.xlu0 %v6729
      %v6731 = vpop.xlane.xlu0 %6730
      %v6732 = vsel %vm1303, %v6684, 0.0
      %6733 = vadd.xlane.f32.xlu0 %v6732
      %v6734 = vpop.xlane.xlu0 %6733
      %v6735 = vsel %vm1303, %v6686, 0.0
      %6736 = vadd.xlane.f32.xlu0 %v6735
      %v6737 = vpop.xlane.xlu0 %6736
      %v6738 = vsel %vm1303, %v6688, 0.0
      %6739 = vadd.xlane.f32.xlu0 %v6738
      %v6740 = vpop.xlane.xlu0 %6739
      %v6741 = vsel %vm1303, %v6690, 0.0
      %6742 = vadd.xlane.f32.xlu0 %v6741
      %v6743 = vpop.xlane.xlu0 %6742
      %v6744 = vsel %vm1303, %v6692, 0.0
      %6745 = vadd.xlane.f32.xlu0 %v6744
      %v6746 = vpop.xlane.xlu0 %6745
      %v6747 = vsel %vm1303, %v6694, 0.0
      %6748 = vadd.xlane.f32.xlu0 %v6747
      %v6749 = vpop.xlane.xlu0 %6748
      %v6750 = vsel %vm1303, %v6696, 0.0
      %6751 = vadd.xlane.f32.xlu0 %v6750
      %v6752 = vpop.xlane.xlu0 %6751
      %v6753 = vsel %vm1303, %v6698, 0.0
      %6754 = vadd.xlane.f32.xlu0 %v6753
      %v6755 = vpop.xlane.xlu0 %6754
      %v6756 = vsel %vm1303, %v6700, 0.0
      %6757 = vadd.xlane.f32.xlu0 %v6756
      %v6758 = vpop.xlane.xlu0 %6757
      %v6759 = vsel %vm1303, %v6702, 0.0
      %6760 = vadd.xlane.f32.xlu0 %v6759
      %v6761 = vpop.xlane.xlu0 %6760
      %v6762 = vsel %vm1303, %v6704, 0.0
      %6763 = vadd.xlane.f32.xlu0 %v6762
      %v6764 = vpop.xlane.xlu0 %6763
      %v6765 = vsel %vm1303, %v6706, 0.0
      %6766 = vadd.xlane.f32.xlu0 %v6765
      %v6767 = vpop.xlane.xlu0 %6766
      %v6768 = vsel %vm1303, %v6708, 0.0
      %6769 = vadd.xlane.f32.xlu0 %v6768
      %v6770 = vpop.xlane.xlu0 %6769
      %v6771 = vsel %vm1303, %v6710, 0.0
      %6772 = vadd.xlane.f32.xlu0 %v6771
      %v6773 = vpop.xlane.xlu0 %6772
      %v6774 = vsel %vm1303, %v6712, 0.0
      %6775 = vadd.xlane.f32.xlu0 %v6774
      %v6776 = vpop.xlane.xlu0 %6775
      %v6777 = vmul.f32 %v6731, %v1352
      %v6778 = vmul.f32 %v6734, %v1352
      %v6779 = vmul.f32 %v6737, %v1352
      %v6780 = vmul.f32 %v6740, %v1352
      %v6781 = vmul.f32 %v6743, %v1352
      %v6782 = vmul.f32 %v6746, %v1352
      %v6783 = vmul.f32 %v6749, %v1352
      %v6784 = vmul.f32 %v6752, %v1352
      %v6785 = vmul.f32 %v6755, %v1352
      %v6786 = vmul.f32 %v6758, %v1352
      %v6787 = vmul.f32 %v6761, %v1352
      %v6788 = vmul.f32 %v6764, %v1352
      %v6789 = vmul.f32 %v6767, %v1352
      %v6790 = vmul.f32 %v6770, %v1352
      %v6791 = vmul.f32 %v6773, %v1352
      %v6792 = vmul.f32 %v6776, %v1352
      %v6793 = vadd.f32 %v6777, 1e-05
      %v6794 = vadd.f32 %v6778, 1e-05
      %v6795 = vadd.f32 %v6779, 1e-05
      %v6796 = vadd.f32 %v6780, 1e-05
      %v6797 = vadd.f32 %v6781, 1e-05
      %v6798 = vadd.f32 %v6782, 1e-05
      %v6799 = vadd.f32 %v6783, 1e-05
      %v6800 = vadd.f32 %v6784, 1e-05
      %v6801 = vadd.f32 %v6785, 1e-05
      %v6802 = vadd.f32 %v6786, 1e-05
      %v6803 = vadd.f32 %v6787, 1e-05
      %v6804 = vadd.f32 %v6788, 1e-05
      %v6805 = vadd.f32 %v6789, 1e-05
      %v6806 = vadd.f32 %v6790, 1e-05
      %v6807 = vadd.f32 %v6791, 1e-05
      %v6808 = vadd.f32 %v6792, 1e-05
      %v6809 = vrsqrt.pop %v6793
      %v6810 = vrsqrt.pop %v6794
      %v6811 = vrsqrt.pop %v6795
      %v6812 = vrsqrt.pop %v6796
      %v6813 = vrsqrt.pop %v6797
      %v6814 = vrsqrt.pop %v6798
      %v6815 = vrsqrt.pop %v6799
      %v6816 = vrsqrt.pop %v6800
      %v6817 = vrsqrt.pop %v6801
      %v6818 = vrsqrt.pop %v6802
      %v6819 = vrsqrt.pop %v6803
      %v6820 = vrsqrt.pop %v6804
      %v6821 = vrsqrt.pop %v6805
      %v6822 = vrsqrt.pop %v6806
      %v6823 = vrsqrt.pop %v6807
      %v6824 = vrsqrt.pop %v6808
      %v6825 = vmul.f32 %v6633, %v6809
      %v6826 = vmul.f32 %v6634, %v6810
      %v6827 = vmul.f32 %v6635, %v6811
      %v6828 = vmul.f32 %v6636, %v6812
      %v6829 = vmul.f32 %v6637, %v6813
      %v6830 = vmul.f32 %v6638, %v6814
      %v6831 = vmul.f32 %v6639, %v6815
      %v6832 = vmul.f32 %v6640, %v6816
      %v6833 = vmul.f32 %v6641, %v6817
      %v6834 = vmul.f32 %v6642, %v6818
      %v6835 = vmul.f32 %v6643, %v6819
      %v6836 = vmul.f32 %v6644, %v6820
      %v6837 = vmul.f32 %v6645, %v6821
      %v6838 = vmul.f32 %v6646, %v6822
      %v6839 = vmul.f32 %v6647, %v6823
      %v6840 = vmul.f32 %v6648, %v6824
      %6841 = vrot.lane.b32.xlu0 %v1517, 112
      %v6842 = vpop.permute.xlu0 %6841
      %v6844 = vmul.f32 %v6825, %v6842
      %v6845 = vmul.f32 %v6826, %v6842
      %v6846 = vmul.f32 %v6827, %v6842
      %v6847 = vmul.f32 %v6828, %v6842
      %v6848 = vmul.f32 %v6829, %v6842
      %v6849 = vmul.f32 %v6830, %v6842
      %v6850 = vmul.f32 %v6831, %v6842
      %v6851 = vmul.f32 %v6832, %v6842
      %v6852 = vmul.f32 %v6833, %v6842
      %v6853 = vmul.f32 %v6834, %v6842
      %v6854 = vmul.f32 %v6835, %v6842
      %v6855 = vmul.f32 %v6836, %v6842
      %v6856 = vmul.f32 %v6837, %v6842
      %v6857 = vmul.f32 %v6838, %v6842
      %v6858 = vmul.f32 %v6839, %v6842
      %v6859 = vmul.f32 %v6840, %v6842
      %6860 = vrot.lane.b32.xlu0 %v1539, 112
      %v6861 = vpop.permute.xlu0 %6860
      %v6863 = vadd.f32 %v6844, %v6861
      %v6864 = vadd.f32 %v6845, %v6861
      %v6865 = vadd.f32 %v6846, %v6861
      %v6866 = vadd.f32 %v6847, %v6861
      %v6867 = vadd.f32 %v6848, %v6861
      %v6868 = vadd.f32 %v6849, %v6861
      %v6869 = vadd.f32 %v6850, %v6861
      %v6870 = vadd.f32 %v6851, %v6861
      %v6871 = vadd.f32 %v6852, %v6861
      %v6872 = vadd.f32 %v6853, %v6861
      %v6873 = vadd.f32 %v6854, %v6861
      %v6874 = vadd.f32 %v6855, %v6861
      %v6875 = vadd.f32 %v6856, %v6861
      %v6876 = vadd.f32 %v6857, %v6861
      %v6877 = vadd.f32 %v6858, %v6861
      %v6878 = vadd.f32 %v6859, %v6861
      %v6879 = vsel %vm1573, %v6863, 0.0
      %v6880 = vsel %vm1574, %v6864, 0.0
      %v6881 = vsel %vm1575, %v6865, 0.0
      %v6882 = vsel %vm1576, %v6866, 0.0
      %v6883 = vsel %vm1577, %v6867, 0.0
      %v6884 = vsel %vm1578, %v6868, 0.0
      %v6885 = vsel %vm1579, %v6869, 0.0
      %v6886 = vsel %vm1580, %v6870, 0.0
      %v6887 = vsel %vm1581, %v6871, 0.0
      %v6888 = vsel %vm1582, %v6872, 0.0
      %v6889 = vsel %vm1583, %v6873, 0.0
      %v6890 = vsel %vm1584, %v6874, 0.0
      %v6891 = vsel %vm1585, %v6875, 0.0
      %v6892 = vsel %vm1586, %v6876, 0.0
      %v6893 = vsel %vm1587, %v6877, 0.0
      %v6894 = vsel %vm1588, %v6878, 0.0
      %6911 = vrot.lane.b32.xlu0 %v6879, 16
      %v6912 = vpop.permute.xlu0 %6911
      %6913 = vrot.lane.b32.xlu0 %v6880, 16
      %v6914 = vpop.permute.xlu0 %6913
      %6915 = vrot.lane.b32.xlu0 %v6881, 16
      %v6916 = vpop.permute.xlu0 %6915
      %6917 = vrot.lane.b32.xlu0 %v6882, 16
      %v6918 = vpop.permute.xlu0 %6917
      %6919 = vrot.lane.b32.xlu0 %v6883, 16
      %v6920 = vpop.permute.xlu0 %6919
      %6921 = vrot.lane.b32.xlu0 %v6884, 16
      %v6922 = vpop.permute.xlu0 %6921
      %6923 = vrot.lane.b32.xlu0 %v6885, 16
      %v6924 = vpop.permute.xlu0 %6923
      %6925 = vrot.lane.b32.xlu0 %v6886, 16
      %v6926 = vpop.permute.xlu0 %6925
      %6927 = vrot.lane.b32.xlu0 %v6887, 16
      %v6928 = vpop.permute.xlu0 %6927
      %6929 = vrot.lane.b32.xlu0 %v6888, 16
      %v6930 = vpop.permute.xlu0 %6929
      %6931 = vrot.lane.b32.xlu0 %v6889, 16
      %v6932 = vpop.permute.xlu0 %6931
      %6933 = vrot.lane.b32.xlu0 %v6890, 16
      %v6934 = vpop.permute.xlu0 %6933
      %6935 = vrot.lane.b32.xlu0 %v6891, 16
      %v6936 = vpop.permute.xlu0 %6935
      %6937 = vrot.lane.b32.xlu0 %v6892, 16
      %v6938 = vpop.permute.xlu0 %6937
      %6939 = vrot.lane.b32.xlu0 %v6893, 16
      %v6940 = vpop.permute.xlu0 %6939
      %6941 = vrot.lane.b32.xlu0 %v6894, 16
      %v6942 = vpop.permute.xlu0 %6941
      %6959 = vst.msk [vmem:[#allocation3 + $0x380] sm:$0xff] %vm1303, %v6912
      %6960 = vst.msk [vmem:[#allocation3 + $0x388] sm:$0xff] %vm1303, %v6914
      %6961 = vst.msk [vmem:[#allocation3 + $0x390] sm:$0xff] %vm1303, %v6916
      %6962 = vst.msk [vmem:[#allocation3 + $0x398] sm:$0xff] %vm1303, %v6918
      %6963 = vst.msk [vmem:[#allocation3 + $0x3a0] sm:$0xff] %vm1303, %v6920
      %6964 = vst.msk [vmem:[#allocation3 + $0x3a8] sm:$0xff] %vm1303, %v6922
      %6965 = vst.msk [vmem:[#allocation3 + $0x3b0] sm:$0xff] %vm1303, %v6924
      %6966 = vst.msk [vmem:[#allocation3 + $0x3b8] sm:$0xff] %vm1303, %v6926
      %6967 = vst.msk [vmem:[#allocation3 + $0x3c0] sm:$0xff] %vm1303, %v6928
      %6968 = vst.msk [vmem:[#allocation3 + $0x3c8] sm:$0xff] %vm1303, %v6930
      %6969 = vst.msk [vmem:[#allocation3 + $0x3d0] sm:$0xff] %vm1303, %v6932
      %6970 = vst.msk [vmem:[#allocation3 + $0x3d8] sm:$0xff] %vm1303, %v6934
      %6971 = vst.msk [vmem:[#allocation3 + $0x3e0] sm:$0xff] %vm1303, %v6936
      %6972 = vst.msk [vmem:[#allocation3 + $0x3e8] sm:$0xff] %vm1303, %v6938
      %6973 = vst.msk [vmem:[#allocation3 + $0x3f0] sm:$0xff] %vm1303, %v6940
      %6974 = vst.msk [vmem:[#allocation3 + $0x3f8] sm:$0xff] %vm1303, %v6942
      %6975 = vrot.lane.b32.xlu0 %v1625, 114
      %v6976 = vpop.permute.xlu0 %6975
      %v6978 = vsub.f32 %v1234, %v6976
      %v6979 = vsub.f32 %v1235, %v6976
      %v6980 = vsub.f32 %v1236, %v6976
      %v6981 = vsub.f32 %v1237, %v6976
      %v6982 = vsub.f32 %v1238, %v6976
      %v6983 = vsub.f32 %v1239, %v6976
      %v6984 = vsub.f32 %v1240, %v6976
      %v6985 = vsub.f32 %v1241, %v6976
      %v6986 = vsub.f32 %v1242, %v6976
      %v6987 = vsub.f32 %v1243, %v6976
      %v6988 = vsub.f32 %v1244, %v6976
      %v6989 = vsub.f32 %v1245, %v6976
      %v6990 = vsub.f32 %v1246, %v6976
      %v6991 = vsub.f32 %v1247, %v6976
      %v6992 = vsub.f32 %v1248, %v6976
      %v6993 = vsub.f32 %v1249, %v6976
      %6995 = vset.pattern.permute.xlu0 0
      %6996 = vperm.xlu0 %6995, %v6978
      %v6997 = vpop.permute.xlu0 %6996
      %7000 = vset.pattern.permute.xlu0 0
      %7001 = vperm.xlu0 %7000, %v6979
      %v7002 = vpop.permute.xlu0 %7001
      %7005 = vset.pattern.permute.xlu0 0
      %7006 = vperm.xlu0 %7005, %v6980
      %v7007 = vpop.permute.xlu0 %7006
      %7010 = vset.pattern.permute.xlu0 0
      %7011 = vperm.xlu0 %7010, %v6981
      %v7012 = vpop.permute.xlu0 %7011
      %7015 = vset.pattern.permute.xlu0 0
      %7016 = vperm.xlu0 %7015, %v6982
      %v7017 = vpop.permute.xlu0 %7016
      %7020 = vset.pattern.permute.xlu0 0
      %7021 = vperm.xlu0 %7020, %v6983
      %v7022 = vpop.permute.xlu0 %7021
      %7025 = vset.pattern.permute.xlu0 0
      %7026 = vperm.xlu0 %7025, %v6984
      %v7027 = vpop.permute.xlu0 %7026
      %7030 = vset.pattern.permute.xlu0 0
      %7031 = vperm.xlu0 %7030, %v6985
      %v7032 = vpop.permute.xlu0 %7031
      %7035 = vset.pattern.permute.xlu0 0
      %7036 = vperm.xlu0 %7035, %v6986
      %v7037 = vpop.permute.xlu0 %7036
      %7040 = vset.pattern.permute.xlu0 0
      %7041 = vperm.xlu0 %7040, %v6987
      %v7042 = vpop.permute.xlu0 %7041
      %7045 = vset.pattern.permute.xlu0 0
      %7046 = vperm.xlu0 %7045, %v6988
      %v7047 = vpop.permute.xlu0 %7046
      %7050 = vset.pattern.permute.xlu0 0
      %7051 = vperm.xlu0 %7050, %v6989
      %v7052 = vpop.permute.xlu0 %7051
      %7055 = vset.pattern.permute.xlu0 0
      %7056 = vperm.xlu0 %7055, %v6990
      %v7057 = vpop.permute.xlu0 %7056
      %7060 = vset.pattern.permute.xlu0 0
      %7061 = vperm.xlu0 %7060, %v6991
      %v7062 = vpop.permute.xlu0 %7061
      %7065 = vset.pattern.permute.xlu0 0
      %7066 = vperm.xlu0 %7065, %v6992
      %v7067 = vpop.permute.xlu0 %7066
      %7070 = vset.pattern.permute.xlu0 0
      %7071 = vperm.xlu0 %7070, %v6993
      %v7072 = vpop.permute.xlu0 %7071
      %v7074 = vsub.f32 %v6997, %v1726
      %v7075 = vsub.f32 %v7002, %v1726
      %v7076 = vsub.f32 %v7007, %v1726
      %v7077 = vsub.f32 %v7012, %v1726
      %v7078 = vsub.f32 %v7017, %v1726
      %v7079 = vsub.f32 %v7022, %v1726
      %v7080 = vsub.f32 %v7027, %v1726
      %v7081 = vsub.f32 %v7032, %v1726
      %v7082 = vsub.f32 %v7037, %v1726
      %v7083 = vsub.f32 %v7042, %v1726
      %v7084 = vsub.f32 %v7047, %v1726
      %v7085 = vsub.f32 %v7052, %v1726
      %v7086 = vsub.f32 %v7057, %v1726
      %v7087 = vsub.f32 %v7062, %v1726
      %v7088 = vsub.f32 %v7067, %v1726
      %v7089 = vsub.f32 %v7072, %v1726
      %v7090 = vmul.f32 %v7074, %v7074
      %v7091 = vmul.f32 %v7075, %v7075
      %v7092 = vmul.f32 %v7076, %v7076
      %v7093 = vmul.f32 %v7077, %v7077
      %v7094 = vmul.f32 %v7078, %v7078
      %v7095 = vmul.f32 %v7079, %v7079
      %v7096 = vmul.f32 %v7080, %v7080
      %v7097 = vmul.f32 %v7081, %v7081
      %v7098 = vmul.f32 %v7082, %v7082
      %v7099 = vmul.f32 %v7083, %v7083
      %v7100 = vmul.f32 %v7084, %v7084
      %v7101 = vmul.f32 %v7085, %v7085
      %v7102 = vmul.f32 %v7086, %v7086
      %v7103 = vmul.f32 %v7087, %v7087
      %v7104 = vmul.f32 %v7088, %v7088
      %v7105 = vmul.f32 %v7089, %v7089
      %7106 = vset.pattern.permute.xlu0 1
      %7107 = vperm.xlu0 %7106, %v6978
      %v7108 = vpop.permute.xlu0 %7107
      %7110 = vset.pattern.permute.xlu0 1
      %7111 = vperm.xlu0 %7110, %v6979
      %v7112 = vpop.permute.xlu0 %7111
      %7114 = vset.pattern.permute.xlu0 1
      %7115 = vperm.xlu0 %7114, %v6980
      %v7116 = vpop.permute.xlu0 %7115
      %7118 = vset.pattern.permute.xlu0 1
      %7119 = vperm.xlu0 %7118, %v6981
      %v7120 = vpop.permute.xlu0 %7119
      %7122 = vset.pattern.permute.xlu0 1
      %7123 = vperm.xlu0 %7122, %v6982
      %v7124 = vpop.permute.xlu0 %7123
      %7126 = vset.pattern.permute.xlu0 1
      %7127 = vperm.xlu0 %7126, %v6983
      %v7128 = vpop.permute.xlu0 %7127
      %7130 = vset.pattern.permute.xlu0 1
      %7131 = vperm.xlu0 %7130, %v6984
      %v7132 = vpop.permute.xlu0 %7131
      %7134 = vset.pattern.permute.xlu0 1
      %7135 = vperm.xlu0 %7134, %v6985
      %v7136 = vpop.permute.xlu0 %7135
      %7138 = vset.pattern.permute.xlu0 1
      %7139 = vperm.xlu0 %7138, %v6986
      %v7140 = vpop.permute.xlu0 %7139
      %7142 = vset.pattern.permute.xlu0 1
      %7143 = vperm.xlu0 %7142, %v6987
      %v7144 = vpop.permute.xlu0 %7143
      %7146 = vset.pattern.permute.xlu0 1
      %7147 = vperm.xlu0 %7146, %v6988
      %v7148 = vpop.permute.xlu0 %7147
      %7150 = vset.pattern.permute.xlu0 1
      %7151 = vperm.xlu0 %7150, %v6989
      %v7152 = vpop.permute.xlu0 %7151
      %7154 = vset.pattern.permute.xlu0 1
      %7155 = vperm.xlu0 %7154, %v6990
      %v7156 = vpop.permute.xlu0 %7155
      %7158 = vset.pattern.permute.xlu0 1
      %7159 = vperm.xlu0 %7158, %v6991
      %v7160 = vpop.permute.xlu0 %7159
      %7162 = vset.pattern.permute.xlu0 1
      %7163 = vperm.xlu0 %7162, %v6992
      %v7164 = vpop.permute.xlu0 %7163
      %7166 = vset.pattern.permute.xlu0 1
      %7167 = vperm.xlu0 %7166, %v6993
      %v7168 = vpop.permute.xlu0 %7167
      %v7170 = vsub.f32 %v7108, %v1826
      %v7171 = vsub.f32 %v7112, %v1826
      %v7172 = vsub.f32 %v7116, %v1826
      %v7173 = vsub.f32 %v7120, %v1826
      %v7174 = vsub.f32 %v7124, %v1826
      %v7175 = vsub.f32 %v7128, %v1826
      %v7176 = vsub.f32 %v7132, %v1826
      %v7177 = vsub.f32 %v7136, %v1826
      %v7178 = vsub.f32 %v7140, %v1826
      %v7179 = vsub.f32 %v7144, %v1826
      %v7180 = vsub.f32 %v7148, %v1826
      %v7181 = vsub.f32 %v7152, %v1826
      %v7182 = vsub.f32 %v7156, %v1826
      %v7183 = vsub.f32 %v7160, %v1826
      %v7184 = vsub.f32 %v7164, %v1826
      %v7185 = vsub.f32 %v7168, %v1826
      %v7186 = vmul.f32 %v7170, %v7170
      %v7187 = vmul.f32 %v7171, %v7171
      %v7188 = vmul.f32 %v7172, %v7172
      %v7189 = vmul.f32 %v7173, %v7173
      %v7190 = vmul.f32 %v7174, %v7174
      %v7191 = vmul.f32 %v7175, %v7175
      %v7192 = vmul.f32 %v7176, %v7176
      %v7193 = vmul.f32 %v7177, %v7177
      %v7194 = vmul.f32 %v7178, %v7178
      %v7195 = vmul.f32 %v7179, %v7179
      %v7196 = vmul.f32 %v7180, %v7180
      %v7197 = vmul.f32 %v7181, %v7181
      %v7198 = vmul.f32 %v7182, %v7182
      %v7199 = vmul.f32 %v7183, %v7183
      %v7200 = vmul.f32 %v7184, %v7184
      %v7201 = vmul.f32 %v7185, %v7185
      %v7202 = vadd.f32 %v7090, %v7186
      %v7203 = vadd.f32 %v7091, %v7187
      %v7204 = vadd.f32 %v7092, %v7188
      %v7205 = vadd.f32 %v7093, %v7189
      %v7206 = vadd.f32 %v7094, %v7190
      %v7207 = vadd.f32 %v7095, %v7191
      %v7208 = vadd.f32 %v7096, %v7192
      %v7209 = vadd.f32 %v7097, %v7193
      %v7210 = vadd.f32 %v7098, %v7194
      %v7211 = vadd.f32 %v7099, %v7195
      %v7212 = vadd.f32 %v7100, %v7196
      %v7213 = vadd.f32 %v7101, %v7197
      %v7214 = vadd.f32 %v7102, %v7198
      %v7215 = vadd.f32 %v7103, %v7199
      %v7216 = vadd.f32 %v7104, %v7200
      %v7217 = vadd.f32 %v7105, %v7201
      %v7218 = vsub.f32 0.0, %v7202
      %v7219 = vsub.f32 0.0, %v7203
      %v7220 = vsub.f32 0.0, %v7204
      %v7221 = vsub.f32 0.0, %v7205
      %v7222 = vsub.f32 0.0, %v7206
      %v7223 = vsub.f32 0.0, %v7207
      %v7224 = vsub.f32 0.0, %v7208
      %v7225 = vsub.f32 0.0, %v7209
      %v7226 = vsub.f32 0.0, %v7210
      %v7227 = vsub.f32 0.0, %v7211
      %v7228 = vsub.f32 0.0, %v7212
      %v7229 = vsub.f32 0.0, %v7213
      %v7230 = vsub.f32 0.0, %v7214
      %v7231 = vsub.f32 0.0, %v7215
      %v7232 = vsub.f32 0.0, %v7216
      %v7233 = vsub.f32 0.0, %v7217
      %v7234 = vmul.f32 %v7218, 1.442695
      %v7235 = vpow.pop %v7234
      %v7236 = vmul.f32 %v7219, 1.442695
      %v7237 = vpow.pop %v7236
      %v7238 = vmul.f32 %v7220, 1.442695
      %v7239 = vpow.pop %v7238
      %v7240 = vmul.f32 %v7221, 1.442695
      %v7241 = vpow.pop %v7240
      %v7242 = vmul.f32 %v7222, 1.442695
      %v7243 = vpow.pop %v7242
      %v7244 = vmul.f32 %v7223, 1.442695
      %v7245 = vpow.pop %v7244
      %v7246 = vmul.f32 %v7224, 1.442695
      %v7247 = vpow.pop %v7246
      %v7248 = vmul.f32 %v7225, 1.442695
      %v7249 = vpow.pop %v7248
      %v7250 = vmul.f32 %v7226, 1.442695
      %v7251 = vpow.pop %v7250
      %v7252 = vmul.f32 %v7227, 1.442695
      %v7253 = vpow.pop %v7252
      %v7254 = vmul.f32 %v7228, 1.442695
      %v7255 = vpow.pop %v7254
      %v7256 = vmul.f32 %v7229, 1.442695
      %v7257 = vpow.pop %v7256
      %v7258 = vmul.f32 %v7230, 1.442695
      %v7259 = vpow.pop %v7258
      %v7260 = vmul.f32 %v7231, 1.442695
      %v7261 = vpow.pop %v7260
      %v7262 = vmul.f32 %v7232, 1.442695
      %v7263 = vpow.pop %v7262
      %v7264 = vmul.f32 %v7233, 1.442695
      %v7265 = vpow.pop %v7264
      %7266 = vst [vmem:[#allocation2 + $0x38] sm:$0xff] %v7235
      %7267 = vst [vmem:[#allocation2 + $0x80] sm:$0xff] %v7237
      %7268 = vst [vmem:[#allocation2 + $0xc8] sm:$0xff] %v7239
      %7269 = vst [vmem:[#allocation2 + $0x110] sm:$0xff] %v7241
      %7270 = vst [vmem:[#allocation2 + $0x158] sm:$0xff] %v7243
      %7271 = vst [vmem:[#allocation2 + $0x1a0] sm:$0xff] %v7245
      %7272 = vst [vmem:[#allocation2 + $0x1e8] sm:$0xff] %v7247
      %7273 = vst [vmem:[#allocation2 + $0x230] sm:$0xff] %v7249
      %7274 = vst [vmem:[#allocation2 + $0x278] sm:$0xff] %v7251
      %7275 = vst [vmem:[#allocation2 + $0x2c0] sm:$0xff] %v7253
      %7276 = vst [vmem:[#allocation2 + $0x308] sm:$0xff] %v7255
      %7277 = vst [vmem:[#allocation2 + $0x350] sm:$0xff] %v7257
      %7278 = vst [vmem:[#allocation2 + $0x398] sm:$0xff] %v7259
      %7279 = vst [vmem:[#allocation2 + $0x3e0] sm:$0xff] %v7261
      %7280 = vst [vmem:[#allocation2 + $0x428] sm:$0xff] %v7263
      %7281 = vst [vmem:[#allocation2 + $0x470] sm:$0xff] %v7265
      %v7282 = vsel %vm1303, %v1124, 0.0
      %7283 = vadd.xlane.f32.xlu0 %v7282
      %v7284 = vpop.xlane.xlu0 %7283
      %v7285 = vsel %vm1303, %v1130, 0.0
      %7286 = vadd.xlane.f32.xlu0 %v7285
      %v7287 = vpop.xlane.xlu0 %7286
      %v7288 = vsel %vm1303, %v1136, 0.0
      %7289 = vadd.xlane.f32.xlu0 %v7288
      %v7290 = vpop.xlane.xlu0 %7289
      %v7291 = vsel %vm1303, %v1142, 0.0
      %7292 = vadd.xlane.f32.xlu0 %v7291
      %v7293 = vpop.xlane.xlu0 %7292
      %v7294 = vsel %vm1303, %v1148, 0.0
      %7295 = vadd.xlane.f32.xlu0 %v7294
      %v7296 = vpop.xlane.xlu0 %7295
      %v7297 = vsel %vm1303, %v1154, 0.0
      %7298 = vadd.xlane.f32.xlu0 %v7297
      %v7299 = vpop.xlane.xlu0 %7298
      %v7300 = vsel %vm1303, %v1160, 0.0
      %7301 = vadd.xlane.f32.xlu0 %v7300
      %v7302 = vpop.xlane.xlu0 %7301
      %v7303 = vsel %vm1303, %v1166, 0.0
      %7304 = vadd.xlane.f32.xlu0 %v7303
      %v7305 = vpop.xlane.xlu0 %7304
      %v7306 = vsel %vm1303, %v1172, 0.0
      %7307 = vadd.xlane.f32.xlu0 %v7306
      %v7308 = vpop.xlane.xlu0 %7307
      %v7309 = vsel %vm1303, %v1178, 0.0
      %7310 = vadd.xlane.f32.xlu0 %v7309
      %v7311 = vpop.xlane.xlu0 %7310
      %v7312 = vsel %vm1303, %v1184, 0.0
      %7313 = vadd.xlane.f32.xlu0 %v7312
      %v7314 = vpop.xlane.xlu0 %7313
      %v7315 = vsel %vm1303, %v1190, 0.0
      %7316 = vadd.xlane.f32.xlu0 %v7315
      %v7317 = vpop.xlane.xlu0 %7316
      %v7318 = vsel %vm1303, %v1196, 0.0
      %7319 = vadd.xlane.f32.xlu0 %v7318
      %v7320 = vpop.xlane.xlu0 %7319
      %v7321 = vsel %vm1303, %v1202, 0.0
      %7322 = vadd.xlane.f32.xlu0 %v7321
      %v7323 = vpop.xlane.xlu0 %7322
      %v7324 = vsel %vm1303, %v1208, 0.0
      %7325 = vadd.xlane.f32.xlu0 %v7324
      %v7326 = vpop.xlane.xlu0 %7325
      %v7327 = vsel %vm1303, %v1214, 0.0
      %7328 = vadd.xlane.f32.xlu0 %v7327
      %v7329 = vpop.xlane.xlu0 %7328
      %v7330 = vmul.f32 %v7284, %v1352
      %v7331 = vmul.f32 %v7287, %v1352
      %v7332 = vmul.f32 %v7290, %v1352
      %v7333 = vmul.f32 %v7293, %v1352
      %v7334 = vmul.f32 %v7296, %v1352
      %v7335 = vmul.f32 %v7299, %v1352
      %v7336 = vmul.f32 %v7302, %v1352
      %v7337 = vmul.f32 %v7305, %v1352
      %v7338 = vmul.f32 %v7308, %v1352
      %v7339 = vmul.f32 %v7311, %v1352
      %v7340 = vmul.f32 %v7314, %v1352
      %v7341 = vmul.f32 %v7317, %v1352
      %v7342 = vmul.f32 %v7320, %v1352
      %v7343 = vmul.f32 %v7323, %v1352
      %v7344 = vmul.f32 %v7326, %v1352
      %v7345 = vmul.f32 %v7329, %v1352
      %v7346 = vsub.f32 %v1124, %v7330
      %v7347 = vsub.f32 %v1130, %v7331
      %v7348 = vsub.f32 %v1136, %v7332
      %v7349 = vsub.f32 %v1142, %v7333
      %v7350 = vsub.f32 %v1148, %v7334
      %v7351 = vsub.f32 %v1154, %v7335
      %v7352 = vsub.f32 %v1160, %v7336
      %v7353 = vsub.f32 %v1166, %v7337
      %v7354 = vsub.f32 %v1172, %v7338
      %v7355 = vsub.f32 %v1178, %v7339
      %v7356 = vsub.f32 %v1184, %v7340
      %v7357 = vsub.f32 %v1190, %v7341
      %v7358 = vsub.f32 %v1196, %v7342
      %v7359 = vsub.f32 %v1202, %v7343
      %v7360 = vsub.f32 %v1208, %v7344
      %v7361 = vsub.f32 %v1214, %v7345
      %v7362 = vmul.f32 %v7346, %v7346
      %v7363 = vmul.f32 %v7347, %v7347
      %v7364 = vmul.f32 %v7348, %v7348
      %v7365 = vmul.f32 %v7349, %v7349
      %v7366 = vmul.f32 %v7350, %v7350
      %v7367 = vmul.f32 %v7351, %v7351
      %v7368 = vmul.f32 %v7352, %v7352
      %v7369 = vmul.f32 %v7353, %v7353
      %v7370 = vmul.f32 %v7354, %v7354
      %v7371 = vmul.f32 %v7355, %v7355
      %v7372 = vmul.f32 %v7356, %v7356
      %v7373 = vmul.f32 %v7357, %v7357
      %v7374 = vmul.f32 %v7358, %v7358
      %v7375 = vmul.f32 %v7359, %v7359
      %v7376 = vmul.f32 %v7360, %v7360
      %v7377 = vmul.f32 %v7361, %v7361
      %v7378 = vsel %vm1303, %v7362, 0.0
      %7379 = vadd.xlane.f32.xlu0 %v7378
      %v7380 = vpop.xlane.xlu0 %7379
      %v7381 = vsel %vm1303, %v7363, 0.0
      %7382 = vadd.xlane.f32.xlu0 %v7381
      %v7383 = vpop.xlane.xlu0 %7382
      %v7384 = vsel %vm1303, %v7364, 0.0
      %7385 = vadd.xlane.f32.xlu0 %v7384
      %v7386 = vpop.xlane.xlu0 %7385
      %v7387 = vsel %vm1303, %v7365, 0.0
      %7388 = vadd.xlane.f32.xlu0 %v7387
      %v7389 = vpop.xlane.xlu0 %7388
      %v7390 = vsel %vm1303, %v7366, 0.0
      %7391 = vadd.xlane.f32.xlu0 %v7390
      %v7392 = vpop.xlane.xlu0 %7391
      %v7393 = vsel %vm1303, %v7367, 0.0
      %7394 = vadd.xlane.f32.xlu0 %v7393
      %v7395 = vpop.xlane.xlu0 %7394
      %v7396 = vsel %vm1303, %v7368, 0.0
      %7397 = vadd.xlane.f32.xlu0 %v7396
      %v7398 = vpop.xlane.xlu0 %7397
      %v7399 = vsel %vm1303, %v7369, 0.0
      %7400 = vadd.xlane.f32.xlu0 %v7399
      %v7401 = vpop.xlane.xlu0 %7400
      %v7402 = vsel %vm1303, %v7370, 0.0
      %7403 = vadd.xlane.f32.xlu0 %v7402
      %v7404 = vpop.xlane.xlu0 %7403
      %v7405 = vsel %vm1303, %v7371, 0.0
      %7406 = vadd.xlane.f32.xlu0 %v7405
      %v7407 = vpop.xlane.xlu0 %7406
      %v7408 = vsel %vm1303, %v7372, 0.0
      %7409 = vadd.xlane.f32.xlu0 %v7408
      %v7410 = vpop.xlane.xlu0 %7409
      %v7411 = vsel %vm1303, %v7373, 0.0
      %7412 = vadd.xlane.f32.xlu0 %v7411
      %v7413 = vpop.xlane.xlu0 %7412
      %v7414 = vsel %vm1303, %v7374, 0.0
      %7415 = vadd.xlane.f32.xlu0 %v7414
      %v7416 = vpop.xlane.xlu0 %7415
      %v7417 = vsel %vm1303, %v7375, 0.0
      %7418 = vadd.xlane.f32.xlu0 %v7417
      %v7419 = vpop.xlane.xlu0 %7418
      %v7420 = vsel %vm1303, %v7376, 0.0
      %7421 = vadd.xlane.f32.xlu0 %v7420
      %v7422 = vpop.xlane.xlu0 %7421
      %v7423 = vsel %vm1303, %v7377, 0.0
      %7424 = vadd.xlane.f32.xlu0 %v7423
      %v7425 = vpop.xlane.xlu0 %7424
      %v7426 = vmul.f32 %v7380, %v1352
      %v7427 = vmul.f32 %v7383, %v1352
      %v7428 = vmul.f32 %v7386, %v1352
      %v7429 = vmul.f32 %v7389, %v1352
      %v7430 = vmul.f32 %v7392, %v1352
      %v7431 = vmul.f32 %v7395, %v1352
      %v7432 = vmul.f32 %v7398, %v1352
      %v7433 = vmul.f32 %v7401, %v1352
      %v7434 = vmul.f32 %v7404, %v1352
      %v7435 = vmul.f32 %v7407, %v1352
      %v7436 = vmul.f32 %v7410, %v1352
      %v7437 = vmul.f32 %v7413, %v1352
      %v7438 = vmul.f32 %v7416, %v1352
      %v7439 = vmul.f32 %v7419, %v1352
      %v7440 = vmul.f32 %v7422, %v1352
      %v7441 = vmul.f32 %v7425, %v1352
      %v7442 = vadd.f32 %v7426, 1e-05
      %v7443 = vadd.f32 %v7427, 1e-05
      %v7444 = vadd.f32 %v7428, 1e-05
      %v7445 = vadd.f32 %v7429, 1e-05
      %v7446 = vadd.f32 %v7430, 1e-05
      %v7447 = vadd.f32 %v7431, 1e-05
      %v7448 = vadd.f32 %v7432, 1e-05
      %v7449 = vadd.f32 %v7433, 1e-05
      %v7450 = vadd.f32 %v7434, 1e-05
      %v7451 = vadd.f32 %v7435, 1e-05
      %v7452 = vadd.f32 %v7436, 1e-05
      %v7453 = vadd.f32 %v7437, 1e-05
      %v7454 = vadd.f32 %v7438, 1e-05
      %v7455 = vadd.f32 %v7439, 1e-05
      %v7456 = vadd.f32 %v7440, 1e-05
      %v7457 = vadd.f32 %v7441, 1e-05
      %v7458 = vrsqrt.pop %v7442
      %v7459 = vrsqrt.pop %v7443
      %v7460 = vrsqrt.pop %v7444
      %v7461 = vrsqrt.pop %v7445
      %v7462 = vrsqrt.pop %v7446
      %v7463 = vrsqrt.pop %v7447
      %v7464 = vrsqrt.pop %v7448
      %v7465 = vrsqrt.pop %v7449
      %v7466 = vrsqrt.pop %v7450
      %v7467 = vrsqrt.pop %v7451
      %v7468 = vrsqrt.pop %v7452
      %v7469 = vrsqrt.pop %v7453
      %v7470 = vrsqrt.pop %v7454
      %v7471 = vrsqrt.pop %v7455
      %v7472 = vrsqrt.pop %v7456
      %v7473 = vrsqrt.pop %v7457
      %v7474 = vmul.f32 %v7346, %v7458
      %v7475 = vmul.f32 %v7347, %v7459
      %v7476 = vmul.f32 %v7348, %v7460
      %v7477 = vmul.f32 %v7349, %v7461
      %v7478 = vmul.f32 %v7350, %v7462
      %v7479 = vmul.f32 %v7351, %v7463
      %v7480 = vmul.f32 %v7352, %v7464
      %v7481 = vmul.f32 %v7353, %v7465
      %v7482 = vmul.f32 %v7354, %v7466
      %v7483 = vmul.f32 %v7355, %v7467
      %v7484 = vmul.f32 %v7356, %v7468
      %v7485 = vmul.f32 %v7357, %v7469
      %v7486 = vmul.f32 %v7358, %v7470
      %v7487 = vmul.f32 %v7359, %v7471
      %v7488 = vmul.f32 %v7360, %v7472
      %v7489 = vmul.f32 %v7361, %v7473
      %v7490 = vmul.f32 %v7474, %v1517
      %v7491 = vmul.f32 %v7475, %v1517
      %v7492 = vmul.f32 %v7476, %v1517
      %v7493 = vmul.f32 %v7477, %v1517
      %v7494 = vmul.f32 %v7478, %v1517
      %v7495 = vmul.f32 %v7479, %v1517
      %v7496 = vmul.f32 %v7480, %v1517
      %v7497 = vmul.f32 %v7481, %v1517
      %v7498 = vmul.f32 %v7482, %v1517
      %v7499 = vmul.f32 %v7483, %v1517
      %v7500 = vmul.f32 %v7484, %v1517
      %v7501 = vmul.f32 %v7485, %v1517
      %v7502 = vmul.f32 %v7486, %v1517
      %v7503 = vmul.f32 %v7487, %v1517
      %v7504 = vmul.f32 %v7488, %v1517
      %v7505 = vmul.f32 %v7489, %v1517
      %v7506 = vadd.f32 %v7490, %v1539
      %v7507 = vadd.f32 %v7491, %v1539
      %v7508 = vadd.f32 %v7492, %v1539
      %v7509 = vadd.f32 %v7493, %v1539
      %v7510 = vadd.f32 %v7494, %v1539
      %v7511 = vadd.f32 %v7495, %v1539
      %v7512 = vadd.f32 %v7496, %v1539
      %v7513 = vadd.f32 %v7497, %v1539
      %v7514 = vadd.f32 %v7498, %v1539
      %v7515 = vadd.f32 %v7499, %v1539
      %v7516 = vadd.f32 %v7500, %v1539
      %v7517 = vadd.f32 %v7501, %v1539
      %v7518 = vadd.f32 %v7502, %v1539
      %v7519 = vadd.f32 %v7503, %v1539
      %v7520 = vadd.f32 %v7504, %v1539
      %v7521 = vadd.f32 %v7505, %v1539
      %v7522 = vsel %vm1573, %v7506, 0.0
      %v7523 = vsel %vm1574, %v7507, 0.0
      %v7524 = vsel %vm1575, %v7508, 0.0
      %v7525 = vsel %vm1576, %v7509, 0.0
      %v7526 = vsel %vm1577, %v7510, 0.0
      %v7527 = vsel %vm1578, %v7511, 0.0
      %v7528 = vsel %vm1579, %v7512, 0.0
      %v7529 = vsel %vm1580, %v7513, 0.0
      %v7530 = vsel %vm1581, %v7514, 0.0
      %v7531 = vsel %vm1582, %v7515, 0.0
      %v7532 = vsel %vm1583, %v7516, 0.0
      %v7533 = vsel %vm1584, %v7517, 0.0
      %v7534 = vsel %vm1585, %v7518, 0.0
      %v7535 = vsel %vm1586, %v7519, 0.0
      %v7536 = vsel %vm1587, %v7520, 0.0
      %v7537 = vsel %vm1588, %v7521, 0.0
      %7538 = vst.msk [vmem:[#allocation3 + $0x400] sm:$0xff] %vm1303, %v7522
      %7539 = vst.msk [vmem:[#allocation3 + $0x408] sm:$0xff] %vm1303, %v7523
      %7540 = vst.msk [vmem:[#allocation3 + $0x410] sm:$0xff] %vm1303, %v7524
      %7541 = vst.msk [vmem:[#allocation3 + $0x418] sm:$0xff] %vm1303, %v7525
      %7542 = vst.msk [vmem:[#allocation3 + $0x420] sm:$0xff] %vm1303, %v7526
      %7543 = vst.msk [vmem:[#allocation3 + $0x428] sm:$0xff] %vm1303, %v7527
      %7544 = vst.msk [vmem:[#allocation3 + $0x430] sm:$0xff] %vm1303, %v7528
      %7545 = vst.msk [vmem:[#allocation3 + $0x438] sm:$0xff] %vm1303, %v7529
      %7546 = vst.msk [vmem:[#allocation3 + $0x440] sm:$0xff] %vm1303, %v7530
      %7547 = vst.msk [vmem:[#allocation3 + $0x448] sm:$0xff] %vm1303, %v7531
      %7548 = vst.msk [vmem:[#allocation3 + $0x450] sm:$0xff] %vm1303, %v7532
      %7549 = vst.msk [vmem:[#allocation3 + $0x458] sm:$0xff] %vm1303, %v7533
      %7550 = vst.msk [vmem:[#allocation3 + $0x460] sm:$0xff] %vm1303, %v7534
      %7551 = vst.msk [vmem:[#allocation3 + $0x468] sm:$0xff] %vm1303, %v7535
      %7552 = vst.msk [vmem:[#allocation3 + $0x470] sm:$0xff] %vm1303, %v7536
      %7553 = vst.msk [vmem:[#allocation3 + $0x478] sm:$0xff] %vm1303, %v7537
      %7554 = vrot.lane.b32.xlu0 %v1625, 112
      %v7555 = vpop.permute.xlu0 %7554
      %v7557 = vsub.f32 %v1234, %v7555
      %v7558 = vsub.f32 %v1235, %v7555
      %v7559 = vsub.f32 %v1236, %v7555
      %v7560 = vsub.f32 %v1237, %v7555
      %v7561 = vsub.f32 %v1238, %v7555
      %v7562 = vsub.f32 %v1239, %v7555
      %v7563 = vsub.f32 %v1240, %v7555
      %v7564 = vsub.f32 %v1241, %v7555
      %v7565 = vsub.f32 %v1242, %v7555
      %v7566 = vsub.f32 %v1243, %v7555
      %v7567 = vsub.f32 %v1244, %v7555
      %v7568 = vsub.f32 %v1245, %v7555
      %v7569 = vsub.f32 %v1246, %v7555
      %v7570 = vsub.f32 %v1247, %v7555
      %v7571 = vsub.f32 %v1248, %v7555
      %v7572 = vsub.f32 %v1249, %v7555
      %7574 = vset.pattern.permute.xlu0 0
      %7575 = vperm.xlu0 %7574, %v7557
      %v7576 = vpop.permute.xlu0 %7575
      %7579 = vset.pattern.permute.xlu0 0
      %7580 = vperm.xlu0 %7579, %v7558
      %v7581 = vpop.permute.xlu0 %7580
      %7584 = vset.pattern.permute.xlu0 0
      %7585 = vperm.xlu0 %7584, %v7559
      %v7586 = vpop.permute.xlu0 %7585
      %7589 = vset.pattern.permute.xlu0 0
      %7590 = vperm.xlu0 %7589, %v7560
      %v7591 = vpop.permute.xlu0 %7590
      %7594 = vset.pattern.permute.xlu0 0
      %7595 = vperm.xlu0 %7594, %v7561
      %v7596 = vpop.permute.xlu0 %7595
      %7599 = vset.pattern.permute.xlu0 0
      %7600 = vperm.xlu0 %7599, %v7562
      %v7601 = vpop.permute.xlu0 %7600
      %7604 = vset.pattern.permute.xlu0 0
      %7605 = vperm.xlu0 %7604, %v7563
      %v7606 = vpop.permute.xlu0 %7605
      %7609 = vset.pattern.permute.xlu0 0
      %7610 = vperm.xlu0 %7609, %v7564
      %v7611 = vpop.permute.xlu0 %7610
      %7614 = vset.pattern.permute.xlu0 0
      %7615 = vperm.xlu0 %7614, %v7565
      %v7616 = vpop.permute.xlu0 %7615
      %7619 = vset.pattern.permute.xlu0 0
      %7620 = vperm.xlu0 %7619, %v7566
      %v7621 = vpop.permute.xlu0 %7620
      %7624 = vset.pattern.permute.xlu0 0
      %7625 = vperm.xlu0 %7624, %v7567
      %v7626 = vpop.permute.xlu0 %7625
      %7629 = vset.pattern.permute.xlu0 0
      %7630 = vperm.xlu0 %7629, %v7568
      %v7631 = vpop.permute.xlu0 %7630
      %7634 = vset.pattern.permute.xlu0 0
      %7635 = vperm.xlu0 %7634, %v7569
      %v7636 = vpop.permute.xlu0 %7635
      %7639 = vset.pattern.permute.xlu0 0
      %7640 = vperm.xlu0 %7639, %v7570
      %v7641 = vpop.permute.xlu0 %7640
      %7644 = vset.pattern.permute.xlu0 0
      %7645 = vperm.xlu0 %7644, %v7571
      %v7646 = vpop.permute.xlu0 %7645
      %7649 = vset.pattern.permute.xlu0 0
      %7650 = vperm.xlu0 %7649, %v7572
      %v7651 = vpop.permute.xlu0 %7650
      %v7653 = vsub.f32 %v7576, %v1726
      %v7654 = vsub.f32 %v7581, %v1726
      %v7655 = vsub.f32 %v7586, %v1726
      %v7656 = vsub.f32 %v7591, %v1726
      %v7657 = vsub.f32 %v7596, %v1726
      %v7658 = vsub.f32 %v7601, %v1726
      %v7659 = vsub.f32 %v7606, %v1726
      %v7660 = vsub.f32 %v7611, %v1726
      %v7661 = vsub.f32 %v7616, %v1726
      %v7662 = vsub.f32 %v7621, %v1726
      %v7663 = vsub.f32 %v7626, %v1726
      %v7664 = vsub.f32 %v7631, %v1726
      %v7665 = vsub.f32 %v7636, %v1726
      %v7666 = vsub.f32 %v7641, %v1726
      %v7667 = vsub.f32 %v7646, %v1726
      %v7668 = vsub.f32 %v7651, %v1726
      %v7669 = vmul.f32 %v7653, %v7653
      %v7670 = vmul.f32 %v7654, %v7654
      %v7671 = vmul.f32 %v7655, %v7655
      %v7672 = vmul.f32 %v7656, %v7656
      %v7673 = vmul.f32 %v7657, %v7657
      %v7674 = vmul.f32 %v7658, %v7658
      %v7675 = vmul.f32 %v7659, %v7659
      %v7676 = vmul.f32 %v7660, %v7660
      %v7677 = vmul.f32 %v7661, %v7661
      %v7678 = vmul.f32 %v7662, %v7662
      %v7679 = vmul.f32 %v7663, %v7663
      %v7680 = vmul.f32 %v7664, %v7664
      %v7681 = vmul.f32 %v7665, %v7665
      %v7682 = vmul.f32 %v7666, %v7666
      %v7683 = vmul.f32 %v7667, %v7667
      %v7684 = vmul.f32 %v7668, %v7668
      %7685 = vset.pattern.permute.xlu0 1
      %7686 = vperm.xlu0 %7685, %v7557
      %v7687 = vpop.permute.xlu0 %7686
      %7689 = vset.pattern.permute.xlu0 1
      %7690 = vperm.xlu0 %7689, %v7558
      %v7691 = vpop.permute.xlu0 %7690
      %7693 = vset.pattern.permute.xlu0 1
      %7694 = vperm.xlu0 %7693, %v7559
      %v7695 = vpop.permute.xlu0 %7694
      %7697 = vset.pattern.permute.xlu0 1
      %7698 = vperm.xlu0 %7697, %v7560
      %v7699 = vpop.permute.xlu0 %7698
      %7701 = vset.pattern.permute.xlu0 1
      %7702 = vperm.xlu0 %7701, %v7561
      %v7703 = vpop.permute.xlu0 %7702
      %7705 = vset.pattern.permute.xlu0 1
      %7706 = vperm.xlu0 %7705, %v7562
      %v7707 = vpop.permute.xlu0 %7706
      %7709 = vset.pattern.permute.xlu0 1
      %7710 = vperm.xlu0 %7709, %v7563
      %v7711 = vpop.permute.xlu0 %7710
      %7713 = vset.pattern.permute.xlu0 1
      %7714 = vperm.xlu0 %7713, %v7564
      %v7715 = vpop.permute.xlu0 %7714
      %7717 = vset.pattern.permute.xlu0 1
      %7718 = vperm.xlu0 %7717, %v7565
      %v7719 = vpop.permute.xlu0 %7718
      %7721 = vset.pattern.permute.xlu0 1
      %7722 = vperm.xlu0 %7721, %v7566
      %v7723 = vpop.permute.xlu0 %7722
      %7725 = vset.pattern.permute.xlu0 1
      %7726 = vperm.xlu0 %7725, %v7567
      %v7727 = vpop.permute.xlu0 %7726
      %7729 = vset.pattern.permute.xlu0 1
      %7730 = vperm.xlu0 %7729, %v7568
      %v7731 = vpop.permute.xlu0 %7730
      %7733 = vset.pattern.permute.xlu0 1
      %7734 = vperm.xlu0 %7733, %v7569
      %v7735 = vpop.permute.xlu0 %7734
      %7737 = vset.pattern.permute.xlu0 1
      %7738 = vperm.xlu0 %7737, %v7570
      %v7739 = vpop.permute.xlu0 %7738
      %7741 = vset.pattern.permute.xlu0 1
      %7742 = vperm.xlu0 %7741, %v7571
      %v7743 = vpop.permute.xlu0 %7742
      %7745 = vset.pattern.permute.xlu0 1
      %7746 = vperm.xlu0 %7745, %v7572
      %v7747 = vpop.permute.xlu0 %7746
      %v7749 = vsub.f32 %v7687, %v1826
      %v7750 = vsub.f32 %v7691, %v1826
      %v7751 = vsub.f32 %v7695, %v1826
      %v7752 = vsub.f32 %v7699, %v1826
      %v7753 = vsub.f32 %v7703, %v1826
      %v7754 = vsub.f32 %v7707, %v1826
      %v7755 = vsub.f32 %v7711, %v1826
      %v7756 = vsub.f32 %v7715, %v1826
      %v7757 = vsub.f32 %v7719, %v1826
      %v7758 = vsub.f32 %v7723, %v1826
      %v7759 = vsub.f32 %v7727, %v1826
      %v7760 = vsub.f32 %v7731, %v1826
      %v7761 = vsub.f32 %v7735, %v1826
      %v7762 = vsub.f32 %v7739, %v1826
      %v7763 = vsub.f32 %v7743, %v1826
      %v7764 = vsub.f32 %v7747, %v1826
      %v7765 = vmul.f32 %v7749, %v7749
      %v7766 = vmul.f32 %v7750, %v7750
      %v7767 = vmul.f32 %v7751, %v7751
      %v7768 = vmul.f32 %v7752, %v7752
      %v7769 = vmul.f32 %v7753, %v7753
      %v7770 = vmul.f32 %v7754, %v7754
      %v7771 = vmul.f32 %v7755, %v7755
      %v7772 = vmul.f32 %v7756, %v7756
      %v7773 = vmul.f32 %v7757, %v7757
      %v7774 = vmul.f32 %v7758, %v7758
      %v7775 = vmul.f32 %v7759, %v7759
      %v7776 = vmul.f32 %v7760, %v7760
      %v7777 = vmul.f32 %v7761, %v7761
      %v7778 = vmul.f32 %v7762, %v7762
      %v7779 = vmul.f32 %v7763, %v7763
      %v7780 = vmul.f32 %v7764, %v7764
      %v7781 = vadd.f32 %v7669, %v7765
      %v7782 = vadd.f32 %v7670, %v7766
      %v7783 = vadd.f32 %v7671, %v7767
      %v7784 = vadd.f32 %v7672, %v7768
      %v7785 = vadd.f32 %v7673, %v7769
      %v7786 = vadd.f32 %v7674, %v7770
      %v7787 = vadd.f32 %v7675, %v7771
      %v7788 = vadd.f32 %v7676, %v7772
      %v7789 = vadd.f32 %v7677, %v7773
      %v7790 = vadd.f32 %v7678, %v7774
      %v7791 = vadd.f32 %v7679, %v7775
      %v7792 = vadd.f32 %v7680, %v7776
      %v7793 = vadd.f32 %v7681, %v7777
      %v7794 = vadd.f32 %v7682, %v7778
      %v7795 = vadd.f32 %v7683, %v7779
      %v7796 = vadd.f32 %v7684, %v7780
      %v7797 = vsub.f32 0.0, %v7781
      %v7798 = vsub.f32 0.0, %v7782
      %v7799 = vsub.f32 0.0, %v7783
      %v7800 = vsub.f32 0.0, %v7784
      %v7801 = vsub.f32 0.0, %v7785
      %v7802 = vsub.f32 0.0, %v7786
      %v7803 = vsub.f32 0.0, %v7787
      %v7804 = vsub.f32 0.0, %v7788
      %v7805 = vsub.f32 0.0, %v7789
      %v7806 = vsub.f32 0.0, %v7790
      %v7807 = vsub.f32 0.0, %v7791
      %v7808 = vsub.f32 0.0, %v7792
      %v7809 = vsub.f32 0.0, %v7793
      %v7810 = vsub.f32 0.0, %v7794
      %v7811 = vsub.f32 0.0, %v7795
      %v7812 = vsub.f32 0.0, %v7796
      %v7813 = vmul.f32 %v7797, 1.442695
      %v7814 = vpow.pop %v7813
      %v7815 = vmul.f32 %v7798, 1.442695
      %v7816 = vpow.pop %v7815
      %v7817 = vmul.f32 %v7799, 1.442695
      %v7818 = vpow.pop %v7817
      %v7819 = vmul.f32 %v7800, 1.442695
      %v7820 = vpow.pop %v7819
      %v7821 = vmul.f32 %v7801, 1.442695
      %v7822 = vpow.pop %v7821
      %v7823 = vmul.f32 %v7802, 1.442695
      %v7824 = vpow.pop %v7823
      %v7825 = vmul.f32 %v7803, 1.442695
      %v7826 = vpow.pop %v7825
      %v7827 = vmul.f32 %v7804, 1.442695
      %v7828 = vpow.pop %v7827
      %v7829 = vmul.f32 %v7805, 1.442695
      %v7830 = vpow.pop %v7829
      %v7831 = vmul.f32 %v7806, 1.442695
      %v7832 = vpow.pop %v7831
      %v7833 = vmul.f32 %v7807, 1.442695
      %v7834 = vpow.pop %v7833
      %v7835 = vmul.f32 %v7808, 1.442695
      %v7836 = vpow.pop %v7835
      %v7837 = vmul.f32 %v7809, 1.442695
      %v7838 = vpow.pop %v7837
      %v7839 = vmul.f32 %v7810, 1.442695
      %v7840 = vpow.pop %v7839
      %v7841 = vmul.f32 %v7811, 1.442695
      %v7842 = vpow.pop %v7841
      %v7843 = vmul.f32 %v7812, 1.442695
      %v7844 = vpow.pop %v7843
      %7845 = vst [vmem:[#allocation2 + $0x40] sm:$0xff] %v7814
      %7846 = vst [vmem:[#allocation2 + $0x88] sm:$0xff] %v7816
      %7847 = vst [vmem:[#allocation2 + $0xd0] sm:$0xff] %v7818
      %7848 = vst [vmem:[#allocation2 + $0x118] sm:$0xff] %v7820
      %7849 = vst [vmem:[#allocation2 + $0x160] sm:$0xff] %v7822
      %7850 = vst [vmem:[#allocation2 + $0x1a8] sm:$0xff] %v7824
      %7851 = vst [vmem:[#allocation2 + $0x1f0] sm:$0xff] %v7826
      %7852 = vst [vmem:[#allocation2 + $0x238] sm:$0xff] %v7828
      %7853 = vst [vmem:[#allocation2 + $0x280] sm:$0xff] %v7830
      %7854 = vst [vmem:[#allocation2 + $0x2c8] sm:$0xff] %v7832
      %7855 = vst [vmem:[#allocation2 + $0x310] sm:$0xff] %v7834
      %7856 = vst [vmem:[#allocation2 + $0x358] sm:$0xff] %v7836
      %7857 = vst [vmem:[#allocation2 + $0x3a0] sm:$0xff] %v7838
      %7858 = vst [vmem:[#allocation2 + $0x3e8] sm:$0xff] %v7840
      %7859 = vst [vmem:[#allocation2 + $0x430] sm:$0xff] %v7842
      %7860 = vst [vmem:[#allocation2 + $0x478] sm:$0xff] %v7844
      %v7861 = vld [vmem:[%s480] sm:$0xff]
      %v7862 = vld [vmem:[%s480 + $0x8] sm:$0xff]
      %v7863 = vld [vmem:[%s480 + $0x10] sm:$0xff]
      %v7864 = vld [vmem:[%s480 + $0x18] sm:$0xff]
      %v7865 = vld [vmem:[%s480 + $0x20] sm:$0xff]
      %v7866 = vld [vmem:[%s480 + $0x28] sm:$0xff]
      %v7867 = vld [vmem:[%s480 + $0x30] sm:$0xff]
      %v7868 = vld [vmem:[%s480 + $0x38] sm:$0xff]
      %v7869 = vld [vmem:[%s480 + $0x40] sm:$0xff]
      %v7870 = vld [vmem:[%s480 + $0x48] sm:$0xff]
      %v7871 = vld [vmem:[%s480 + $0x50] sm:$0xff]
      %v7872 = vld [vmem:[%s480 + $0x58] sm:$0xff]
      %v7873 = vld [vmem:[%s480 + $0x60] sm:$0xff]
      %v7874 = vld [vmem:[%s480 + $0x68] sm:$0xff]
      %v7875 = vld [vmem:[%s480 + $0x70] sm:$0xff]
      %v7876 = vld [vmem:[%s480 + $0x78] sm:$0xff]
      %v7877 = vld [vmem:[#allocation2] sm:$0xff]
      %v7878 = vld [vmem:[#allocation2 + $0x8] sm:$0xff]
      %v7879 = vld [vmem:[#allocation2 + $0x10] sm:$0xff]
      %v7880 = vld [vmem:[#allocation2 + $0x18] sm:$0xff]
      %v7881 = vld [vmem:[#allocation2 + $0x20] sm:$0xff]
      %v7882 = vld [vmem:[#allocation2 + $0x28] sm:$0xff]
      %v7883 = vld [vmem:[#allocation2 + $0x30] sm:$0xff]
      %v7884 = vld [vmem:[#allocation2 + $0x38] sm:$0xff]
      %v7885 = vld [vmem:[#allocation2 + $0x40] sm:$0xff]
      %v7886 = vld [vmem:[#allocation2 + $0x48] sm:$0xff]
      %v7887 = vld [vmem:[#allocation2 + $0x50] sm:$0xff]
      %v7888 = vld [vmem:[#allocation2 + $0x58] sm:$0xff]
      %v7889 = vld [vmem:[#allocation2 + $0x60] sm:$0xff]
      %v7890 = vld [vmem:[#allocation2 + $0x68] sm:$0xff]
      %v7891 = vld [vmem:[#allocation2 + $0x70] sm:$0xff]
      %v7892 = vld [vmem:[#allocation2 + $0x78] sm:$0xff]
      %v7893 = vld [vmem:[#allocation2 + $0x80] sm:$0xff]
      %v7894 = vld [vmem:[#allocation2 + $0x88] sm:$0xff]
      %v7895 = vld [vmem:[#allocation2 + $0x90] sm:$0xff]
      %v7896 = vld [vmem:[#allocation2 + $0x98] sm:$0xff]
      %v7897 = vld [vmem:[#allocation2 + $0xa0] sm:$0xff]
      %v7898 = vld [vmem:[#allocation2 + $0xa8] sm:$0xff]
      %v7899 = vld [vmem:[#allocation2 + $0xb0] sm:$0xff]
      %v7900 = vld [vmem:[#allocation2 + $0xb8] sm:$0xff]
      %v7901 = vld [vmem:[#allocation2 + $0xc0] sm:$0xff]
      %v7902 = vld [vmem:[#allocation2 + $0xc8] sm:$0xff]
      %v7903 = vld [vmem:[#allocation2 + $0xd0] sm:$0xff]
      %v7904 = vld [vmem:[#allocation2 + $0xd8] sm:$0xff]
      %v7905 = vld [vmem:[#allocation2 + $0xe0] sm:$0xff]
      %v7906 = vld [vmem:[#allocation2 + $0xe8] sm:$0xff]
      %v7907 = vld [vmem:[#allocation2 + $0xf0] sm:$0xff]
      %v7908 = vld [vmem:[#allocation2 + $0xf8] sm:$0xff]
      %v7909 = vld [vmem:[#allocation2 + $0x100] sm:$0xff]
      %v7910 = vld [vmem:[#allocation2 + $0x108] sm:$0xff]
      %v7911 = vld [vmem:[#allocation2 + $0x110] sm:$0xff]
      %v7912 = vld [vmem:[#allocation2 + $0x118] sm:$0xff]
      %v7913 = vld [vmem:[#allocation2 + $0x120] sm:$0xff]
      %v7914 = vld [vmem:[#allocation2 + $0x128] sm:$0xff]
      %v7915 = vld [vmem:[#allocation2 + $0x130] sm:$0xff]
      %v7916 = vld [vmem:[#allocation2 + $0x138] sm:$0xff]
      %v7917 = vld [vmem:[#allocation2 + $0x140] sm:$0xff]
      %v7918 = vld [vmem:[#allocation2 + $0x148] sm:$0xff]
      %v7919 = vld [vmem:[#allocation2 + $0x150] sm:$0xff]
      %v7920 = vld [vmem:[#allocation2 + $0x158] sm:$0xff]
      %v7921 = vld [vmem:[#allocation2 + $0x160] sm:$0xff]
      %v7922 = vld [vmem:[#allocation2 + $0x168] sm:$0xff]
      %v7923 = vld [vmem:[#allocation2 + $0x170] sm:$0xff]
      %v7924 = vld [vmem:[#allocation2 + $0x178] sm:$0xff]
      %v7925 = vld [vmem:[#allocation2 + $0x180] sm:$0xff]
      %v7926 = vld [vmem:[#allocation2 + $0x188] sm:$0xff]
      %v7927 = vld [vmem:[#allocation2 + $0x190] sm:$0xff]
      %v7928 = vld [vmem:[#allocation2 + $0x198] sm:$0xff]
      %v7929 = vld [vmem:[#allocation2 + $0x1a0] sm:$0xff]
      %v7930 = vld [vmem:[#allocation2 + $0x1a8] sm:$0xff]
      %v7931 = vld [vmem:[#allocation2 + $0x1b0] sm:$0xff]
      %v7932 = vld [vmem:[#allocation2 + $0x1b8] sm:$0xff]
      %v7933 = vld [vmem:[#allocation2 + $0x1c0] sm:$0xff]
      %v7934 = vld [vmem:[#allocation2 + $0x1c8] sm:$0xff]
      %v7935 = vld [vmem:[#allocation2 + $0x1d0] sm:$0xff]
      %v7936 = vld [vmem:[#allocation2 + $0x1d8] sm:$0xff]
      %v7937 = vld [vmem:[#allocation2 + $0x1e0] sm:$0xff]
      %v7938 = vld [vmem:[#allocation2 + $0x1e8] sm:$0xff]
      %v7939 = vld [vmem:[#allocation2 + $0x1f0] sm:$0xff]
      %v7940 = vld [vmem:[#allocation2 + $0x1f8] sm:$0xff]
      %v7941 = vld [vmem:[#allocation2 + $0x200] sm:$0xff]
      %v7942 = vld [vmem:[#allocation2 + $0x208] sm:$0xff]
      %v7943 = vld [vmem:[#allocation2 + $0x210] sm:$0xff]
      %v7944 = vld [vmem:[#allocation2 + $0x218] sm:$0xff]
      %v7945 = vld [vmem:[#allocation2 + $0x220] sm:$0xff]
      %v7946 = vld [vmem:[#allocation2 + $0x228] sm:$0xff]
      %v7947 = vld [vmem:[#allocation2 + $0x230] sm:$0xff]
      %v7948 = vld [vmem:[#allocation2 + $0x238] sm:$0xff]
      %v7949 = vld [vmem:[#allocation2 + $0x240] sm:$0xff]
      %v7950 = vld [vmem:[#allocation2 + $0x248] sm:$0xff]
      %v7951 = vld [vmem:[#allocation2 + $0x250] sm:$0xff]
      %v7952 = vld [vmem:[#allocation2 + $0x258] sm:$0xff]
      %v7953 = vld [vmem:[#allocation2 + $0x260] sm:$0xff]
      %v7954 = vld [vmem:[#allocation2 + $0x268] sm:$0xff]
      %v7955 = vld [vmem:[#allocation2 + $0x270] sm:$0xff]
      %v7956 = vld [vmem:[#allocation2 + $0x278] sm:$0xff]
      %v7957 = vld [vmem:[#allocation2 + $0x280] sm:$0xff]
      %v7958 = vld [vmem:[#allocation2 + $0x288] sm:$0xff]
      %v7959 = vld [vmem:[#allocation2 + $0x290] sm:$0xff]
      %v7960 = vld [vmem:[#allocation2 + $0x298] sm:$0xff]
      %v7961 = vld [vmem:[#allocation2 + $0x2a0] sm:$0xff]
      %v7962 = vld [vmem:[#allocation2 + $0x2a8] sm:$0xff]
      %v7963 = vld [vmem:[#allocation2 + $0x2b0] sm:$0xff]
      %v7964 = vld [vmem:[#allocation2 + $0x2b8] sm:$0xff]
      %v7965 = vld [vmem:[#allocation2 + $0x2c0] sm:$0xff]
      %v7966 = vld [vmem:[#allocation2 + $0x2c8] sm:$0xff]
      %v7967 = vld [vmem:[#allocation2 + $0x2d0] sm:$0xff]
      %v7968 = vld [vmem:[#allocation2 + $0x2d8] sm:$0xff]
      %v7969 = vld [vmem:[#allocation2 + $0x2e0] sm:$0xff]
      %v7970 = vld [vmem:[#allocation2 + $0x2e8] sm:$0xff]
      %v7971 = vld [vmem:[#allocation2 + $0x2f0] sm:$0xff]
      %v7972 = vld [vmem:[#allocation2 + $0x2f8] sm:$0xff]
      %v7973 = vld [vmem:[#allocation2 + $0x300] sm:$0xff]
      %v7974 = vld [vmem:[#allocation2 + $0x308] sm:$0xff]
      %v7975 = vld [vmem:[#allocation2 + $0x310] sm:$0xff]
      %v7976 = vld [vmem:[#allocation2 + $0x318] sm:$0xff]
      %v7977 = vld [vmem:[#allocation2 + $0x320] sm:$0xff]
      %v7978 = vld [vmem:[#allocation2 + $0x328] sm:$0xff]
      %v7979 = vld [vmem:[#allocation2 + $0x330] sm:$0xff]
      %v7980 = vld [vmem:[#allocation2 + $0x338] sm:$0xff]
      %v7981 = vld [vmem:[#allocation2 + $0x340] sm:$0xff]
      %v7982 = vld [vmem:[#allocation2 + $0x348] sm:$0xff]
      %v7983 = vld [vmem:[#allocation2 + $0x350] sm:$0xff]
      %v7984 = vld [vmem:[#allocation2 + $0x358] sm:$0xff]
      %v7985 = vld [vmem:[#allocation2 + $0x360] sm:$0xff]
      %v7986 = vld [vmem:[#allocation2 + $0x368] sm:$0xff]
      %v7987 = vld [vmem:[#allocation2 + $0x370] sm:$0xff]
      %v7988 = vld [vmem:[#allocation2 + $0x378] sm:$0xff]
      %v7989 = vld [vmem:[#allocation2 + $0x380] sm:$0xff]
      %v7990 = vld [vmem:[#allocation2 + $0x388] sm:$0xff]
      %v7991 = vld [vmem:[#allocation2 + $0x390] sm:$0xff]
      %v7992 = vld [vmem:[#allocation2 + $0x398] sm:$0xff]
      %v7993 = vld [vmem:[#allocation2 + $0x3a0] sm:$0xff]
      %v7994 = vld [vmem:[#allocation2 + $0x3a8] sm:$0xff]
      %v7995 = vld [vmem:[#allocation2 + $0x3b0] sm:$0xff]
      %v7996 = vld [vmem:[#allocation2 + $0x3b8] sm:$0xff]
      %v7997 = vld [vmem:[#allocation2 + $0x3c0] sm:$0xff]
      %v7998 = vld [vmem:[#allocation2 + $0x3c8] sm:$0xff]
      %v7999 = vld [vmem:[#allocation2 + $0x3d0] sm:$0xff]
      %v8000 = vld [vmem:[#allocation2 + $0x3d8] sm:$0xff]
      %v8001 = vld [vmem:[#allocation2 + $0x3e0] sm:$0xff]
      %v8002 = vld [vmem:[#allocation2 + $0x3e8] sm:$0xff]
      %v8003 = vld [vmem:[#allocation2 + $0x3f0] sm:$0xff]
      %v8004 = vld [vmem:[#allocation2 + $0x3f8] sm:$0xff]
      %v8005 = vld [vmem:[#allocation2 + $0x400] sm:$0xff]
      %v8006 = vld [vmem:[#allocation2 + $0x408] sm:$0xff]
      %v8007 = vld [vmem:[#allocation2 + $0x410] sm:$0xff]
      %v8008 = vld [vmem:[#allocation2 + $0x418] sm:$0xff]
      %v8009 = vld [vmem:[#allocation2 + $0x420] sm:$0xff]
      %v8010 = vld [vmem:[#allocation2 + $0x428] sm:$0xff]
      %v8011 = vld [vmem:[#allocation2 + $0x430] sm:$0xff]
      %v8012 = vld [vmem:[#allocation2 + $0x438] sm:$0xff]
      %v8013 = vld [vmem:[#allocation2 + $0x440] sm:$0xff]
      %v8014 = vld [vmem:[#allocation2 + $0x448] sm:$0xff]
      %v8015 = vld [vmem:[#allocation2 + $0x450] sm:$0xff]
      %v8016 = vld [vmem:[#allocation2 + $0x458] sm:$0xff]
      %v8017 = vld [vmem:[#allocation2 + $0x460] sm:$0xff]
      %v8018 = vld [vmem:[#allocation2 + $0x468] sm:$0xff]
      %v8019 = vld [vmem:[#allocation2 + $0x470] sm:$0xff]
      %v8020 = vld [vmem:[#allocation2 + $0x478] sm:$0xff]
      %v8021 = vld [vmem:[#allocation3] sm:$0xff]
      %v8022 = vld [vmem:[#allocation3 + $0x8] sm:$0xff]
      %v8023 = vld [vmem:[#allocation3 + $0x10] sm:$0xff]
      %v8024 = vld [vmem:[#allocation3 + $0x18] sm:$0xff]
      %v8025 = vld [vmem:[#allocation3 + $0x20] sm:$0xff]
      %v8026 = vld [vmem:[#allocation3 + $0x28] sm:$0xff]
      %v8027 = vld [vmem:[#allocation3 + $0x30] sm:$0xff]
      %v8028 = vld [vmem:[#allocation3 + $0x38] sm:$0xff]
      %v8029 = vld [vmem:[#allocation3 + $0x40] sm:$0xff]
      %v8030 = vld [vmem:[#allocation3 + $0x48] sm:$0xff]
      %v8031 = vld [vmem:[#allocation3 + $0x50] sm:$0xff]
      %v8032 = vld [vmem:[#allocation3 + $0x58] sm:$0xff]
      %v8033 = vld [vmem:[#allocation3 + $0x60] sm:$0xff]
      %v8034 = vld [vmem:[#allocation3 + $0x68] sm:$0xff]
      %v8035 = vld [vmem:[#allocation3 + $0x70] sm:$0xff]
      %v8036 = vld [vmem:[#allocation3 + $0x78] sm:$0xff]
      %v8037 = vld [vmem:[#allocation3 + $0x80] sm:$0xff]
      %v8038 = vld [vmem:[#allocation3 + $0x88] sm:$0xff]
      %v8039 = vld [vmem:[#allocation3 + $0x90] sm:$0xff]
      %v8040 = vld [vmem:[#allocation3 + $0x98] sm:$0xff]
      %v8041 = vld [vmem:[#allocation3 + $0xa0] sm:$0xff]
      %v8042 = vld [vmem:[#allocation3 + $0xa8] sm:$0xff]
      %v8043 = vld [vmem:[#allocation3 + $0xb0] sm:$0xff]
      %v8044 = vld [vmem:[#allocation3 + $0xb8] sm:$0xff]
      %v8045 = vld [vmem:[#allocation3 + $0xc0] sm:$0xff]
      %v8046 = vld [vmem:[#allocation3 + $0xc8] sm:$0xff]
      %v8047 = vld [vmem:[#allocation3 + $0xd0] sm:$0xff]
      %v8048 = vld [vmem:[#allocation3 + $0xd8] sm:$0xff]
      %v8049 = vld [vmem:[#allocation3 + $0xe0] sm:$0xff]
      %v8050 = vld [vmem:[#allocation3 + $0xe8] sm:$0xff]
      %v8051 = vld [vmem:[#allocation3 + $0xf0] sm:$0xff]
      %v8052 = vld [vmem:[#allocation3 + $0xf8] sm:$0xff]
      %v8053 = vld [vmem:[#allocation3 + $0x100] sm:$0xff]
      %v8054 = vld [vmem:[#allocation3 + $0x108] sm:$0xff]
      %v8055 = vld [vmem:[#allocation3 + $0x110] sm:$0xff]
      %v8056 = vld [vmem:[#allocation3 + $0x118] sm:$0xff]
      %v8057 = vld [vmem:[#allocation3 + $0x120] sm:$0xff]
      %v8058 = vld [vmem:[#allocation3 + $0x128] sm:$0xff]
      %v8059 = vld [vmem:[#allocation3 + $0x130] sm:$0xff]
      %v8060 = vld [vmem:[#allocation3 + $0x138] sm:$0xff]
      %v8061 = vld [vmem:[#allocation3 + $0x140] sm:$0xff]
      %v8062 = vld [vmem:[#allocation3 + $0x148] sm:$0xff]
      %v8063 = vld [vmem:[#allocation3 + $0x150] sm:$0xff]
      %v8064 = vld [vmem:[#allocation3 + $0x158] sm:$0xff]
      %v8065 = vld [vmem:[#allocation3 + $0x160] sm:$0xff]
      %v8066 = vld [vmem:[#allocation3 + $0x168] sm:$0xff]
      %v8067 = vld [vmem:[#allocation3 + $0x170] sm:$0xff]
      %v8068 = vld [vmem:[#allocation3 + $0x178] sm:$0xff]
      %v8069 = vld [vmem:[#allocation3 + $0x180] sm:$0xff]
      %v8070 = vld [vmem:[#allocation3 + $0x188] sm:$0xff]
      %v8071 = vld [vmem:[#allocation3 + $0x190] sm:$0xff]
      %v8072 = vld [vmem:[#allocation3 + $0x198] sm:$0xff]
      %v8073 = vld [vmem:[#allocation3 + $0x1a0] sm:$0xff]
      %v8074 = vld [vmem:[#allocation3 + $0x1a8] sm:$0xff]
      %v8075 = vld [vmem:[#allocation3 + $0x1b0] sm:$0xff]
      %v8076 = vld [vmem:[#allocation3 + $0x1b8] sm:$0xff]
      %v8077 = vld [vmem:[#allocation3 + $0x1c0] sm:$0xff]
      %v8078 = vld [vmem:[#allocation3 + $0x1c8] sm:$0xff]
      %v8079 = vld [vmem:[#allocation3 + $0x1d0] sm:$0xff]
      %v8080 = vld [vmem:[#allocation3 + $0x1d8] sm:$0xff]
      %v8081 = vld [vmem:[#allocation3 + $0x1e0] sm:$0xff]
      %v8082 = vld [vmem:[#allocation3 + $0x1e8] sm:$0xff]
      %v8083 = vld [vmem:[#allocation3 + $0x1f0] sm:$0xff]
      %v8084 = vld [vmem:[#allocation3 + $0x1f8] sm:$0xff]
      %v8085 = vld [vmem:[#allocation3 + $0x200] sm:$0xff]
      %v8086 = vld [vmem:[#allocation3 + $0x208] sm:$0xff]
      %v8087 = vld [vmem:[#allocation3 + $0x210] sm:$0xff]
      %v8088 = vld [vmem:[#allocation3 + $0x218] sm:$0xff]
      %v8089 = vld [vmem:[#allocation3 + $0x220] sm:$0xff]
      %v8090 = vld [vmem:[#allocation3 + $0x228] sm:$0xff]
      %v8091 = vld [vmem:[#allocation3 + $0x230] sm:$0xff]
      %v8092 = vld [vmem:[#allocation3 + $0x238] sm:$0xff]
      %v8093 = vld [vmem:[#allocation3 + $0x240] sm:$0xff]
      %v8094 = vld [vmem:[#allocation3 + $0x248] sm:$0xff]
      %v8095 = vld [vmem:[#allocation3 + $0x250] sm:$0xff]
      %v8096 = vld [vmem:[#allocation3 + $0x258] sm:$0xff]
      %v8097 = vld [vmem:[#allocation3 + $0x260] sm:$0xff]
      %v8098 = vld [vmem:[#allocation3 + $0x268] sm:$0xff]
      %v8099 = vld [vmem:[#allocation3 + $0x270] sm:$0xff]
      %v8100 = vld [vmem:[#allocation3 + $0x278] sm:$0xff]
      %v8101 = vld [vmem:[#allocation3 + $0x280] sm:$0xff]
      %v8102 = vld [vmem:[#allocation3 + $0x288] sm:$0xff]
      %v8103 = vld [vmem:[#allocation3 + $0x290] sm:$0xff]
      %v8104 = vld [vmem:[#allocation3 + $0x298] sm:$0xff]
      %v8105 = vld [vmem:[#allocation3 + $0x2a0] sm:$0xff]
      %v8106 = vld [vmem:[#allocation3 + $0x2a8] sm:$0xff]
      %v8107 = vld [vmem:[#allocation3 + $0x2b0] sm:$0xff]
      %v8108 = vld [vmem:[#allocation3 + $0x2b8] sm:$0xff]
      %v8109 = vld [vmem:[#allocation3 + $0x2c0] sm:$0xff]
      %v8110 = vld [vmem:[#allocation3 + $0x2c8] sm:$0xff]
      %v8111 = vld [vmem:[#allocation3 + $0x2d0] sm:$0xff]
      %v8112 = vld [vmem:[#allocation3 + $0x2d8] sm:$0xff]
      %v8113 = vld [vmem:[#allocation3 + $0x2e0] sm:$0xff]
      %v8114 = vld [vmem:[#allocation3 + $0x2e8] sm:$0xff]
      %v8115 = vld [vmem:[#allocation3 + $0x2f0] sm:$0xff]
      %v8116 = vld [vmem:[#allocation3 + $0x2f8] sm:$0xff]
      %v8117 = vld [vmem:[#allocation3 + $0x300] sm:$0xff]
      %v8118 = vld [vmem:[#allocation3 + $0x308] sm:$0xff]
      %v8119 = vld [vmem:[#allocation3 + $0x310] sm:$0xff]
      %v8120 = vld [vmem:[#allocation3 + $0x318] sm:$0xff]
      %v8121 = vld [vmem:[#allocation3 + $0x320] sm:$0xff]
      %v8122 = vld [vmem:[#allocation3 + $0x328] sm:$0xff]
      %v8123 = vld [vmem:[#allocation3 + $0x330] sm:$0xff]
      %v8124 = vld [vmem:[#allocation3 + $0x338] sm:$0xff]
      %v8125 = vld [vmem:[#allocation3 + $0x340] sm:$0xff]
      %v8126 = vld [vmem:[#allocation3 + $0x348] sm:$0xff]
      %v8127 = vld [vmem:[#allocation3 + $0x350] sm:$0xff]
      %v8128 = vld [vmem:[#allocation3 + $0x358] sm:$0xff]
      %v8129 = vld [vmem:[#allocation3 + $0x360] sm:$0xff]
      %v8130 = vld [vmem:[#allocation3 + $0x368] sm:$0xff]
      %v8131 = vld [vmem:[#allocation3 + $0x370] sm:$0xff]
      %v8132 = vld [vmem:[#allocation3 + $0x378] sm:$0xff]
      %v8133 = vld [vmem:[#allocation3 + $0x380] sm:$0xff]
      %v8134 = vld [vmem:[#allocation3 + $0x388] sm:$0xff]
      %v8135 = vld [vmem:[#allocation3 + $0x390] sm:$0xff]
      %v8136 = vld [vmem:[#allocation3 + $0x398] sm:$0xff]
      %v8137 = vld [vmem:[#allocation3 + $0x3a0] sm:$0xff]
      %v8138 = vld [vmem:[#allocation3 + $0x3a8] sm:$0xff]
      %v8139 = vld [vmem:[#allocation3 + $0x3b0] sm:$0xff]
      %v8140 = vld [vmem:[#allocation3 + $0x3b8] sm:$0xff]
      %v8141 = vld [vmem:[#allocation3 + $0x3c0] sm:$0xff]
      %v8142 = vld [vmem:[#allocation3 + $0x3c8] sm:$0xff]
      %v8143 = vld [vmem:[#allocation3 + $0x3d0] sm:$0xff]
      %v8144 = vld [vmem:[#allocation3 + $0x3d8] sm:$0xff]
      %v8145 = vld [vmem:[#allocation3 + $0x3e0] sm:$0xff]
      %v8146 = vld [vmem:[#allocation3 + $0x3e8] sm:$0xff]
      %v8147 = vld [vmem:[#allocation3 + $0x3f0] sm:$0xff]
      %v8148 = vld [vmem:[#allocation3 + $0x3f8] sm:$0xff]
      %v8149 = vld [vmem:[#allocation3 + $0x400] sm:$0xff]
      %v8150 = vld [vmem:[#allocation3 + $0x408] sm:$0xff]
      %v8151 = vld [vmem:[#allocation3 + $0x410] sm:$0xff]
      %v8152 = vld [vmem:[#allocation3 + $0x418] sm:$0xff]
      %v8153 = vld [vmem:[#allocation3 + $0x420] sm:$0xff]
      %v8154 = vld [vmem:[#allocation3 + $0x428] sm:$0xff]
      %v8155 = vld [vmem:[#allocation3 + $0x430] sm:$0xff]
      %v8156 = vld [vmem:[#allocation3 + $0x438] sm:$0xff]
      %v8157 = vld [vmem:[#allocation3 + $0x440] sm:$0xff]
      %v8158 = vld [vmem:[#allocation3 + $0x448] sm:$0xff]
      %v8159 = vld [vmem:[#allocation3 + $0x450] sm:$0xff]
      %v8160 = vld [vmem:[#allocation3 + $0x458] sm:$0xff]
      %v8161 = vld [vmem:[#allocation3 + $0x460] sm:$0xff]
      %v8162 = vld [vmem:[#allocation3 + $0x468] sm:$0xff]
      %v8163 = vld [vmem:[#allocation3 + $0x470] sm:$0xff]
      %v8164 = vld [vmem:[#allocation3 + $0x478] sm:$0xff]
      %8165 = vmatprep.subr.mxu0 0.0
      %8166 = vmatpush1.msra.mxu0 %v8021
      %8167 = vmatprep.subr.mxu0 0.0
      %8168 = vmatpush1.msra.mxu0 %v8022
      %8169 = vmatprep.subr.mxu0 0.0
      %8170 = vmatpush1.msra.mxu0 %v8023
      %8171 = vmatprep.subr.mxu0 0.0
      %8172 = vmatpush1.msra.mxu0 %v8024
      %8173 = vmatprep.subr.mxu0 0.0
      %8174 = vmatpush1.msra.mxu0 %v8025
      %8175 = vmatprep.subr.mxu0 0.0
      %8176 = vmatpush1.msra.mxu0 %v8026
      %8177 = vmatprep.subr.mxu0 0.0
      %8178 = vmatpush1.msra.mxu0 %v8027
      %8179 = vmatprep.subr.mxu0 0.0
      %8180 = vmatpush1.msra.mxu0 %v8028
      %8181 = vmatprep.subr.mxu0 0.0
      %8182 = vmatpush1.msra.mxu0 %v8029
      %8183 = vmatprep.subr.mxu0 0.0
      %8184 = vmatpush1.msra.mxu0 %v8030
      %8185 = vmatprep.subr.mxu0 0.0
      %8186 = vmatpush1.msra.mxu0 %v8031
      %8187 = vmatprep.subr.mxu0 0.0
      %8188 = vmatpush1.msra.mxu0 %v8032
      %8189 = vmatprep.subr.mxu0 0.0
      %8190 = vmatpush1.msra.mxu0 %v8033
      %8191 = vmatprep.subr.mxu0 0.0
      %8192 = vmatpush1.msra.mxu0 %v8034
      %8193 = vmatprep.subr.mxu0 0.0
      %8194 = vmatpush1.msra.mxu0 %v8035
      %8195 = vmatprep.subr.mxu0 0.0
      %8196 = vmatpush1.msra.mxu0 %v8036
      %8197 = vmatprep.subr.mxu0 0.0
      %8198 = vmatpush1.msra.mxu0 %v8037
      %8199 = vmatprep.subr.mxu0 0.0
      %8200 = vmatpush1.msra.mxu0 %v8038
      %8201 = vmatprep.subr.mxu0 0.0
      %8202 = vmatpush1.msra.mxu0 %v8039
      %8203 = vmatprep.subr.mxu0 0.0
      %8204 = vmatpush1.msra.mxu0 %v8040
      %8205 = vmatprep.subr.mxu0 0.0
      %8206 = vmatpush1.msra.mxu0 %v8041
      %8207 = vmatprep.subr.mxu0 0.0
      %8208 = vmatpush1.msra.mxu0 %v8042
      %8209 = vmatprep.subr.mxu0 0.0
      %8210 = vmatpush1.msra.mxu0 %v8043
      %8211 = vmatprep.subr.mxu0 0.0
      %8212 = vmatpush1.msra.mxu0 %v8044
      %8213 = vmatprep.subr.mxu0 0.0
      %8214 = vmatpush1.msra.mxu0 %v8045
      %8215 = vmatprep.subr.mxu0 0.0
      %8216 = vmatpush1.msra.mxu0 %v8046
      %8217 = vmatprep.subr.mxu0 0.0
      %8218 = vmatpush1.msra.mxu0 %v8047
      %8219 = vmatprep.subr.mxu0 0.0
      %8220 = vmatpush1.msra.mxu0 %v8048
      %8221 = vmatprep.subr.mxu0 0.0
      %8222 = vmatpush1.msra.mxu0 %v8049
      %8223 = vmatprep.subr.mxu0 0.0
      %8224 = vmatpush1.msra.mxu0 %v8050
      %8225 = vmatprep.subr.mxu0 0.0
      %8226 = vmatpush1.msra.mxu0 %v8051
      %8227 = vmatprep.subr.mxu0 0.0
      %8228 = vmatpush1.msra.mxu0 %v8052
      %8229 = vmatprep.mubr.f32.mxu0 %v7878
      %8230 = vmatmul.mubr.f32.gmra.mrb[0].mxu0 %v7877
      %v8231 = vpop.f32.mrb[0].mxu0
      %v8232 = vadd.f32 0.0, %v8231
      %v8233 = vpop.f32.mrb[0].mxu0
      %8234 = vmatprep.mubr.f32.mxu0 %v7887
      %8235 = vmatmul.mubr.f32.gmra.mrb[0].mxu0 %v7886
      %v8236 = vpop.f32.mrb[0].mxu0
      %v8237 = vadd.f32 0.0, %v8236
      %v8238 = vpop.f32.mrb[0].mxu0
      %8239 = vmatprep.mubr.f32.mxu0 %v7896
      %8240 = vmatmul.mubr.f32.gmra.mrb[0].mxu0 %v7895
      %v8241 = vpop.f32.mrb[0].mxu0
      %v8242 = vadd.f32 0.0, %v8241
      %v8243 = vpop.f32.mrb[0].mxu0
      %8244 = vmatprep.mubr.f32.mxu0 %v7905
      %8245 = vmatmul.mubr.f32.gmra.mrb[0].mxu0 %v7904
      %v8246 = vpop.f32.mrb[0].mxu0
      %v8247 = vadd.f32 0.0, %v8246
      %v8248 = vpop.f32.mrb[0].mxu0
      %8249 = vmatprep.mubr.f32.mxu0 %v7914
      %8250 = vmatmul.mubr.f32.gmra.mrb[0].mxu0 %v7913
      %v8251 = vpop.f32.mrb[0].mxu0
      %v8252 = vadd.f32 0.0, %v8251
      %v8253 = vpop.f32.mrb[0].mxu0
      %8254 = vmatprep.mubr.f32.mxu0 %v7923
      %8255 = vmatmul.mubr.f32.gmra.mrb[0].mxu0 %v7922
      %v8256 = vpop.f32.mrb[0].mxu0
      %v8257 = vadd.f32 0.0, %v8256
      %v8258 = vpop.f32.mrb[0].mxu0
      %8259 = vmatprep.mubr.f32.mxu0 %v7932
      %8260 = vmatmul.mubr.f32.gmra.mrb[0].mxu0 %v7931
      %v8261 = vpop.f32.mrb[0].mxu0
      %v8262 = vadd.f32 0.0, %v8261
      %v8263 = vpop.f32.mrb[0].mxu0
      %8264 = vmatprep.mubr.f32.mxu0 %v7941
      %8265 = vmatmul.mubr.f32.gmra.mrb[0].mxu0 %v7940
      %v8266 = vpop.f32.mrb[0].mxu0
      %v8267 = vadd.f32 0.0, %v8266
      %v8268 = vpop.f32.mrb[0].mxu0
      %8269 = vmatprep.mubr.f32.mxu0 %v7950
      %8270 = vmatmul.mubr.f32.gmra.mrb[0].mxu0 %v7949
      %v8271 = vpop.f32.mrb[0].mxu0
      %v8272 = vadd.f32 0.0, %v8271
      %v8273 = vpop.f32.mrb[0].mxu0
      %8274 = vmatprep.mubr.f32.mxu0 %v7959
      %8275 = vmatmul.mubr.f32.gmra.mrb[0].mxu0 %v7958
      %v8276 = vpop.f32.mrb[0].mxu0
      %v8277 = vadd.f32 0.0, %v8276
      %v8278 = vpop.f32.mrb[0].mxu0
      %8279 = vmatprep.mubr.f32.mxu0 %v7968
      %8280 = vmatmul.mubr.f32.gmra.mrb[0].mxu0 %v7967
      %v8281 = vpop.f32.mrb[0].mxu0
      %v8282 = vadd.f32 0.0, %v8281
      %v8283 = vpop.f32.mrb[0].mxu0
      %8284 = vmatprep.mubr.f32.mxu0 %v7977
      %8285 = vmatmul.mubr.f32.gmra.mrb[0].mxu0 %v7976
      %v8286 = vpop.f32.mrb[0].mxu0
      %v8287 = vadd.f32 0.0, %v8286
      %v8288 = vpop.f32.mrb[0].mxu0
      %8289 = vmatprep.mubr.f32.mxu0 %v7986
      %8290 = vmatmul.mubr.f32.gmra.mrb[0].mxu0 %v7985
      %v8291 = vpop.f32.mrb[0].mxu0
      %v8292 = vadd.f32 0.0, %v8291
      %v8293 = vpop.f32.mrb[0].mxu0
      %8294 = vmatprep.mubr.f32.mxu0 %v7995
      %8295 = vmatmul.mubr.f32.gmra.mrb[0].mxu0 %v7994
      %v8296 = vpop.f32.mrb[0].mxu0
      %v8297 = vadd.f32 0.0, %v8296
      %v8298 = vpop.f32.mrb[0].mxu0
      %8299 = vmatprep.mubr.f32.mxu0 %v8004
      %8300 = vmatmul.mubr.f32.gmra.mrb[0].mxu0 %v8003
      %v8301 = vpop.f32.mrb[0].mxu0
      %v8302 = vadd.f32 0.0, %v8301
      %v8303 = vpop.f32.mrb[0].mxu0
      %8304 = vmatprep.mubr.f32.mxu0 %v8013
      %8305 = vmatmul.mubr.f32.gmra.mrb[0].mxu0 %v8012
      %v8306 = vpop.f32.mrb[0].mxu0
      %v8307 = vadd.f32 0.0, %v8306
      %v8308 = vpop.f32.mrb[0].mxu0
      %8309 = vdwg.mxu0
      %8310 = vmatprep.subr.mxu0 0.0
      %8311 = vmatpush1.msra.mxu0 %v8053
      %8312 = vmatprep.subr.mxu0 0.0
      %8313 = vmatpush1.msra.mxu0 %v8054
      %8314 = vmatprep.subr.mxu0 0.0
      %8315 = vmatpush1.msra.mxu0 %v8055
      %8316 = vmatprep.subr.mxu0 0.0
      %8317 = vmatpush1.msra.mxu0 %v8056
      %8318 = vmatprep.subr.mxu0 0.0
      %8319 = vmatpush1.msra.mxu0 %v8057
      %8320 = vmatprep.subr.mxu0 0.0
      %8321 = vmatpush1.msra.mxu0 %v8058
      %8322 = vmatprep.subr.mxu0 0.0
      %8323 = vmatpush1.msra.mxu0 %v8059
      %8324 = vmatprep.subr.mxu0 0.0
      %8325 = vmatpush1.msra.mxu0 %v8060
      %8326 = vmatprep.subr.mxu0 0.0
      %8327 = vmatpush1.msra.mxu0 %v8061
      %8328 = vmatprep.subr.mxu0 0.0
      %8329 = vmatpush1.msra.mxu0 %v8062
      %8330 = vmatprep.subr.mxu0 0.0
      %8331 = vmatpush1.msra.mxu0 %v8063
      %8332 = vmatprep.subr.mxu0 0.0
      %8333 = vmatpush1.msra.mxu0 %v8064
      %8334 = vmatprep.subr.mxu0 0.0
      %8335 = vmatpush1.msra.mxu0 %v8065
      %8336 = vmatprep.subr.mxu0 0.0
      %8337 = vmatpush1.msra.mxu0 %v8066
      %8338 = vmatprep.subr.mxu0 0.0
      %8339 = vmatpush1.msra.mxu0 %v8067
      %8340 = vmatprep.subr.mxu0 0.0
      %8341 = vmatpush1.msra.mxu0 %v8068
      %8342 = vmatprep.subr.mxu0 0.0
      %8343 = vmatpush1.msra.mxu0 %v8069
      %8344 = vmatprep.subr.mxu0 0.0
      %8345 = vmatpush1.msra.mxu0 %v8070
      %8346 = vmatprep.subr.mxu0 0.0
      %8347 = vmatpush1.msra.mxu0 %v8071
      %8348 = vmatprep.subr.mxu0 0.0
      %8349 = vmatpush1.msra.mxu0 %v8072
      %8350 = vmatprep.subr.mxu0 0.0
      %8351 = vmatpush1.msra.mxu0 %v8073
      %8352 = vmatprep.subr.mxu0 0.0
      %8353 = vmatpush1.msra.mxu0 %v8074
      %8354 = vmatprep.subr.mxu0 0.0
      %8355 = vmatpush1.msra.mxu0 %v8075
      %8356 = vmatprep.subr.mxu0 0.0
      %8357 = vmatpush1.msra.mxu0 %v8076
      %8358 = vmatprep.subr.mxu0 0.0
      %8359 = vmatpush1.msra.mxu0 %v8077
      %8360 = vmatprep.subr.mxu0 0.0
      %8361 = vmatpush1.msra.mxu0 %v8078
      %8362 = vmatprep.subr.mxu0 0.0
      %8363 = vmatpush1.msra.mxu0 %v8079
      %8364 = vmatprep.subr.mxu0 0.0
      %8365 = vmatpush1.msra.mxu0 %v8080
      %8366 = vmatprep.subr.mxu0 0.0
      %8367 = vmatpush1.msra.mxu0 %v8081
      %8368 = vmatprep.subr.mxu0 0.0
      %8369 = vmatpush1.msra.mxu0 %v8082
      %8370 = vmatprep.subr.mxu0 0.0
      %8371 = vmatpush1.msra.mxu0 %v8083
      %8372 = vmatprep.subr.mxu0 0.0
      %8373 = vmatpush1.msra.mxu0 %v8084
      %8374 = vmatprep.mubr.f32.mxu0 %v7880
      %8375 = vmatmul.mubr.f32.gmra.mrb[0].mxu0 %v7879
      %v8376 = vpop.f32.mrb[0].mxu0
      %v8377 = vadd.f32 %v8232, %v8376
      %v8378 = vpop.f32.mrb[0].mxu0
      %8379 = vmatprep.mubr.f32.mxu0 %v7889
      %8380 = vmatmul.mubr.f32.gmra.mrb[0].mxu0 %v7888
      %v8381 = vpop.f32.mrb[0].mxu0
      %v8382 = vadd.f32 %v8237, %v8381
      %v8383 = vpop.f32.mrb[0].mxu0
      %8384 = vmatprep.mubr.f32.mxu0 %v7898
      %8385 = vmatmul.mubr.f32.gmra.mrb[0].mxu0 %v7897
      %v8386 = vpop.f32.mrb[0].mxu0
      %v8387 = vadd.f32 %v8242, %v8386
      %v8388 = vpop.f32.mrb[0].mxu0
      %8389 = vmatprep.mubr.f32.mxu0 %v7907
      %8390 = vmatmul.mubr.f32.gmra.mrb[0].mxu0 %v7906
      %v8391 = vpop.f32.mrb[0].mxu0
      %v8392 = vadd.f32 %v8247, %v8391
      %v8393 = vpop.f32.mrb[0].mxu0
      %8394 = vmatprep.mubr.f32.mxu0 %v7916
      %8395 = vmatmul.mubr.f32.gmra.mrb[0].mxu0 %v7915
      %v8396 = vpop.f32.mrb[0].mxu0
      %v8397 = vadd.f32 %v8252, %v8396
      %v8398 = vpop.f32.mrb[0].mxu0
      %8399 = vmatprep.mubr.f32.mxu0 %v7925
      %8400 = vmatmul.mubr.f32.gmra.mrb[0].mxu0 %v7924
      %v8401 = vpop.f32.mrb[0].mxu0
      %v8402 = vadd.f32 %v8257, %v8401
      %v8403 = vpop.f32.mrb[0].mxu0
      %8404 = vmatprep.mubr.f32.mxu0 %v7934
      %8405 = vmatmul.mubr.f32.gmra.mrb[0].mxu0 %v7933
      %v8406 = vpop.f32.mrb[0].mxu0
      %v8407 = vadd.f32 %v8262, %v8406
      %v8408 = vpop.f32.mrb[0].mxu0
      %8409 = vmatprep.mubr.f32.mxu0 %v7943
      %8410 = vmatmul.mubr.f32.gmra.mrb[0].mxu0 %v7942
      %v8411 = vpop.f32.mrb[0].mxu0
      %v8412 = vadd.f32 %v8267, %v8411
      %v8413 = vpop.f32.mrb[0].mxu0
      %8414 = vmatprep.mubr.f32.mxu0 %v7952
      %8415 = vmatmul.mubr.f32.gmra.mrb[0].mxu0 %v7951
      %v8416 = vpop.f32.mrb[0].mxu0
      %v8417 = vadd.f32 %v8272, %v8416
      %v8418 = vpop.f32.mrb[0].mxu0
      %8419 = vmatprep.mubr.f32.mxu0 %v7961
      %8420 = vmatmul.mubr.f32.gmra.mrb[0].mxu0 %v7960
      %v8421 = vpop.f32.mrb[0].mxu0
      %v8422 = vadd.f32 %v8277, %v8421
      %v8423 = vpop.f32.mrb[0].mxu0
      %8424 = vmatprep.mubr.f32.mxu0 %v7970
      %8425 = vmatmul.mubr.f32.gmra.mrb[0].mxu0 %v7969
      %v8426 = vpop.f32.mrb[0].mxu0
      %v8427 = vadd.f32 %v8282, %v8426
      %v8428 = vpop.f32.mrb[0].mxu0
      %8429 = vmatprep.mubr.f32.mxu0 %v7979
      %8430 = vmatmul.mubr.f32.gmra.mrb[0].mxu0 %v7978
      %v8431 = vpop.f32.mrb[0].mxu0
      %v8432 = vadd.f32 %v8287, %v8431
      %v8433 = vpop.f32.mrb[0].mxu0
      %8434 = vmatprep.mubr.f32.mxu0 %v7988
      %8435 = vmatmul.mubr.f32.gmra.mrb[0].mxu0 %v7987
      %v8436 = vpop.f32.mrb[0].mxu0
      %v8437 = vadd.f32 %v8292, %v8436
      %v8438 = vpop.f32.mrb[0].mxu0
      %8439 = vmatprep.mubr.f32.mxu0 %v7997
      %8440 = vmatmul.mubr.f32.gmra.mrb[0].mxu0 %v7996
      %v8441 = vpop.f32.mrb[0].mxu0
      %v8442 = vadd.f32 %v8297, %v8441
      %v8443 = vpop.f32.mrb[0].mxu0
      %8444 = vmatprep.mubr.f32.mxu0 %v8006
      %8445 = vmatmul.mubr.f32.gmra.mrb[0].mxu0 %v8005
      %v8446 = vpop.f32.mrb[0].mxu0
      %v8447 = vadd.f32 %v8302, %v8446
      %v8448 = vpop.f32.mrb[0].mxu0
      %8449 = vmatprep.mubr.f32.mxu0 %v8015
      %8450 = vmatmul.mubr.f32.gmra.mrb[0].mxu0 %v8014
      %v8451 = vpop.f32.mrb[0].mxu0
      %v8452 = vadd.f32 %v8307, %v8451
      %v8453 = vpop.f32.mrb[0].mxu0
      %8454 = vdwg.mxu0
      %8455 = vmatprep.subr.mxu0 0.0
      %8456 = vmatpush1.msra.mxu0 %v8085
      %8457 = vmatprep.subr.mxu0 0.0
      %8458 = vmatpush1.msra.mxu0 %v8086
      %8459 = vmatprep.subr.mxu0 0.0
      %8460 = vmatpush1.msra.mxu0 %v8087
      %8461 = vmatprep.subr.mxu0 0.0
      %8462 = vmatpush1.msra.mxu0 %v8088
      %8463 = vmatprep.subr.mxu0 0.0
      %8464 = vmatpush1.msra.mxu0 %v8089
      %8465 = vmatprep.subr.mxu0 0.0
      %8466 = vmatpush1.msra.mxu0 %v8090
      %8467 = vmatprep.subr.mxu0 0.0
      %8468 = vmatpush1.msra.mxu0 %v8091
      %8469 = vmatprep.subr.mxu0 0.0
      %8470 = vmatpush1.msra.mxu0 %v8092
      %8471 = vmatprep.subr.mxu0 0.0
      %8472 = vmatpush1.msra.mxu0 %v8093
      %8473 = vmatprep.subr.mxu0 0.0
      %8474 = vmatpush1.msra.mxu0 %v8094
      %8475 = vmatprep.subr.mxu0 0.0
      %8476 = vmatpush1.msra.mxu0 %v8095
      %8477 = vmatprep.subr.mxu0 0.0
      %8478 = vmatpush1.msra.mxu0 %v8096
      %8479 = vmatprep.subr.mxu0 0.0
      %8480 = vmatpush1.msra.mxu0 %v8097
      %8481 = vmatprep.subr.mxu0 0.0
      %8482 = vmatpush1.msra.mxu0 %v8098
      %8483 = vmatprep.subr.mxu0 0.0
      %8484 = vmatpush1.msra.mxu0 %v8099
      %8485 = vmatprep.subr.mxu0 0.0
      %8486 = vmatpush1.msra.mxu0 %v8100
      %8487 = vmatprep.subr.mxu0 0.0
      %8488 = vmatpush1.msra.mxu0 %v8101
      %8489 = vmatprep.subr.mxu0 0.0
      %8490 = vmatpush1.msra.mxu0 %v8102
      %8491 = vmatprep.subr.mxu0 0.0
      %8492 = vmatpush1.msra.mxu0 %v8103
      %8493 = vmatprep.subr.mxu0 0.0
      %8494 = vmatpush1.msra.mxu0 %v8104
      %8495 = vmatprep.subr.mxu0 0.0
      %8496 = vmatpush1.msra.mxu0 %v8105
      %8497 = vmatprep.subr.mxu0 0.0
      %8498 = vmatpush1.msra.mxu0 %v8106
      %8499 = vmatprep.subr.mxu0 0.0
      %8500 = vmatpush1.msra.mxu0 %v8107
      %8501 = vmatprep.subr.mxu0 0.0
      %8502 = vmatpush1.msra.mxu0 %v8108
      %8503 = vmatprep.subr.mxu0 0.0
      %8504 = vmatpush1.msra.mxu0 %v8109
      %8505 = vmatprep.subr.mxu0 0.0
      %8506 = vmatpush1.msra.mxu0 %v8110
      %8507 = vmatprep.subr.mxu0 0.0
      %8508 = vmatpush1.msra.mxu0 %v8111
      %8509 = vmatprep.subr.mxu0 0.0
      %8510 = vmatpush1.msra.mxu0 %v8112
      %8511 = vmatprep.subr.mxu0 0.0
      %8512 = vmatpush1.msra.mxu0 %v8113
      %8513 = vmatprep.subr.mxu0 0.0
      %8514 = vmatpush1.msra.mxu0 %v8114
      %8515 = vmatprep.subr.mxu0 0.0
      %8516 = vmatpush1.msra.mxu0 %v8115
      %8517 = vmatprep.subr.mxu0 0.0
      %8518 = vmatpush1.msra.mxu0 %v8116
      %8519 = vmatprep.mubr.f32.mxu0 %v7882
      %8520 = vmatmul.mubr.f32.gmra.mrb[0].mxu0 %v7881
      %v8521 = vpop.f32.mrb[0].mxu0
      %v8522 = vadd.f32 %v8377, %v8521
      %v8523 = vpop.f32.mrb[0].mxu0
      %8524 = vmatprep.mubr.f32.mxu0 %v7891
      %8525 = vmatmul.mubr.f32.gmra.mrb[0].mxu0 %v7890
      %v8526 = vpop.f32.mrb[0].mxu0
      %v8527 = vadd.f32 %v8382, %v8526
      %v8528 = vpop.f32.mrb[0].mxu0
      %8529 = vmatprep.mubr.f32.mxu0 %v7900
      %8530 = vmatmul.mubr.f32.gmra.mrb[0].mxu0 %v7899
      %v8531 = vpop.f32.mrb[0].mxu0
      %v8532 = vadd.f32 %v8387, %v8531
      %v8533 = vpop.f32.mrb[0].mxu0
      %8534 = vmatprep.mubr.f32.mxu0 %v7909
      %8535 = vmatmul.mubr.f32.gmra.mrb[0].mxu0 %v7908
      %v8536 = vpop.f32.mrb[0].mxu0
      %v8537 = vadd.f32 %v8392, %v8536
      %v8538 = vpop.f32.mrb[0].mxu0
      %8539 = vmatprep.mubr.f32.mxu0 %v7918
      %8540 = vmatmul.mubr.f32.gmra.mrb[0].mxu0 %v7917
      %v8541 = vpop.f32.mrb[0].mxu0
      %v8542 = vadd.f32 %v8397, %v8541
      %v8543 = vpop.f32.mrb[0].mxu0
      %8544 = vmatprep.mubr.f32.mxu0 %v7927
      %8545 = vmatmul.mubr.f32.gmra.mrb[0].mxu0 %v7926
      %v8546 = vpop.f32.mrb[0].mxu0
      %v8547 = vadd.f32 %v8402, %v8546
      %v8548 = vpop.f32.mrb[0].mxu0
      %8549 = vmatprep.mubr.f32.mxu0 %v7936
      %8550 = vmatmul.mubr.f32.gmra.mrb[0].mxu0 %v7935
      %v8551 = vpop.f32.mrb[0].mxu0
      %v8552 = vadd.f32 %v8407, %v8551
      %v8553 = vpop.f32.mrb[0].mxu0
      %8554 = vmatprep.mubr.f32.mxu0 %v7945
      %8555 = vmatmul.mubr.f32.gmra.mrb[0].mxu0 %v7944
      %v8556 = vpop.f32.mrb[0].mxu0
      %v8557 = vadd.f32 %v8412, %v8556
      %v8558 = vpop.f32.mrb[0].mxu0
      %8559 = vmatprep.mubr.f32.mxu0 %v7954
      %8560 = vmatmul.mubr.f32.gmra.mrb[0].mxu0 %v7953
      %v8561 = vpop.f32.mrb[0].mxu0
      %v8562 = vadd.f32 %v8417, %v8561
      %v8563 = vpop.f32.mrb[0].mxu0
      %8564 = vmatprep.mubr.f32.mxu0 %v7963
      %8565 = vmatmul.mubr.f32.gmra.mrb[0].mxu0 %v7962
      %v8566 = vpop.f32.mrb[0].mxu0
      %v8567 = vadd.f32 %v8422, %v8566
      %v8568 = vpop.f32.mrb[0].mxu0
      %8569 = vmatprep.mubr.f32.mxu0 %v7972
      %8570 = vmatmul.mubr.f32.gmra.mrb[0].mxu0 %v7971
      %v8571 = vpop.f32.mrb[0].mxu0
      %v8572 = vadd.f32 %v8427, %v8571
      %v8573 = vpop.f32.mrb[0].mxu0
      %8574 = vmatprep.mubr.f32.mxu0 %v7981
      %8575 = vmatmul.mubr.f32.gmra.mrb[0].mxu0 %v7980
      %v8576 = vpop.f32.mrb[0].mxu0
      %v8577 = vadd.f32 %v8432, %v8576
      %v8578 = vpop.f32.mrb[0].mxu0
      %8579 = vmatprep.mubr.f32.mxu0 %v7990
      %8580 = vmatmul.mubr.f32.gmra.mrb[0].mxu0 %v7989
      %v8581 = vpop.f32.mrb[0].mxu0
      %v8582 = vadd.f32 %v8437, %v8581
      %v8583 = vpop.f32.mrb[0].mxu0
      %8584 = vmatprep.mubr.f32.mxu0 %v7999
      %8585 = vmatmul.mubr.f32.gmra.mrb[0].mxu0 %v7998
      %v8586 = vpop.f32.mrb[0].mxu0
      %v8587 = vadd.f32 %v8442, %v8586
      %v8588 = vpop.f32.mrb[0].mxu0
      %8589 = vmatprep.mubr.f32.mxu0 %v8008
      %8590 = vmatmul.mubr.f32.gmra.mrb[0].mxu0 %v8007
      %v8591 = vpop.f32.mrb[0].mxu0
      %v8592 = vadd.f32 %v8447, %v8591
      %v8593 = vpop.f32.mrb[0].mxu0
      %8594 = vmatprep.mubr.f32.mxu0 %v8017
      %8595 = vmatmul.mubr.f32.gmra.mrb[0].mxu0 %v8016
      %v8596 = vpop.f32.mrb[0].mxu0
      %v8597 = vadd.f32 %v8452, %v8596
      %v8598 = vpop.f32.mrb[0].mxu0
      %8599 = vdwg.mxu0
      %8600 = vmatprep.subr.mxu0 0.0
      %8601 = vmatpush1.msra.mxu0 %v8117
      %8602 = vmatprep.subr.mxu0 0.0
      %8603 = vmatpush1.msra.mxu0 %v8118
      %8604 = vmatprep.subr.mxu0 0.0
      %8605 = vmatpush1.msra.mxu0 %v8119
      %8606 = vmatprep.subr.mxu0 0.0
      %8607 = vmatpush1.msra.mxu0 %v8120
      %8608 = vmatprep.subr.mxu0 0.0
      %8609 = vmatpush1.msra.mxu0 %v8121
      %8610 = vmatprep.subr.mxu0 0.0
      %8611 = vmatpush1.msra.mxu0 %v8122
      %8612 = vmatprep.subr.mxu0 0.0
      %8613 = vmatpush1.msra.mxu0 %v8123
      %8614 = vmatprep.subr.mxu0 0.0
      %8615 = vmatpush1.msra.mxu0 %v8124
      %8616 = vmatprep.subr.mxu0 0.0
      %8617 = vmatpush1.msra.mxu0 %v8125
      %8618 = vmatprep.subr.mxu0 0.0
      %8619 = vmatpush1.msra.mxu0 %v8126
      %8620 = vmatprep.subr.mxu0 0.0
      %8621 = vmatpush1.msra.mxu0 %v8127
      %8622 = vmatprep.subr.mxu0 0.0
      %8623 = vmatpush1.msra.mxu0 %v8128
      %8624 = vmatprep.subr.mxu0 0.0
      %8625 = vmatpush1.msra.mxu0 %v8129
      %8626 = vmatprep.subr.mxu0 0.0
      %8627 = vmatpush1.msra.mxu0 %v8130
      %8628 = vmatprep.subr.mxu0 0.0
      %8629 = vmatpush1.msra.mxu0 %v8131
      %8630 = vmatprep.subr.mxu0 0.0
      %8631 = vmatpush1.msra.mxu0 %v8132
      %8632 = vmatprep.subr.mxu0 0.0
      %8633 = vmatpush1.msra.mxu0 %v8133
      %8634 = vmatprep.subr.mxu0 0.0
      %8635 = vmatpush1.msra.mxu0 %v8134
      %8636 = vmatprep.subr.mxu0 0.0
      %8637 = vmatpush1.msra.mxu0 %v8135
      %8638 = vmatprep.subr.mxu0 0.0
      %8639 = vmatpush1.msra.mxu0 %v8136
      %8640 = vmatprep.subr.mxu0 0.0
      %8641 = vmatpush1.msra.mxu0 %v8137
      %8642 = vmatprep.subr.mxu0 0.0
      %8643 = vmatpush1.msra.mxu0 %v8138
      %8644 = vmatprep.subr.mxu0 0.0
      %8645 = vmatpush1.msra.mxu0 %v8139
      %8646 = vmatprep.subr.mxu0 0.0
      %8647 = vmatpush1.msra.mxu0 %v8140
      %8648 = vmatprep.subr.mxu0 0.0
      %8649 = vmatpush1.msra.mxu0 %v8141
      %8650 = vmatprep.subr.mxu0 0.0
      %8651 = vmatpush1.msra.mxu0 %v8142
      %8652 = vmatprep.subr.mxu0 0.0
      %8653 = vmatpush1.msra.mxu0 %v8143
      %8654 = vmatprep.subr.mxu0 0.0
      %8655 = vmatpush1.msra.mxu0 %v8144
      %8656 = vmatprep.subr.mxu0 0.0
      %8657 = vmatpush1.msra.mxu0 %v8145
      %8658 = vmatprep.subr.mxu0 0.0
      %8659 = vmatpush1.msra.mxu0 %v8146
      %8660 = vmatprep.subr.mxu0 0.0
      %8661 = vmatpush1.msra.mxu0 %v8147
      %8662 = vmatprep.subr.mxu0 0.0
      %8663 = vmatpush1.msra.mxu0 %v8148
      %8664 = vmatprep.mubr.f32.mxu0 %v7884
      %8665 = vmatmul.mubr.f32.gmra.mrb[0].mxu0 %v7883
      %v8666 = vpop.f32.mrb[0].mxu0
      %v8667 = vadd.f32 %v8522, %v8666
      %v8668 = vpop.f32.mrb[0].mxu0
      %8669 = vmatprep.mubr.f32.mxu0 %v7893
      %8670 = vmatmul.mubr.f32.gmra.mrb[0].mxu0 %v7892
      %v8671 = vpop.f32.mrb[0].mxu0
      %v8672 = vadd.f32 %v8527, %v8671
      %v8673 = vpop.f32.mrb[0].mxu0
      %8674 = vmatprep.mubr.f32.mxu0 %v7902
      %8675 = vmatmul.mubr.f32.gmra.mrb[0].mxu0 %v7901
      %v8676 = vpop.f32.mrb[0].mxu0
      %v8677 = vadd.f32 %v8532, %v8676
      %v8678 = vpop.f32.mrb[0].mxu0
      %8679 = vmatprep.mubr.f32.mxu0 %v7911
      %8680 = vmatmul.mubr.f32.gmra.mrb[0].mxu0 %v7910
      %v8681 = vpop.f32.mrb[0].mxu0
      %v8682 = vadd.f32 %v8537, %v8681
      %v8683 = vpop.f32.mrb[0].mxu0
      %8684 = vmatprep.mubr.f32.mxu0 %v7920
      %8685 = vmatmul.mubr.f32.gmra.mrb[0].mxu0 %v7919
      %v8686 = vpop.f32.mrb[0].mxu0
      %v8687 = vadd.f32 %v8542, %v8686
      %v8688 = vpop.f32.mrb[0].mxu0
      %8689 = vmatprep.mubr.f32.mxu0 %v7929
      %8690 = vmatmul.mubr.f32.gmra.mrb[0].mxu0 %v7928
      %v8691 = vpop.f32.mrb[0].mxu0
      %v8692 = vadd.f32 %v8547, %v8691
      %v8693 = vpop.f32.mrb[0].mxu0
      %8694 = vmatprep.mubr.f32.mxu0 %v7938
      %8695 = vmatmul.mubr.f32.gmra.mrb[0].mxu0 %v7937
      %v8696 = vpop.f32.mrb[0].mxu0
      %v8697 = vadd.f32 %v8552, %v8696
      %v8698 = vpop.f32.mrb[0].mxu0
      %8699 = vmatprep.mubr.f32.mxu0 %v7947
      %8700 = vmatmul.mubr.f32.gmra.mrb[0].mxu0 %v7946
      %v8701 = vpop.f32.mrb[0].mxu0
      %v8702 = vadd.f32 %v8557, %v8701
      %v8703 = vpop.f32.mrb[0].mxu0
      %8704 = vmatprep.mubr.f32.mxu0 %v7956
      %8705 = vmatmul.mubr.f32.gmra.mrb[0].mxu0 %v7955
      %v8706 = vpop.f32.mrb[0].mxu0
      %v8707 = vadd.f32 %v8562, %v8706
      %v8708 = vpop.f32.mrb[0].mxu0
      %8709 = vmatprep.mubr.f32.mxu0 %v7965
      %8710 = vmatmul.mubr.f32.gmra.mrb[0].mxu0 %v7964
      %v8711 = vpop.f32.mrb[0].mxu0
      %v8712 = vadd.f32 %v8567, %v8711
      %v8713 = vpop.f32.mrb[0].mxu0
      %8714 = vmatprep.mubr.f32.mxu0 %v7974
      %8715 = vmatmul.mubr.f32.gmra.mrb[0].mxu0 %v7973
      %v8716 = vpop.f32.mrb[0].mxu0
      %v8717 = vadd.f32 %v8572, %v8716
      %v8718 = vpop.f32.mrb[0].mxu0
      %8719 = vmatprep.mubr.f32.mxu0 %v7983
      %8720 = vmatmul.mubr.f32.gmra.mrb[0].mxu0 %v7982
      %v8721 = vpop.f32.mrb[0].mxu0
      %v8722 = vadd.f32 %v8577, %v8721
      %v8723 = vpop.f32.mrb[0].mxu0
      %8724 = vmatprep.mubr.f32.mxu0 %v7992
      %8725 = vmatmul.mubr.f32.gmra.mrb[0].mxu0 %v7991
      %v8726 = vpop.f32.mrb[0].mxu0
      %v8727 = vadd.f32 %v8582, %v8726
      %v8728 = vpop.f32.mrb[0].mxu0
      %8729 = vmatprep.mubr.f32.mxu0 %v8001
      %8730 = vmatmul.mubr.f32.gmra.mrb[0].mxu0 %v8000
      %v8731 = vpop.f32.mrb[0].mxu0
      %v8732 = vadd.f32 %v8587, %v8731
      %v8733 = vpop.f32.mrb[0].mxu0
      %8734 = vmatprep.mubr.f32.mxu0 %v8010
      %8735 = vmatmul.mubr.f32.gmra.mrb[0].mxu0 %v8009
      %v8736 = vpop.f32.mrb[0].mxu0
      %v8737 = vadd.f32 %v8592, %v8736
      %v8738 = vpop.f32.mrb[0].mxu0
      %8739 = vmatprep.mubr.f32.mxu0 %v8019
      %8740 = vmatmul.mubr.f32.gmra.mrb[0].mxu0 %v8018
      %v8741 = vpop.f32.mrb[0].mxu0
      %v8742 = vadd.f32 %v8597, %v8741
      %v8743 = vpop.f32.mrb[0].mxu0
      %8744 = vdwg.mxu0
      %8745 = vmatprep.subr.mxu0 0.0
      %8746 = vmatpush1.msra.mxu0 %v8149
      %8747 = vmatprep.subr.mxu0 0.0
      %8748 = vmatpush1.msra.mxu0 %v8150
      %8749 = vmatprep.subr.mxu0 0.0
      %8750 = vmatpush1.msra.mxu0 %v8151
      %8751 = vmatprep.subr.mxu0 0.0
      %8752 = vmatpush1.msra.mxu0 %v8152
      %8753 = vmatprep.subr.mxu0 0.0
      %8754 = vmatpush1.msra.mxu0 %v8153
      %8755 = vmatprep.subr.mxu0 0.0
      %8756 = vmatpush1.msra.mxu0 %v8154
      %8757 = vmatprep.subr.mxu0 0.0
      %8758 = vmatpush1.msra.mxu0 %v8155
      %8759 = vmatprep.subr.mxu0 0.0
      %8760 = vmatpush1.msra.mxu0 %v8156
      %8761 = vmatprep.subr.mxu0 0.0
      %8762 = vmatpush1.msra.mxu0 %v8157
      %8763 = vmatprep.subr.mxu0 0.0
      %8764 = vmatpush1.msra.mxu0 %v8158
      %8765 = vmatprep.subr.mxu0 0.0
      %8766 = vmatpush1.msra.mxu0 %v8159
      %8767 = vmatprep.subr.mxu0 0.0
      %8768 = vmatpush1.msra.mxu0 %v8160
      %8769 = vmatprep.subr.mxu0 0.0
      %8770 = vmatpush1.msra.mxu0 %v8161
      %8771 = vmatprep.subr.mxu0 0.0
      %8772 = vmatpush1.msra.mxu0 %v8162
      %8773 = vmatprep.subr.mxu0 0.0
      %8774 = vmatpush1.msra.mxu0 %v8163
      %8775 = vmatprep.subr.mxu0 0.0
      %8776 = vmatpush1.msra.mxu0 %v8164
      %8777 = vmatprep.subr.mxu0 0.0
      %8778 = vmatpush1.msra.mxu0 0.0
      %8779 = vmatprep.subr.mxu0 0.0
      %8780 = vmatpush1.msra.mxu0 0.0
      %8781 = vmatprep.subr.mxu0 0.0
      %8782 = vmatpush1.msra.mxu0 0.0
      %8783 = vmatprep.subr.mxu0 0.0
      %8784 = vmatpush1.msra.mxu0 0.0
      %8785 = vmatprep.subr.mxu0 0.0
      %8786 = vmatpush1.msra.mxu0 0.0
      %8787 = vmatprep.subr.mxu0 0.0
      %8788 = vmatpush1.msra.mxu0 0.0
      %8789 = vmatprep.subr.mxu0 0.0
      %8790 = vmatpush1.msra.mxu0 0.0
      %8791 = vmatprep.subr.mxu0 0.0
      %8792 = vmatpush1.msra.mxu0 0.0
      %8793 = vmatprep.subr.mxu0 0.0
      %8794 = vmatpush1.msra.mxu0 0.0
      %8795 = vmatprep.subr.mxu0 0.0
      %8796 = vmatpush1.msra.mxu0 0.0
      %8797 = vmatprep.subr.mxu0 0.0
      %8798 = vmatpush1.msra.mxu0 0.0
      %8799 = vmatprep.subr.mxu0 0.0
      %8800 = vmatpush1.msra.mxu0 0.0
      %8801 = vmatprep.subr.mxu0 0.0
      %8802 = vmatpush1.msra.mxu0 0.0
      %8803 = vmatprep.subr.mxu0 0.0
      %8804 = vmatpush1.msra.mxu0 0.0
      %8805 = vmatprep.subr.mxu0 0.0
      %8806 = vmatpush1.msra.mxu0 0.0
      %8807 = vmatprep.subr.mxu0 0.0
      %8808 = vmatpush1.msra.mxu0 0.0
      %8809 = vmatprep.mubr.f32.mxu0 0.0
      %8810 = vmatmul.mubr.f32.gmra.mrb[0].mxu0 %v7885
      %v8811 = vpop.f32.mrb[0].mxu0
      %v8812 = vadd.f32 %v8667, %v8811
      %v8813 = vpop.f32.mrb[0].mxu0
      %8814 = vmatprep.mubr.f32.mxu0 0.0
      %8815 = vmatmul.mubr.f32.gmra.mrb[0].mxu0 %v7894
      %v8816 = vpop.f32.mrb[0].mxu0
      %v8817 = vadd.f32 %v8672, %v8816
      %v8818 = vpop.f32.mrb[0].mxu0
      %8819 = vmatprep.mubr.f32.mxu0 0.0
      %8820 = vmatmul.mubr.f32.gmra.mrb[0].mxu0 %v7903
      %v8821 = vpop.f32.mrb[0].mxu0
      %v8822 = vadd.f32 %v8677, %v8821
      %v8823 = vpop.f32.mrb[0].mxu0
      %8824 = vmatprep.mubr.f32.mxu0 0.0
      %8825 = vmatmul.mubr.f32.gmra.mrb[0].mxu0 %v7912
      %v8826 = vpop.f32.mrb[0].mxu0
      %v8827 = vadd.f32 %v8682, %v8826
      %v8828 = vpop.f32.mrb[0].mxu0
      %8829 = vmatprep.mubr.f32.mxu0 0.0
      %8830 = vmatmul.mubr.f32.gmra.mrb[0].mxu0 %v7921
      %v8831 = vpop.f32.mrb[0].mxu0
      %v8832 = vadd.f32 %v8687, %v8831
      %v8833 = vpop.f32.mrb[0].mxu0
      %8834 = vmatprep.mubr.f32.mxu0 0.0
      %8835 = vmatmul.mubr.f32.gmra.mrb[0].mxu0 %v7930
      %v8836 = vpop.f32.mrb[0].mxu0
      %v8837 = vadd.f32 %v8692, %v8836
      %v8838 = vpop.f32.mrb[0].mxu0
      %8839 = vmatprep.mubr.f32.mxu0 0.0
      %8840 = vmatmul.mubr.f32.gmra.mrb[0].mxu0 %v7939
      %v8841 = vpop.f32.mrb[0].mxu0
      %v8842 = vadd.f32 %v8697, %v8841
      %v8843 = vpop.f32.mrb[0].mxu0
      %8844 = vmatprep.mubr.f32.mxu0 0.0
      %8845 = vmatmul.mubr.f32.gmra.mrb[0].mxu0 %v7948
      %v8846 = vpop.f32.mrb[0].mxu0
      %v8847 = vadd.f32 %v8702, %v8846
      %v8848 = vpop.f32.mrb[0].mxu0
      %8849 = vmatprep.mubr.f32.mxu0 0.0
      %8850 = vmatmul.mubr.f32.gmra.mrb[0].mxu0 %v7957
      %v8851 = vpop.f32.mrb[0].mxu0
      %v8852 = vadd.f32 %v8707, %v8851
      %v8853 = vpop.f32.mrb[0].mxu0
      %8854 = vmatprep.mubr.f32.mxu0 0.0
      %8855 = vmatmul.mubr.f32.gmra.mrb[0].mxu0 %v7966
      %v8856 = vpop.f32.mrb[0].mxu0
      %v8857 = vadd.f32 %v8712, %v8856
      %v8858 = vpop.f32.mrb[0].mxu0
      %8859 = vmatprep.mubr.f32.mxu0 0.0
      %8860 = vmatmul.mubr.f32.gmra.mrb[0].mxu0 %v7975
      %v8861 = vpop.f32.mrb[0].mxu0
      %v8862 = vadd.f32 %v8717, %v8861
      %v8863 = vpop.f32.mrb[0].mxu0
      %8864 = vmatprep.mubr.f32.mxu0 0.0
      %8865 = vmatmul.mubr.f32.gmra.mrb[0].mxu0 %v7984
      %v8866 = vpop.f32.mrb[0].mxu0
      %v8867 = vadd.f32 %v8722, %v8866
      %v8868 = vpop.f32.mrb[0].mxu0
      %8869 = vmatprep.mubr.f32.mxu0 0.0
      %8870 = vmatmul.mubr.f32.gmra.mrb[0].mxu0 %v7993
      %v8871 = vpop.f32.mrb[0].mxu0
      %v8872 = vadd.f32 %v8727, %v8871
      %v8873 = vpop.f32.mrb[0].mxu0
      %8874 = vmatprep.mubr.f32.mxu0 0.0
      %8875 = vmatmul.mubr.f32.gmra.mrb[0].mxu0 %v8002
      %v8876 = vpop.f32.mrb[0].mxu0
      %v8877 = vadd.f32 %v8732, %v8876
      %v8878 = vpop.f32.mrb[0].mxu0
      %8879 = vmatprep.mubr.f32.mxu0 0.0
      %8880 = vmatmul.mubr.f32.gmra.mrb[0].mxu0 %v8011
      %v8881 = vpop.f32.mrb[0].mxu0
      %v8882 = vadd.f32 %v8737, %v8881
      %v8883 = vpop.f32.mrb[0].mxu0
      %8884 = vmatprep.mubr.f32.mxu0 0.0
      %8885 = vmatmul.mubr.f32.gmra.mrb[0].mxu0 %v8020
      %v8886 = vpop.f32.mrb[0].mxu0
      %v8887 = vadd.f32 %v8742, %v8886
      %v8888 = vpop.f32.mrb[0].mxu0
      %8889 = vdwg.mxu0
      %v8890 = vadd.f32 %v7861, %v8812
      %v8891 = vadd.f32 %v7862, %v8817
      %v8892 = vadd.f32 %v7863, %v8822
      %v8893 = vadd.f32 %v7864, %v8827
      %v8894 = vadd.f32 %v7865, %v8832
      %v8895 = vadd.f32 %v7866, %v8837
      %v8896 = vadd.f32 %v7867, %v8842
      %v8897 = vadd.f32 %v7868, %v8847
      %v8898 = vadd.f32 %v7869, %v8852
      %v8899 = vadd.f32 %v7870, %v8857
      %v8900 = vadd.f32 %v7871, %v8862
      %v8901 = vadd.f32 %v7872, %v8867
      %v8902 = vadd.f32 %v7873, %v8872
      %v8903 = vadd.f32 %v7874, %v8877
      %v8904 = vadd.f32 %v7875, %v8882
      %v8905 = vadd.f32 %v7876, %v8887
      %8906 = vst.msk [vmem:[%s480] sm:$0xff] %vm1303, %v8890
      %8907 = vst.msk [vmem:[%s480 + $0x8] sm:$0xff] %vm1303, %v8891
      %8908 = vst.msk [vmem:[%s480 + $0x10] sm:$0xff] %vm1303, %v8892
      %8909 = vst.msk [vmem:[%s480 + $0x18] sm:$0xff] %vm1303, %v8893
      %8910 = vst.msk [vmem:[%s480 + $0x20] sm:$0xff] %vm1303, %v8894
      %8911 = vst.msk [vmem:[%s480 + $0x28] sm:$0xff] %vm1303, %v8895
      %8912 = vst.msk [vmem:[%s480 + $0x30] sm:$0xff] %vm1303, %v8896
      %8913 = vst.msk [vmem:[%s480 + $0x38] sm:$0xff] %vm1303, %v8897
      %8914 = vst.msk [vmem:[%s480 + $0x40] sm:$0xff] %vm1303, %v8898
      %8915 = vst.msk [vmem:[%s480 + $0x48] sm:$0xff] %vm1303, %v8899
      %8916 = vst.msk [vmem:[%s480 + $0x50] sm:$0xff] %vm1303, %v8900
      %8917 = vst.msk [vmem:[%s480 + $0x58] sm:$0xff] %vm1303, %v8901
      %8918 = vst.msk [vmem:[%s480 + $0x60] sm:$0xff] %vm1303, %v8902
      %8919 = vst.msk [vmem:[%s480 + $0x68] sm:$0xff] %vm1303, %v8903
      %8920 = vst.msk [vmem:[%s480 + $0x70] sm:$0xff] %vm1303, %v8904
      %8921 = vst.msk [vmem:[%s480 + $0x78] sm:$0xff] %vm1303, %v8905
      %s8922 = smul.u32 16, %s28
      %p8923 = scmp.lt.s32.totalorder %s8922, 47
      %s8924 = scalar_select %p8923, %s8922, 47
      %s8925 = smul.addr %s8924, 8
      %s8926 = scalar_lea.vmem %s11, %s8925
      %s8927 = smul.u32 16, %s28
      %p8928 = scmp.lt.s32.totalorder %s8927, 47
      %s8929 = scalar_select %p8928, %s8927, 47
      %s8930 = smul.addr %s8929, 8
      %s8931 = scalar_lea.vmem %s12, %s8930
      // Predicated region
      $region69: #{knn_block_forward.1} parent=63 // pred_check
        %p8932 = pneg %p300
      $region70: #{knn_block_forward.1} parent=63 // pred_check_branch
        %8934 = sbr.rel (%p8932) target = $region72
      $region71: #{knn_block_forward.1} parent=63 // pred_region
        %s8935 = smul.u32 16, %s28
      $region72: #{knn_block_forward.1} parent=63 // pred_fallthru
        _
      // Predicated region
      $region73: #{knn_block_forward.1} parent=63 // pred_check
        %p8936 = pneg %p326
      $region74: #{knn_block_forward.1} parent=63 // pred_check_branch
        %8938 = sbr.rel (%p8936) target = $region76
      $region75: #{knn_block_forward.1} parent=63 // pred_region
        %s8939 = smul.u32 16, %s28
      $region76: #{knn_block_forward.1} parent=63 // pred_fallthru
        _
    $region64: #{knn_block_forward.1} parent=5 // pred_fallthru
      _
    %p8940 = scmp.le.s32.totalorder 2, %s19
    // Predicated region
    $region77: #{knn_block_forward.1} parent=5 // pred_check
      %p8941 = pneg %p8940
    $region78: #{knn_block_forward.1} parent=5 // pred_check_branch
      %8943 = sbr.rel (%p8941) target = $region80
    $region79: #{knn_block_forward.1} parent=5 // pred_region
      %s8944 = ssub.s32 %s19, 2
      // Predicated region
      $region81: #{knn_block_forward.1} parent=79 // pred_check
        %p8945 = pneg %p306
      $region82: #{knn_block_forward.1} parent=79 // pred_check_branch
        %8947 = sbr.rel (%p8945) target = $region84
      $region83: #{knn_block_forward.1} parent=79 // pred_region
        %s8948 = smul.u32 16, %s30
        %p8949 = scmp.lt.s32.totalorder %s8948, 47
        %s8950 = scalar_select %p8949, %s8948, 47
        %s8951 = smul.addr %s8950, 8
        %s8952 = scalar_lea.vmem %s11, %s8951
      $region84: #{knn_block_forward.1} parent=79 // pred_fallthru
        _
      // Predicated region
      $region85: #{knn_block_forward.1} parent=79 // pred_check
        %p8953 = pneg %p332
      $region86: #{knn_block_forward.1} parent=79 // pred_check_branch
        %8955 = sbr.rel (%p8953) target = $region88
      $region87: #{knn_block_forward.1} parent=79 // pred_region
        %s8956 = smul.u32 16, %s30
        %p8957 = scmp.lt.s32.totalorder %s8956, 47
        %s8958 = scalar_select %p8957, %s8956, 47
        %s8959 = smul.addr %s8958, 8
        %s8960 = scalar_lea.vmem %s12, %s8959
      $region88: #{knn_block_forward.1} parent=79 // pred_fallthru
        _
    $region80: #{knn_block_forward.1} parent=5 // pred_fallthru
      _
  $region6: #{knn_block_forward.1} parent=0 // loop_footer
    %s23 = sadd.s32 1, %s19
  $region7: #{knn_block_forward.1} parent=0 // loop_footer_branch
    %18 = sbr.rel target = $region3
  $region8: #{knn_block_forward.1} parent=0 // loop_exit
    _

</llo_original>
